<compile_context>
chip_gen: v6e
topology: v6e:2x2x1
jax: 0.10.0
libtpu: 0.0.40
codegen_flags: <defaults>
</compile_context>

<pallas_src>
import jax
import jax.numpy as jnp
from jax import lax
from jax.experimental import pallas as pl
from jax.experimental.pallas import tpu as pltpu

K = 7          # conv kernel size for spatial / pixel attention
P = 3          # reflect padding on each side
KK = K * K


def _rsrc(i, n):
    """Reflect (PyTorch 'reflect' mode) source index for i in [-P, n-1+P]."""
    if i < 0:
        return -i
    if i >= n:
        return 2 * (n - 1) - i
    return i


def _round_up(x, m):
    return ((x + m - 1) // m) * m


def _fold_rows(a, op):
    """Log-depth tree reduction of a (R, N) array over rows -> (1, N)."""
    while a.shape[0] > 1:
        r = a.shape[0]
        h = r // 2
        lo = op(a[:h], a[h:2 * h])
        if r % 2:
            lo = jnp.concatenate([lo, a[2 * h:]], axis=0)
        a = lo
    return a


def _make_cga_kernel(H, W, C):
    Hp, Wp = H + 2 * P, W + 2 * P
    HW = H * W
    HpWp = Hp * Wp
    LW = H * Wp                       # strided-grid width; valid output cols are w < W
    OFF = 8                           # left margin so edge-fix loads at -2P stay in-bounds
    LBUF = _round_up(OFF + HpWp + 2 * P, 128)
    R0 = P * Wp + P                   # padded-flat offset of dense position (0, 0)

    def fix_cols(ref, cm):
        # Reflect the 2P edge columns of every padded row from that row's interior
        # columns: 6 lane-offset window loads + selects, one window store.
        a = ref[:, OFF:OFF + HpWp]
        cmb = jnp.broadcast_to(cm, a.shape)
        for k in range(1, P + 1):
            left_src = ref[:, OFF + 2 * k:OFF + 2 * k + HpWp]
            right_src = ref[:, OFF - 2 * k:OFF - 2 * k + HpWp]
            a = jnp.where(cmb == (P - k), left_src, a)
            a = jnp.where(cmb == (P + W - 1 + k), right_src, a)
        ref[:, OFF:OFF + HpWp] = a

    def kernel(x_ref, y_ref, col_ref,
               ca_w1_ref, ca_b1_ref, ca_w2_ref, ca_b2_ref,
               sa_w_ref, sa_b_ref,
               pa_wi_ref, pa_wp_ref, pa_b_ref,
               cw_ref, cb_ref,
               o_ref,
               pad_i_ref, pad_am_ref, pad_s_ref, s_ref, p2s_ref, p2d_ref):
        x = x_ref[0]                       # (C, H*W)
        y = y_ref[0]
        initial = x + y
        cm = col_ref[...]                  # (1, Hp*Wp) int32: lane -> column within padded row

        # Keep untouched lanes of the padded scratch buffers benign (cheap).
        pad_i_ref[...] = jnp.zeros((C, LBUF), jnp.float32)
        pad_am_ref[...] = jnp.zeros((2, LBUF), jnp.float32)
        pad_s_ref[...] = jnp.zeros((1, LBUF), jnp.float32)

        # ---------------- channel attention: GAP -> 1x1 -> ReLU -> 1x1 ----------------
        gap = jnp.sum(initial, axis=1, keepdims=True) * (1.0 / HW)              # (C, 1)
        h1 = jnp.maximum(
            jnp.dot(ca_w1_ref[...], gap, preferred_element_type=jnp.float32)
            + ca_b1_ref[...], 0.0)                                              # (Cr, 1)
        cattn = jnp.dot(ca_w2_ref[...], h1,
                        preferred_element_type=jnp.float32) + ca_b2_ref[...]    # (C, 1)

        # ---------------- channel mean / max over C (log-depth tree) ------------------
        x_avg = _fold_rows(initial, jnp.add) * (1.0 / C)                        # (1, H*W)
        x_max = _fold_rows(initial, jnp.maximum)                                # (1, H*W)

        # ------- reflect-padded avg/max fields, flattened (rows of width Wp) ----------
        for hp in range(Hp):
            hs = _rsrc(hp - P, H)
            dst = OFF + hp * Wp + P
            pad_am_ref[0:1, dst:dst + W] = x_avg[:, hs * W:(hs + 1) * W]
            pad_am_ref[1:2, dst:dst + W] = x_max[:, hs * W:(hs + 1) * W]
        fix_cols(pad_am_ref, cm)

        # --------- spatial attention: 7x7 conv evaluated on the Wp-strided grid -------
        acc_sa = [jnp.zeros((2, LW), jnp.float32) for _ in range(4)]
        for di in range(K):
            for dj in range(K):
                t = di * K + dj
                s = OFF + di * Wp + dj
                acc_sa[t % 4] = acc_sa[t % 4] + sa_w_ref[:, t:t + 1] * pad_am_ref[:, s:s + LW]
        sa = (acc_sa[0] + acc_sa[1]) + (acc_sa[2] + acc_sa[3])
        sattn = sa[0:1] + sa[1:2] + sa_b_ref[0]                                 # (1, LW)

        # --------------------- reflect-padded sattn (single channel) ------------------
        # Interior rows come from ONE block store (the strided layout already has
        # width Wp); strided garbage columns only land on edge columns which the
        # column fix below overwrites.
        pad_s_ref[0:1, OFF + R0:OFF + R0 + LW] = sattn
        for hp in list(range(P)) + list(range(P + H, Hp)):
            hs = _rsrc(hp - P, H)
            dst = OFF + hp * Wp + P
            pad_s_ref[0:1, dst:dst + W] = sattn[:, hs * Wp:hs * Wp + W]
        fix_cols(pad_s_ref, cm)

        # --------- pattn1 branch of the grouped conv: im2col + one MXU matmul ---------
        # pattn1 = sattn + cattn (cattn constant over space), so
        # conv_wp(pad(pattn1)) = pa_wp @ im2col(pad(sattn)) + (sum_t pa_wp) * cattn.
        for di in range(K):
            for dj in range(K):
                t = di * K + dj
                s = OFF + di * Wp + dj
                s_ref[t:t + 1, :] = pad_s_ref[0:1, s:s + LW]
        wp_sum = jnp.sum(pa_wp_ref[...], axis=1, keepdims=True)                 # (C, 1)
        conv_p = jnp.dot(pa_wp_ref[...], s_ref[...],
                         preferred_element_type=jnp.float32) + wp_sum * cattn   # (C, LW)

        # ----------------- reflect-padded `initial`, flattened ------------------------
        for hp in range(Hp):
            hs = _rsrc(hp - P, H)
            dst = OFF + hp * Wp + P
            pad_i_ref[:, dst:dst + W] = initial[:, hs * W:(hs + 1) * W]
        fix_cols(pad_i_ref, cm)

        # ----------- `initial` branch of the grouped 7x7 conv on the VPU --------------
        acc = [jnp.zeros((C, LW), jnp.float32) for _ in range(4)]
        for di in range(K):
            for dj in range(K):
                t = di * K + dj
                s = OFF + di * Wp + dj
                acc[t % 4] = acc[t % 4] + pa_wi_ref[:, t:t + 1] * pad_i_ref[:, s:s + LW]
        conv_pa = (acc[0] + acc[1]) + (acc[2] + acc[3]) + conv_p + pa_b_ref[...]

        # NOTE: the reference module applies sigmoid twice (inside PixelAttention and
        # again in CGAFusion) -- keep both on purpose.
        p2s_ref[...] = jax.nn.sigmoid(jax.nn.sigmoid(conv_pa))                  # (C, LW)

        # ------------- drop pad columns: strided (C, H*Wp) -> dense (C, H*W) ----------
        for h in range(H):
            p2d_ref[:, h * W:(h + 1) * W] = p2s_ref[:, h * Wp:h * Wp + W]
        p2 = p2d_ref[...]                                                       # (C, H*W)

        # --------- fusion + final 1x1 conv (one MXU matmul, lane-dense store) ---------
        res = initial + p2 * x + (1.0 - p2) * y
        out = jnp.dot(cw_ref[...], res, preferred_element_type=jnp.float32) + cb_ref[...]
        o_ref[0] = out

    return kernel


def cga_fusion(x_nchw, y_nchw, p):
    B, C, H, W = x_nchw.shape
    assert H > P and W > P, "reflect padding (pad=3) requires H, W >= 4"
    HW = H * W
    Hp, Wp = H + 2 * P, W + 2 * P
    HpWp = Hp * Wp
    LW = H * Wp
    OFF = 8
    LBUF = _round_up(OFF + HpWp + 2 * P, 128)
    Cr = p["ca_w1"].shape[0]

    # Free reshapes only -- no transposes, no extra HBM passes.
    x = x_nchw.reshape(B, C, HW).astype(jnp.float32)
    y = y_nchw.reshape(B, C, HW).astype(jnp.float32)

    # Column index within a padded row, per flattened padded lane (static).
    col_map = jnp.tile(jnp.arange(Wp, dtype=jnp.int32), Hp)[None, :]            # (1, Hp*Wp)

    ca_w1 = p["ca_w1"].astype(jnp.float32)                       # (Cr, C)
    ca_b1 = p["ca_b1"].reshape(Cr, 1).astype(jnp.float32)
    ca_w2 = p["ca_w2"].astype(jnp.float32)                       # (C, Cr)
    ca_b2 = p["ca_b2"].reshape(C, 1).astype(jnp.float32)
    sa_w = p["sa_w"].reshape(2, KK).astype(jnp.float32)          # row 0: avg taps, row 1: max taps
    sa_b = p["sa_b"].reshape(1).astype(jnp.float32)
    pa_wi = p["pa_w"][:, 0].reshape(C, KK).astype(jnp.float32)   # taps for `initial`
    pa_wp = p["pa_w"][:, 1].reshape(C, KK).astype(jnp.float32)   # taps for `pattn1`
    pa_b = p["pa_b"].reshape(C, 1).astype(jnp.float32)
    conv_w = p["conv_w"].astype(jnp.float32)                     # (C, C)
    conv_b = p["conv_b"].reshape(C, 1).astype(jnp.float32)

    def full_spec(shape):
        nd = len(shape)
        return pl.BlockSpec(shape, lambda *g, _nd=nd: (0,) * _nd)

    smem_spec = pl.BlockSpec(memory_space=pltpu.MemorySpace.SMEM)

    in_specs = [
        pl.BlockSpec((1, C, HW), lambda b: (b, 0, 0)),   # x
        pl.BlockSpec((1, C, HW), lambda b: (b, 0, 0)),   # y
        full_spec((1, HpWp)),                            # col_map
        full_spec((Cr, C)),                              # ca_w1
        full_spec((Cr, 1)),                              # ca_b1
        full_spec((C, Cr)),                              # ca_w2
        full_spec((C, 1)),                               # ca_b2
        full_spec((2, KK)),                              # sa_w
        smem_spec,                                       # sa_b (scalar)
        full_spec((C, KK)),                              # pa_wi
        full_spec((C, KK)),                              # pa_wp
        full_spec((C, 1)),                               # pa_b
        full_spec((C, C)),                               # conv_w
        full_spec((C, 1)),                               # conv_b
    ]
    out_specs = pl.BlockSpec((1, C, HW), lambda b: (b, 0, 0))

    scratch_shapes = [
        pltpu.VMEM((C, LBUF), jnp.float32),   # reflect-padded initial, flattened
        pltpu.VMEM((2, LBUF), jnp.float32),   # reflect-padded channel-avg / channel-max fields
        pltpu.VMEM((1, LBUF), jnp.float32),   # reflect-padded sattn field
        pltpu.VMEM((KK, LW), jnp.float32),    # im2col of padded sattn
        pltpu.VMEM((C, LW), jnp.float32),     # pattn2 on the strided grid
        pltpu.VMEM((C, HW), jnp.float32),     # pattn2 on the dense grid
    ]

    out_flat = pl.pallas_call(
        _make_cga_kernel(H, W, C),
        out_shape=jax.ShapeDtypeStruct((B, C, HW), jnp.float32),
        grid_spec=pltpu.PrefetchScalarGridSpec(
            num_scalar_prefetch=0, grid=(B,),
            in_specs=in_specs, out_specs=out_specs,
            scratch_shapes=scratch_shapes),
        compiler_params=pltpu.CompilerParams(dimension_semantics=("parallel",)),
    )(x, y, col_map, ca_w1, ca_b1, ca_w2, ca_b2, sa_w, sa_b,
      pa_wi, pa_wp, pa_b, conv_w, conv_b)

    return out_flat.reshape(B, C, H, W)


# ----------------------------- pure-JAX reference (for validation) -------------------------
def _conv2d_nchw(x, w, b, groups=1):
    out = lax.conv_general_dilated(
        x, w, window_strides=(1, 1), padding="VALID",
        dimension_numbers=("NCHW", "OIHW", "NCHW"),
        feature_group_count=groups, precision=lax.Precision.HIGHEST)
    return out + b.reshape(1, -1, 1, 1)


def cga_fusion_reference(x, y, p):
    B, C, H, W = x.shape
    Cr = p["ca_w1"].shape[0]
    initial = x + y
    # channel attention
    gap = jnp.mean(initial, axis=(2, 3), keepdims=True)
    h = jax.nn.relu(_conv2d_nchw(gap, p["ca_w1"].reshape(Cr, C, 1, 1), p["ca_b1"]))
    cattn = _conv2d_nchw(h, p["ca_w2"].reshape(C, Cr, 1, 1), p["ca_b2"])
    # spatial attention
    x_avg = jnp.mean(initial, axis=1, keepdims=True)
    x_max = jnp.max(initial, axis=1, keepdims=True)
    x2 = jnp.concatenate([x_avg, x_max], axis=1)
    x2p = jnp.pad(x2, ((0, 0), (0, 0), (P, P), (P, P)), mode="reflect")
    sattn = _conv2d_nchw(x2p, p["sa_w"], p["sa_b"])
    pattn1 = sattn + cattn
    # pixel attention (grouped conv), double sigmoid as in the reference module
    z = jnp.stack([initial, pattn1], axis=2).reshape(B, 2 * C, H, W)
    zp = jnp.pad(z, ((0, 0), (0, 0), (P, P), (P, P)), mode="reflect")
    pattn2 = jax.nn.sigmoid(jax.nn.sigmoid(_conv2d_nchw(zp, p["pa_w"], p["pa_b"], groups=C)))
    result = initial + pattn2 * x + (1.0 - pattn2) * y
    return _conv2d_nchw(result, p["conv_w"].reshape(C, C, 1, 1), p["conv_b"])


if __name__ == "__main__":
    B, C, H, W = 2, 16, 16, 16
    reduction = 8
    Cr = C // reduction

    key = jax.random.PRNGKey(0)
    ks = jax.random.split(key, 14)
    s = 0.1
    params = {
        "ca_w1": jax.random.normal(ks[0], (Cr, C), jnp.float32) * s,
        "ca_b1": jax.random.normal(ks[1], (Cr,), jnp.float32) * s,
        "ca_w2": jax.random.normal(ks[2], (C, Cr), jnp.float32) * s,
        "ca_b2": jax.random.normal(ks[3], (C,), jnp.float32) * s,
        "sa_w": jax.random.normal(ks[4], (1, 2, K, K), jnp.float32) * s,
        "sa_b": jax.random.normal(ks[5], (1,), jnp.float32) * s,
        "pa_w": jax.random.normal(ks[6], (C, 2, K, K), jnp.float32) * s,
        "pa_b": jax.random.normal(ks[7], (C,), jnp.float32) * s,
        "conv_w": jax.random.normal(ks[8], (C, C), jnp.float32) * s,
        "conv_b": jax.random.normal(ks[9], (C,), jnp.float32) * s,
    }

    x = jax.random.normal(ks[10], (B, C, H, W), jnp.float32)
    y = jax.random.normal(ks[11], (B, C, H, W), jnp.float32)

    out = jax.block_until_ready(cga_fusion(x, y, params))
    ref = jax.block_until_ready(cga_fusion_reference(x, y, params))

    err = float(jnp.max(jnp.abs(out - ref)))
    assert out.shape == (B, C, H, W)
    assert bool(jnp.all(jnp.isfinite(out)))
    assert err < 1e-3, f"max abs error vs reference: {err}"
    print("KERNEL_OK")
</pallas_src>

<mosaic_0001>
module attributes {stable_mosaic.version = 11 : i64} {
  func.func @kernel(%arg0: i32, %arg1: memref<1x16x256xf32, #tpu.memory_space<vmem>>, %arg2: memref<1x16x256xf32, #tpu.memory_space<vmem>>, %arg3: memref<1x484xi32, #tpu.memory_space<vmem>>, %arg4: memref<2x16xf32, #tpu.memory_space<vmem>>, %arg5: memref<2x1xf32, #tpu.memory_space<vmem>>, %arg6: memref<16x2xf32, #tpu.memory_space<vmem>>, %arg7: memref<16x1xf32, #tpu.memory_space<vmem>>, %arg8: memref<2x49xf32, #tpu.memory_space<vmem>>, %arg9: memref<1xf32, #tpu.memory_space<smem>>, %arg10: memref<16x49xf32, #tpu.memory_space<vmem>>, %arg11: memref<16x49xf32, #tpu.memory_space<vmem>>, %arg12: memref<16x1xf32, #tpu.memory_space<vmem>>, %arg13: memref<16x16xf32, #tpu.memory_space<vmem>>, %arg14: memref<16x1xf32, #tpu.memory_space<vmem>>, %arg15: memref<1x16x256xf32, #tpu.memory_space<vmem>>, %arg16: memref<16x512xf32, #tpu.memory_space<vmem>>, %arg17: memref<2x512xf32, #tpu.memory_space<vmem>>, %arg18: memref<1x512xf32, #tpu.memory_space<vmem>>, %arg19: memref<49x352xf32, #tpu.memory_space<vmem>>, %arg20: memref<16x352xf32, #tpu.memory_space<vmem>>, %arg21: memref<16x256xf32, #tpu.memory_space<vmem>>) attributes {dimension_semantics = [#tpu.dimension_semantics<parallel>], iteration_bounds = array<i64: 2>, scalar_prefetch = 0 : i64, scratch_operands = 6 : i64, tpu.core_type = #tpu.core_type<tc>, window_params = [{transform_indices = @transform_0, window_bounds = array<i64: 1, 16, 256>}, {transform_indices = @transform_1, window_bounds = array<i64: 1, 16, 256>}, {pipeline_mode = #tpu.pipeline_mode<synchronous>, transform_indices = @transform_2, window_bounds = array<i64: 1, 484>}, {pipeline_mode = #tpu.pipeline_mode<synchronous>, transform_indices = @transform_3, window_bounds = array<i64: 2, 16>}, {pipeline_mode = #tpu.pipeline_mode<synchronous>, transform_indices = @transform_4, window_bounds = array<i64: 2, 1>}, {pipeline_mode = #tpu.pipeline_mode<synchronous>, transform_indices = @transform_5, window_bounds = array<i64: 16, 2>}, {pipeline_mode = #tpu.pipeline_mode<synchronous>, transform_indices = @transform_6, window_bounds = array<i64: 16, 1>}, {pipeline_mode = #tpu.pipeline_mode<synchronous>, transform_indices = @transform_7, window_bounds = array<i64: 2, 49>}, {transform_indices = @transform_8, window_bounds = array<i64: 1>}, {pipeline_mode = #tpu.pipeline_mode<synchronous>, transform_indices = @transform_9, window_bounds = array<i64: 16, 49>}, {pipeline_mode = #tpu.pipeline_mode<synchronous>, transform_indices = @transform_10, window_bounds = array<i64: 16, 49>}, {pipeline_mode = #tpu.pipeline_mode<synchronous>, transform_indices = @transform_11, window_bounds = array<i64: 16, 1>}, {pipeline_mode = #tpu.pipeline_mode<synchronous>, transform_indices = @transform_12, window_bounds = array<i64: 16, 16>}, {pipeline_mode = #tpu.pipeline_mode<synchronous>, transform_indices = @transform_13, window_bounds = array<i64: 16, 1>}, {transform_indices = @transform_14, window_bounds = array<i64: 1, 16, 256>}]} {
    %c0 = arith.constant 0 : index
    %c0_0 = arith.constant 0 : index
    %c0_1 = arith.constant 0 : index
    %0 = vector.load %arg1[%c0, %c0_0, %c0_1] : memref<1x16x256xf32, #tpu.memory_space<vmem>>, vector<1x16x256xf32>
    %1 = vector.shape_cast %0 : vector<1x16x256xf32> to vector<16x256xf32>
    %c0_2 = arith.constant 0 : index
    %c0_3 = arith.constant 0 : index
    %c0_4 = arith.constant 0 : index
    %2 = vector.load %arg2[%c0_2, %c0_3, %c0_4] : memref<1x16x256xf32, #tpu.memory_space<vmem>>, vector<1x16x256xf32>
    %3 = vector.shape_cast %2 : vector<1x16x256xf32> to vector<16x256xf32>
    %4 = arith.addf %1, %3 : vector<16x256xf32>
    %c0_5 = arith.constant 0 : index
    %c0_6 = arith.constant 0 : index
    %5 = vector.load %arg3[%c0_5, %c0_6] : memref<1x484xi32, #tpu.memory_space<vmem>>, vector<1x484xi32>
    %cst = arith.constant 0.000000e+00 : f32
    %6 = vector.broadcast %cst : f32 to vector<16x512xf32>
    %c0_7 = arith.constant 0 : index
    %c0_8 = arith.constant 0 : index
    %7 = vector.load %arg16[%c0_7, %c0_8] : memref<16x512xf32, #tpu.memory_space<vmem>>, vector<16x512xf32>
    tpu.vector_store %arg16[%c0_7, %c0_8], %6 {strides = array<i32>} : memref<16x512xf32, #tpu.memory_space<vmem>>, vector<16x512xf32>,
    %cst_9 = arith.constant 0.000000e+00 : f32
    %8 = vector.broadcast %cst_9 : f32 to vector<2x512xf32>
    %c0_10 = arith.constant 0 : index
    %c0_11 = arith.constant 0 : index
    %9 = vector.load %arg17[%c0_10, %c0_11] : memref<2x512xf32, #tpu.memory_space<vmem>>, vector<2x512xf32>
    tpu.vector_store %arg17[%c0_10, %c0_11], %8 {strides = array<i32>} : memref<2x512xf32, #tpu.memory_space<vmem>>, vector<2x512xf32>,
    %cst_12 = arith.constant 0.000000e+00 : f32
    %10 = vector.broadcast %cst_12 : f32 to vector<1x512xf32>
    %c0_13 = arith.constant 0 : index
    %c0_14 = arith.constant 0 : index
    %11 = vector.load %arg18[%c0_13, %c0_14] : memref<1x512xf32, #tpu.memory_space<vmem>>, vector<1x512xf32>
    tpu.vector_store %arg18[%c0_13, %c0_14], %10 {strides = array<i32>} : memref<1x512xf32, #tpu.memory_space<vmem>>, vector<1x512xf32>,
    %cst_15 = arith.constant dense<0.000000e+00> : vector<16xf32>
    %12 = vector.multi_reduction <add>, %4, %cst_15 [1] : vector<16x256xf32> to vector<16xf32>
    %13 = vector.shape_cast %12 : vector<16xf32> to vector<16x1xf32>
    %cst_16 = arith.constant 3.906250e-03 : f32
    %14 = vector.broadcast %cst_16 : f32 to vector<16x1xf32>
    %15 = arith.mulf %13, %14 : vector<16x1xf32>
    %c0_17 = arith.constant 0 : index
    %c0_18 = arith.constant 0 : index
    %16 = vector.load %arg4[%c0_17, %c0_18] : memref<2x16xf32, #tpu.memory_space<vmem>>, vector<2x16xf32>
    %cst_19 = arith.constant dense<0.000000e+00> : vector<2x1xf32>
    %17 = tpu.matmul %16, %15, %cst_19 {dimension_numbers = #tpu.dot_dimension_numbers<[1], [0], [0], [1], [0, 0, 1, 1], [], []>} : vector<2x16xf32>, vector<16x1xf32>, vector<2x1xf32> -> vector<2x1xf32>
    %c0_20 = arith.constant 0 : index
    %c0_21 = arith.constant 0 : index
    %18 = vector.load %arg5[%c0_20, %c0_21] : memref<2x1xf32, #tpu.memory_space<vmem>>, vector<2x1xf32>
    %19 = arith.addf %17, %18 : vector<2x1xf32>
    %cst_22 = arith.constant 0.000000e+00 : f32
    %20 = vector.broadcast %cst_22 : f32 to vector<2x1xf32>
    %21 = arith.maximumf %19, %20 : vector<2x1xf32>
    %c0_23 = arith.constant 0 : index
    %c0_24 = arith.constant 0 : index
    %22 = vector.load %arg6[%c0_23, %c0_24] : memref<16x2xf32, #tpu.memory_space<vmem>>, vector<16x2xf32>
    %cst_25 = arith.constant dense<0.000000e+00> : vector<16x1xf32>
    %23 = tpu.matmul %22, %21, %cst_25 {dimension_numbers = #tpu.dot_dimension_numbers<[1], [0], [0], [1], [0, 0, 1, 1], [], []>} : vector<16x2xf32>, vector<2x1xf32>, vector<16x1xf32> -> vector<16x1xf32>
    %c0_26 = arith.constant 0 : index
    %c0_27 = arith.constant 0 : index
    %24 = vector.load %arg7[%c0_26, %c0_27] : memref<16x1xf32, #tpu.memory_space<vmem>>, vector<16x1xf32>
    %25 = arith.addf %23, %24 : vector<16x1xf32>
    %26 = vector.extract_strided_slice %4 {offsets = [0, 0], sizes = [8, 256], strides = [1, 1]} : vector<16x256xf32> to vector<8x256xf32>
    %27 = vector.extract_strided_slice %4 {offsets = [8, 0], sizes = [8, 256], strides = [1, 1]} : vector<16x256xf32> to vector<8x256xf32>
    %28 = arith.addf %26, %27 : vector<8x256xf32>
    %29 = vector.extract_strided_slice %28 {offsets = [0, 0], sizes = [4, 256], strides = [1, 1]} : vector<8x256xf32> to vector<4x256xf32>
    %30 = vector.extract_strided_slice %28 {offsets = [4, 0], sizes = [4, 256], strides = [1, 1]} : vector<8x256xf32> to vector<4x256xf32>
    %31 = arith.addf %29, %30 : vector<4x256xf32>
    %32 = vector.extract_strided_slice %31 {offsets = [0, 0], sizes = [2, 256], strides = [1, 1]} : vector<4x256xf32> to vector<2x256xf32>
    %33 = vector.extract_strided_slice %31 {offsets = [2, 0], sizes = [2, 256], strides = [1, 1]} : vector<4x256xf32> to vector<2x256xf32>
    %34 = arith.addf %32, %33 : vector<2x256xf32>
    %35 = vector.extract_strided_slice %34 {offsets = [0, 0], sizes = [1, 256], strides = [1, 1]} : vector<2x256xf32> to vector<1x256xf32>
    %36 = vector.extract_strided_slice %34 {offsets = [1, 0], sizes = [1, 256], strides = [1, 1]} : vector<2x256xf32> to vector<1x256xf32>
    %37 = arith.addf %35, %36 : vector<1x256xf32>
    %cst_28 = arith.constant 6.250000e-02 : f32
    %38 = vector.broadcast %cst_28 : f32 to vector<1x256xf32>
    %39 = arith.mulf %37, %38 : vector<1x256xf32>
    %40 = vector.extract_strided_slice %4 {offsets = [0, 0], sizes = [8, 256], strides = [1, 1]} : vector<16x256xf32> to vector<8x256xf32>
    %41 = vector.extract_strided_slice %4 {offsets = [8, 0], sizes = [8, 256], strides = [1, 1]} : vector<16x256xf32> to vector<8x256xf32>
    %42 = arith.maximumf %40, %41 : vector<8x256xf32>
    %43 = vector.extract_strided_slice %42 {offsets = [0, 0], sizes = [4, 256], strides = [1, 1]} : vector<8x256xf32> to vector<4x256xf32>
    %44 = vector.extract_strided_slice %42 {offsets = [4, 0], sizes = [4, 256], strides = [1, 1]} : vector<8x256xf32> to vector<4x256xf32>
    %45 = arith.maximumf %43, %44 : vector<4x256xf32>
    %46 = vector.extract_strided_slice %45 {offsets = [0, 0], sizes = [2, 256], strides = [1, 1]} : vector<4x256xf32> to vector<2x256xf32>
    %47 = vector.extract_strided_slice %45 {offsets = [2, 0], sizes = [2, 256], strides = [1, 1]} : vector<4x256xf32> to vector<2x256xf32>
    %48 = arith.maximumf %46, %47 : vector<2x256xf32>
    %49 = vector.extract_strided_slice %48 {offsets = [0, 0], sizes = [1, 256], strides = [1, 1]} : vector<2x256xf32> to vector<1x256xf32>
    %50 = vector.extract_strided_slice %48 {offsets = [1, 0], sizes = [1, 256], strides = [1, 1]} : vector<2x256xf32> to vector<1x256xf32>
    %51 = arith.maximumf %49, %50 : vector<1x256xf32>
    %52 = vector.extract_strided_slice %39 {offsets = [0, 48], sizes = [1, 16], strides = [1, 1]} : vector<1x256xf32> to vector<1x16xf32>
    %c0_29 = arith.constant 0 : index
    %c11 = arith.constant 11 : index
    %53 = vector.load %arg17[%c0_29, %c11] : memref<2x512xf32, #tpu.memory_space<vmem>>, vector<1x16xf32>
    tpu.vector_store %arg17[%c0_29, %c11], %52 {strides = array<i32>} : memref<2x512xf32, #tpu.memory_space<vmem>>, vector<1x16xf32>,
    %54 = vector.extract_strided_slice %51 {offsets = [0, 48], sizes = [1, 16], strides = [1, 1]} : vector<1x256xf32> to vector<1x16xf32>
    %c1 = arith.constant 1 : index
    %c11_30 = arith.constant 11 : index
    %55 = vector.load %arg17[%c1, %c11_30] : memref<2x512xf32, #tpu.memory_space<vmem>>, vector<1x16xf32>
    tpu.vector_store %arg17[%c1, %c11_30], %54 {strides = array<i32>} : memref<2x512xf32, #tpu.memory_space<vmem>>, vector<1x16xf32>,
    %56 = vector.extract_strided_slice %39 {offsets = [0, 32], sizes = [1, 16], strides = [1, 1]} : vector<1x256xf32> to vector<1x16xf32>
    %c0_31 = arith.constant 0 : index
    %c33 = arith.constant 33 : index
    %57 = vector.load %arg17[%c0_31, %c33] : memref<2x512xf32, #tpu.memory_space<vmem>>, vector<1x16xf32>
    tpu.vector_store %arg17[%c0_31, %c33], %56 {strides = array<i32>} : memref<2x512xf32, #tpu.memory_space<vmem>>, vector<1x16xf32>,
    %58 = vector.extract_strided_slice %51 {offsets = [0, 32], sizes = [1, 16], strides = [1, 1]} : vector<1x256xf32> to vector<1x16xf32>
    %c1_32 = arith.constant 1 : index
    %c33_33 = arith.constant 33 : index
    %59 = vector.load %arg17[%c1_32, %c33_33] : memref<2x512xf32, #tpu.memory_space<vmem>>, vector<1x16xf32>
    tpu.vector_store %arg17[%c1_32, %c33_33], %58 {strides = array<i32>} : memref<2x512xf32, #tpu.memory_space<vmem>>, vector<1x16xf32>,
    %60 = vector.extract_strided_slice %39 {offsets = [0, 16], sizes = [1, 16], strides = [1, 1]} : vector<1x256xf32> to vector<1x16xf32>
    %c0_34 = arith.constant 0 : index
    %c55 = arith.constant 55 : index
    %61 = vector.load %arg17[%c0_34, %c55] : memref<2x512xf32, #tpu.memory_space<vmem>>, vector<1x16xf32>
    tpu.vector_store %arg17[%c0_34, %c55], %60 {strides = array<i32>} : memref<2x512xf32, #tpu.memory_space<vmem>>, vector<1x16xf32>,
    %62 = vector.extract_strided_slice %51 {offsets = [0, 16], sizes = [1, 16], strides = [1, 1]} : vector<1x256xf32> to vector<1x16xf32>
    %c1_35 = arith.constant 1 : index
    %c55_36 = arith.constant 55 : index
    %63 = vector.load %arg17[%c1_35, %c55_36] : memref<2x512xf32, #tpu.memory_space<vmem>>, vector<1x16xf32>
    tpu.vector_store %arg17[%c1_35, %c55_36], %62 {strides = array<i32>} : memref<2x512xf32, #tpu.memory_space<vmem>>, vector<1x16xf32>,
    %64 = vector.extract_strided_slice %39 {offsets = [0, 0], sizes = [1, 16], strides = [1, 1]} : vector<1x256xf32> to vector<1x16xf32>
    %c0_37 = arith.constant 0 : index
    %c77 = arith.constant 77 : index
    %65 = vector.load %arg17[%c0_37, %c77] : memref<2x512xf32, #tpu.memory_space<vmem>>, vector<1x16xf32>
    tpu.vector_store %arg17[%c0_37, %c77], %64 {strides = array<i32>} : memref<2x512xf32, #tpu.memory_space<vmem>>, vector<1x16xf32>,
    %66 = vector.extract_strided_slice %51 {offsets = [0, 0], sizes = [1, 16], strides = [1, 1]} : vector<1x256xf32> to vector<1x16xf32>
    %c1_38 = arith.constant 1 : index
    %c77_39 = arith.constant 77 : index
    %67 = vector.load %arg17[%c1_38, %c77_39] : memref<2x512xf32, #tpu.memory_space<vmem>>, vector<1x16xf32>
    tpu.vector_store %arg17[%c1_38, %c77_39], %66 {strides = array<i32>} : memref<2x512xf32, #tpu.memory_space<vmem>>, vector<1x16xf32>,
    %68 = vector.extract_strided_slice %39 {offsets = [0, 16], sizes = [1, 16], strides = [1, 1]} : vector<1x256xf32> to vector<1x16xf32>
    %c0_40 = arith.constant 0 : index
    %c99 = arith.constant 99 : index
    %69 = vector.load %arg17[%c0_40, %c99] : memref<2x512xf32, #tpu.memory_space<vmem>>, vector<1x16xf32>
    tpu.vector_store %arg17[%c0_40, %c99], %68 {strides = array<i32>} : memref<2x512xf32, #tpu.memory_space<vmem>>, vector<1x16xf32>,
    %70 = vector.extract_strided_slice %51 {offsets = [0, 16], sizes = [1, 16], strides = [1, 1]} : vector<1x256xf32> to vector<1x16xf32>
    %c1_41 = arith.constant 1 : index
    %c99_42 = arith.constant 99 : index
    %71 = vector.load %arg17[%c1_41, %c99_42] : memref<2x512xf32, #tpu.memory_space<vmem>>, vector<1x16xf32>
    tpu.vector_store %arg17[%c1_41, %c99_42], %70 {strides = array<i32>} : memref<2x512xf32, #tpu.memory_space<vmem>>, vector<1x16xf32>,
    %72 = vector.extract_strided_slice %39 {offsets = [0, 32], sizes = [1, 16], strides = [1, 1]} : vector<1x256xf32> to vector<1x16xf32>
    %c0_43 = arith.constant 0 : index
    %c121 = arith.constant 121 : index
    %73 = vector.load %arg17[%c0_43, %c121] : memref<2x512xf32, #tpu.memory_space<vmem>>, vector<1x16xf32>
    tpu.vector_store %arg17[%c0_43, %c121], %72 {strides = array<i32>} : memref<2x512xf32, #tpu.memory_space<vmem>>, vector<1x16xf32>,
    %74 = vector.extract_strided_slice %51 {offsets = [0, 32], sizes = [1, 16], strides = [1, 1]} : vector<1x256xf32> to vector<1x16xf32>
    %c1_44 = arith.constant 1 : index
    %c121_45 = arith.constant 121 : index
    %75 = vector.load %arg17[%c1_44, %c121_45] : memref<2x512xf32, #tpu.memory_space<vmem>>, vector<1x16xf32>
    tpu.vector_store %arg17[%c1_44, %c121_45], %74 {strides = array<i32>} : memref<2x512xf32, #tpu.memory_space<vmem>>, vector<1x16xf32>,
    %76 = vector.extract_strided_slice %39 {offsets = [0, 48], sizes = [1, 16], strides = [1, 1]} : vector<1x256xf32> to vector<1x16xf32>
    %c0_46 = arith.constant 0 : index
    %c143 = arith.constant 143 : index
    %77 = vector.load %arg17[%c0_46, %c143] : memref<2x512xf32, #tpu.memory_space<vmem>>, vector<1x16xf32>
    tpu.vector_store %arg17[%c0_46, %c143], %76 {strides = array<i32>} : memref<2x512xf32, #tpu.memory_space<vmem>>, vector<1x16xf32>,
    %78 = vector.extract_strided_slice %51 {offsets = [0, 48], sizes = [1, 16], strides = [1, 1]} : vector<1x256xf32> to vector<1x16xf32>
    %c1_47 = arith.constant 1 : index
    %c143_48 = arith.constant 143 : index
    %79 = vector.load %arg17[%c1_47, %c143_48] : memref<2x512xf32, #tpu.memory_space<vmem>>, vector<1x16xf32>
    tpu.vector_store %arg17[%c1_47, %c143_48], %78 {strides = array<i32>} : memref<2x512xf32, #tpu.memory_space<vmem>>, vector<1x16xf32>,
    %80 = vector.extract_strided_slice %39 {offsets = [0, 64], sizes = [1, 16], strides = [1, 1]} : vector<1x256xf32> to vector<1x16xf32>
    %c0_49 = arith.constant 0 : index
    %c165 = arith.constant 165 : index
    %81 = vector.load %arg17[%c0_49, %c165] : memref<2x512xf32, #tpu.memory_space<vmem>>, vector<1x16xf32>
    tpu.vector_store %arg17[%c0_49, %c165], %80 {strides = array<i32>} : memref<2x512xf32, #tpu.memory_space<vmem>>, vector<1x16xf32>,
    %82 = vector.extract_strided_slice %51 {offsets = [0, 64], sizes = [1, 16], strides = [1, 1]} : vector<1x256xf32> to vector<1x16xf32>
    %c1_50 = arith.constant 1 : index
    %c165_51 = arith.constant 165 : index
    %83 = vector.load %arg17[%c1_50, %c165_51] : memref<2x512xf32, #tpu.memory_space<vmem>>, vector<1x16xf32>
    tpu.vector_store %arg17[%c1_50, %c165_51], %82 {strides = array<i32>} : memref<2x512xf32, #tpu.memory_space<vmem>>, vector<1x16xf32>,
    %84 = vector.extract_strided_slice %39 {offsets = [0, 80], sizes = [1, 16], strides = [1, 1]} : vector<1x256xf32> to vector<1x16xf32>
    %c0_52 = arith.constant 0 : index
    %c187 = arith.constant 187 : index
    %85 = vector.load %arg17[%c0_52, %c187] : memref<2x512xf32, #tpu.memory_space<vmem>>, vector<1x16xf32>
    tpu.vector_store %arg17[%c0_52, %c187], %84 {strides = array<i32>} : memref<2x512xf32, #tpu.memory_space<vmem>>, vector<1x16xf32>,
    %86 = vector.extract_strided_slice %51 {offsets = [0, 80], sizes = [1, 16], strides = [1, 1]} : vector<1x256xf32> to vector<1x16xf32>
    %c1_53 = arith.constant 1 : index
    %c187_54 = arith.constant 187 : index
    %87 = vector.load %arg17[%c1_53, %c187_54] : memref<2x512xf32, #tpu.memory_space<vmem>>, vector<1x16xf32>
    tpu.vector_store %arg17[%c1_53, %c187_54], %86 {strides = array<i32>} : memref<2x512xf32, #tpu.memory_space<vmem>>, vector<1x16xf32>,
    %88 = vector.extract_strided_slice %39 {offsets = [0, 96], sizes = [1, 16], strides = [1, 1]} : vector<1x256xf32> to vector<1x16xf32>
    %c0_55 = arith.constant 0 : index
    %c209 = arith.constant 209 : index
    %89 = vector.load %arg17[%c0_55, %c209] : memref<2x512xf32, #tpu.memory_space<vmem>>, vector<1x16xf32>
    tpu.vector_store %arg17[%c0_55, %c209], %88 {strides = array<i32>} : memref<2x512xf32, #tpu.memory_space<vmem>>, vector<1x16xf32>,
    %90 = vector.extract_strided_slice %51 {offsets = [0, 96], sizes = [1, 16], strides = [1, 1]} : vector<1x256xf32> to vector<1x16xf32>
    %c1_56 = arith.constant 1 : index
    %c209_57 = arith.constant 209 : index
    %91 = vector.load %arg17[%c1_56, %c209_57] : memref<2x512xf32, #tpu.memory_space<vmem>>, vector<1x16xf32>
    tpu.vector_store %arg17[%c1_56, %c209_57], %90 {strides = array<i32>} : memref<2x512xf32, #tpu.memory_space<vmem>>, vector<1x16xf32>,
    %92 = vector.extract_strided_slice %39 {offsets = [0, 112], sizes = [1, 16], strides = [1, 1]} : vector<1x256xf32> to vector<1x16xf32>
    %c0_58 = arith.constant 0 : index
    %c231 = arith.constant 231 : index
    %93 = vector.load %arg17[%c0_58, %c231] : memref<2x512xf32, #tpu.memory_space<vmem>>, vector<1x16xf32>
    tpu.vector_store %arg17[%c0_58, %c231], %92 {strides = array<i32>} : memref<2x512xf32, #tpu.memory_space<vmem>>, vector<1x16xf32>,
    %94 = vector.extract_strided_slice %51 {offsets = [0, 112], sizes = [1, 16], strides = [1, 1]} : vector<1x256xf32> to vector<1x16xf32>
    %c1_59 = arith.constant 1 : index
    %c231_60 = arith.constant 231 : index
    %95 = vector.load %arg17[%c1_59, %c231_60] : memref<2x512xf32, #tpu.memory_space<vmem>>, vector<1x16xf32>
    tpu.vector_store %arg17[%c1_59, %c231_60], %94 {strides = array<i32>} : memref<2x512xf32, #tpu.memory_space<vmem>>, vector<1x16xf32>,
    %96 = vector.extract_strided_slice %39 {offsets = [0, 128], sizes = [1, 16], strides = [1, 1]} : vector<1x256xf32> to vector<1x16xf32>
    %c0_61 = arith.constant 0 : index
    %c253 = arith.constant 253 : index
    %97 = vector.load %arg17[%c0_61, %c253] : memref<2x512xf32, #tpu.memory_space<vmem>>, vector<1x16xf32>
    tpu.vector_store %arg17[%c0_61, %c253], %96 {strides = array<i32>} : memref<2x512xf32, #tpu.memory_space<vmem>>, vector<1x16xf32>,
    %98 = vector.extract_strided_slice %51 {offsets = [0, 128], sizes = [1, 16], strides = [1, 1]} : vector<1x256xf32> to vector<1x16xf32>
    %c1_62 = arith.constant 1 : index
    %c253_63 = arith.constant 253 : index
    %99 = vector.load %arg17[%c1_62, %c253_63] : memref<2x512xf32, #tpu.memory_space<vmem>>, vector<1x16xf32>
    tpu.vector_store %arg17[%c1_62, %c253_63], %98 {strides = array<i32>} : memref<2x512xf32, #tpu.memory_space<vmem>>, vector<1x16xf32>,
    %100 = vector.extract_strided_slice %39 {offsets = [0, 144], sizes = [1, 16], strides = [1, 1]} : vector<1x256xf32> to vector<1x16xf32>
    %c0_64 = arith.constant 0 : index
    %c275 = arith.constant 275 : index
    %101 = vector.load %arg17[%c0_64, %c275] : memref<2x512xf32, #tpu.memory_space<vmem>>, vector<1x16xf32>
    tpu.vector_store %arg17[%c0_64, %c275], %100 {strides = array<i32>} : memref<2x512xf32, #tpu.memory_space<vmem>>, vector<1x16xf32>,
    %102 = vector.extract_strided_slice %51 {offsets = [0, 144], sizes = [1, 16], strides = [1, 1]} : vector<1x256xf32> to vector<1x16xf32>
    %c1_65 = arith.constant 1 : index
    %c275_66 = arith.constant 275 : index
    %103 = vector.load %arg17[%c1_65, %c275_66] : memref<2x512xf32, #tpu.memory_space<vmem>>, vector<1x16xf32>
    tpu.vector_store %arg17[%c1_65, %c275_66], %102 {strides = array<i32>} : memref<2x512xf32, #tpu.memory_space<vmem>>, vector<1x16xf32>,
    %104 = vector.extract_strided_slice %39 {offsets = [0, 160], sizes = [1, 16], strides = [1, 1]} : vector<1x256xf32> to vector<1x16xf32>
    %c0_67 = arith.constant 0 : index
    %c297 = arith.constant 297 : index
    %105 = vector.load %arg17[%c0_67, %c297] : memref<2x512xf32, #tpu.memory_space<vmem>>, vector<1x16xf32>
    tpu.vector_store %arg17[%c0_67, %c297], %104 {strides = array<i32>} : memref<2x512xf32, #tpu.memory_space<vmem>>, vector<1x16xf32>,
    %106 = vector.extract_strided_slice %51 {offsets = [0, 160], sizes = [1, 16], strides = [1, 1]} : vector<1x256xf32> to vector<1x16xf32>
    %c1_68 = arith.constant 1 : index
    %c297_69 = arith.constant 297 : index
    %107 = vector.load %arg17[%c1_68, %c297_69] : memref<2x512xf32, #tpu.memory_space<vmem>>, vector<1x16xf32>
    tpu.vector_store %arg17[%c1_68, %c297_69], %106 {strides = array<i32>} : memref<2x512xf32, #tpu.memory_space<vmem>>, vector<1x16xf32>,
    %108 = vector.extract_strided_slice %39 {offsets = [0, 176], sizes = [1, 16], strides = [1, 1]} : vector<1x256xf32> to vector<1x16xf32>
    %c0_70 = arith.constant 0 : index
    %c319 = arith.constant 319 : index
    %109 = vector.load %arg17[%c0_70, %c319] : memref<2x512xf32, #tpu.memory_space<vmem>>, vector<1x16xf32>
    tpu.vector_store %arg17[%c0_70, %c319], %108 {strides = array<i32>} : memref<2x512xf32, #tpu.memory_space<vmem>>, vector<1x16xf32>,
    %110 = vector.extract_strided_slice %51 {offsets = [0, 176], sizes = [1, 16], strides = [1, 1]} : vector<1x256xf32> to vector<1x16xf32>
    %c1_71 = arith.constant 1 : index
    %c319_72 = arith.constant 319 : index
    %111 = vector.load %arg17[%c1_71, %c319_72] : memref<2x512xf32, #tpu.memory_space<vmem>>, vector<1x16xf32>
    tpu.vector_store %arg17[%c1_71, %c319_72], %110 {strides = array<i32>} : memref<2x512xf32, #tpu.memory_space<vmem>>, vector<1x16xf32>,
    %112 = vector.extract_strided_slice %39 {offsets = [0, 192], sizes = [1, 16], strides = [1, 1]} : vector<1x256xf32> to vector<1x16xf32>
    %c0_73 = arith.constant 0 : index
    %c341 = arith.constant 341 : index
    %113 = vector.load %arg17[%c0_73, %c341] : memref<2x512xf32, #tpu.memory_space<vmem>>, vector<1x16xf32>
    tpu.vector_store %arg17[%c0_73, %c341], %112 {strides = array<i32>} : memref<2x512xf32, #tpu.memory_space<vmem>>, vector<1x16xf32>,
    %114 = vector.extract_strided_slice %51 {offsets = [0, 192], sizes = [1, 16], strides = [1, 1]} : vector<1x256xf32> to vector<1x16xf32>
    %c1_74 = arith.constant 1 : index
    %c341_75 = arith.constant 341 : index
    %115 = vector.load %arg17[%c1_74, %c341_75] : memref<2x512xf32, #tpu.memory_space<vmem>>, vector<1x16xf32>
    tpu.vector_store %arg17[%c1_74, %c341_75], %114 {strides = array<i32>} : memref<2x512xf32, #tpu.memory_space<vmem>>, vector<1x16xf32>,
    %116 = vector.extract_strided_slice %39 {offsets = [0, 208], sizes = [1, 16], strides = [1, 1]} : vector<1x256xf32> to vector<1x16xf32>
    %c0_76 = arith.constant 0 : index
    %c363 = arith.constant 363 : index
    %117 = vector.load %arg17[%c0_76, %c363] : memref<2x512xf32, #tpu.memory_space<vmem>>, vector<1x16xf32>
    tpu.vector_store %arg17[%c0_76, %c363], %116 {strides = array<i32>} : memref<2x512xf32, #tpu.memory_space<vmem>>, vector<1x16xf32>,
    %118 = vector.extract_strided_slice %51 {offsets = [0, 208], sizes = [1, 16], strides = [1, 1]} : vector<1x256xf32> to vector<1x16xf32>
    %c1_77 = arith.constant 1 : index
    %c363_78 = arith.constant 363 : index
    %119 = vector.load %arg17[%c1_77, %c363_78] : memref<2x512xf32, #tpu.memory_space<vmem>>, vector<1x16xf32>
    tpu.vector_store %arg17[%c1_77, %c363_78], %118 {strides = array<i32>} : memref<2x512xf32, #tpu.memory_space<vmem>>, vector<1x16xf32>,
    %120 = vector.extract_strided_slice %39 {offsets = [0, 224], sizes = [1, 16], strides = [1, 1]} : vector<1x256xf32> to vector<1x16xf32>
    %c0_79 = arith.constant 0 : index
    %c385 = arith.constant 385 : index
    %121 = vector.load %arg17[%c0_79, %c385] : memref<2x512xf32, #tpu.memory_space<vmem>>, vector<1x16xf32>
    tpu.vector_store %arg17[%c0_79, %c385], %120 {strides = array<i32>} : memref<2x512xf32, #tpu.memory_space<vmem>>, vector<1x16xf32>,
    %122 = vector.extract_strided_slice %51 {offsets = [0, 224], sizes = [1, 16], strides = [1, 1]} : vector<1x256xf32> to vector<1x16xf32>
    %c1_80 = arith.constant 1 : index
    %c385_81 = arith.constant 385 : index
    %123 = vector.load %arg17[%c1_80, %c385_81] : memref<2x512xf32, #tpu.memory_space<vmem>>, vector<1x16xf32>
    tpu.vector_store %arg17[%c1_80, %c385_81], %122 {strides = array<i32>} : memref<2x512xf32, #tpu.memory_space<vmem>>, vector<1x16xf32>,
    %124 = vector.extract_strided_slice %39 {offsets = [0, 240], sizes = [1, 16], strides = [1, 1]} : vector<1x256xf32> to vector<1x16xf32>
    %c0_82 = arith.constant 0 : index
    %c407 = arith.constant 407 : index
    %125 = vector.load %arg17[%c0_82, %c407] : memref<2x512xf32, #tpu.memory_space<vmem>>, vector<1x16xf32>
    tpu.vector_store %arg17[%c0_82, %c407], %124 {strides = array<i32>} : memref<2x512xf32, #tpu.memory_space<vmem>>, vector<1x16xf32>,
    %126 = vector.extract_strided_slice %51 {offsets = [0, 240], sizes = [1, 16], strides = [1, 1]} : vector<1x256xf32> to vector<1x16xf32>
    %c1_83 = arith.constant 1 : index
    %c407_84 = arith.constant 407 : index
    %127 = vector.load %arg17[%c1_83, %c407_84] : memref<2x512xf32, #tpu.memory_space<vmem>>, vector<1x16xf32>
    tpu.vector_store %arg17[%c1_83, %c407_84], %126 {strides = array<i32>} : memref<2x512xf32, #tpu.memory_space<vmem>>, vector<1x16xf32>,
    %128 = vector.extract_strided_slice %39 {offsets = [0, 224], sizes = [1, 16], strides = [1, 1]} : vector<1x256xf32> to vector<1x16xf32>
    %c0_85 = arith.constant 0 : index
    %c429 = arith.constant 429 : index
    %129 = vector.load %arg17[%c0_85, %c429] : memref<2x512xf32, #tpu.memory_space<vmem>>, vector<1x16xf32>
    tpu.vector_store %arg17[%c0_85, %c429], %128 {strides = array<i32>} : memref<2x512xf32, #tpu.memory_space<vmem>>, vector<1x16xf32>,
    %130 = vector.extract_strided_slice %51 {offsets = [0, 224], sizes = [1, 16], strides = [1, 1]} : vector<1x256xf32> to vector<1x16xf32>
    %c1_86 = arith.constant 1 : index
    %c429_87 = arith.constant 429 : index
    %131 = vector.load %arg17[%c1_86, %c429_87] : memref<2x512xf32, #tpu.memory_space<vmem>>, vector<1x16xf32>
    tpu.vector_store %arg17[%c1_86, %c429_87], %130 {strides = array<i32>} : memref<2x512xf32, #tpu.memory_space<vmem>>, vector<1x16xf32>,
    %132 = vector.extract_strided_slice %39 {offsets = [0, 208], sizes = [1, 16], strides = [1, 1]} : vector<1x256xf32> to vector<1x16xf32>
    %c0_88 = arith.constant 0 : index
    %c451 = arith.constant 451 : index
    %133 = vector.load %arg17[%c0_88, %c451] : memref<2x512xf32, #tpu.memory_space<vmem>>, vector<1x16xf32>
    tpu.vector_store %arg17[%c0_88, %c451], %132 {strides = array<i32>} : memref<2x512xf32, #tpu.memory_space<vmem>>, vector<1x16xf32>,
    %134 = vector.extract_strided_slice %51 {offsets = [0, 208], sizes = [1, 16], strides = [1, 1]} : vector<1x256xf32> to vector<1x16xf32>
    %c1_89 = arith.constant 1 : index
    %c451_90 = arith.constant 451 : index
    %135 = vector.load %arg17[%c1_89, %c451_90] : memref<2x512xf32, #tpu.memory_space<vmem>>, vector<1x16xf32>
    tpu.vector_store %arg17[%c1_89, %c451_90], %134 {strides = array<i32>} : memref<2x512xf32, #tpu.memory_space<vmem>>, vector<1x16xf32>,
    %136 = vector.extract_strided_slice %39 {offsets = [0, 192], sizes = [1, 16], strides = [1, 1]} : vector<1x256xf32> to vector<1x16xf32>
    %c0_91 = arith.constant 0 : index
    %c473 = arith.constant 473 : index
    %137 = vector.load %arg17[%c0_91, %c473] : memref<2x512xf32, #tpu.memory_space<vmem>>, vector<1x16xf32>
    tpu.vector_store %arg17[%c0_91, %c473], %136 {strides = array<i32>} : memref<2x512xf32, #tpu.memory_space<vmem>>, vector<1x16xf32>,
    %138 = vector.extract_strided_slice %51 {offsets = [0, 192], sizes = [1, 16], strides = [1, 1]} : vector<1x256xf32> to vector<1x16xf32>
    %c1_92 = arith.constant 1 : index
    %c473_93 = arith.constant 473 : index
    %139 = vector.load %arg17[%c1_92, %c473_93] : memref<2x512xf32, #tpu.memory_space<vmem>>, vector<1x16xf32>
    tpu.vector_store %arg17[%c1_92, %c473_93], %138 {strides = array<i32>} : memref<2x512xf32, #tpu.memory_space<vmem>>, vector<1x16xf32>,
    %c0_94 = arith.constant 0 : index
    %c8 = arith.constant 8 : index
    %140 = vector.load %arg17[%c0_94, %c8] : memref<2x512xf32, #tpu.memory_space<vmem>>, vector<2x484xf32>
    %141 = vector.shape_cast %5 : vector<1x484xi32> to vector<1x484xi32>
    %142 = vector.broadcast %141 : vector<1x484xi32> to vector<2x484xi32>
    %c0_95 = arith.constant 0 : index
    %c10 = arith.constant 10 : index
    %143 = vector.load %arg17[%c0_95, %c10] : memref<2x512xf32, #tpu.memory_space<vmem>>, vector<2x484xf32>
    %c0_96 = arith.constant 0 : index
    %c6 = arith.constant 6 : index
    %144 = vector.load %arg17[%c0_96, %c6] : memref<2x512xf32, #tpu.memory_space<vmem>>, vector<2x484xf32>
    %c2_i32 = arith.constant 2 : i32
    %145 = vector.broadcast %c2_i32 : i32 to vector<2x484xi32>
    %146 = arith.cmpi eq, %142, %145 : vector<2x484xi32>
    %147 = arith.select %146, %143, %140 : vector<2x484xi1>, vector<2x484xf32>
    %c19_i32 = arith.constant 19 : i32
    %148 = vector.broadcast %c19_i32 : i32 to vector<2x484xi32>
    %149 = arith.cmpi eq, %142, %148 : vector<2x484xi32>
    %150 = arith.select %149, %144, %147 : vector<2x484xi1>, vector<2x484xf32>
    %c0_97 = arith.constant 0 : index
    %c12 = arith.constant 12 : index
    %151 = vector.load %arg17[%c0_97, %c12] : memref<2x512xf32, #tpu.memory_space<vmem>>, vector<2x484xf32>
    %c0_98 = arith.constant 0 : index
    %c4 = arith.constant 4 : index
    %152 = vector.load %arg17[%c0_98, %c4] : memref<2x512xf32, #tpu.memory_space<vmem>>, vector<2x484xf32>
    %c1_i32 = arith.constant 1 : i32
    %153 = vector.broadcast %c1_i32 : i32 to vector<2x484xi32>
    %154 = arith.cmpi eq, %142, %153 : vector<2x484xi32>
    %155 = arith.select %154, %151, %150 : vector<2x484xi1>, vector<2x484xf32>
    %c20_i32 = arith.constant 20 : i32
    %156 = vector.broadcast %c20_i32 : i32 to vector<2x484xi32>
    %157 = arith.cmpi eq, %142, %156 : vector<2x484xi32>
    %158 = arith.select %157, %152, %155 : vector<2x484xi1>, vector<2x484xf32>
    %c0_99 = arith.constant 0 : index
    %c14 = arith.constant 14 : index
    %159 = vector.load %arg17[%c0_99, %c14] : memref<2x512xf32, #tpu.memory_space<vmem>>, vector<2x484xf32>
    %c0_100 = arith.constant 0 : index
    %c2 = arith.constant 2 : index
    %160 = vector.load %arg17[%c0_100, %c2] : memref<2x512xf32, #tpu.memory_space<vmem>>, vector<2x484xf32>
    %c0_i32 = arith.constant 0 : i32
    %161 = vector.broadcast %c0_i32 : i32 to vector<2x484xi32>
    %162 = arith.cmpi eq, %142, %161 : vector<2x484xi32>
    %163 = arith.select %162, %159, %158 : vector<2x484xi1>, vector<2x484xf32>
    %c21_i32 = arith.constant 21 : i32
    %164 = vector.broadcast %c21_i32 : i32 to vector<2x484xi32>
    %165 = arith.cmpi eq, %142, %164 : vector<2x484xi32>
    %166 = arith.select %165, %160, %163 : vector<2x484xi1>, vector<2x484xf32>
    %c0_101 = arith.constant 0 : index
    %c8_102 = arith.constant 8 : index
    %167 = vector.load %arg17[%c0_101, %c8_102] : memref<2x512xf32, #tpu.memory_space<vmem>>, vector<2x484xf32>
    tpu.vector_store %arg17[%c0_101, %c8_102], %166 {strides = array<i32>} : memref<2x512xf32, #tpu.memory_space<vmem>>, vector<2x484xf32>,
    %cst_103 = arith.constant 0.000000e+00 : f32
    %168 = vector.broadcast %cst_103 : f32 to vector<2x352xf32>
    %cst_104 = arith.constant 0.000000e+00 : f32
    %169 = vector.broadcast %cst_104 : f32 to vector<2x352xf32>
    %cst_105 = arith.constant 0.000000e+00 : f32
    %170 = vector.broadcast %cst_105 : f32 to vector<2x352xf32>
    %cst_106 = arith.constant 0.000000e+00 : f32
    %171 = vector.broadcast %cst_106 : f32 to vector<2x352xf32>
    %c0_107 = arith.constant 0 : index
    %c0_108 = arith.constant 0 : index
    %172 = vector.load %arg8[%c0_107, %c0_108] : memref<2x49xf32, #tpu.memory_space<vmem>>, vector<2x1xf32>
    %c0_109 = arith.constant 0 : index
    %c8_110 = arith.constant 8 : index
    %173 = vector.load %arg17[%c0_109, %c8_110] : memref<2x512xf32, #tpu.memory_space<vmem>>, vector<2x352xf32>
    %174 = vector.broadcast %172 : vector<2x1xf32> to vector<2x352xf32>
    %175 = arith.mulf %174, %173 : vector<2x352xf32>
    %176 = arith.addf %168, %175 : vector<2x352xf32>
    %c0_111 = arith.constant 0 : index
    %c1_112 = arith.constant 1 : index
    %177 = vector.load %arg8[%c0_111, %c1_112] : memref<2x49xf32, #tpu.memory_space<vmem>>, vector<2x1xf32>
    %c0_113 = arith.constant 0 : index
    %c9 = arith.constant 9 : index
    %178 = vector.load %arg17[%c0_113, %c9] : memref<2x512xf32, #tpu.memory_space<vmem>>, vector<2x352xf32>
    %179 = vector.broadcast %177 : vector<2x1xf32> to vector<2x352xf32>
    %180 = arith.mulf %179, %178 : vector<2x352xf32>
    %181 = arith.addf %169, %180 : vector<2x352xf32>
    %c0_114 = arith.constant 0 : index
    %c2_115 = arith.constant 2 : index
    %182 = vector.load %arg8[%c0_114, %c2_115] : memref<2x49xf32, #tpu.memory_space<vmem>>, vector<2x1xf32>
    %c0_116 = arith.constant 0 : index
    %c10_117 = arith.constant 10 : index
    %183 = vector.load %arg17[%c0_116, %c10_117] : memref<2x512xf32, #tpu.memory_space<vmem>>, vector<2x352xf32>
    %184 = vector.broadcast %182 : vector<2x1xf32> to vector<2x352xf32>
    %185 = arith.mulf %184, %183 : vector<2x352xf32>
    %186 = arith.addf %170, %185 : vector<2x352xf32>
    %c0_118 = arith.constant 0 : index
    %c3 = arith.constant 3 : index
    %187 = vector.load %arg8[%c0_118, %c3] : memref<2x49xf32, #tpu.memory_space<vmem>>, vector<2x1xf32>
    %c0_119 = arith.constant 0 : index
    %c11_120 = arith.constant 11 : index
    %188 = vector.load %arg17[%c0_119, %c11_120] : memref<2x512xf32, #tpu.memory_space<vmem>>, vector<2x352xf32>
    %189 = vector.broadcast %187 : vector<2x1xf32> to vector<2x352xf32>
    %190 = arith.mulf %189, %188 : vector<2x352xf32>
    %191 = arith.addf %171, %190 : vector<2x352xf32>
    %c0_121 = arith.constant 0 : index
    %c4_122 = arith.constant 4 : index
    %192 = vector.load %arg8[%c0_121, %c4_122] : memref<2x49xf32, #tpu.memory_space<vmem>>, vector<2x1xf32>
    %c0_123 = arith.constant 0 : index
    %c12_124 = arith.constant 12 : index
    %193 = vector.load %arg17[%c0_123, %c12_124] : memref<2x512xf32, #tpu.memory_space<vmem>>, vector<2x352xf32>
    %194 = vector.broadcast %192 : vector<2x1xf32> to vector<2x352xf32>
    %195 = arith.mulf %194, %193 : vector<2x352xf32>
    %196 = arith.addf %176, %195 : vector<2x352xf32>
    %c0_125 = arith.constant 0 : index
    %c5 = arith.constant 5 : index
    %197 = vector.load %arg8[%c0_125, %c5] : memref<2x49xf32, #tpu.memory_space<vmem>>, vector<2x1xf32>
    %c0_126 = arith.constant 0 : index
    %c13 = arith.constant 13 : index
    %198 = vector.load %arg17[%c0_126, %c13] : memref<2x512xf32, #tpu.memory_space<vmem>>, vector<2x352xf32>
    %199 = vector.broadcast %197 : vector<2x1xf32> to vector<2x352xf32>
    %200 = arith.mulf %199, %198 : vector<2x352xf32>
    %201 = arith.addf %181, %200 : vector<2x352xf32>
    %c0_127 = arith.constant 0 : index
    %c6_128 = arith.constant 6 : index
    %202 = vector.load %arg8[%c0_127, %c6_128] : memref<2x49xf32, #tpu.memory_space<vmem>>, vector<2x1xf32>
    %c0_129 = arith.constant 0 : index
    %c14_130 = arith.constant 14 : index
    %203 = vector.load %arg17[%c0_129, %c14_130] : memref<2x512xf32, #tpu.memory_space<vmem>>, vector<2x352xf32>
    %204 = vector.broadcast %202 : vector<2x1xf32> to vector<2x352xf32>
    %205 = arith.mulf %204, %203 : vector<2x352xf32>
    %206 = arith.addf %186, %205 : vector<2x352xf32>
    %c0_131 = arith.constant 0 : index
    %c7 = arith.constant 7 : index
    %207 = vector.load %arg8[%c0_131, %c7] : memref<2x49xf32, #tpu.memory_space<vmem>>, vector<2x1xf32>
    %c0_132 = arith.constant 0 : index
    %c30 = arith.constant 30 : index
    %208 = vector.load %arg17[%c0_132, %c30] : memref<2x512xf32, #tpu.memory_space<vmem>>, vector<2x352xf32>
    %209 = vector.broadcast %207 : vector<2x1xf32> to vector<2x352xf32>
    %210 = arith.mulf %209, %208 : vector<2x352xf32>
    %211 = arith.addf %191, %210 : vector<2x352xf32>
    %c0_133 = arith.constant 0 : index
    %c8_134 = arith.constant 8 : index
    %212 = vector.load %arg8[%c0_133, %c8_134] : memref<2x49xf32, #tpu.memory_space<vmem>>, vector<2x1xf32>
    %c0_135 = arith.constant 0 : index
    %c31 = arith.constant 31 : index
    %213 = vector.load %arg17[%c0_135, %c31] : memref<2x512xf32, #tpu.memory_space<vmem>>, vector<2x352xf32>
    %214 = vector.broadcast %212 : vector<2x1xf32> to vector<2x352xf32>
    %215 = arith.mulf %214, %213 : vector<2x352xf32>
    %216 = arith.addf %196, %215 : vector<2x352xf32>
    %c0_136 = arith.constant 0 : index
    %c9_137 = arith.constant 9 : index
    %217 = vector.load %arg8[%c0_136, %c9_137] : memref<2x49xf32, #tpu.memory_space<vmem>>, vector<2x1xf32>
    %c0_138 = arith.constant 0 : index
    %c32 = arith.constant 32 : index
    %218 = vector.load %arg17[%c0_138, %c32] : memref<2x512xf32, #tpu.memory_space<vmem>>, vector<2x352xf32>
    %219 = vector.broadcast %217 : vector<2x1xf32> to vector<2x352xf32>
    %220 = arith.mulf %219, %218 : vector<2x352xf32>
    %221 = arith.addf %201, %220 : vector<2x352xf32>
    %c0_139 = arith.constant 0 : index
    %c10_140 = arith.constant 10 : index
    %222 = vector.load %arg8[%c0_139, %c10_140] : memref<2x49xf32, #tpu.memory_space<vmem>>, vector<2x1xf32>
    %c0_141 = arith.constant 0 : index
    %c33_142 = arith.constant 33 : index
    %223 = vector.load %arg17[%c0_141, %c33_142] : memref<2x512xf32, #tpu.memory_space<vmem>>, vector<2x352xf32>
    %224 = vector.broadcast %222 : vector<2x1xf32> to vector<2x352xf32>
    %225 = arith.mulf %224, %223 : vector<2x352xf32>
    %226 = arith.addf %206, %225 : vector<2x352xf32>
    %c0_143 = arith.constant 0 : index
    %c11_144 = arith.constant 11 : index
    %227 = vector.load %arg8[%c0_143, %c11_144] : memref<2x49xf32, #tpu.memory_space<vmem>>, vector<2x1xf32>
    %c0_145 = arith.constant 0 : index
    %c34 = arith.constant 34 : index
    %228 = vector.load %arg17[%c0_145, %c34] : memref<2x512xf32, #tpu.memory_space<vmem>>, vector<2x352xf32>
    %229 = vector.broadcast %227 : vector<2x1xf32> to vector<2x352xf32>
    %230 = arith.mulf %229, %228 : vector<2x352xf32>
    %231 = arith.addf %211, %230 : vector<2x352xf32>
    %c0_146 = arith.constant 0 : index
    %c12_147 = arith.constant 12 : index
    %232 = vector.load %arg8[%c0_146, %c12_147] : memref<2x49xf32, #tpu.memory_space<vmem>>, vector<2x1xf32>
    %c0_148 = arith.constant 0 : index
    %c35 = arith.constant 35 : index
    %233 = vector.load %arg17[%c0_148, %c35] : memref<2x512xf32, #tpu.memory_space<vmem>>, vector<2x352xf32>
    %234 = vector.broadcast %232 : vector<2x1xf32> to vector<2x352xf32>
    %235 = arith.mulf %234, %233 : vector<2x352xf32>
    %236 = arith.addf %216, %235 : vector<2x352xf32>
    %c0_149 = arith.constant 0 : index
    %c13_150 = arith.constant 13 : index
    %237 = vector.load %arg8[%c0_149, %c13_150] : memref<2x49xf32, #tpu.memory_space<vmem>>, vector<2x1xf32>
    %c0_151 = arith.constant 0 : index
    %c36 = arith.constant 36 : index
    %238 = vector.load %arg17[%c0_151, %c36] : memref<2x512xf32, #tpu.memory_space<vmem>>, vector<2x352xf32>
    %239 = vector.broadcast %237 : vector<2x1xf32> to vector<2x352xf32>
    %240 = arith.mulf %239, %238 : vector<2x352xf32>
    %241 = arith.addf %221, %240 : vector<2x352xf32>
    %c0_152 = arith.constant 0 : index
    %c14_153 = arith.constant 14 : index
    %242 = vector.load %arg8[%c0_152, %c14_153] : memref<2x49xf32, #tpu.memory_space<vmem>>, vector<2x1xf32>
    %c0_154 = arith.constant 0 : index
    %c52 = arith.constant 52 : index
    %243 = vector.load %arg17[%c0_154, %c52] : memref<2x512xf32, #tpu.memory_space<vmem>>, vector<2x352xf32>
    %244 = vector.broadcast %242 : vector<2x1xf32> to vector<2x352xf32>
    %245 = arith.mulf %244, %243 : vector<2x352xf32>
    %246 = arith.addf %226, %245 : vector<2x352xf32>
    %c0_155 = arith.constant 0 : index
    %c15 = arith.constant 15 : index
    %247 = vector.load %arg8[%c0_155, %c15] : memref<2x49xf32, #tpu.memory_space<vmem>>, vector<2x1xf32>
    %c0_156 = arith.constant 0 : index
    %c53 = arith.constant 53 : index
    %248 = vector.load %arg17[%c0_156, %c53] : memref<2x512xf32, #tpu.memory_space<vmem>>, vector<2x352xf32>
    %249 = vector.broadcast %247 : vector<2x1xf32> to vector<2x352xf32>
    %250 = arith.mulf %249, %248 : vector<2x352xf32>
    %251 = arith.addf %231, %250 : vector<2x352xf32>
    %c0_157 = arith.constant 0 : index
    %c16 = arith.constant 16 : index
    %252 = vector.load %arg8[%c0_157, %c16] : memref<2x49xf32, #tpu.memory_space<vmem>>, vector<2x1xf32>
    %c0_158 = arith.constant 0 : index
    %c54 = arith.constant 54 : index
    %253 = vector.load %arg17[%c0_158, %c54] : memref<2x512xf32, #tpu.memory_space<vmem>>, vector<2x352xf32>
    %254 = vector.broadcast %252 : vector<2x1xf32> to vector<2x352xf32>
    %255 = arith.mulf %254, %253 : vector<2x352xf32>
    %256 = arith.addf %236, %255 : vector<2x352xf32>
    %c0_159 = arith.constant 0 : index
    %c17 = arith.constant 17 : index
    %257 = vector.load %arg8[%c0_159, %c17] : memref<2x49xf32, #tpu.memory_space<vmem>>, vector<2x1xf32>
    %c0_160 = arith.constant 0 : index
    %c55_161 = arith.constant 55 : index
    %258 = vector.load %arg17[%c0_160, %c55_161] : memref<2x512xf32, #tpu.memory_space<vmem>>, vector<2x352xf32>
    %259 = vector.broadcast %257 : vector<2x1xf32> to vector<2x352xf32>
    %260 = arith.mulf %259, %258 : vector<2x352xf32>
    %261 = arith.addf %241, %260 : vector<2x352xf32>
    %c0_162 = arith.constant 0 : index
    %c18 = arith.constant 18 : index
    %262 = vector.load %arg8[%c0_162, %c18] : memref<2x49xf32, #tpu.memory_space<vmem>>, vector<2x1xf32>
    %c0_163 = arith.constant 0 : index
    %c56 = arith.constant 56 : index
    %263 = vector.load %arg17[%c0_163, %c56] : memref<2x512xf32, #tpu.memory_space<vmem>>, vector<2x352xf32>
    %264 = vector.broadcast %262 : vector<2x1xf32> to vector<2x352xf32>
    %265 = arith.mulf %264, %263 : vector<2x352xf32>
    %266 = arith.addf %246, %265 : vector<2x352xf32>
    %c0_164 = arith.constant 0 : index
    %c19 = arith.constant 19 : index
    %267 = vector.load %arg8[%c0_164, %c19] : memref<2x49xf32, #tpu.memory_space<vmem>>, vector<2x1xf32>
    %c0_165 = arith.constant 0 : index
    %c57 = arith.constant 57 : index
    %268 = vector.load %arg17[%c0_165, %c57] : memref<2x512xf32, #tpu.memory_space<vmem>>, vector<2x352xf32>
    %269 = vector.broadcast %267 : vector<2x1xf32> to vector<2x352xf32>
    %270 = arith.mulf %269, %268 : vector<2x352xf32>
    %271 = arith.addf %251, %270 : vector<2x352xf32>
    %c0_166 = arith.constant 0 : index
    %c20 = arith.constant 20 : index
    %272 = vector.load %arg8[%c0_166, %c20] : memref<2x49xf32, #tpu.memory_space<vmem>>, vector<2x1xf32>
    %c0_167 = arith.constant 0 : index
    %c58 = arith.constant 58 : index
    %273 = vector.load %arg17[%c0_167, %c58] : memref<2x512xf32, #tpu.memory_space<vmem>>, vector<2x352xf32>
    %274 = vector.broadcast %272 : vector<2x1xf32> to vector<2x352xf32>
    %275 = arith.mulf %274, %273 : vector<2x352xf32>
    %276 = arith.addf %256, %275 : vector<2x352xf32>
    %c0_168 = arith.constant 0 : index
    %c21 = arith.constant 21 : index
    %277 = vector.load %arg8[%c0_168, %c21] : memref<2x49xf32, #tpu.memory_space<vmem>>, vector<2x1xf32>
    %c0_169 = arith.constant 0 : index
    %c74 = arith.constant 74 : index
    %278 = vector.load %arg17[%c0_169, %c74] : memref<2x512xf32, #tpu.memory_space<vmem>>, vector<2x352xf32>
    %279 = vector.broadcast %277 : vector<2x1xf32> to vector<2x352xf32>
    %280 = arith.mulf %279, %278 : vector<2x352xf32>
    %281 = arith.addf %261, %280 : vector<2x352xf32>
    %c0_170 = arith.constant 0 : index
    %c22 = arith.constant 22 : index
    %282 = vector.load %arg8[%c0_170, %c22] : memref<2x49xf32, #tpu.memory_space<vmem>>, vector<2x1xf32>
    %c0_171 = arith.constant 0 : index
    %c75 = arith.constant 75 : index
    %283 = vector.load %arg17[%c0_171, %c75] : memref<2x512xf32, #tpu.memory_space<vmem>>, vector<2x352xf32>
    %284 = vector.broadcast %282 : vector<2x1xf32> to vector<2x352xf32>
    %285 = arith.mulf %284, %283 : vector<2x352xf32>
    %286 = arith.addf %266, %285 : vector<2x352xf32>
    %c0_172 = arith.constant 0 : index
    %c23 = arith.constant 23 : index
    %287 = vector.load %arg8[%c0_172, %c23] : memref<2x49xf32, #tpu.memory_space<vmem>>, vector<2x1xf32>
    %c0_173 = arith.constant 0 : index
    %c76 = arith.constant 76 : index
    %288 = vector.load %arg17[%c0_173, %c76] : memref<2x512xf32, #tpu.memory_space<vmem>>, vector<2x352xf32>
    %289 = vector.broadcast %287 : vector<2x1xf32> to vector<2x352xf32>
    %290 = arith.mulf %289, %288 : vector<2x352xf32>
    %291 = arith.addf %271, %290 : vector<2x352xf32>
    %c0_174 = arith.constant 0 : index
    %c24 = arith.constant 24 : index
    %292 = vector.load %arg8[%c0_174, %c24] : memref<2x49xf32, #tpu.memory_space<vmem>>, vector<2x1xf32>
    %c0_175 = arith.constant 0 : index
    %c77_176 = arith.constant 77 : index
    %293 = vector.load %arg17[%c0_175, %c77_176] : memref<2x512xf32, #tpu.memory_space<vmem>>, vector<2x352xf32>
    %294 = vector.broadcast %292 : vector<2x1xf32> to vector<2x352xf32>
    %295 = arith.mulf %294, %293 : vector<2x352xf32>
    %296 = arith.addf %276, %295 : vector<2x352xf32>
    %c0_177 = arith.constant 0 : index
    %c25 = arith.constant 25 : index
    %297 = vector.load %arg8[%c0_177, %c25] : memref<2x49xf32, #tpu.memory_space<vmem>>, vector<2x1xf32>
    %c0_178 = arith.constant 0 : index
    %c78 = arith.constant 78 : index
    %298 = vector.load %arg17[%c0_178, %c78] : memref<2x512xf32, #tpu.memory_space<vmem>>, vector<2x352xf32>
    %299 = vector.broadcast %297 : vector<2x1xf32> to vector<2x352xf32>
    %300 = arith.mulf %299, %298 : vector<2x352xf32>
    %301 = arith.addf %281, %300 : vector<2x352xf32>
    %c0_179 = arith.constant 0 : index
    %c26 = arith.constant 26 : index
    %302 = vector.load %arg8[%c0_179, %c26] : memref<2x49xf32, #tpu.memory_space<vmem>>, vector<2x1xf32>
    %c0_180 = arith.constant 0 : index
    %c79 = arith.constant 79 : index
    %303 = vector.load %arg17[%c0_180, %c79] : memref<2x512xf32, #tpu.memory_space<vmem>>, vector<2x352xf32>
    %304 = vector.broadcast %302 : vector<2x1xf32> to vector<2x352xf32>
    %305 = arith.mulf %304, %303 : vector<2x352xf32>
    %306 = arith.addf %286, %305 : vector<2x352xf32>
    %c0_181 = arith.constant 0 : index
    %c27 = arith.constant 27 : index
    %307 = vector.load %arg8[%c0_181, %c27] : memref<2x49xf32, #tpu.memory_space<vmem>>, vector<2x1xf32>
    %c0_182 = arith.constant 0 : index
    %c80 = arith.constant 80 : index
    %308 = vector.load %arg17[%c0_182, %c80] : memref<2x512xf32, #tpu.memory_space<vmem>>, vector<2x352xf32>
    %309 = vector.broadcast %307 : vector<2x1xf32> to vector<2x352xf32>
    %310 = arith.mulf %309, %308 : vector<2x352xf32>
    %311 = arith.addf %291, %310 : vector<2x352xf32>
    %c0_183 = arith.constant 0 : index
    %c28 = arith.constant 28 : index
    %312 = vector.load %arg8[%c0_183, %c28] : memref<2x49xf32, #tpu.memory_space<vmem>>, vector<2x1xf32>
    %c0_184 = arith.constant 0 : index
    %c96 = arith.constant 96 : index
    %313 = vector.load %arg17[%c0_184, %c96] : memref<2x512xf32, #tpu.memory_space<vmem>>, vector<2x352xf32>
    %314 = vector.broadcast %312 : vector<2x1xf32> to vector<2x352xf32>
    %315 = arith.mulf %314, %313 : vector<2x352xf32>
    %316 = arith.addf %296, %315 : vector<2x352xf32>
    %c0_185 = arith.constant 0 : index
    %c29 = arith.constant 29 : index
    %317 = vector.load %arg8[%c0_185, %c29] : memref<2x49xf32, #tpu.memory_space<vmem>>, vector<2x1xf32>
    %c0_186 = arith.constant 0 : index
    %c97 = arith.constant 97 : index
    %318 = vector.load %arg17[%c0_186, %c97] : memref<2x512xf32, #tpu.memory_space<vmem>>, vector<2x352xf32>
    %319 = vector.broadcast %317 : vector<2x1xf32> to vector<2x352xf32>
    %320 = arith.mulf %319, %318 : vector<2x352xf32>
    %321 = arith.addf %301, %320 : vector<2x352xf32>
    %c0_187 = arith.constant 0 : index
    %c30_188 = arith.constant 30 : index
    %322 = vector.load %arg8[%c0_187, %c30_188] : memref<2x49xf32, #tpu.memory_space<vmem>>, vector<2x1xf32>
    %c0_189 = arith.constant 0 : index
    %c98 = arith.constant 98 : index
    %323 = vector.load %arg17[%c0_189, %c98] : memref<2x512xf32, #tpu.memory_space<vmem>>, vector<2x352xf32>
    %324 = vector.broadcast %322 : vector<2x1xf32> to vector<2x352xf32>
    %325 = arith.mulf %324, %323 : vector<2x352xf32>
    %326 = arith.addf %306, %325 : vector<2x352xf32>
    %c0_190 = arith.constant 0 : index
    %c31_191 = arith.constant 31 : index
    %327 = vector.load %arg8[%c0_190, %c31_191] : memref<2x49xf32, #tpu.memory_space<vmem>>, vector<2x1xf32>
    %c0_192 = arith.constant 0 : index
    %c99_193 = arith.constant 99 : index
    %328 = vector.load %arg17[%c0_192, %c99_193] : memref<2x512xf32, #tpu.memory_space<vmem>>, vector<2x352xf32>
    %329 = vector.broadcast %327 : vector<2x1xf32> to vector<2x352xf32>
    %330 = arith.mulf %329, %328 : vector<2x352xf32>
    %331 = arith.addf %311, %330 : vector<2x352xf32>
    %c0_194 = arith.constant 0 : index
    %c32_195 = arith.constant 32 : index
    %332 = vector.load %arg8[%c0_194, %c32_195] : memref<2x49xf32, #tpu.memory_space<vmem>>, vector<2x1xf32>
    %c0_196 = arith.constant 0 : index
    %c100 = arith.constant 100 : index
    %333 = vector.load %arg17[%c0_196, %c100] : memref<2x512xf32, #tpu.memory_space<vmem>>, vector<2x352xf32>
    %334 = vector.broadcast %332 : vector<2x1xf32> to vector<2x352xf32>
    %335 = arith.mulf %334, %333 : vector<2x352xf32>
    %336 = arith.addf %316, %335 : vector<2x352xf32>
    %c0_197 = arith.constant 0 : index
    %c33_198 = arith.constant 33 : index
    %337 = vector.load %arg8[%c0_197, %c33_198] : memref<2x49xf32, #tpu.memory_space<vmem>>, vector<2x1xf32>
    %c0_199 = arith.constant 0 : index
    %c101 = arith.constant 101 : index
    %338 = vector.load %arg17[%c0_199, %c101] : memref<2x512xf32, #tpu.memory_space<vmem>>, vector<2x352xf32>
    %339 = vector.broadcast %337 : vector<2x1xf32> to vector<2x352xf32>
    %340 = arith.mulf %339, %338 : vector<2x352xf32>
    %341 = arith.addf %321, %340 : vector<2x352xf32>
    %c0_200 = arith.constant 0 : index
    %c34_201 = arith.constant 34 : index
    %342 = vector.load %arg8[%c0_200, %c34_201] : memref<2x49xf32, #tpu.memory_space<vmem>>, vector<2x1xf32>
    %c0_202 = arith.constant 0 : index
    %c102 = arith.constant 102 : index
    %343 = vector.load %arg17[%c0_202, %c102] : memref<2x512xf32, #tpu.memory_space<vmem>>, vector<2x352xf32>
    %344 = vector.broadcast %342 : vector<2x1xf32> to vector<2x352xf32>
    %345 = arith.mulf %344, %343 : vector<2x352xf32>
    %346 = arith.addf %326, %345 : vector<2x352xf32>
    %c0_203 = arith.constant 0 : index
    %c35_204 = arith.constant 35 : index
    %347 = vector.load %arg8[%c0_203, %c35_204] : memref<2x49xf32, #tpu.memory_space<vmem>>, vector<2x1xf32>
    %c0_205 = arith.constant 0 : index
    %c118 = arith.constant 118 : index
    %348 = vector.load %arg17[%c0_205, %c118] : memref<2x512xf32, #tpu.memory_space<vmem>>, vector<2x352xf32>
    %349 = vector.broadcast %347 : vector<2x1xf32> to vector<2x352xf32>
    %350 = arith.mulf %349, %348 : vector<2x352xf32>
    %351 = arith.addf %331, %350 : vector<2x352xf32>
    %c0_206 = arith.constant 0 : index
    %c36_207 = arith.constant 36 : index
    %352 = vector.load %arg8[%c0_206, %c36_207] : memref<2x49xf32, #tpu.memory_space<vmem>>, vector<2x1xf32>
    %c0_208 = arith.constant 0 : index
    %c119 = arith.constant 119 : index
    %353 = vector.load %arg17[%c0_208, %c119] : memref<2x512xf32, #tpu.memory_space<vmem>>, vector<2x352xf32>
    %354 = vector.broadcast %352 : vector<2x1xf32> to vector<2x352xf32>
    %355 = arith.mulf %354, %353 : vector<2x352xf32>
    %356 = arith.addf %336, %355 : vector<2x352xf32>
    %c0_209 = arith.constant 0 : index
    %c37 = arith.constant 37 : index
    %357 = vector.load %arg8[%c0_209, %c37] : memref<2x49xf32, #tpu.memory_space<vmem>>, vector<2x1xf32>
    %c0_210 = arith.constant 0 : index
    %c120 = arith.constant 120 : index
    %358 = vector.load %arg17[%c0_210, %c120] : memref<2x512xf32, #tpu.memory_space<vmem>>, vector<2x352xf32>
    %359 = vector.broadcast %357 : vector<2x1xf32> to vector<2x352xf32>
    %360 = arith.mulf %359, %358 : vector<2x352xf32>
    %361 = arith.addf %341, %360 : vector<2x352xf32>
    %c0_211 = arith.constant 0 : index
    %c38 = arith.constant 38 : index
    %362 = vector.load %arg8[%c0_211, %c38] : memref<2x49xf32, #tpu.memory_space<vmem>>, vector<2x1xf32>
    %c0_212 = arith.constant 0 : index
    %c121_213 = arith.constant 121 : index
    %363 = vector.load %arg17[%c0_212, %c121_213] : memref<2x512xf32, #tpu.memory_space<vmem>>, vector<2x352xf32>
    %364 = vector.broadcast %362 : vector<2x1xf32> to vector<2x352xf32>
    %365 = arith.mulf %364, %363 : vector<2x352xf32>
    %366 = arith.addf %346, %365 : vector<2x352xf32>
    %c0_214 = arith.constant 0 : index
    %c39 = arith.constant 39 : index
    %367 = vector.load %arg8[%c0_214, %c39] : memref<2x49xf32, #tpu.memory_space<vmem>>, vector<2x1xf32>
    %c0_215 = arith.constant 0 : index
    %c122 = arith.constant 122 : index
    %368 = vector.load %arg17[%c0_215, %c122] : memref<2x512xf32, #tpu.memory_space<vmem>>, vector<2x352xf32>
    %369 = vector.broadcast %367 : vector<2x1xf32> to vector<2x352xf32>
    %370 = arith.mulf %369, %368 : vector<2x352xf32>
    %371 = arith.addf %351, %370 : vector<2x352xf32>
    %c0_216 = arith.constant 0 : index
    %c40 = arith.constant 40 : index
    %372 = vector.load %arg8[%c0_216, %c40] : memref<2x49xf32, #tpu.memory_space<vmem>>, vector<2x1xf32>
    %c0_217 = arith.constant 0 : index
    %c123 = arith.constant 123 : index
    %373 = vector.load %arg17[%c0_217, %c123] : memref<2x512xf32, #tpu.memory_space<vmem>>, vector<2x352xf32>
    %374 = vector.broadcast %372 : vector<2x1xf32> to vector<2x352xf32>
    %375 = arith.mulf %374, %373 : vector<2x352xf32>
    %376 = arith.addf %356, %375 : vector<2x352xf32>
    %c0_218 = arith.constant 0 : index
    %c41 = arith.constant 41 : index
    %377 = vector.load %arg8[%c0_218, %c41] : memref<2x49xf32, #tpu.memory_space<vmem>>, vector<2x1xf32>
    %c0_219 = arith.constant 0 : index
    %c124 = arith.constant 124 : index
    %378 = vector.load %arg17[%c0_219, %c124] : memref<2x512xf32, #tpu.memory_space<vmem>>, vector<2x352xf32>
    %379 = vector.broadcast %377 : vector<2x1xf32> to vector<2x352xf32>
    %380 = arith.mulf %379, %378 : vector<2x352xf32>
    %381 = arith.addf %361, %380 : vector<2x352xf32>
    %c0_220 = arith.constant 0 : index
    %c42 = arith.constant 42 : index
    %382 = vector.load %arg8[%c0_220, %c42] : memref<2x49xf32, #tpu.memory_space<vmem>>, vector<2x1xf32>
    %c0_221 = arith.constant 0 : index
    %c140 = arith.constant 140 : index
    %383 = vector.load %arg17[%c0_221, %c140] : memref<2x512xf32, #tpu.memory_space<vmem>>, vector<2x352xf32>
    %384 = vector.broadcast %382 : vector<2x1xf32> to vector<2x352xf32>
    %385 = arith.mulf %384, %383 : vector<2x352xf32>
    %386 = arith.addf %366, %385 : vector<2x352xf32>
    %c0_222 = arith.constant 0 : index
    %c43 = arith.constant 43 : index
    %387 = vector.load %arg8[%c0_222, %c43] : memref<2x49xf32, #tpu.memory_space<vmem>>, vector<2x1xf32>
    %c0_223 = arith.constant 0 : index
    %c141 = arith.constant 141 : index
    %388 = vector.load %arg17[%c0_223, %c141] : memref<2x512xf32, #tpu.memory_space<vmem>>, vector<2x352xf32>
    %389 = vector.broadcast %387 : vector<2x1xf32> to vector<2x352xf32>
    %390 = arith.mulf %389, %388 : vector<2x352xf32>
    %391 = arith.addf %371, %390 : vector<2x352xf32>
    %c0_224 = arith.constant 0 : index
    %c44 = arith.constant 44 : index
    %392 = vector.load %arg8[%c0_224, %c44] : memref<2x49xf32, #tpu.memory_space<vmem>>, vector<2x1xf32>
    %c0_225 = arith.constant 0 : index
    %c142 = arith.constant 142 : index
    %393 = vector.load %arg17[%c0_225, %c142] : memref<2x512xf32, #tpu.memory_space<vmem>>, vector<2x352xf32>
    %394 = vector.broadcast %392 : vector<2x1xf32> to vector<2x352xf32>
    %395 = arith.mulf %394, %393 : vector<2x352xf32>
    %396 = arith.addf %376, %395 : vector<2x352xf32>
    %c0_226 = arith.constant 0 : index
    %c45 = arith.constant 45 : index
    %397 = vector.load %arg8[%c0_226, %c45] : memref<2x49xf32, #tpu.memory_space<vmem>>, vector<2x1xf32>
    %c0_227 = arith.constant 0 : index
    %c143_228 = arith.constant 143 : index
    %398 = vector.load %arg17[%c0_227, %c143_228] : memref<2x512xf32, #tpu.memory_space<vmem>>, vector<2x352xf32>
    %399 = vector.broadcast %397 : vector<2x1xf32> to vector<2x352xf32>
    %400 = arith.mulf %399, %398 : vector<2x352xf32>
    %401 = arith.addf %381, %400 : vector<2x352xf32>
    %c0_229 = arith.constant 0 : index
    %c46 = arith.constant 46 : index
    %402 = vector.load %arg8[%c0_229, %c46] : memref<2x49xf32, #tpu.memory_space<vmem>>, vector<2x1xf32>
    %c0_230 = arith.constant 0 : index
    %c144 = arith.constant 144 : index
    %403 = vector.load %arg17[%c0_230, %c144] : memref<2x512xf32, #tpu.memory_space<vmem>>, vector<2x352xf32>
    %404 = vector.broadcast %402 : vector<2x1xf32> to vector<2x352xf32>
    %405 = arith.mulf %404, %403 : vector<2x352xf32>
    %406 = arith.addf %386, %405 : vector<2x352xf32>
    %c0_231 = arith.constant 0 : index
    %c47 = arith.constant 47 : index
    %407 = vector.load %arg8[%c0_231, %c47] : memref<2x49xf32, #tpu.memory_space<vmem>>, vector<2x1xf32>
    %c0_232 = arith.constant 0 : index
    %c145 = arith.constant 145 : index
    %408 = vector.load %arg17[%c0_232, %c145] : memref<2x512xf32, #tpu.memory_space<vmem>>, vector<2x352xf32>
    %409 = vector.broadcast %407 : vector<2x1xf32> to vector<2x352xf32>
    %410 = arith.mulf %409, %408 : vector<2x352xf32>
    %411 = arith.addf %391, %410 : vector<2x352xf32>
    %c0_233 = arith.constant 0 : index
    %c48 = arith.constant 48 : index
    %412 = vector.load %arg8[%c0_233, %c48] : memref<2x49xf32, #tpu.memory_space<vmem>>, vector<2x1xf32>
    %c0_234 = arith.constant 0 : index
    %c146 = arith.constant 146 : index
    %413 = vector.load %arg17[%c0_234, %c146] : memref<2x512xf32, #tpu.memory_space<vmem>>, vector<2x352xf32>
    %414 = vector.broadcast %412 : vector<2x1xf32> to vector<2x352xf32>
    %415 = arith.mulf %414, %413 : vector<2x352xf32>
    %416 = arith.addf %396, %415 : vector<2x352xf32>
    %417 = arith.addf %416, %401 : vector<2x352xf32>
    %418 = arith.addf %406, %411 : vector<2x352xf32>
    %419 = arith.addf %417, %418 : vector<2x352xf32>
    %420 = vector.extract_strided_slice %419 {offsets = [0, 0], sizes = [1, 352], strides = [1, 1]} : vector<2x352xf32> to vector<1x352xf32>
    %421 = vector.extract_strided_slice %419 {offsets = [1, 0], sizes = [1, 352], strides = [1, 1]} : vector<2x352xf32> to vector<1x352xf32>
    %422 = arith.addf %420, %421 : vector<1x352xf32>
    %c0_235 = arith.constant 0 : index
    %423 = memref.load %arg9[%c0_235] : memref<1xf32, #tpu.memory_space<smem>>
    %424 = vector.broadcast %423 : f32 to vector<1x352xf32>
    %425 = arith.addf %422, %424 : vector<1x352xf32>
    %c0_236 = arith.constant 0 : index
    %c77_237 = arith.constant 77 : index
    %426 = vector.load %arg18[%c0_236, %c77_237] : memref<1x512xf32, #tpu.memory_space<vmem>>, vector<1x352xf32>
    tpu.vector_store %arg18[%c0_236, %c77_237], %425 {strides = array<i32>} : memref<1x512xf32, #tpu.memory_space<vmem>>, vector<1x352xf32>,
    %427 = vector.extract_strided_slice %425 {offsets = [0, 66], sizes = [1, 16], strides = [1, 1]} : vector<1x352xf32> to vector<1x16xf32>
    %c0_238 = arith.constant 0 : index
    %c11_239 = arith.constant 11 : index
    %428 = vector.load %arg18[%c0_238, %c11_239] : memref<1x512xf32, #tpu.memory_space<vmem>>, vector<1x16xf32>
    tpu.vector_store %arg18[%c0_238, %c11_239], %427 {strides = array<i32>} : memref<1x512xf32, #tpu.memory_space<vmem>>, vector<1x16xf32>,
    %429 = vector.extract_strided_slice %425 {offsets = [0, 44], sizes = [1, 16], strides = [1, 1]} : vector<1x352xf32> to vector<1x16xf32>
    %c0_240 = arith.constant 0 : index
    %c33_241 = arith.constant 33 : index
    %430 = vector.load %arg18[%c0_240, %c33_241] : memref<1x512xf32, #tpu.memory_space<vmem>>, vector<1x16xf32>
    tpu.vector_store %arg18[%c0_240, %c33_241], %429 {strides = array<i32>} : memref<1x512xf32, #tpu.memory_space<vmem>>, vector<1x16xf32>,
    %431 = vector.extract_strided_slice %425 {offsets = [0, 22], sizes = [1, 16], strides = [1, 1]} : vector<1x352xf32> to vector<1x16xf32>
    %c0_242 = arith.constant 0 : index
    %c55_243 = arith.constant 55 : index
    %432 = vector.load %arg18[%c0_242, %c55_243] : memref<1x512xf32, #tpu.memory_space<vmem>>, vector<1x16xf32>
    tpu.vector_store %arg18[%c0_242, %c55_243], %431 {strides = array<i32>} : memref<1x512xf32, #tpu.memory_space<vmem>>, vector<1x16xf32>,
    %433 = vector.extract_strided_slice %425 {offsets = [0, 308], sizes = [1, 16], strides = [1, 1]} : vector<1x352xf32> to vector<1x16xf32>
    %c0_244 = arith.constant 0 : index
    %c429_245 = arith.constant 429 : index
    %434 = vector.load %arg18[%c0_244, %c429_245] : memref<1x512xf32, #tpu.memory_space<vmem>>, vector<1x16xf32>
    tpu.vector_store %arg18[%c0_244, %c429_245], %433 {strides = array<i32>} : memref<1x512xf32, #tpu.memory_space<vmem>>, vector<1x16xf32>,
    %435 = vector.extract_strided_slice %425 {offsets = [0, 286], sizes = [1, 16], strides = [1, 1]} : vector<1x352xf32> to vector<1x16xf32>
    %c0_246 = arith.constant 0 : index
    %c451_247 = arith.constant 451 : index
    %436 = vector.load %arg18[%c0_246, %c451_247] : memref<1x512xf32, #tpu.memory_space<vmem>>, vector<1x16xf32>
    tpu.vector_store %arg18[%c0_246, %c451_247], %435 {strides = array<i32>} : memref<1x512xf32, #tpu.memory_space<vmem>>, vector<1x16xf32>,
    %437 = vector.extract_strided_slice %425 {offsets = [0, 264], sizes = [1, 16], strides = [1, 1]} : vector<1x352xf32> to vector<1x16xf32>
    %c0_248 = arith.constant 0 : index
    %c473_249 = arith.constant 473 : index
    %438 = vector.load %arg18[%c0_248, %c473_249] : memref<1x512xf32, #tpu.memory_space<vmem>>, vector<1x16xf32>
    tpu.vector_store %arg18[%c0_248, %c473_249], %437 {strides = array<i32>} : memref<1x512xf32, #tpu.memory_space<vmem>>, vector<1x16xf32>,
    %c0_250 = arith.constant 0 : index
    %c8_251 = arith.constant 8 : index
    %439 = vector.load %arg18[%c0_250, %c8_251] : memref<1x512xf32, #tpu.memory_space<vmem>>, vector<1x484xf32>
    %c0_252 = arith.constant 0 : index
    %c10_253 = arith.constant 10 : index
    %440 = vector.load %arg18[%c0_252, %c10_253] : memref<1x512xf32, #tpu.memory_space<vmem>>, vector<1x484xf32>
    %c0_254 = arith.constant 0 : index
    %c6_255 = arith.constant 6 : index
    %441 = vector.load %arg18[%c0_254, %c6_255] : memref<1x512xf32, #tpu.memory_space<vmem>>, vector<1x484xf32>
    %c2_i32_256 = arith.constant 2 : i32
    %442 = vector.broadcast %c2_i32_256 : i32 to vector<1x484xi32>
    %443 = arith.cmpi eq, %5, %442 : vector<1x484xi32>
    %444 = arith.select %443, %440, %439 : vector<1x484xi1>, vector<1x484xf32>
    %c19_i32_257 = arith.constant 19 : i32
    %445 = vector.broadcast %c19_i32_257 : i32 to vector<1x484xi32>
    %446 = arith.cmpi eq, %5, %445 : vector<1x484xi32>
    %447 = arith.select %446, %441, %444 : vector<1x484xi1>, vector<1x484xf32>
    %c0_258 = arith.constant 0 : index
    %c12_259 = arith.constant 12 : index
    %448 = vector.load %arg18[%c0_258, %c12_259] : memref<1x512xf32, #tpu.memory_space<vmem>>, vector<1x484xf32>
    %c0_260 = arith.constant 0 : index
    %c4_261 = arith.constant 4 : index
    %449 = vector.load %arg18[%c0_260, %c4_261] : memref<1x512xf32, #tpu.memory_space<vmem>>, vector<1x484xf32>
    %c1_i32_262 = arith.constant 1 : i32
    %450 = vector.broadcast %c1_i32_262 : i32 to vector<1x484xi32>
    %451 = arith.cmpi eq, %5, %450 : vector<1x484xi32>
    %452 = arith.select %451, %448, %447 : vector<1x484xi1>, vector<1x484xf32>
    %c20_i32_263 = arith.constant 20 : i32
    %453 = vector.broadcast %c20_i32_263 : i32 to vector<1x484xi32>
    %454 = arith.cmpi eq, %5, %453 : vector<1x484xi32>
    %455 = arith.select %454, %449, %452 : vector<1x484xi1>, vector<1x484xf32>
    %c0_264 = arith.constant 0 : index
    %c14_265 = arith.constant 14 : index
    %456 = vector.load %arg18[%c0_264, %c14_265] : memref<1x512xf32, #tpu.memory_space<vmem>>, vector<1x484xf32>
    %c0_266 = arith.constant 0 : index
    %c2_267 = arith.constant 2 : index
    %457 = vector.load %arg18[%c0_266, %c2_267] : memref<1x512xf32, #tpu.memory_space<vmem>>, vector<1x484xf32>
    %c0_i32_268 = arith.constant 0 : i32
    %458 = vector.broadcast %c0_i32_268 : i32 to vector<1x484xi32>
    %459 = arith.cmpi eq, %5, %458 : vector<1x484xi32>
    %460 = arith.select %459, %456, %455 : vector<1x484xi1>, vector<1x484xf32>
    %c21_i32_269 = arith.constant 21 : i32
    %461 = vector.broadcast %c21_i32_269 : i32 to vector<1x484xi32>
    %462 = arith.cmpi eq, %5, %461 : vector<1x484xi32>
    %463 = arith.select %462, %457, %460 : vector<1x484xi1>, vector<1x484xf32>
    %c0_270 = arith.constant 0 : index
    %c8_271 = arith.constant 8 : index
    %464 = vector.load %arg18[%c0_270, %c8_271] : memref<1x512xf32, #tpu.memory_space<vmem>>, vector<1x484xf32>
    tpu.vector_store %arg18[%c0_270, %c8_271], %463 {strides = array<i32>} : memref<1x512xf32, #tpu.memory_space<vmem>>, vector<1x484xf32>,
    %c0_272 = arith.constant 0 : index
    %c8_273 = arith.constant 8 : index
    %465 = vector.load %arg18[%c0_272, %c8_273] : memref<1x512xf32, #tpu.memory_space<vmem>>, vector<1x352xf32>
    %c0_274 = arith.constant 0 : index
    %c0_275 = arith.constant 0 : index
    %466 = vector.load %arg19[%c0_274, %c0_275] : memref<49x352xf32, #tpu.memory_space<vmem>>, vector<1x352xf32>
    tpu.vector_store %arg19[%c0_274, %c0_275], %465 {strides = array<i32>} : memref<49x352xf32, #tpu.memory_space<vmem>>, vector<1x352xf32>,
    %c0_276 = arith.constant 0 : index
    %c9_277 = arith.constant 9 : index
    %467 = vector.load %arg18[%c0_276, %c9_277] : memref<1x512xf32, #tpu.memory_space<vmem>>, vector<1x352xf32>
    %c1_278 = arith.constant 1 : index
    %c0_279 = arith.constant 0 : index
    %468 = vector.load %arg19[%c1_278, %c0_279] : memref<49x352xf32, #tpu.memory_space<vmem>>, vector<1x352xf32>
    tpu.vector_store %arg19[%c1_278, %c0_279], %467 {strides = array<i32>} : memref<49x352xf32, #tpu.memory_space<vmem>>, vector<1x352xf32>,
    %c0_280 = arith.constant 0 : index
    %c10_281 = arith.constant 10 : index
    %469 = vector.load %arg18[%c0_280, %c10_281] : memref<1x512xf32, #tpu.memory_space<vmem>>, vector<1x352xf32>
    %c2_282 = arith.constant 2 : index
    %c0_283 = arith.constant 0 : index
    %470 = vector.load %arg19[%c2_282, %c0_283] : memref<49x352xf32, #tpu.memory_space<vmem>>, vector<1x352xf32>
    tpu.vector_store %arg19[%c2_282, %c0_283], %469 {strides = array<i32>} : memref<49x352xf32, #tpu.memory_space<vmem>>, vector<1x352xf32>,
    %c0_284 = arith.constant 0 : index
    %c11_285 = arith.constant 11 : index
    %471 = vector.load %arg18[%c0_284, %c11_285] : memref<1x512xf32, #tpu.memory_space<vmem>>, vector<1x352xf32>
    %c3_286 = arith.constant 3 : index
    %c0_287 = arith.constant 0 : index
    %472 = vector.load %arg19[%c3_286, %c0_287] : memref<49x352xf32, #tpu.memory_space<vmem>>, vector<1x352xf32>
    tpu.vector_store %arg19[%c3_286, %c0_287], %471 {strides = array<i32>} : memref<49x352xf32, #tpu.memory_space<vmem>>, vector<1x352xf32>,
    %c0_288 = arith.constant 0 : index
    %c12_289 = arith.constant 12 : index
    %473 = vector.load %arg18[%c0_288, %c12_289] : memref<1x512xf32, #tpu.memory_space<vmem>>, vector<1x352xf32>
    %c4_290 = arith.constant 4 : index
    %c0_291 = arith.constant 0 : index
    %474 = vector.load %arg19[%c4_290, %c0_291] : memref<49x352xf32, #tpu.memory_space<vmem>>, vector<1x352xf32>
    tpu.vector_store %arg19[%c4_290, %c0_291], %473 {strides = array<i32>} : memref<49x352xf32, #tpu.memory_space<vmem>>, vector<1x352xf32>,
    %c0_292 = arith.constant 0 : index
    %c13_293 = arith.constant 13 : index
    %475 = vector.load %arg18[%c0_292, %c13_293] : memref<1x512xf32, #tpu.memory_space<vmem>>, vector<1x352xf32>
    %c5_294 = arith.constant 5 : index
    %c0_295 = arith.constant 0 : index
    %476 = vector.load %arg19[%c5_294, %c0_295] : memref<49x352xf32, #tpu.memory_space<vmem>>, vector<1x352xf32>
    tpu.vector_store %arg19[%c5_294, %c0_295], %475 {strides = array<i32>} : memref<49x352xf32, #tpu.memory_space<vmem>>, vector<1x352xf32>,
    %c0_296 = arith.constant 0 : index
    %c14_297 = arith.constant 14 : index
    %477 = vector.load %arg18[%c0_296, %c14_297] : memref<1x512xf32, #tpu.memory_space<vmem>>, vector<1x352xf32>
    %c6_298 = arith.constant 6 : index
    %c0_299 = arith.constant 0 : index
    %478 = vector.load %arg19[%c6_298, %c0_299] : memref<49x352xf32, #tpu.memory_space<vmem>>, vector<1x352xf32>
    tpu.vector_store %arg19[%c6_298, %c0_299], %477 {strides = array<i32>} : memref<49x352xf32, #tpu.memory_space<vmem>>, vector<1x352xf32>,
    %c0_300 = arith.constant 0 : index
    %c30_301 = arith.constant 30 : index
    %479 = vector.load %arg18[%c0_300, %c30_301] : memref<1x512xf32, #tpu.memory_space<vmem>>, vector<1x352xf32>
    %c7_302 = arith.constant 7 : index
    %c0_303 = arith.constant 0 : index
    %480 = vector.load %arg19[%c7_302, %c0_303] : memref<49x352xf32, #tpu.memory_space<vmem>>, vector<1x352xf32>
    tpu.vector_store %arg19[%c7_302, %c0_303], %479 {strides = array<i32>} : memref<49x352xf32, #tpu.memory_space<vmem>>, vector<1x352xf32>,
    %c0_304 = arith.constant 0 : index
    %c31_305 = arith.constant 31 : index
    %481 = vector.load %arg18[%c0_304, %c31_305] : memref<1x512xf32, #tpu.memory_space<vmem>>, vector<1x352xf32>
    %c8_306 = arith.constant 8 : index
    %c0_307 = arith.constant 0 : index
    %482 = vector.load %arg19[%c8_306, %c0_307] : memref<49x352xf32, #tpu.memory_space<vmem>>, vector<1x352xf32>
    tpu.vector_store %arg19[%c8_306, %c0_307], %481 {strides = array<i32>} : memref<49x352xf32, #tpu.memory_space<vmem>>, vector<1x352xf32>,
    %c0_308 = arith.constant 0 : index
    %c32_309 = arith.constant 32 : index
    %483 = vector.load %arg18[%c0_308, %c32_309] : memref<1x512xf32, #tpu.memory_space<vmem>>, vector<1x352xf32>
    %c9_310 = arith.constant 9 : index
    %c0_311 = arith.constant 0 : index
    %484 = vector.load %arg19[%c9_310, %c0_311] : memref<49x352xf32, #tpu.memory_space<vmem>>, vector<1x352xf32>
    tpu.vector_store %arg19[%c9_310, %c0_311], %483 {strides = array<i32>} : memref<49x352xf32, #tpu.memory_space<vmem>>, vector<1x352xf32>,
    %c0_312 = arith.constant 0 : index
    %c33_313 = arith.constant 33 : index
    %485 = vector.load %arg18[%c0_312, %c33_313] : memref<1x512xf32, #tpu.memory_space<vmem>>, vector<1x352xf32>
    %c10_314 = arith.constant 10 : index
    %c0_315 = arith.constant 0 : index
    %486 = vector.load %arg19[%c10_314, %c0_315] : memref<49x352xf32, #tpu.memory_space<vmem>>, vector<1x352xf32>
    tpu.vector_store %arg19[%c10_314, %c0_315], %485 {strides = array<i32>} : memref<49x352xf32, #tpu.memory_space<vmem>>, vector<1x352xf32>,
    %c0_316 = arith.constant 0 : index
    %c34_317 = arith.constant 34 : index
    %487 = vector.load %arg18[%c0_316, %c34_317] : memref<1x512xf32, #tpu.memory_space<vmem>>, vector<1x352xf32>
    %c11_318 = arith.constant 11 : index
    %c0_319 = arith.constant 0 : index
    %488 = vector.load %arg19[%c11_318, %c0_319] : memref<49x352xf32, #tpu.memory_space<vmem>>, vector<1x352xf32>
    tpu.vector_store %arg19[%c11_318, %c0_319], %487 {strides = array<i32>} : memref<49x352xf32, #tpu.memory_space<vmem>>, vector<1x352xf32>,
    %c0_320 = arith.constant 0 : index
    %c35_321 = arith.constant 35 : index
    %489 = vector.load %arg18[%c0_320, %c35_321] : memref<1x512xf32, #tpu.memory_space<vmem>>, vector<1x352xf32>
    %c12_322 = arith.constant 12 : index
    %c0_323 = arith.constant 0 : index
    %490 = vector.load %arg19[%c12_322, %c0_323] : memref<49x352xf32, #tpu.memory_space<vmem>>, vector<1x352xf32>
    tpu.vector_store %arg19[%c12_322, %c0_323], %489 {strides = array<i32>} : memref<49x352xf32, #tpu.memory_space<vmem>>, vector<1x352xf32>,
    %c0_324 = arith.constant 0 : index
    %c36_325 = arith.constant 36 : index
    %491 = vector.load %arg18[%c0_324, %c36_325] : memref<1x512xf32, #tpu.memory_space<vmem>>, vector<1x352xf32>
    %c13_326 = arith.constant 13 : index
    %c0_327 = arith.constant 0 : index
    %492 = vector.load %arg19[%c13_326, %c0_327] : memref<49x352xf32, #tpu.memory_space<vmem>>, vector<1x352xf32>
    tpu.vector_store %arg19[%c13_326, %c0_327], %491 {strides = array<i32>} : memref<49x352xf32, #tpu.memory_space<vmem>>, vector<1x352xf32>,
    %c0_328 = arith.constant 0 : index
    %c52_329 = arith.constant 52 : index
    %493 = vector.load %arg18[%c0_328, %c52_329] : memref<1x512xf32, #tpu.memory_space<vmem>>, vector<1x352xf32>
    %c14_330 = arith.constant 14 : index
    %c0_331 = arith.constant 0 : index
    %494 = vector.load %arg19[%c14_330, %c0_331] : memref<49x352xf32, #tpu.memory_space<vmem>>, vector<1x352xf32>
    tpu.vector_store %arg19[%c14_330, %c0_331], %493 {strides = array<i32>} : memref<49x352xf32, #tpu.memory_space<vmem>>, vector<1x352xf32>,
    %c0_332 = arith.constant 0 : index
    %c53_333 = arith.constant 53 : index
    %495 = vector.load %arg18[%c0_332, %c53_333] : memref<1x512xf32, #tpu.memory_space<vmem>>, vector<1x352xf32>
    %c15_334 = arith.constant 15 : index
    %c0_335 = arith.constant 0 : index
    %496 = vector.load %arg19[%c15_334, %c0_335] : memref<49x352xf32, #tpu.memory_space<vmem>>, vector<1x352xf32>
    tpu.vector_store %arg19[%c15_334, %c0_335], %495 {strides = array<i32>} : memref<49x352xf32, #tpu.memory_space<vmem>>, vector<1x352xf32>,
    %c0_336 = arith.constant 0 : index
    %c54_337 = arith.constant 54 : index
    %497 = vector.load %arg18[%c0_336, %c54_337] : memref<1x512xf32, #tpu.memory_space<vmem>>, vector<1x352xf32>
    %c16_338 = arith.constant 16 : index
    %c0_339 = arith.constant 0 : index
    %498 = vector.load %arg19[%c16_338, %c0_339] : memref<49x352xf32, #tpu.memory_space<vmem>>, vector<1x352xf32>
    tpu.vector_store %arg19[%c16_338, %c0_339], %497 {strides = array<i32>} : memref<49x352xf32, #tpu.memory_space<vmem>>, vector<1x352xf32>,
    %c0_340 = arith.constant 0 : index
    %c55_341 = arith.constant 55 : index
    %499 = vector.load %arg18[%c0_340, %c55_341] : memref<1x512xf32, #tpu.memory_space<vmem>>, vector<1x352xf32>
    %c17_342 = arith.constant 17 : index
    %c0_343 = arith.constant 0 : index
    %500 = vector.load %arg19[%c17_342, %c0_343] : memref<49x352xf32, #tpu.memory_space<vmem>>, vector<1x352xf32>
    tpu.vector_store %arg19[%c17_342, %c0_343], %499 {strides = array<i32>} : memref<49x352xf32, #tpu.memory_space<vmem>>, vector<1x352xf32>,
    %c0_344 = arith.constant 0 : index
    %c56_345 = arith.constant 56 : index
    %501 = vector.load %arg18[%c0_344, %c56_345] : memref<1x512xf32, #tpu.memory_space<vmem>>, vector<1x352xf32>
    %c18_346 = arith.constant 18 : index
    %c0_347 = arith.constant 0 : index
    %502 = vector.load %arg19[%c18_346, %c0_347] : memref<49x352xf32, #tpu.memory_space<vmem>>, vector<1x352xf32>
    tpu.vector_store %arg19[%c18_346, %c0_347], %501 {strides = array<i32>} : memref<49x352xf32, #tpu.memory_space<vmem>>, vector<1x352xf32>,
    %c0_348 = arith.constant 0 : index
    %c57_349 = arith.constant 57 : index
    %503 = vector.load %arg18[%c0_348, %c57_349] : memref<1x512xf32, #tpu.memory_space<vmem>>, vector<1x352xf32>
    %c19_350 = arith.constant 19 : index
    %c0_351 = arith.constant 0 : index
    %504 = vector.load %arg19[%c19_350, %c0_351] : memref<49x352xf32, #tpu.memory_space<vmem>>, vector<1x352xf32>
    tpu.vector_store %arg19[%c19_350, %c0_351], %503 {strides = array<i32>} : memref<49x352xf32, #tpu.memory_space<vmem>>, vector<1x352xf32>,
    %c0_352 = arith.constant 0 : index
    %c58_353 = arith.constant 58 : index
    %505 = vector.load %arg18[%c0_352, %c58_353] : memref<1x512xf32, #tpu.memory_space<vmem>>, vector<1x352xf32>
    %c20_354 = arith.constant 20 : index
    %c0_355 = arith.constant 0 : index
    %506 = vector.load %arg19[%c20_354, %c0_355] : memref<49x352xf32, #tpu.memory_space<vmem>>, vector<1x352xf32>
    tpu.vector_store %arg19[%c20_354, %c0_355], %505 {strides = array<i32>} : memref<49x352xf32, #tpu.memory_space<vmem>>, vector<1x352xf32>,
    %c0_356 = arith.constant 0 : index
    %c74_357 = arith.constant 74 : index
    %507 = vector.load %arg18[%c0_356, %c74_357] : memref<1x512xf32, #tpu.memory_space<vmem>>, vector<1x352xf32>
    %c21_358 = arith.constant 21 : index
    %c0_359 = arith.constant 0 : index
    %508 = vector.load %arg19[%c21_358, %c0_359] : memref<49x352xf32, #tpu.memory_space<vmem>>, vector<1x352xf32>
    tpu.vector_store %arg19[%c21_358, %c0_359], %507 {strides = array<i32>} : memref<49x352xf32, #tpu.memory_space<vmem>>, vector<1x352xf32>,
    %c0_360 = arith.constant 0 : index
    %c75_361 = arith.constant 75 : index
    %509 = vector.load %arg18[%c0_360, %c75_361] : memref<1x512xf32, #tpu.memory_space<vmem>>, vector<1x352xf32>
    %c22_362 = arith.constant 22 : index
    %c0_363 = arith.constant 0 : index
    %510 = vector.load %arg19[%c22_362, %c0_363] : memref<49x352xf32, #tpu.memory_space<vmem>>, vector<1x352xf32>
    tpu.vector_store %arg19[%c22_362, %c0_363], %509 {strides = array<i32>} : memref<49x352xf32, #tpu.memory_space<vmem>>, vector<1x352xf32>,
    %c0_364 = arith.constant 0 : index
    %c76_365 = arith.constant 76 : index
    %511 = vector.load %arg18[%c0_364, %c76_365] : memref<1x512xf32, #tpu.memory_space<vmem>>, vector<1x352xf32>
    %c23_366 = arith.constant 23 : index
    %c0_367 = arith.constant 0 : index
    %512 = vector.load %arg19[%c23_366, %c0_367] : memref<49x352xf32, #tpu.memory_space<vmem>>, vector<1x352xf32>
    tpu.vector_store %arg19[%c23_366, %c0_367], %511 {strides = array<i32>} : memref<49x352xf32, #tpu.memory_space<vmem>>, vector<1x352xf32>,
    %c0_368 = arith.constant 0 : index
    %c77_369 = arith.constant 77 : index
    %513 = vector.load %arg18[%c0_368, %c77_369] : memref<1x512xf32, #tpu.memory_space<vmem>>, vector<1x352xf32>
    %c24_370 = arith.constant 24 : index
    %c0_371 = arith.constant 0 : index
    %514 = vector.load %arg19[%c24_370, %c0_371] : memref<49x352xf32, #tpu.memory_space<vmem>>, vector<1x352xf32>
    tpu.vector_store %arg19[%c24_370, %c0_371], %513 {strides = array<i32>} : memref<49x352xf32, #tpu.memory_space<vmem>>, vector<1x352xf32>,
    %c0_372 = arith.constant 0 : index
    %c78_373 = arith.constant 78 : index
    %515 = vector.load %arg18[%c0_372, %c78_373] : memref<1x512xf32, #tpu.memory_space<vmem>>, vector<1x352xf32>
    %c25_374 = arith.constant 25 : index
    %c0_375 = arith.constant 0 : index
    %516 = vector.load %arg19[%c25_374, %c0_375] : memref<49x352xf32, #tpu.memory_space<vmem>>, vector<1x352xf32>
    tpu.vector_store %arg19[%c25_374, %c0_375], %515 {strides = array<i32>} : memref<49x352xf32, #tpu.memory_space<vmem>>, vector<1x352xf32>,
    %c0_376 = arith.constant 0 : index
    %c79_377 = arith.constant 79 : index
    %517 = vector.load %arg18[%c0_376, %c79_377] : memref<1x512xf32, #tpu.memory_space<vmem>>, vector<1x352xf32>
    %c26_378 = arith.constant 26 : index
    %c0_379 = arith.constant 0 : index
    %518 = vector.load %arg19[%c26_378, %c0_379] : memref<49x352xf32, #tpu.memory_space<vmem>>, vector<1x352xf32>
    tpu.vector_store %arg19[%c26_378, %c0_379], %517 {strides = array<i32>} : memref<49x352xf32, #tpu.memory_space<vmem>>, vector<1x352xf32>,
    %c0_380 = arith.constant 0 : index
    %c80_381 = arith.constant 80 : index
    %519 = vector.load %arg18[%c0_380, %c80_381] : memref<1x512xf32, #tpu.memory_space<vmem>>, vector<1x352xf32>
    %c27_382 = arith.constant 27 : index
    %c0_383 = arith.constant 0 : index
    %520 = vector.load %arg19[%c27_382, %c0_383] : memref<49x352xf32, #tpu.memory_space<vmem>>, vector<1x352xf32>
    tpu.vector_store %arg19[%c27_382, %c0_383], %519 {strides = array<i32>} : memref<49x352xf32, #tpu.memory_space<vmem>>, vector<1x352xf32>,
    %c0_384 = arith.constant 0 : index
    %c96_385 = arith.constant 96 : index
    %521 = vector.load %arg18[%c0_384, %c96_385] : memref<1x512xf32, #tpu.memory_space<vmem>>, vector<1x352xf32>
    %c28_386 = arith.constant 28 : index
    %c0_387 = arith.constant 0 : index
    %522 = vector.load %arg19[%c28_386, %c0_387] : memref<49x352xf32, #tpu.memory_space<vmem>>, vector<1x352xf32>
    tpu.vector_store %arg19[%c28_386, %c0_387], %521 {strides = array<i32>} : memref<49x352xf32, #tpu.memory_space<vmem>>, vector<1x352xf32>,
    %c0_388 = arith.constant 0 : index
    %c97_389 = arith.constant 97 : index
    %523 = vector.load %arg18[%c0_388, %c97_389] : memref<1x512xf32, #tpu.memory_space<vmem>>, vector<1x352xf32>
    %c29_390 = arith.constant 29 : index
    %c0_391 = arith.constant 0 : index
    %524 = vector.load %arg19[%c29_390, %c0_391] : memref<49x352xf32, #tpu.memory_space<vmem>>, vector<1x352xf32>
    tpu.vector_store %arg19[%c29_390, %c0_391], %523 {strides = array<i32>} : memref<49x352xf32, #tpu.memory_space<vmem>>, vector<1x352xf32>,
    %c0_392 = arith.constant 0 : index
    %c98_393 = arith.constant 98 : index
    %525 = vector.load %arg18[%c0_392, %c98_393] : memref<1x512xf32, #tpu.memory_space<vmem>>, vector<1x352xf32>
    %c30_394 = arith.constant 30 : index
    %c0_395 = arith.constant 0 : index
    %526 = vector.load %arg19[%c30_394, %c0_395] : memref<49x352xf32, #tpu.memory_space<vmem>>, vector<1x352xf32>
    tpu.vector_store %arg19[%c30_394, %c0_395], %525 {strides = array<i32>} : memref<49x352xf32, #tpu.memory_space<vmem>>, vector<1x352xf32>,
    %c0_396 = arith.constant 0 : index
    %c99_397 = arith.constant 99 : index
    %527 = vector.load %arg18[%c0_396, %c99_397] : memref<1x512xf32, #tpu.memory_space<vmem>>, vector<1x352xf32>
    %c31_398 = arith.constant 31 : index
    %c0_399 = arith.constant 0 : index
    %528 = vector.load %arg19[%c31_398, %c0_399] : memref<49x352xf32, #tpu.memory_space<vmem>>, vector<1x352xf32>
    tpu.vector_store %arg19[%c31_398, %c0_399], %527 {strides = array<i32>} : memref<49x352xf32, #tpu.memory_space<vmem>>, vector<1x352xf32>,
    %c0_400 = arith.constant 0 : index
    %c100_401 = arith.constant 100 : index
    %529 = vector.load %arg18[%c0_400, %c100_401] : memref<1x512xf32, #tpu.memory_space<vmem>>, vector<1x352xf32>
    %c32_402 = arith.constant 32 : index
    %c0_403 = arith.constant 0 : index
    %530 = vector.load %arg19[%c32_402, %c0_403] : memref<49x352xf32, #tpu.memory_space<vmem>>, vector<1x352xf32>
    tpu.vector_store %arg19[%c32_402, %c0_403], %529 {strides = array<i32>} : memref<49x352xf32, #tpu.memory_space<vmem>>, vector<1x352xf32>,
    %c0_404 = arith.constant 0 : index
    %c101_405 = arith.constant 101 : index
    %531 = vector.load %arg18[%c0_404, %c101_405] : memref<1x512xf32, #tpu.memory_space<vmem>>, vector<1x352xf32>
    %c33_406 = arith.constant 33 : index
    %c0_407 = arith.constant 0 : index
    %532 = vector.load %arg19[%c33_406, %c0_407] : memref<49x352xf32, #tpu.memory_space<vmem>>, vector<1x352xf32>
    tpu.vector_store %arg19[%c33_406, %c0_407], %531 {strides = array<i32>} : memref<49x352xf32, #tpu.memory_space<vmem>>, vector<1x352xf32>,
    %c0_408 = arith.constant 0 : index
    %c102_409 = arith.constant 102 : index
    %533 = vector.load %arg18[%c0_408, %c102_409] : memref<1x512xf32, #tpu.memory_space<vmem>>, vector<1x352xf32>
    %c34_410 = arith.constant 34 : index
    %c0_411 = arith.constant 0 : index
    %534 = vector.load %arg19[%c34_410, %c0_411] : memref<49x352xf32, #tpu.memory_space<vmem>>, vector<1x352xf32>
    tpu.vector_store %arg19[%c34_410, %c0_411], %533 {strides = array<i32>} : memref<49x352xf32, #tpu.memory_space<vmem>>, vector<1x352xf32>,
    %c0_412 = arith.constant 0 : index
    %c118_413 = arith.constant 118 : index
    %535 = vector.load %arg18[%c0_412, %c118_413] : memref<1x512xf32, #tpu.memory_space<vmem>>, vector<1x352xf32>
    %c35_414 = arith.constant 35 : index
    %c0_415 = arith.constant 0 : index
    %536 = vector.load %arg19[%c35_414, %c0_415] : memref<49x352xf32, #tpu.memory_space<vmem>>, vector<1x352xf32>
    tpu.vector_store %arg19[%c35_414, %c0_415], %535 {strides = array<i32>} : memref<49x352xf32, #tpu.memory_space<vmem>>, vector<1x352xf32>,
    %c0_416 = arith.constant 0 : index
    %c119_417 = arith.constant 119 : index
    %537 = vector.load %arg18[%c0_416, %c119_417] : memref<1x512xf32, #tpu.memory_space<vmem>>, vector<1x352xf32>
    %c36_418 = arith.constant 36 : index
    %c0_419 = arith.constant 0 : index
    %538 = vector.load %arg19[%c36_418, %c0_419] : memref<49x352xf32, #tpu.memory_space<vmem>>, vector<1x352xf32>
    tpu.vector_store %arg19[%c36_418, %c0_419], %537 {strides = array<i32>} : memref<49x352xf32, #tpu.memory_space<vmem>>, vector<1x352xf32>,
    %c0_420 = arith.constant 0 : index
    %c120_421 = arith.constant 120 : index
    %539 = vector.load %arg18[%c0_420, %c120_421] : memref<1x512xf32, #tpu.memory_space<vmem>>, vector<1x352xf32>
    %c37_422 = arith.constant 37 : index
    %c0_423 = arith.constant 0 : index
    %540 = vector.load %arg19[%c37_422, %c0_423] : memref<49x352xf32, #tpu.memory_space<vmem>>, vector<1x352xf32>
    tpu.vector_store %arg19[%c37_422, %c0_423], %539 {strides = array<i32>} : memref<49x352xf32, #tpu.memory_space<vmem>>, vector<1x352xf32>,
    %c0_424 = arith.constant 0 : index
    %c121_425 = arith.constant 121 : index
    %541 = vector.load %arg18[%c0_424, %c121_425] : memref<1x512xf32, #tpu.memory_space<vmem>>, vector<1x352xf32>
    %c38_426 = arith.constant 38 : index
    %c0_427 = arith.constant 0 : index
    %542 = vector.load %arg19[%c38_426, %c0_427] : memref<49x352xf32, #tpu.memory_space<vmem>>, vector<1x352xf32>
    tpu.vector_store %arg19[%c38_426, %c0_427], %541 {strides = array<i32>} : memref<49x352xf32, #tpu.memory_space<vmem>>, vector<1x352xf32>,
    %c0_428 = arith.constant 0 : index
    %c122_429 = arith.constant 122 : index
    %543 = vector.load %arg18[%c0_428, %c122_429] : memref<1x512xf32, #tpu.memory_space<vmem>>, vector<1x352xf32>
    %c39_430 = arith.constant 39 : index
    %c0_431 = arith.constant 0 : index
    %544 = vector.load %arg19[%c39_430, %c0_431] : memref<49x352xf32, #tpu.memory_space<vmem>>, vector<1x352xf32>
    tpu.vector_store %arg19[%c39_430, %c0_431], %543 {strides = array<i32>} : memref<49x352xf32, #tpu.memory_space<vmem>>, vector<1x352xf32>,
    %c0_432 = arith.constant 0 : index
    %c123_433 = arith.constant 123 : index
    %545 = vector.load %arg18[%c0_432, %c123_433] : memref<1x512xf32, #tpu.memory_space<vmem>>, vector<1x352xf32>
    %c40_434 = arith.constant 40 : index
    %c0_435 = arith.constant 0 : index
    %546 = vector.load %arg19[%c40_434, %c0_435] : memref<49x352xf32, #tpu.memory_space<vmem>>, vector<1x352xf32>
    tpu.vector_store %arg19[%c40_434, %c0_435], %545 {strides = array<i32>} : memref<49x352xf32, #tpu.memory_space<vmem>>, vector<1x352xf32>,
    %c0_436 = arith.constant 0 : index
    %c124_437 = arith.constant 124 : index
    %547 = vector.load %arg18[%c0_436, %c124_437] : memref<1x512xf32, #tpu.memory_space<vmem>>, vector<1x352xf32>
    %c41_438 = arith.constant 41 : index
    %c0_439 = arith.constant 0 : index
    %548 = vector.load %arg19[%c41_438, %c0_439] : memref<49x352xf32, #tpu.memory_space<vmem>>, vector<1x352xf32>
    tpu.vector_store %arg19[%c41_438, %c0_439], %547 {strides = array<i32>} : memref<49x352xf32, #tpu.memory_space<vmem>>, vector<1x352xf32>,
    %c0_440 = arith.constant 0 : index
    %c140_441 = arith.constant 140 : index
    %549 = vector.load %arg18[%c0_440, %c140_441] : memref<1x512xf32, #tpu.memory_space<vmem>>, vector<1x352xf32>
    %c42_442 = arith.constant 42 : index
    %c0_443 = arith.constant 0 : index
    %550 = vector.load %arg19[%c42_442, %c0_443] : memref<49x352xf32, #tpu.memory_space<vmem>>, vector<1x352xf32>
    tpu.vector_store %arg19[%c42_442, %c0_443], %549 {strides = array<i32>} : memref<49x352xf32, #tpu.memory_space<vmem>>, vector<1x352xf32>,
    %c0_444 = arith.constant 0 : index
    %c141_445 = arith.constant 141 : index
    %551 = vector.load %arg18[%c0_444, %c141_445] : memref<1x512xf32, #tpu.memory_space<vmem>>, vector<1x352xf32>
    %c43_446 = arith.constant 43 : index
    %c0_447 = arith.constant 0 : index
    %552 = vector.load %arg19[%c43_446, %c0_447] : memref<49x352xf32, #tpu.memory_space<vmem>>, vector<1x352xf32>
    tpu.vector_store %arg19[%c43_446, %c0_447], %551 {strides = array<i32>} : memref<49x352xf32, #tpu.memory_space<vmem>>, vector<1x352xf32>,
    %c0_448 = arith.constant 0 : index
    %c142_449 = arith.constant 142 : index
    %553 = vector.load %arg18[%c0_448, %c142_449] : memref<1x512xf32, #tpu.memory_space<vmem>>, vector<1x352xf32>
    %c44_450 = arith.constant 44 : index
    %c0_451 = arith.constant 0 : index
    %554 = vector.load %arg19[%c44_450, %c0_451] : memref<49x352xf32, #tpu.memory_space<vmem>>, vector<1x352xf32>
    tpu.vector_store %arg19[%c44_450, %c0_451], %553 {strides = array<i32>} : memref<49x352xf32, #tpu.memory_space<vmem>>, vector<1x352xf32>,
    %c0_452 = arith.constant 0 : index
    %c143_453 = arith.constant 143 : index
    %555 = vector.load %arg18[%c0_452, %c143_453] : memref<1x512xf32, #tpu.memory_space<vmem>>, vector<1x352xf32>
    %c45_454 = arith.constant 45 : index
    %c0_455 = arith.constant 0 : index
    %556 = vector.load %arg19[%c45_454, %c0_455] : memref<49x352xf32, #tpu.memory_space<vmem>>, vector<1x352xf32>
    tpu.vector_store %arg19[%c45_454, %c0_455], %555 {strides = array<i32>} : memref<49x352xf32, #tpu.memory_space<vmem>>, vector<1x352xf32>,
    %c0_456 = arith.constant 0 : index
    %c144_457 = arith.constant 144 : index
    %557 = vector.load %arg18[%c0_456, %c144_457] : memref<1x512xf32, #tpu.memory_space<vmem>>, vector<1x352xf32>
    %c46_458 = arith.constant 46 : index
    %c0_459 = arith.constant 0 : index
    %558 = vector.load %arg19[%c46_458, %c0_459] : memref<49x352xf32, #tpu.memory_space<vmem>>, vector<1x352xf32>
    tpu.vector_store %arg19[%c46_458, %c0_459], %557 {strides = array<i32>} : memref<49x352xf32, #tpu.memory_space<vmem>>, vector<1x352xf32>,
    %c0_460 = arith.constant 0 : index
    %c145_461 = arith.constant 145 : index
    %559 = vector.load %arg18[%c0_460, %c145_461] : memref<1x512xf32, #tpu.memory_space<vmem>>, vector<1x352xf32>
    %c47_462 = arith.constant 47 : index
    %c0_463 = arith.constant 0 : index
    %560 = vector.load %arg19[%c47_462, %c0_463] : memref<49x352xf32, #tpu.memory_space<vmem>>, vector<1x352xf32>
    tpu.vector_store %arg19[%c47_462, %c0_463], %559 {strides = array<i32>} : memref<49x352xf32, #tpu.memory_space<vmem>>, vector<1x352xf32>,
    %c0_464 = arith.constant 0 : index
    %c146_465 = arith.constant 146 : index
    %561 = vector.load %arg18[%c0_464, %c146_465] : memref<1x512xf32, #tpu.memory_space<vmem>>, vector<1x352xf32>
    %c48_466 = arith.constant 48 : index
    %c0_467 = arith.constant 0 : index
    %562 = vector.load %arg19[%c48_466, %c0_467] : memref<49x352xf32, #tpu.memory_space<vmem>>, vector<1x352xf32>
    tpu.vector_store %arg19[%c48_466, %c0_467], %561 {strides = array<i32>} : memref<49x352xf32, #tpu.memory_space<vmem>>, vector<1x352xf32>,
    %c0_468 = arith.constant 0 : index
    %c0_469 = arith.constant 0 : index
    %563 = vector.load %arg11[%c0_468, %c0_469] : memref<16x49xf32, #tpu.memory_space<vmem>>, vector<16x49xf32>
    %cst_470 = arith.constant dense<0.000000e+00> : vector<16xf32>
    %564 = vector.multi_reduction <add>, %563, %cst_470 [1] : vector<16x49xf32> to vector<16xf32>
    %565 = vector.shape_cast %564 : vector<16xf32> to vector<16x1xf32>
    %c0_471 = arith.constant 0 : index
    %c0_472 = arith.constant 0 : index
    %566 = vector.load %arg11[%c0_471, %c0_472] : memref<16x49xf32, #tpu.memory_space<vmem>>, vector<16x49xf32>
    %c0_473 = arith.constant 0 : index
    %c0_474 = arith.constant 0 : index
    %567 = vector.load %arg19[%c0_473, %c0_474] : memref<49x352xf32, #tpu.memory_space<vmem>>, vector<49x352xf32>
    %cst_475 = arith.constant dense<0.000000e+00> : vector<16x352xf32>
    %568 = tpu.matmul %566, %567, %cst_475 {dimension_numbers = #tpu.dot_dimension_numbers<[1], [0], [0], [1], [0, 0, 1, 1], [], []>} : vector<16x49xf32>, vector<49x352xf32>, vector<16x352xf32> -> vector<16x352xf32>
    %569 = arith.mulf %565, %25 : vector<16x1xf32>
    %570 = vector.broadcast %569 : vector<16x1xf32> to vector<16x352xf32>
    %571 = arith.addf %568, %570 : vector<16x352xf32>
    %572 = vector.extract_strided_slice %4 {offsets = [0, 48], sizes = [16, 16], strides = [1, 1]} : vector<16x256xf32> to vector<16x16xf32>
    %c0_476 = arith.constant 0 : index
    %c11_477 = arith.constant 11 : index
    %573 = vector.load %arg16[%c0_476, %c11_477] : memref<16x512xf32, #tpu.memory_space<vmem>>, vector<16x16xf32>
    tpu.vector_store %arg16[%c0_476, %c11_477], %572 {strides = array<i32>} : memref<16x512xf32, #tpu.memory_space<vmem>>, vector<16x16xf32>,
    %574 = vector.extract_strided_slice %4 {offsets = [0, 32], sizes = [16, 16], strides = [1, 1]} : vector<16x256xf32> to vector<16x16xf32>
    %c0_478 = arith.constant 0 : index
    %c33_479 = arith.constant 33 : index
    %575 = vector.load %arg16[%c0_478, %c33_479] : memref<16x512xf32, #tpu.memory_space<vmem>>, vector<16x16xf32>
    tpu.vector_store %arg16[%c0_478, %c33_479], %574 {strides = array<i32>} : memref<16x512xf32, #tpu.memory_space<vmem>>, vector<16x16xf32>,
    %576 = vector.extract_strided_slice %4 {offsets = [0, 16], sizes = [16, 16], strides = [1, 1]} : vector<16x256xf32> to vector<16x16xf32>
    %c0_480 = arith.constant 0 : index
    %c55_481 = arith.constant 55 : index
    %577 = vector.load %arg16[%c0_480, %c55_481] : memref<16x512xf32, #tpu.memory_space<vmem>>, vector<16x16xf32>
    tpu.vector_store %arg16[%c0_480, %c55_481], %576 {strides = array<i32>} : memref<16x512xf32, #tpu.memory_space<vmem>>, vector<16x16xf32>,
    %578 = vector.extract_strided_slice %4 {offsets = [0, 0], sizes = [16, 16], strides = [1, 1]} : vector<16x256xf32> to vector<16x16xf32>
    %c0_482 = arith.constant 0 : index
    %c77_483 = arith.constant 77 : index
    %579 = vector.load %arg16[%c0_482, %c77_483] : memref<16x512xf32, #tpu.memory_space<vmem>>, vector<16x16xf32>
    tpu.vector_store %arg16[%c0_482, %c77_483], %578 {strides = array<i32>} : memref<16x512xf32, #tpu.memory_space<vmem>>, vector<16x16xf32>,
    %580 = vector.extract_strided_slice %4 {offsets = [0, 16], sizes = [16, 16], strides = [1, 1]} : vector<16x256xf32> to vector<16x16xf32>
    %c0_484 = arith.constant 0 : index
    %c99_485 = arith.constant 99 : index
    %581 = vector.load %arg16[%c0_484, %c99_485] : memref<16x512xf32, #tpu.memory_space<vmem>>, vector<16x16xf32>
    tpu.vector_store %arg16[%c0_484, %c99_485], %580 {strides = array<i32>} : memref<16x512xf32, #tpu.memory_space<vmem>>, vector<16x16xf32>,
    %582 = vector.extract_strided_slice %4 {offsets = [0, 32], sizes = [16, 16], strides = [1, 1]} : vector<16x256xf32> to vector<16x16xf32>
    %c0_486 = arith.constant 0 : index
    %c121_487 = arith.constant 121 : index
    %583 = vector.load %arg16[%c0_486, %c121_487] : memref<16x512xf32, #tpu.memory_space<vmem>>, vector<16x16xf32>
    tpu.vector_store %arg16[%c0_486, %c121_487], %582 {strides = array<i32>} : memref<16x512xf32, #tpu.memory_space<vmem>>, vector<16x16xf32>,
    %584 = vector.extract_strided_slice %4 {offsets = [0, 48], sizes = [16, 16], strides = [1, 1]} : vector<16x256xf32> to vector<16x16xf32>
    %c0_488 = arith.constant 0 : index
    %c143_489 = arith.constant 143 : index
    %585 = vector.load %arg16[%c0_488, %c143_489] : memref<16x512xf32, #tpu.memory_space<vmem>>, vector<16x16xf32>
    tpu.vector_store %arg16[%c0_488, %c143_489], %584 {strides = array<i32>} : memref<16x512xf32, #tpu.memory_space<vmem>>, vector<16x16xf32>,
    %586 = vector.extract_strided_slice %4 {offsets = [0, 64], sizes = [16, 16], strides = [1, 1]} : vector<16x256xf32> to vector<16x16xf32>
    %c0_490 = arith.constant 0 : index
    %c165_491 = arith.constant 165 : index
    %587 = vector.load %arg16[%c0_490, %c165_491] : memref<16x512xf32, #tpu.memory_space<vmem>>, vector<16x16xf32>
    tpu.vector_store %arg16[%c0_490, %c165_491], %586 {strides = array<i32>} : memref<16x512xf32, #tpu.memory_space<vmem>>, vector<16x16xf32>,
    %588 = vector.extract_strided_slice %4 {offsets = [0, 80], sizes = [16, 16], strides = [1, 1]} : vector<16x256xf32> to vector<16x16xf32>
    %c0_492 = arith.constant 0 : index
    %c187_493 = arith.constant 187 : index
    %589 = vector.load %arg16[%c0_492, %c187_493] : memref<16x512xf32, #tpu.memory_space<vmem>>, vector<16x16xf32>
    tpu.vector_store %arg16[%c0_492, %c187_493], %588 {strides = array<i32>} : memref<16x512xf32, #tpu.memory_space<vmem>>, vector<16x16xf32>,
    %590 = vector.extract_strided_slice %4 {offsets = [0, 96], sizes = [16, 16], strides = [1, 1]} : vector<16x256xf32> to vector<16x16xf32>
    %c0_494 = arith.constant 0 : index
    %c209_495 = arith.constant 209 : index
    %591 = vector.load %arg16[%c0_494, %c209_495] : memref<16x512xf32, #tpu.memory_space<vmem>>, vector<16x16xf32>
    tpu.vector_store %arg16[%c0_494, %c209_495], %590 {strides = array<i32>} : memref<16x512xf32, #tpu.memory_space<vmem>>, vector<16x16xf32>,
    %592 = vector.extract_strided_slice %4 {offsets = [0, 112], sizes = [16, 16], strides = [1, 1]} : vector<16x256xf32> to vector<16x16xf32>
    %c0_496 = arith.constant 0 : index
    %c231_497 = arith.constant 231 : index
    %593 = vector.load %arg16[%c0_496, %c231_497] : memref<16x512xf32, #tpu.memory_space<vmem>>, vector<16x16xf32>
    tpu.vector_store %arg16[%c0_496, %c231_497], %592 {strides = array<i32>} : memref<16x512xf32, #tpu.memory_space<vmem>>, vector<16x16xf32>,
    %594 = vector.extract_strided_slice %4 {offsets = [0, 128], sizes = [16, 16], strides = [1, 1]} : vector<16x256xf32> to vector<16x16xf32>
    %c0_498 = arith.constant 0 : index
    %c253_499 = arith.constant 253 : index
    %595 = vector.load %arg16[%c0_498, %c253_499] : memref<16x512xf32, #tpu.memory_space<vmem>>, vector<16x16xf32>
    tpu.vector_store %arg16[%c0_498, %c253_499], %594 {strides = array<i32>} : memref<16x512xf32, #tpu.memory_space<vmem>>, vector<16x16xf32>,
    %596 = vector.extract_strided_slice %4 {offsets = [0, 144], sizes = [16, 16], strides = [1, 1]} : vector<16x256xf32> to vector<16x16xf32>
    %c0_500 = arith.constant 0 : index
    %c275_501 = arith.constant 275 : index
    %597 = vector.load %arg16[%c0_500, %c275_501] : memref<16x512xf32, #tpu.memory_space<vmem>>, vector<16x16xf32>
    tpu.vector_store %arg16[%c0_500, %c275_501], %596 {strides = array<i32>} : memref<16x512xf32, #tpu.memory_space<vmem>>, vector<16x16xf32>,
    %598 = vector.extract_strided_slice %4 {offsets = [0, 160], sizes = [16, 16], strides = [1, 1]} : vector<16x256xf32> to vector<16x16xf32>
    %c0_502 = arith.constant 0 : index
    %c297_503 = arith.constant 297 : index
    %599 = vector.load %arg16[%c0_502, %c297_503] : memref<16x512xf32, #tpu.memory_space<vmem>>, vector<16x16xf32>
    tpu.vector_store %arg16[%c0_502, %c297_503], %598 {strides = array<i32>} : memref<16x512xf32, #tpu.memory_space<vmem>>, vector<16x16xf32>,
    %600 = vector.extract_strided_slice %4 {offsets = [0, 176], sizes = [16, 16], strides = [1, 1]} : vector<16x256xf32> to vector<16x16xf32>
    %c0_504 = arith.constant 0 : index
    %c319_505 = arith.constant 319 : index
    %601 = vector.load %arg16[%c0_504, %c319_505] : memref<16x512xf32, #tpu.memory_space<vmem>>, vector<16x16xf32>
    tpu.vector_store %arg16[%c0_504, %c319_505], %600 {strides = array<i32>} : memref<16x512xf32, #tpu.memory_space<vmem>>, vector<16x16xf32>,
    %602 = vector.extract_strided_slice %4 {offsets = [0, 192], sizes = [16, 16], strides = [1, 1]} : vector<16x256xf32> to vector<16x16xf32>
    %c0_506 = arith.constant 0 : index
    %c341_507 = arith.constant 341 : index
    %603 = vector.load %arg16[%c0_506, %c341_507] : memref<16x512xf32, #tpu.memory_space<vmem>>, vector<16x16xf32>
    tpu.vector_store %arg16[%c0_506, %c341_507], %602 {strides = array<i32>} : memref<16x512xf32, #tpu.memory_space<vmem>>, vector<16x16xf32>,
    %604 = vector.extract_strided_slice %4 {offsets = [0, 208], sizes = [16, 16], strides = [1, 1]} : vector<16x256xf32> to vector<16x16xf32>
    %c0_508 = arith.constant 0 : index
    %c363_509 = arith.constant 363 : index
    %605 = vector.load %arg16[%c0_508, %c363_509] : memref<16x512xf32, #tpu.memory_space<vmem>>, vector<16x16xf32>
    tpu.vector_store %arg16[%c0_508, %c363_509], %604 {strides = array<i32>} : memref<16x512xf32, #tpu.memory_space<vmem>>, vector<16x16xf32>,
    %606 = vector.extract_strided_slice %4 {offsets = [0, 224], sizes = [16, 16], strides = [1, 1]} : vector<16x256xf32> to vector<16x16xf32>
    %c0_510 = arith.constant 0 : index
    %c385_511 = arith.constant 385 : index
    %607 = vector.load %arg16[%c0_510, %c385_511] : memref<16x512xf32, #tpu.memory_space<vmem>>, vector<16x16xf32>
    tpu.vector_store %arg16[%c0_510, %c385_511], %606 {strides = array<i32>} : memref<16x512xf32, #tpu.memory_space<vmem>>, vector<16x16xf32>,
    %608 = vector.extract_strided_slice %4 {offsets = [0, 240], sizes = [16, 16], strides = [1, 1]} : vector<16x256xf32> to vector<16x16xf32>
    %c0_512 = arith.constant 0 : index
    %c407_513 = arith.constant 407 : index
    %609 = vector.load %arg16[%c0_512, %c407_513] : memref<16x512xf32, #tpu.memory_space<vmem>>, vector<16x16xf32>
    tpu.vector_store %arg16[%c0_512, %c407_513], %608 {strides = array<i32>} : memref<16x512xf32, #tpu.memory_space<vmem>>, vector<16x16xf32>,
    %610 = vector.extract_strided_slice %4 {offsets = [0, 224], sizes = [16, 16], strides = [1, 1]} : vector<16x256xf32> to vector<16x16xf32>
    %c0_514 = arith.constant 0 : index
    %c429_515 = arith.constant 429 : index
    %611 = vector.load %arg16[%c0_514, %c429_515] : memref<16x512xf32, #tpu.memory_space<vmem>>, vector<16x16xf32>
    tpu.vector_store %arg16[%c0_514, %c429_515], %610 {strides = array<i32>} : memref<16x512xf32, #tpu.memory_space<vmem>>, vector<16x16xf32>,
    %612 = vector.extract_strided_slice %4 {offsets = [0, 208], sizes = [16, 16], strides = [1, 1]} : vector<16x256xf32> to vector<16x16xf32>
    %c0_516 = arith.constant 0 : index
    %c451_517 = arith.constant 451 : index
    %613 = vector.load %arg16[%c0_516, %c451_517] : memref<16x512xf32, #tpu.memory_space<vmem>>, vector<16x16xf32>
    tpu.vector_store %arg16[%c0_516, %c451_517], %612 {strides = array<i32>} : memref<16x512xf32, #tpu.memory_space<vmem>>, vector<16x16xf32>,
    %614 = vector.extract_strided_slice %4 {offsets = [0, 192], sizes = [16, 16], strides = [1, 1]} : vector<16x256xf32> to vector<16x16xf32>
    %c0_518 = arith.constant 0 : index
    %c473_519 = arith.constant 473 : index
    %615 = vector.load %arg16[%c0_518, %c473_519] : memref<16x512xf32, #tpu.memory_space<vmem>>, vector<16x16xf32>
    tpu.vector_store %arg16[%c0_518, %c473_519], %614 {strides = array<i32>} : memref<16x512xf32, #tpu.memory_space<vmem>>, vector<16x16xf32>,
    %c0_520 = arith.constant 0 : index
    %c8_521 = arith.constant 8 : index
    %616 = vector.load %arg16[%c0_520, %c8_521] : memref<16x512xf32, #tpu.memory_space<vmem>>, vector<16x484xf32>
    %617 = vector.shape_cast %5 : vector<1x484xi32> to vector<1x484xi32>
    %618 = vector.broadcast %617 : vector<1x484xi32> to vector<16x484xi32>
    %c0_522 = arith.constant 0 : index
    %c10_523 = arith.constant 10 : index
    %619 = vector.load %arg16[%c0_522, %c10_523] : memref<16x512xf32, #tpu.memory_space<vmem>>, vector<16x484xf32>
    %c0_524 = arith.constant 0 : index
    %c6_525 = arith.constant 6 : index
    %620 = vector.load %arg16[%c0_524, %c6_525] : memref<16x512xf32, #tpu.memory_space<vmem>>, vector<16x484xf32>
    %c2_i32_526 = arith.constant 2 : i32
    %621 = vector.broadcast %c2_i32_526 : i32 to vector<16x484xi32>
    %622 = arith.cmpi eq, %618, %621 : vector<16x484xi32>
    %623 = arith.select %622, %619, %616 : vector<16x484xi1>, vector<16x484xf32>
    %c19_i32_527 = arith.constant 19 : i32
    %624 = vector.broadcast %c19_i32_527 : i32 to vector<16x484xi32>
    %625 = arith.cmpi eq, %618, %624 : vector<16x484xi32>
    %626 = arith.select %625, %620, %623 : vector<16x484xi1>, vector<16x484xf32>
    %c0_528 = arith.constant 0 : index
    %c12_529 = arith.constant 12 : index
    %627 = vector.load %arg16[%c0_528, %c12_529] : memref<16x512xf32, #tpu.memory_space<vmem>>, vector<16x484xf32>
    %c0_530 = arith.constant 0 : index
    %c4_531 = arith.constant 4 : index
    %628 = vector.load %arg16[%c0_530, %c4_531] : memref<16x512xf32, #tpu.memory_space<vmem>>, vector<16x484xf32>
    %c1_i32_532 = arith.constant 1 : i32
    %629 = vector.broadcast %c1_i32_532 : i32 to vector<16x484xi32>
    %630 = arith.cmpi eq, %618, %629 : vector<16x484xi32>
    %631 = arith.select %630, %627, %626 : vector<16x484xi1>, vector<16x484xf32>
    %c20_i32_533 = arith.constant 20 : i32
    %632 = vector.broadcast %c20_i32_533 : i32 to vector<16x484xi32>
    %633 = arith.cmpi eq, %618, %632 : vector<16x484xi32>
    %634 = arith.select %633, %628, %631 : vector<16x484xi1>, vector<16x484xf32>
    %c0_534 = arith.constant 0 : index
    %c14_535 = arith.constant 14 : index
    %635 = vector.load %arg16[%c0_534, %c14_535] : memref<16x512xf32, #tpu.memory_space<vmem>>, vector<16x484xf32>
    %c0_536 = arith.constant 0 : index
    %c2_537 = arith.constant 2 : index
    %636 = vector.load %arg16[%c0_536, %c2_537] : memref<16x512xf32, #tpu.memory_space<vmem>>, vector<16x484xf32>
    %c0_i32_538 = arith.constant 0 : i32
    %637 = vector.broadcast %c0_i32_538 : i32 to vector<16x484xi32>
    %638 = arith.cmpi eq, %618, %637 : vector<16x484xi32>
    %639 = arith.select %638, %635, %634 : vector<16x484xi1>, vector<16x484xf32>
    %c21_i32_539 = arith.constant 21 : i32
    %640 = vector.broadcast %c21_i32_539 : i32 to vector<16x484xi32>
    %641 = arith.cmpi eq, %618, %640 : vector<16x484xi32>
    %642 = arith.select %641, %636, %639 : vector<16x484xi1>, vector<16x484xf32>
    %c0_540 = arith.constant 0 : index
    %c8_541 = arith.constant 8 : index
    %643 = vector.load %arg16[%c0_540, %c8_541] : memref<16x512xf32, #tpu.memory_space<vmem>>, vector<16x484xf32>
    tpu.vector_store %arg16[%c0_540, %c8_541], %642 {strides = array<i32>} : memref<16x512xf32, #tpu.memory_space<vmem>>, vector<16x484xf32>,
    %cst_542 = arith.constant 0.000000e+00 : f32
    %644 = vector.broadcast %cst_542 : f32 to vector<16x352xf32>
    %cst_543 = arith.constant 0.000000e+00 : f32
    %645 = vector.broadcast %cst_543 : f32 to vector<16x352xf32>
    %cst_544 = arith.constant 0.000000e+00 : f32
    %646 = vector.broadcast %cst_544 : f32 to vector<16x352xf32>
    %cst_545 = arith.constant 0.000000e+00 : f32
    %647 = vector.broadcast %cst_545 : f32 to vector<16x352xf32>
    %c0_546 = arith.constant 0 : index
    %c0_547 = arith.constant 0 : index
    %648 = vector.load %arg10[%c0_546, %c0_547] : memref<16x49xf32, #tpu.memory_space<vmem>>, vector<16x1xf32>
    %c0_548 = arith.constant 0 : index
    %c8_549 = arith.constant 8 : index
    %649 = vector.load %arg16[%c0_548, %c8_549] : memref<16x512xf32, #tpu.memory_space<vmem>>, vector<16x352xf32>
    %650 = vector.broadcast %648 : vector<16x1xf32> to vector<16x352xf32>
    %651 = arith.mulf %650, %649 : vector<16x352xf32>
    %652 = arith.addf %644, %651 : vector<16x352xf32>
    %c0_550 = arith.constant 0 : index
    %c1_551 = arith.constant 1 : index
    %653 = vector.load %arg10[%c0_550, %c1_551] : memref<16x49xf32, #tpu.memory_space<vmem>>, vector<16x1xf32>
    %c0_552 = arith.constant 0 : index
    %c9_553 = arith.constant 9 : index
    %654 = vector.load %arg16[%c0_552, %c9_553] : memref<16x512xf32, #tpu.memory_space<vmem>>, vector<16x352xf32>
    %655 = vector.broadcast %653 : vector<16x1xf32> to vector<16x352xf32>
    %656 = arith.mulf %655, %654 : vector<16x352xf32>
    %657 = arith.addf %645, %656 : vector<16x352xf32>
    %c0_554 = arith.constant 0 : index
    %c2_555 = arith.constant 2 : index
    %658 = vector.load %arg10[%c0_554, %c2_555] : memref<16x49xf32, #tpu.memory_space<vmem>>, vector<16x1xf32>
    %c0_556 = arith.constant 0 : index
    %c10_557 = arith.constant 10 : index
    %659 = vector.load %arg16[%c0_556, %c10_557] : memref<16x512xf32, #tpu.memory_space<vmem>>, vector<16x352xf32>
    %660 = vector.broadcast %658 : vector<16x1xf32> to vector<16x352xf32>
    %661 = arith.mulf %660, %659 : vector<16x352xf32>
    %662 = arith.addf %646, %661 : vector<16x352xf32>
    %c0_558 = arith.constant 0 : index
    %c3_559 = arith.constant 3 : index
    %663 = vector.load %arg10[%c0_558, %c3_559] : memref<16x49xf32, #tpu.memory_space<vmem>>, vector<16x1xf32>
    %c0_560 = arith.constant 0 : index
    %c11_561 = arith.constant 11 : index
    %664 = vector.load %arg16[%c0_560, %c11_561] : memref<16x512xf32, #tpu.memory_space<vmem>>, vector<16x352xf32>
    %665 = vector.broadcast %663 : vector<16x1xf32> to vector<16x352xf32>
    %666 = arith.mulf %665, %664 : vector<16x352xf32>
    %667 = arith.addf %647, %666 : vector<16x352xf32>
    %c0_562 = arith.constant 0 : index
    %c4_563 = arith.constant 4 : index
    %668 = vector.load %arg10[%c0_562, %c4_563] : memref<16x49xf32, #tpu.memory_space<vmem>>, vector<16x1xf32>
    %c0_564 = arith.constant 0 : index
    %c12_565 = arith.constant 12 : index
    %669 = vector.load %arg16[%c0_564, %c12_565] : memref<16x512xf32, #tpu.memory_space<vmem>>, vector<16x352xf32>
    %670 = vector.broadcast %668 : vector<16x1xf32> to vector<16x352xf32>
    %671 = arith.mulf %670, %669 : vector<16x352xf32>
    %672 = arith.addf %652, %671 : vector<16x352xf32>
    %c0_566 = arith.constant 0 : index
    %c5_567 = arith.constant 5 : index
    %673 = vector.load %arg10[%c0_566, %c5_567] : memref<16x49xf32, #tpu.memory_space<vmem>>, vector<16x1xf32>
    %c0_568 = arith.constant 0 : index
    %c13_569 = arith.constant 13 : index
    %674 = vector.load %arg16[%c0_568, %c13_569] : memref<16x512xf32, #tpu.memory_space<vmem>>, vector<16x352xf32>
    %675 = vector.broadcast %673 : vector<16x1xf32> to vector<16x352xf32>
    %676 = arith.mulf %675, %674 : vector<16x352xf32>
    %677 = arith.addf %657, %676 : vector<16x352xf32>
    %c0_570 = arith.constant 0 : index
    %c6_571 = arith.constant 6 : index
    %678 = vector.load %arg10[%c0_570, %c6_571] : memref<16x49xf32, #tpu.memory_space<vmem>>, vector<16x1xf32>
    %c0_572 = arith.constant 0 : index
    %c14_573 = arith.constant 14 : index
    %679 = vector.load %arg16[%c0_572, %c14_573] : memref<16x512xf32, #tpu.memory_space<vmem>>, vector<16x352xf32>
    %680 = vector.broadcast %678 : vector<16x1xf32> to vector<16x352xf32>
    %681 = arith.mulf %680, %679 : vector<16x352xf32>
    %682 = arith.addf %662, %681 : vector<16x352xf32>
    %c0_574 = arith.constant 0 : index
    %c7_575 = arith.constant 7 : index
    %683 = vector.load %arg10[%c0_574, %c7_575] : memref<16x49xf32, #tpu.memory_space<vmem>>, vector<16x1xf32>
    %c0_576 = arith.constant 0 : index
    %c30_577 = arith.constant 30 : index
    %684 = vector.load %arg16[%c0_576, %c30_577] : memref<16x512xf32, #tpu.memory_space<vmem>>, vector<16x352xf32>
    %685 = vector.broadcast %683 : vector<16x1xf32> to vector<16x352xf32>
    %686 = arith.mulf %685, %684 : vector<16x352xf32>
    %687 = arith.addf %667, %686 : vector<16x352xf32>
    %c0_578 = arith.constant 0 : index
    %c8_579 = arith.constant 8 : index
    %688 = vector.load %arg10[%c0_578, %c8_579] : memref<16x49xf32, #tpu.memory_space<vmem>>, vector<16x1xf32>
    %c0_580 = arith.constant 0 : index
    %c31_581 = arith.constant 31 : index
    %689 = vector.load %arg16[%c0_580, %c31_581] : memref<16x512xf32, #tpu.memory_space<vmem>>, vector<16x352xf32>
    %690 = vector.broadcast %688 : vector<16x1xf32> to vector<16x352xf32>
    %691 = arith.mulf %690, %689 : vector<16x352xf32>
    %692 = arith.addf %672, %691 : vector<16x352xf32>
    %c0_582 = arith.constant 0 : index
    %c9_583 = arith.constant 9 : index
    %693 = vector.load %arg10[%c0_582, %c9_583] : memref<16x49xf32, #tpu.memory_space<vmem>>, vector<16x1xf32>
    %c0_584 = arith.constant 0 : index
    %c32_585 = arith.constant 32 : index
    %694 = vector.load %arg16[%c0_584, %c32_585] : memref<16x512xf32, #tpu.memory_space<vmem>>, vector<16x352xf32>
    %695 = vector.broadcast %693 : vector<16x1xf32> to vector<16x352xf32>
    %696 = arith.mulf %695, %694 : vector<16x352xf32>
    %697 = arith.addf %677, %696 : vector<16x352xf32>
    %c0_586 = arith.constant 0 : index
    %c10_587 = arith.constant 10 : index
    %698 = vector.load %arg10[%c0_586, %c10_587] : memref<16x49xf32, #tpu.memory_space<vmem>>, vector<16x1xf32>
    %c0_588 = arith.constant 0 : index
    %c33_589 = arith.constant 33 : index
    %699 = vector.load %arg16[%c0_588, %c33_589] : memref<16x512xf32, #tpu.memory_space<vmem>>, vector<16x352xf32>
    %700 = vector.broadcast %698 : vector<16x1xf32> to vector<16x352xf32>
    %701 = arith.mulf %700, %699 : vector<16x352xf32>
    %702 = arith.addf %682, %701 : vector<16x352xf32>
    %c0_590 = arith.constant 0 : index
    %c11_591 = arith.constant 11 : index
    %703 = vector.load %arg10[%c0_590, %c11_591] : memref<16x49xf32, #tpu.memory_space<vmem>>, vector<16x1xf32>
    %c0_592 = arith.constant 0 : index
    %c34_593 = arith.constant 34 : index
    %704 = vector.load %arg16[%c0_592, %c34_593] : memref<16x512xf32, #tpu.memory_space<vmem>>, vector<16x352xf32>
    %705 = vector.broadcast %703 : vector<16x1xf32> to vector<16x352xf32>
    %706 = arith.mulf %705, %704 : vector<16x352xf32>
    %707 = arith.addf %687, %706 : vector<16x352xf32>
    %c0_594 = arith.constant 0 : index
    %c12_595 = arith.constant 12 : index
    %708 = vector.load %arg10[%c0_594, %c12_595] : memref<16x49xf32, #tpu.memory_space<vmem>>, vector<16x1xf32>
    %c0_596 = arith.constant 0 : index
    %c35_597 = arith.constant 35 : index
    %709 = vector.load %arg16[%c0_596, %c35_597] : memref<16x512xf32, #tpu.memory_space<vmem>>, vector<16x352xf32>
    %710 = vector.broadcast %708 : vector<16x1xf32> to vector<16x352xf32>
    %711 = arith.mulf %710, %709 : vector<16x352xf32>
    %712 = arith.addf %692, %711 : vector<16x352xf32>
    %c0_598 = arith.constant 0 : index
    %c13_599 = arith.constant 13 : index
    %713 = vector.load %arg10[%c0_598, %c13_599] : memref<16x49xf32, #tpu.memory_space<vmem>>, vector<16x1xf32>
    %c0_600 = arith.constant 0 : index
    %c36_601 = arith.constant 36 : index
    %714 = vector.load %arg16[%c0_600, %c36_601] : memref<16x512xf32, #tpu.memory_space<vmem>>, vector<16x352xf32>
    %715 = vector.broadcast %713 : vector<16x1xf32> to vector<16x352xf32>
    %716 = arith.mulf %715, %714 : vector<16x352xf32>
    %717 = arith.addf %697, %716 : vector<16x352xf32>
    %c0_602 = arith.constant 0 : index
    %c14_603 = arith.constant 14 : index
    %718 = vector.load %arg10[%c0_602, %c14_603] : memref<16x49xf32, #tpu.memory_space<vmem>>, vector<16x1xf32>
    %c0_604 = arith.constant 0 : index
    %c52_605 = arith.constant 52 : index
    %719 = vector.load %arg16[%c0_604, %c52_605] : memref<16x512xf32, #tpu.memory_space<vmem>>, vector<16x352xf32>
    %720 = vector.broadcast %718 : vector<16x1xf32> to vector<16x352xf32>
    %721 = arith.mulf %720, %719 : vector<16x352xf32>
    %722 = arith.addf %702, %721 : vector<16x352xf32>
    %c0_606 = arith.constant 0 : index
    %c15_607 = arith.constant 15 : index
    %723 = vector.load %arg10[%c0_606, %c15_607] : memref<16x49xf32, #tpu.memory_space<vmem>>, vector<16x1xf32>
    %c0_608 = arith.constant 0 : index
    %c53_609 = arith.constant 53 : index
    %724 = vector.load %arg16[%c0_608, %c53_609] : memref<16x512xf32, #tpu.memory_space<vmem>>, vector<16x352xf32>
    %725 = vector.broadcast %723 : vector<16x1xf32> to vector<16x352xf32>
    %726 = arith.mulf %725, %724 : vector<16x352xf32>
    %727 = arith.addf %707, %726 : vector<16x352xf32>
    %c0_610 = arith.constant 0 : index
    %c16_611 = arith.constant 16 : index
    %728 = vector.load %arg10[%c0_610, %c16_611] : memref<16x49xf32, #tpu.memory_space<vmem>>, vector<16x1xf32>
    %c0_612 = arith.constant 0 : index
    %c54_613 = arith.constant 54 : index
    %729 = vector.load %arg16[%c0_612, %c54_613] : memref<16x512xf32, #tpu.memory_space<vmem>>, vector<16x352xf32>
    %730 = vector.broadcast %728 : vector<16x1xf32> to vector<16x352xf32>
    %731 = arith.mulf %730, %729 : vector<16x352xf32>
    %732 = arith.addf %712, %731 : vector<16x352xf32>
    %c0_614 = arith.constant 0 : index
    %c17_615 = arith.constant 17 : index
    %733 = vector.load %arg10[%c0_614, %c17_615] : memref<16x49xf32, #tpu.memory_space<vmem>>, vector<16x1xf32>
    %c0_616 = arith.constant 0 : index
    %c55_617 = arith.constant 55 : index
    %734 = vector.load %arg16[%c0_616, %c55_617] : memref<16x512xf32, #tpu.memory_space<vmem>>, vector<16x352xf32>
    %735 = vector.broadcast %733 : vector<16x1xf32> to vector<16x352xf32>
    %736 = arith.mulf %735, %734 : vector<16x352xf32>
    %737 = arith.addf %717, %736 : vector<16x352xf32>
    %c0_618 = arith.constant 0 : index
    %c18_619 = arith.constant 18 : index
    %738 = vector.load %arg10[%c0_618, %c18_619] : memref<16x49xf32, #tpu.memory_space<vmem>>, vector<16x1xf32>
    %c0_620 = arith.constant 0 : index
    %c56_621 = arith.constant 56 : index
    %739 = vector.load %arg16[%c0_620, %c56_621] : memref<16x512xf32, #tpu.memory_space<vmem>>, vector<16x352xf32>
    %740 = vector.broadcast %738 : vector<16x1xf32> to vector<16x352xf32>
    %741 = arith.mulf %740, %739 : vector<16x352xf32>
    %742 = arith.addf %722, %741 : vector<16x352xf32>
    %c0_622 = arith.constant 0 : index
    %c19_623 = arith.constant 19 : index
    %743 = vector.load %arg10[%c0_622, %c19_623] : memref<16x49xf32, #tpu.memory_space<vmem>>, vector<16x1xf32>
    %c0_624 = arith.constant 0 : index
    %c57_625 = arith.constant 57 : index
    %744 = vector.load %arg16[%c0_624, %c57_625] : memref<16x512xf32, #tpu.memory_space<vmem>>, vector<16x352xf32>
    %745 = vector.broadcast %743 : vector<16x1xf32> to vector<16x352xf32>
    %746 = arith.mulf %745, %744 : vector<16x352xf32>
    %747 = arith.addf %727, %746 : vector<16x352xf32>
    %c0_626 = arith.constant 0 : index
    %c20_627 = arith.constant 20 : index
    %748 = vector.load %arg10[%c0_626, %c20_627] : memref<16x49xf32, #tpu.memory_space<vmem>>, vector<16x1xf32>
    %c0_628 = arith.constant 0 : index
    %c58_629 = arith.constant 58 : index
    %749 = vector.load %arg16[%c0_628, %c58_629] : memref<16x512xf32, #tpu.memory_space<vmem>>, vector<16x352xf32>
    %750 = vector.broadcast %748 : vector<16x1xf32> to vector<16x352xf32>
    %751 = arith.mulf %750, %749 : vector<16x352xf32>
    %752 = arith.addf %732, %751 : vector<16x352xf32>
    %c0_630 = arith.constant 0 : index
    %c21_631 = arith.constant 21 : index
    %753 = vector.load %arg10[%c0_630, %c21_631] : memref<16x49xf32, #tpu.memory_space<vmem>>, vector<16x1xf32>
    %c0_632 = arith.constant 0 : index
    %c74_633 = arith.constant 74 : index
    %754 = vector.load %arg16[%c0_632, %c74_633] : memref<16x512xf32, #tpu.memory_space<vmem>>, vector<16x352xf32>
    %755 = vector.broadcast %753 : vector<16x1xf32> to vector<16x352xf32>
    %756 = arith.mulf %755, %754 : vector<16x352xf32>
    %757 = arith.addf %737, %756 : vector<16x352xf32>
    %c0_634 = arith.constant 0 : index
    %c22_635 = arith.constant 22 : index
    %758 = vector.load %arg10[%c0_634, %c22_635] : memref<16x49xf32, #tpu.memory_space<vmem>>, vector<16x1xf32>
    %c0_636 = arith.constant 0 : index
    %c75_637 = arith.constant 75 : index
    %759 = vector.load %arg16[%c0_636, %c75_637] : memref<16x512xf32, #tpu.memory_space<vmem>>, vector<16x352xf32>
    %760 = vector.broadcast %758 : vector<16x1xf32> to vector<16x352xf32>
    %761 = arith.mulf %760, %759 : vector<16x352xf32>
    %762 = arith.addf %742, %761 : vector<16x352xf32>
    %c0_638 = arith.constant 0 : index
    %c23_639 = arith.constant 23 : index
    %763 = vector.load %arg10[%c0_638, %c23_639] : memref<16x49xf32, #tpu.memory_space<vmem>>, vector<16x1xf32>
    %c0_640 = arith.constant 0 : index
    %c76_641 = arith.constant 76 : index
    %764 = vector.load %arg16[%c0_640, %c76_641] : memref<16x512xf32, #tpu.memory_space<vmem>>, vector<16x352xf32>
    %765 = vector.broadcast %763 : vector<16x1xf32> to vector<16x352xf32>
    %766 = arith.mulf %765, %764 : vector<16x352xf32>
    %767 = arith.addf %747, %766 : vector<16x352xf32>
    %c0_642 = arith.constant 0 : index
    %c24_643 = arith.constant 24 : index
    %768 = vector.load %arg10[%c0_642, %c24_643] : memref<16x49xf32, #tpu.memory_space<vmem>>, vector<16x1xf32>
    %c0_644 = arith.constant 0 : index
    %c77_645 = arith.constant 77 : index
    %769 = vector.load %arg16[%c0_644, %c77_645] : memref<16x512xf32, #tpu.memory_space<vmem>>, vector<16x352xf32>
    %770 = vector.broadcast %768 : vector<16x1xf32> to vector<16x352xf32>
    %771 = arith.mulf %770, %769 : vector<16x352xf32>
    %772 = arith.addf %752, %771 : vector<16x352xf32>
    %c0_646 = arith.constant 0 : index
    %c25_647 = arith.constant 25 : index
    %773 = vector.load %arg10[%c0_646, %c25_647] : memref<16x49xf32, #tpu.memory_space<vmem>>, vector<16x1xf32>
    %c0_648 = arith.constant 0 : index
    %c78_649 = arith.constant 78 : index
    %774 = vector.load %arg16[%c0_648, %c78_649] : memref<16x512xf32, #tpu.memory_space<vmem>>, vector<16x352xf32>
    %775 = vector.broadcast %773 : vector<16x1xf32> to vector<16x352xf32>
    %776 = arith.mulf %775, %774 : vector<16x352xf32>
    %777 = arith.addf %757, %776 : vector<16x352xf32>
    %c0_650 = arith.constant 0 : index
    %c26_651 = arith.constant 26 : index
    %778 = vector.load %arg10[%c0_650, %c26_651] : memref<16x49xf32, #tpu.memory_space<vmem>>, vector<16x1xf32>
    %c0_652 = arith.constant 0 : index
    %c79_653 = arith.constant 79 : index
    %779 = vector.load %arg16[%c0_652, %c79_653] : memref<16x512xf32, #tpu.memory_space<vmem>>, vector<16x352xf32>
    %780 = vector.broadcast %778 : vector<16x1xf32> to vector<16x352xf32>
    %781 = arith.mulf %780, %779 : vector<16x352xf32>
    %782 = arith.addf %762, %781 : vector<16x352xf32>
    %c0_654 = arith.constant 0 : index
    %c27_655 = arith.constant 27 : index
    %783 = vector.load %arg10[%c0_654, %c27_655] : memref<16x49xf32, #tpu.memory_space<vmem>>, vector<16x1xf32>
    %c0_656 = arith.constant 0 : index
    %c80_657 = arith.constant 80 : index
    %784 = vector.load %arg16[%c0_656, %c80_657] : memref<16x512xf32, #tpu.memory_space<vmem>>, vector<16x352xf32>
    %785 = vector.broadcast %783 : vector<16x1xf32> to vector<16x352xf32>
    %786 = arith.mulf %785, %784 : vector<16x352xf32>
    %787 = arith.addf %767, %786 : vector<16x352xf32>
    %c0_658 = arith.constant 0 : index
    %c28_659 = arith.constant 28 : index
    %788 = vector.load %arg10[%c0_658, %c28_659] : memref<16x49xf32, #tpu.memory_space<vmem>>, vector<16x1xf32>
    %c0_660 = arith.constant 0 : index
    %c96_661 = arith.constant 96 : index
    %789 = vector.load %arg16[%c0_660, %c96_661] : memref<16x512xf32, #tpu.memory_space<vmem>>, vector<16x352xf32>
    %790 = vector.broadcast %788 : vector<16x1xf32> to vector<16x352xf32>
    %791 = arith.mulf %790, %789 : vector<16x352xf32>
    %792 = arith.addf %772, %791 : vector<16x352xf32>
    %c0_662 = arith.constant 0 : index
    %c29_663 = arith.constant 29 : index
    %793 = vector.load %arg10[%c0_662, %c29_663] : memref<16x49xf32, #tpu.memory_space<vmem>>, vector<16x1xf32>
    %c0_664 = arith.constant 0 : index
    %c97_665 = arith.constant 97 : index
    %794 = vector.load %arg16[%c0_664, %c97_665] : memref<16x512xf32, #tpu.memory_space<vmem>>, vector<16x352xf32>
    %795 = vector.broadcast %793 : vector<16x1xf32> to vector<16x352xf32>
    %796 = arith.mulf %795, %794 : vector<16x352xf32>
    %797 = arith.addf %777, %796 : vector<16x352xf32>
    %c0_666 = arith.constant 0 : index
    %c30_667 = arith.constant 30 : index
    %798 = vector.load %arg10[%c0_666, %c30_667] : memref<16x49xf32, #tpu.memory_space<vmem>>, vector<16x1xf32>
    %c0_668 = arith.constant 0 : index
    %c98_669 = arith.constant 98 : index
    %799 = vector.load %arg16[%c0_668, %c98_669] : memref<16x512xf32, #tpu.memory_space<vmem>>, vector<16x352xf32>
    %800 = vector.broadcast %798 : vector<16x1xf32> to vector<16x352xf32>
    %801 = arith.mulf %800, %799 : vector<16x352xf32>
    %802 = arith.addf %782, %801 : vector<16x352xf32>
    %c0_670 = arith.constant 0 : index
    %c31_671 = arith.constant 31 : index
    %803 = vector.load %arg10[%c0_670, %c31_671] : memref<16x49xf32, #tpu.memory_space<vmem>>, vector<16x1xf32>
    %c0_672 = arith.constant 0 : index
    %c99_673 = arith.constant 99 : index
    %804 = vector.load %arg16[%c0_672, %c99_673] : memref<16x512xf32, #tpu.memory_space<vmem>>, vector<16x352xf32>
    %805 = vector.broadcast %803 : vector<16x1xf32> to vector<16x352xf32>
    %806 = arith.mulf %805, %804 : vector<16x352xf32>
    %807 = arith.addf %787, %806 : vector<16x352xf32>
    %c0_674 = arith.constant 0 : index
    %c32_675 = arith.constant 32 : index
    %808 = vector.load %arg10[%c0_674, %c32_675] : memref<16x49xf32, #tpu.memory_space<vmem>>, vector<16x1xf32>
    %c0_676 = arith.constant 0 : index
    %c100_677 = arith.constant 100 : index
    %809 = vector.load %arg16[%c0_676, %c100_677] : memref<16x512xf32, #tpu.memory_space<vmem>>, vector<16x352xf32>
    %810 = vector.broadcast %808 : vector<16x1xf32> to vector<16x352xf32>
    %811 = arith.mulf %810, %809 : vector<16x352xf32>
    %812 = arith.addf %792, %811 : vector<16x352xf32>
    %c0_678 = arith.constant 0 : index
    %c33_679 = arith.constant 33 : index
    %813 = vector.load %arg10[%c0_678, %c33_679] : memref<16x49xf32, #tpu.memory_space<vmem>>, vector<16x1xf32>
    %c0_680 = arith.constant 0 : index
    %c101_681 = arith.constant 101 : index
    %814 = vector.load %arg16[%c0_680, %c101_681] : memref<16x512xf32, #tpu.memory_space<vmem>>, vector<16x352xf32>
    %815 = vector.broadcast %813 : vector<16x1xf32> to vector<16x352xf32>
    %816 = arith.mulf %815, %814 : vector<16x352xf32>
    %817 = arith.addf %797, %816 : vector<16x352xf32>
    %c0_682 = arith.constant 0 : index
    %c34_683 = arith.constant 34 : index
    %818 = vector.load %arg10[%c0_682, %c34_683] : memref<16x49xf32, #tpu.memory_space<vmem>>, vector<16x1xf32>
    %c0_684 = arith.constant 0 : index
    %c102_685 = arith.constant 102 : index
    %819 = vector.load %arg16[%c0_684, %c102_685] : memref<16x512xf32, #tpu.memory_space<vmem>>, vector<16x352xf32>
    %820 = vector.broadcast %818 : vector<16x1xf32> to vector<16x352xf32>
    %821 = arith.mulf %820, %819 : vector<16x352xf32>
    %822 = arith.addf %802, %821 : vector<16x352xf32>
    %c0_686 = arith.constant 0 : index
    %c35_687 = arith.constant 35 : index
    %823 = vector.load %arg10[%c0_686, %c35_687] : memref<16x49xf32, #tpu.memory_space<vmem>>, vector<16x1xf32>
    %c0_688 = arith.constant 0 : index
    %c118_689 = arith.constant 118 : index
    %824 = vector.load %arg16[%c0_688, %c118_689] : memref<16x512xf32, #tpu.memory_space<vmem>>, vector<16x352xf32>
    %825 = vector.broadcast %823 : vector<16x1xf32> to vector<16x352xf32>
    %826 = arith.mulf %825, %824 : vector<16x352xf32>
    %827 = arith.addf %807, %826 : vector<16x352xf32>
    %c0_690 = arith.constant 0 : index
    %c36_691 = arith.constant 36 : index
    %828 = vector.load %arg10[%c0_690, %c36_691] : memref<16x49xf32, #tpu.memory_space<vmem>>, vector<16x1xf32>
    %c0_692 = arith.constant 0 : index
    %c119_693 = arith.constant 119 : index
    %829 = vector.load %arg16[%c0_692, %c119_693] : memref<16x512xf32, #tpu.memory_space<vmem>>, vector<16x352xf32>
    %830 = vector.broadcast %828 : vector<16x1xf32> to vector<16x352xf32>
    %831 = arith.mulf %830, %829 : vector<16x352xf32>
    %832 = arith.addf %812, %831 : vector<16x352xf32>
    %c0_694 = arith.constant 0 : index
    %c37_695 = arith.constant 37 : index
    %833 = vector.load %arg10[%c0_694, %c37_695] : memref<16x49xf32, #tpu.memory_space<vmem>>, vector<16x1xf32>
    %c0_696 = arith.constant 0 : index
    %c120_697 = arith.constant 120 : index
    %834 = vector.load %arg16[%c0_696, %c120_697] : memref<16x512xf32, #tpu.memory_space<vmem>>, vector<16x352xf32>
    %835 = vector.broadcast %833 : vector<16x1xf32> to vector<16x352xf32>
    %836 = arith.mulf %835, %834 : vector<16x352xf32>
    %837 = arith.addf %817, %836 : vector<16x352xf32>
    %c0_698 = arith.constant 0 : index
    %c38_699 = arith.constant 38 : index
    %838 = vector.load %arg10[%c0_698, %c38_699] : memref<16x49xf32, #tpu.memory_space<vmem>>, vector<16x1xf32>
    %c0_700 = arith.constant 0 : index
    %c121_701 = arith.constant 121 : index
    %839 = vector.load %arg16[%c0_700, %c121_701] : memref<16x512xf32, #tpu.memory_space<vmem>>, vector<16x352xf32>
    %840 = vector.broadcast %838 : vector<16x1xf32> to vector<16x352xf32>
    %841 = arith.mulf %840, %839 : vector<16x352xf32>
    %842 = arith.addf %822, %841 : vector<16x352xf32>
    %c0_702 = arith.constant 0 : index
    %c39_703 = arith.constant 39 : index
    %843 = vector.load %arg10[%c0_702, %c39_703] : memref<16x49xf32, #tpu.memory_space<vmem>>, vector<16x1xf32>
    %c0_704 = arith.constant 0 : index
    %c122_705 = arith.constant 122 : index
    %844 = vector.load %arg16[%c0_704, %c122_705] : memref<16x512xf32, #tpu.memory_space<vmem>>, vector<16x352xf32>
    %845 = vector.broadcast %843 : vector<16x1xf32> to vector<16x352xf32>
    %846 = arith.mulf %845, %844 : vector<16x352xf32>
    %847 = arith.addf %827, %846 : vector<16x352xf32>
    %c0_706 = arith.constant 0 : index
    %c40_707 = arith.constant 40 : index
    %848 = vector.load %arg10[%c0_706, %c40_707] : memref<16x49xf32, #tpu.memory_space<vmem>>, vector<16x1xf32>
    %c0_708 = arith.constant 0 : index
    %c123_709 = arith.constant 123 : index
    %849 = vector.load %arg16[%c0_708, %c123_709] : memref<16x512xf32, #tpu.memory_space<vmem>>, vector<16x352xf32>
    %850 = vector.broadcast %848 : vector<16x1xf32> to vector<16x352xf32>
    %851 = arith.mulf %850, %849 : vector<16x352xf32>
    %852 = arith.addf %832, %851 : vector<16x352xf32>
    %c0_710 = arith.constant 0 : index
    %c41_711 = arith.constant 41 : index
    %853 = vector.load %arg10[%c0_710, %c41_711] : memref<16x49xf32, #tpu.memory_space<vmem>>, vector<16x1xf32>
    %c0_712 = arith.constant 0 : index
    %c124_713 = arith.constant 124 : index
    %854 = vector.load %arg16[%c0_712, %c124_713] : memref<16x512xf32, #tpu.memory_space<vmem>>, vector<16x352xf32>
    %855 = vector.broadcast %853 : vector<16x1xf32> to vector<16x352xf32>
    %856 = arith.mulf %855, %854 : vector<16x352xf32>
    %857 = arith.addf %837, %856 : vector<16x352xf32>
    %c0_714 = arith.constant 0 : index
    %c42_715 = arith.constant 42 : index
    %858 = vector.load %arg10[%c0_714, %c42_715] : memref<16x49xf32, #tpu.memory_space<vmem>>, vector<16x1xf32>
    %c0_716 = arith.constant 0 : index
    %c140_717 = arith.constant 140 : index
    %859 = vector.load %arg16[%c0_716, %c140_717] : memref<16x512xf32, #tpu.memory_space<vmem>>, vector<16x352xf32>
    %860 = vector.broadcast %858 : vector<16x1xf32> to vector<16x352xf32>
    %861 = arith.mulf %860, %859 : vector<16x352xf32>
    %862 = arith.addf %842, %861 : vector<16x352xf32>
    %c0_718 = arith.constant 0 : index
    %c43_719 = arith.constant 43 : index
    %863 = vector.load %arg10[%c0_718, %c43_719] : memref<16x49xf32, #tpu.memory_space<vmem>>, vector<16x1xf32>
    %c0_720 = arith.constant 0 : index
    %c141_721 = arith.constant 141 : index
    %864 = vector.load %arg16[%c0_720, %c141_721] : memref<16x512xf32, #tpu.memory_space<vmem>>, vector<16x352xf32>
    %865 = vector.broadcast %863 : vector<16x1xf32> to vector<16x352xf32>
    %866 = arith.mulf %865, %864 : vector<16x352xf32>
    %867 = arith.addf %847, %866 : vector<16x352xf32>
    %c0_722 = arith.constant 0 : index
    %c44_723 = arith.constant 44 : index
    %868 = vector.load %arg10[%c0_722, %c44_723] : memref<16x49xf32, #tpu.memory_space<vmem>>, vector<16x1xf32>
    %c0_724 = arith.constant 0 : index
    %c142_725 = arith.constant 142 : index
    %869 = vector.load %arg16[%c0_724, %c142_725] : memref<16x512xf32, #tpu.memory_space<vmem>>, vector<16x352xf32>
    %870 = vector.broadcast %868 : vector<16x1xf32> to vector<16x352xf32>
    %871 = arith.mulf %870, %869 : vector<16x352xf32>
    %872 = arith.addf %852, %871 : vector<16x352xf32>
    %c0_726 = arith.constant 0 : index
    %c45_727 = arith.constant 45 : index
    %873 = vector.load %arg10[%c0_726, %c45_727] : memref<16x49xf32, #tpu.memory_space<vmem>>, vector<16x1xf32>
    %c0_728 = arith.constant 0 : index
    %c143_729 = arith.constant 143 : index
    %874 = vector.load %arg16[%c0_728, %c143_729] : memref<16x512xf32, #tpu.memory_space<vmem>>, vector<16x352xf32>
    %875 = vector.broadcast %873 : vector<16x1xf32> to vector<16x352xf32>
    %876 = arith.mulf %875, %874 : vector<16x352xf32>
    %877 = arith.addf %857, %876 : vector<16x352xf32>
    %c0_730 = arith.constant 0 : index
    %c46_731 = arith.constant 46 : index
    %878 = vector.load %arg10[%c0_730, %c46_731] : memref<16x49xf32, #tpu.memory_space<vmem>>, vector<16x1xf32>
    %c0_732 = arith.constant 0 : index
    %c144_733 = arith.constant 144 : index
    %879 = vector.load %arg16[%c0_732, %c144_733] : memref<16x512xf32, #tpu.memory_space<vmem>>, vector<16x352xf32>
    %880 = vector.broadcast %878 : vector<16x1xf32> to vector<16x352xf32>
    %881 = arith.mulf %880, %879 : vector<16x352xf32>
    %882 = arith.addf %862, %881 : vector<16x352xf32>
    %c0_734 = arith.constant 0 : index
    %c47_735 = arith.constant 47 : index
    %883 = vector.load %arg10[%c0_734, %c47_735] : memref<16x49xf32, #tpu.memory_space<vmem>>, vector<16x1xf32>
    %c0_736 = arith.constant 0 : index
    %c145_737 = arith.constant 145 : index
    %884 = vector.load %arg16[%c0_736, %c145_737] : memref<16x512xf32, #tpu.memory_space<vmem>>, vector<16x352xf32>
    %885 = vector.broadcast %883 : vector<16x1xf32> to vector<16x352xf32>
    %886 = arith.mulf %885, %884 : vector<16x352xf32>
    %887 = arith.addf %867, %886 : vector<16x352xf32>
    %c0_738 = arith.constant 0 : index
    %c48_739 = arith.constant 48 : index
    %888 = vector.load %arg10[%c0_738, %c48_739] : memref<16x49xf32, #tpu.memory_space<vmem>>, vector<16x1xf32>
    %c0_740 = arith.constant 0 : index
    %c146_741 = arith.constant 146 : index
    %889 = vector.load %arg16[%c0_740, %c146_741] : memref<16x512xf32, #tpu.memory_space<vmem>>, vector<16x352xf32>
    %890 = vector.broadcast %888 : vector<16x1xf32> to vector<16x352xf32>
    %891 = arith.mulf %890, %889 : vector<16x352xf32>
    %892 = arith.addf %872, %891 : vector<16x352xf32>
    %893 = arith.addf %892, %877 : vector<16x352xf32>
    %894 = arith.addf %882, %887 : vector<16x352xf32>
    %895 = arith.addf %893, %894 : vector<16x352xf32>
    %896 = arith.addf %895, %571 : vector<16x352xf32>
    %c0_742 = arith.constant 0 : index
    %c0_743 = arith.constant 0 : index
    %897 = vector.load %arg12[%c0_742, %c0_743] : memref<16x1xf32, #tpu.memory_space<vmem>>, vector<16x1xf32>
    %898 = vector.broadcast %897 : vector<16x1xf32> to vector<16x352xf32>
    %899 = arith.addf %896, %898 : vector<16x352xf32>
    %900 = arith.negf %899 : vector<16x352xf32>
    %901 = math.exp %900 : vector<16x352xf32>
    %cst_744 = arith.constant 1.000000e+00 : f32
    %902 = vector.broadcast %cst_744 : f32 to vector<16x352xf32>
    %903 = arith.addf %902, %901 : vector<16x352xf32>
    %904 = arith.divf %902, %903 : vector<16x352xf32>
    %905 = arith.negf %904 : vector<16x352xf32>
    %906 = math.exp %905 : vector<16x352xf32>
    %cst_745 = arith.constant 1.000000e+00 : f32
    %907 = vector.broadcast %cst_745 : f32 to vector<16x352xf32>
    %908 = arith.addf %907, %906 : vector<16x352xf32>
    %909 = arith.divf %907, %908 : vector<16x352xf32>
    %c0_746 = arith.constant 0 : index
    %c0_747 = arith.constant 0 : index
    %910 = vector.load %arg20[%c0_746, %c0_747] : memref<16x352xf32, #tpu.memory_space<vmem>>, vector<16x352xf32>
    tpu.vector_store %arg20[%c0_746, %c0_747], %909 {strides = array<i32>} : memref<16x352xf32, #tpu.memory_space<vmem>>, vector<16x352xf32>,
    %c0_748 = arith.constant 0 : index
    %c0_749 = arith.constant 0 : index
    %911 = vector.load %arg20[%c0_748, %c0_749] : memref<16x352xf32, #tpu.memory_space<vmem>>, vector<16x16xf32>
    %c0_750 = arith.constant 0 : index
    %c0_751 = arith.constant 0 : index
    %912 = vector.load %arg21[%c0_750, %c0_751] : memref<16x256xf32, #tpu.memory_space<vmem>>, vector<16x16xf32>
    tpu.vector_store %arg21[%c0_750, %c0_751], %911 {strides = array<i32>} : memref<16x256xf32, #tpu.memory_space<vmem>>, vector<16x16xf32>,
    %c0_752 = arith.constant 0 : index
    %c22_753 = arith.constant 22 : index
    %913 = vector.load %arg20[%c0_752, %c22_753] : memref<16x352xf32, #tpu.memory_space<vmem>>, vector<16x16xf32>
    %c0_754 = arith.constant 0 : index
    %c16_755 = arith.constant 16 : index
    %914 = vector.load %arg21[%c0_754, %c16_755] : memref<16x256xf32, #tpu.memory_space<vmem>>, vector<16x16xf32>
    tpu.vector_store %arg21[%c0_754, %c16_755], %913 {strides = array<i32>} : memref<16x256xf32, #tpu.memory_space<vmem>>, vector<16x16xf32>,
    %c0_756 = arith.constant 0 : index
    %c44_757 = arith.constant 44 : index
    %915 = vector.load %arg20[%c0_756, %c44_757] : memref<16x352xf32, #tpu.memory_space<vmem>>, vector<16x16xf32>
    %c0_758 = arith.constant 0 : index
    %c32_759 = arith.constant 32 : index
    %916 = vector.load %arg21[%c0_758, %c32_759] : memref<16x256xf32, #tpu.memory_space<vmem>>, vector<16x16xf32>
    tpu.vector_store %arg21[%c0_758, %c32_759], %915 {strides = array<i32>} : memref<16x256xf32, #tpu.memory_space<vmem>>, vector<16x16xf32>,
    %c0_760 = arith.constant 0 : index
    %c66 = arith.constant 66 : index
    %917 = vector.load %arg20[%c0_760, %c66] : memref<16x352xf32, #tpu.memory_space<vmem>>, vector<16x16xf32>
    %c0_761 = arith.constant 0 : index
    %c48_762 = arith.constant 48 : index
    %918 = vector.load %arg21[%c0_761, %c48_762] : memref<16x256xf32, #tpu.memory_space<vmem>>, vector<16x16xf32>
    tpu.vector_store %arg21[%c0_761, %c48_762], %917 {strides = array<i32>} : memref<16x256xf32, #tpu.memory_space<vmem>>, vector<16x16xf32>,
    %c0_763 = arith.constant 0 : index
    %c88 = arith.constant 88 : index
    %919 = vector.load %arg20[%c0_763, %c88] : memref<16x352xf32, #tpu.memory_space<vmem>>, vector<16x16xf32>
    %c0_764 = arith.constant 0 : index
    %c64 = arith.constant 64 : index
    %920 = vector.load %arg21[%c0_764, %c64] : memref<16x256xf32, #tpu.memory_space<vmem>>, vector<16x16xf32>
    tpu.vector_store %arg21[%c0_764, %c64], %919 {strides = array<i32>} : memref<16x256xf32, #tpu.memory_space<vmem>>, vector<16x16xf32>,
    %c0_765 = arith.constant 0 : index
    %c110 = arith.constant 110 : index
    %921 = vector.load %arg20[%c0_765, %c110] : memref<16x352xf32, #tpu.memory_space<vmem>>, vector<16x16xf32>
    %c0_766 = arith.constant 0 : index
    %c80_767 = arith.constant 80 : index
    %922 = vector.load %arg21[%c0_766, %c80_767] : memref<16x256xf32, #tpu.memory_space<vmem>>, vector<16x16xf32>
    tpu.vector_store %arg21[%c0_766, %c80_767], %921 {strides = array<i32>} : memref<16x256xf32, #tpu.memory_space<vmem>>, vector<16x16xf32>,
    %c0_768 = arith.constant 0 : index
    %c132 = arith.constant 132 : index
    %923 = vector.load %arg20[%c0_768, %c132] : memref<16x352xf32, #tpu.memory_space<vmem>>, vector<16x16xf32>
    %c0_769 = arith.constant 0 : index
    %c96_770 = arith.constant 96 : index
    %924 = vector.load %arg21[%c0_769, %c96_770] : memref<16x256xf32, #tpu.memory_space<vmem>>, vector<16x16xf32>
    tpu.vector_store %arg21[%c0_769, %c96_770], %923 {strides = array<i32>} : memref<16x256xf32, #tpu.memory_space<vmem>>, vector<16x16xf32>,
    %c0_771 = arith.constant 0 : index
    %c154 = arith.constant 154 : index
    %925 = vector.load %arg20[%c0_771, %c154] : memref<16x352xf32, #tpu.memory_space<vmem>>, vector<16x16xf32>
    %c0_772 = arith.constant 0 : index
    %c112 = arith.constant 112 : index
    %926 = vector.load %arg21[%c0_772, %c112] : memref<16x256xf32, #tpu.memory_space<vmem>>, vector<16x16xf32>
    tpu.vector_store %arg21[%c0_772, %c112], %925 {strides = array<i32>} : memref<16x256xf32, #tpu.memory_space<vmem>>, vector<16x16xf32>,
    %c0_773 = arith.constant 0 : index
    %c176 = arith.constant 176 : index
    %927 = vector.load %arg20[%c0_773, %c176] : memref<16x352xf32, #tpu.memory_space<vmem>>, vector<16x16xf32>
    %c0_774 = arith.constant 0 : index
    %c128 = arith.constant 128 : index
    %928 = vector.load %arg21[%c0_774, %c128] : memref<16x256xf32, #tpu.memory_space<vmem>>, vector<16x16xf32>
    tpu.vector_store %arg21[%c0_774, %c128], %927 {strides = array<i32>} : memref<16x256xf32, #tpu.memory_space<vmem>>, vector<16x16xf32>,
    %c0_775 = arith.constant 0 : index
    %c198 = arith.constant 198 : index
    %929 = vector.load %arg20[%c0_775, %c198] : memref<16x352xf32, #tpu.memory_space<vmem>>, vector<16x16xf32>
    %c0_776 = arith.constant 0 : index
    %c144_777 = arith.constant 144 : index
    %930 = vector.load %arg21[%c0_776, %c144_777] : memref<16x256xf32, #tpu.memory_space<vmem>>, vector<16x16xf32>
    tpu.vector_store %arg21[%c0_776, %c144_777], %929 {strides = array<i32>} : memref<16x256xf32, #tpu.memory_space<vmem>>, vector<16x16xf32>,
    %c0_778 = arith.constant 0 : index
    %c220 = arith.constant 220 : index
    %931 = vector.load %arg20[%c0_778, %c220] : memref<16x352xf32, #tpu.memory_space<vmem>>, vector<16x16xf32>
    %c0_779 = arith.constant 0 : index
    %c160 = arith.constant 160 : index
    %932 = vector.load %arg21[%c0_779, %c160] : memref<16x256xf32, #tpu.memory_space<vmem>>, vector<16x16xf32>
    tpu.vector_store %arg21[%c0_779, %c160], %931 {strides = array<i32>} : memref<16x256xf32, #tpu.memory_space<vmem>>, vector<16x16xf32>,
    %c0_780 = arith.constant 0 : index
    %c242 = arith.constant 242 : index
    %933 = vector.load %arg20[%c0_780, %c242] : memref<16x352xf32, #tpu.memory_space<vmem>>, vector<16x16xf32>
    %c0_781 = arith.constant 0 : index
    %c176_782 = arith.constant 176 : index
    %934 = vector.load %arg21[%c0_781, %c176_782] : memref<16x256xf32, #tpu.memory_space<vmem>>, vector<16x16xf32>
    tpu.vector_store %arg21[%c0_781, %c176_782], %933 {strides = array<i32>} : memref<16x256xf32, #tpu.memory_space<vmem>>, vector<16x16xf32>,
    %c0_783 = arith.constant 0 : index
    %c264 = arith.constant 264 : index
    %935 = vector.load %arg20[%c0_783, %c264] : memref<16x352xf32, #tpu.memory_space<vmem>>, vector<16x16xf32>
    %c0_784 = arith.constant 0 : index
    %c192 = arith.constant 192 : index
    %936 = vector.load %arg21[%c0_784, %c192] : memref<16x256xf32, #tpu.memory_space<vmem>>, vector<16x16xf32>
    tpu.vector_store %arg21[%c0_784, %c192], %935 {strides = array<i32>} : memref<16x256xf32, #tpu.memory_space<vmem>>, vector<16x16xf32>,
    %c0_785 = arith.constant 0 : index
    %c286 = arith.constant 286 : index
    %937 = vector.load %arg20[%c0_785, %c286] : memref<16x352xf32, #tpu.memory_space<vmem>>, vector<16x16xf32>
    %c0_786 = arith.constant 0 : index
    %c208 = arith.constant 208 : index
    %938 = vector.load %arg21[%c0_786, %c208] : memref<16x256xf32, #tpu.memory_space<vmem>>, vector<16x16xf32>
    tpu.vector_store %arg21[%c0_786, %c208], %937 {strides = array<i32>} : memref<16x256xf32, #tpu.memory_space<vmem>>, vector<16x16xf32>,
    %c0_787 = arith.constant 0 : index
    %c308 = arith.constant 308 : index
    %939 = vector.load %arg20[%c0_787, %c308] : memref<16x352xf32, #tpu.memory_space<vmem>>, vector<16x16xf32>
    %c0_788 = arith.constant 0 : index
    %c224 = arith.constant 224 : index
    %940 = vector.load %arg21[%c0_788, %c224] : memref<16x256xf32, #tpu.memory_space<vmem>>, vector<16x16xf32>
    tpu.vector_store %arg21[%c0_788, %c224], %939 {strides = array<i32>} : memref<16x256xf32, #tpu.memory_space<vmem>>, vector<16x16xf32>,
    %c0_789 = arith.constant 0 : index
    %c330 = arith.constant 330 : index
    %941 = vector.load %arg20[%c0_789, %c330] : memref<16x352xf32, #tpu.memory_space<vmem>>, vector<16x16xf32>
    %c0_790 = arith.constant 0 : index
    %c240 = arith.constant 240 : index
    %942 = vector.load %arg21[%c0_790, %c240] : memref<16x256xf32, #tpu.memory_space<vmem>>, vector<16x16xf32>
    tpu.vector_store %arg21[%c0_790, %c240], %941 {strides = array<i32>} : memref<16x256xf32, #tpu.memory_space<vmem>>, vector<16x16xf32>,
    %c0_791 = arith.constant 0 : index
    %c0_792 = arith.constant 0 : index
    %943 = vector.load %arg21[%c0_791, %c0_792] : memref<16x256xf32, #tpu.memory_space<vmem>>, vector<16x256xf32>
    %944 = arith.mulf %943, %1 : vector<16x256xf32>
    %945 = arith.addf %4, %944 : vector<16x256xf32>
    %cst_793 = arith.constant 1.000000e+00 : f32
    %946 = vector.broadcast %cst_793 : f32 to vector<16x256xf32>
    %947 = arith.subf %946, %943 : vector<16x256xf32>
    %948 = arith.mulf %947, %3 : vector<16x256xf32>
    %949 = arith.addf %945, %948 : vector<16x256xf32>
    %c0_794 = arith.constant 0 : index
    %c0_795 = arith.constant 0 : index
    %950 = vector.load %arg13[%c0_794, %c0_795] : memref<16x16xf32, #tpu.memory_space<vmem>>, vector<16x16xf32>
    %cst_796 = arith.constant dense<0.000000e+00> : vector<16x256xf32>
    %951 = tpu.matmul %950, %949, %cst_796 {dimension_numbers = #tpu.dot_dimension_numbers<[1], [0], [0], [1], [0, 0, 1, 1], [], []>} : vector<16x16xf32>, vector<16x256xf32>, vector<16x256xf32> -> vector<16x256xf32>
    %c0_797 = arith.constant 0 : index
    %c0_798 = arith.constant 0 : index
    %952 = vector.load %arg14[%c0_797, %c0_798] : memref<16x1xf32, #tpu.memory_space<vmem>>, vector<16x1xf32>
    %953 = vector.broadcast %952 : vector<16x1xf32> to vector<16x256xf32>
    %954 = arith.addf %951, %953 : vector<16x256xf32>
    %c0_799 = arith.constant 0 : index
    %c0_800 = arith.constant 0 : index
    %c0_801 = arith.constant 0 : index
    %955 = vector.load %arg15[%c0_799, %c0_800, %c0_801] : memref<1x16x256xf32, #tpu.memory_space<vmem>>, vector<1x16x256xf32>
    %956 = vector.shape_cast %955 : vector<1x16x256xf32> to vector<16x256xf32>
    %957 = vector.shape_cast %954 : vector<16x256xf32> to vector<1x16x256xf32>
    tpu.vector_store %arg15[%c0_799, %c0_800, %c0_801], %957 {strides = array<i32>} : memref<1x16x256xf32, #tpu.memory_space<vmem>>, vector<1x16x256xf32>,
    return
  }
  func.func @transform_0(%arg0: i32) -> (i32, i32, i32) {
    %c0_i32 = arith.constant 0 : i32
    %c0_i32_0 = arith.constant 0 : i32
    %c0_i32_1 = arith.constant 0 : i32
    return %arg0, %c0_i32, %c0_i32_0 : i32, i32, i32
  }
  func.func @transform_1(%arg0: i32) -> (i32, i32, i32) {
    %c0_i32 = arith.constant 0 : i32
    %c0_i32_0 = arith.constant 0 : i32
    %c0_i32_1 = arith.constant 0 : i32
    return %arg0, %c0_i32, %c0_i32_0 : i32, i32, i32
  }
  func.func @transform_2(%arg0: i32) -> (i32, i32) {
    %c0_i32 = arith.constant 0 : i32
    %c0_i32_0 = arith.constant 0 : i32
    %c0_i32_1 = arith.constant 0 : i32
    return %c0_i32, %c0_i32_0 : i32, i32
  }
  func.func @transform_3(%arg0: i32) -> (i32, i32) {
    %c0_i32 = arith.constant 0 : i32
    %c0_i32_0 = arith.constant 0 : i32
    %c0_i32_1 = arith.constant 0 : i32
    return %c0_i32, %c0_i32_0 : i32, i32
  }
  func.func @transform_4(%arg0: i32) -> (i32, i32) {
    %c0_i32 = arith.constant 0 : i32
    %c0_i32_0 = arith.constant 0 : i32
    %c0_i32_1 = arith.constant 0 : i32
    return %c0_i32, %c0_i32_0 : i32, i32
  }
  func.func @transform_5(%arg0: i32) -> (i32, i32) {
    %c0_i32 = arith.constant 0 : i32
    %c0_i32_0 = arith.constant 0 : i32
    %c0_i32_1 = arith.constant 0 : i32
    return %c0_i32, %c0_i32_0 : i32, i32
  }
  func.func @transform_6(%arg0: i32) -> (i32, i32) {
    %c0_i32 = arith.constant 0 : i32
    %c0_i32_0 = arith.constant 0 : i32
    %c0_i32_1 = arith.constant 0 : i32
    return %c0_i32, %c0_i32_0 : i32, i32
  }
  func.func @transform_7(%arg0: i32) -> (i32, i32) {
    %c0_i32 = arith.constant 0 : i32
    %c0_i32_0 = arith.constant 0 : i32
    %c0_i32_1 = arith.constant 0 : i32
    return %c0_i32, %c0_i32_0 : i32, i32
  }
  func.func @transform_8(%arg0: i32) -> i32 {
    %c0_i32 = arith.constant 0 : i32
    %c0_i32_0 = arith.constant 0 : i32
    return %c0_i32 : i32
  }
  func.func @transform_9(%arg0: i32) -> (i32, i32) {
    %c0_i32 = arith.constant 0 : i32
    %c0_i32_0 = arith.constant 0 : i32
    %c0_i32_1 = arith.constant 0 : i32
    return %c0_i32, %c0_i32_0 : i32, i32
  }
  func.func @transform_10(%arg0: i32) -> (i32, i32) {
    %c0_i32 = arith.constant 0 : i32
    %c0_i32_0 = arith.constant 0 : i32
    %c0_i32_1 = arith.constant 0 : i32
    return %c0_i32, %c0_i32_0 : i32, i32
  }
  func.func @transform_11(%arg0: i32) -> (i32, i32) {
    %c0_i32 = arith.constant 0 : i32
    %c0_i32_0 = arith.constant 0 : i32
    %c0_i32_1 = arith.constant 0 : i32
    return %c0_i32, %c0_i32_0 : i32, i32
  }
  func.func @transform_12(%arg0: i32) -> (i32, i32) {
    %c0_i32 = arith.constant 0 : i32
    %c0_i32_0 = arith.constant 0 : i32
    %c0_i32_1 = arith.constant 0 : i32
    return %c0_i32, %c0_i32_0 : i32, i32
  }
  func.func @transform_13(%arg0: i32) -> (i32, i32) {
    %c0_i32 = arith.constant 0 : i32
    %c0_i32_0 = arith.constant 0 : i32
    %c0_i32_1 = arith.constant 0 : i32
    return %c0_i32, %c0_i32_0 : i32, i32
  }
  func.func @transform_14(%arg0: i32) -> (i32, i32, i32) {
    %c0_i32 = arith.constant 0 : i32
    %c0_i32_0 = arith.constant 0 : i32
    %c0_i32_1 = arith.constant 0 : i32
    return %arg0, %c0_i32, %c0_i32_0 : i32, i32, i32
  }
}

</mosaic_0001>

<llo_original>
// kernel: tpu_custom_call.1
$region0: #{tpu_custom_call.1}
  #allocation0 [shape = 'u32[]', space=smem, size = 0x4, offset = 0x4, fixed_abs, tag = 'smem constant byte address 0x4 - core index']
  #allocation1 [shape = 'u32[144,128]{1,0:T(1,128)}', space=vmem, size = 0x12000, scoped, tag = 'internal scratch']
  #allocation2 [shape = 'f32[16,512]{1,0:T(8,128)}', space=vmem, size = 0x8000, scoped, tag = 'scratch operand']
  #allocation3 [shape = 'f32[2,512]{1,0:T(2,128)}', space=vmem, size = 0x1000, scoped, tag = 'scratch operand']
  #allocation4 [shape = 'f32[1,512]{1,0:T(1,128)}', space=vmem, size = 0x800, scoped, tag = 'scratch operand']
  #allocation5 [shape = 'f32[49,352]{1,0:T(8,128)}', space=vmem, size = 0x15000, scoped, tag = 'scratch operand']
  #allocation6 [shape = 'f32[16,352]{1,0:T(8,128)}', space=vmem, size = 0x6000, scoped, tag = 'scratch operand']
  #allocation7 [shape = 'f32[16,256]{1,0:T(8,128)}', space=vmem, size = 0x4000, scoped, tag = 'scratch operand']
  #allocation8 [shape = 'f32[1]{0:T(128)S(6)}', space=smem, size = 0x200, scoped, tag = 'scoped memory for tpu_custom_call.1']
  %s0 = inlined_call_operand.vmem [shape: f32[2,16,256], index: 0, kind: input, shape index: {}]
  %s1 = inlined_call_operand.hbm [shape: f32[2,16,256], index: 1, kind: input, shape index: {}]
  %s2 = inlined_call_operand.hbm [shape: s32[1,484], index: 2, kind: input, shape index: {}]
  %s3 = inlined_call_operand.hbm [shape: f32[2,16], index: 3, kind: input, shape index: {}]
  %s4 = inlined_call_operand.vmem [shape: f32[2,1], index: 4, kind: input, shape index: {}]
  %s5 = inlined_call_operand.vmem [shape: f32[16,2], index: 5, kind: input, shape index: {}]
  %s6 = inlined_call_operand.vmem [shape: f32[16,1], index: 6, kind: input, shape index: {}]
  %s7 = inlined_call_operand.vmem [shape: f32[2,49], index: 7, kind: input, shape index: {}]
  %s8 = inlined_call_operand.<no memory space> [shape: f32[1], index: 8, kind: input, shape index: {}]
  %s9 = inlined_call_operand.vmem [shape: f32[16,49], index: 9, kind: input, shape index: {}]
  %s10 = inlined_call_operand.hbm [shape: f32[16,49], index: 10, kind: input, shape index: {}]
  %s11 = inlined_call_operand.vmem [shape: f32[16,1], index: 11, kind: input, shape index: {}]
  %s12 = inlined_call_operand.hbm [shape: f32[16,16], index: 12, kind: input, shape index: {}]
  %s13 = inlined_call_operand.vmem [shape: f32[16,1], index: 13, kind: input, shape index: {}]
  %s14 = inlined_call_operand.hbm [shape: f32[2,16,256], index: 14, kind: output, shape index: {}]
  %s15 = sld [smem:[#allocation0]]
  $region109: #{tpu_custom_call.1} parent=0
    _
  %s17 = ssub.s32 1, %s15
  %s18 = scalar_select 0, %s17, %s15
  %19 = sst [smem:[#allocation8]] %s8
  $region1: #{tpu_custom_call.1} parent=0
    #allocation9 [shape = 'u8[32768]{0}', space=vmem, size = 0x8000, scoped, tag = 'input window, operand 1']
    #allocation10 [shape = 's32[2]{0}', space=sflag, size = 0x8, scoped, tag = 'scoped memory for tpu_custom_call.1']
    #allocation11 [shape = 's32[2]{0}', space=sflag, size = 0x8, scoped, tag = 'scoped memory for tpu_custom_call.1']
    #allocation12 [shape = 'u8[2048]{0}', space=vmem, size = 0x800, scoped, tag = 'input window, operand 2, single buffered']
    #allocation13 [shape = 's32[1]{0}', space=sflag, size = 0x4, scoped, tag = 'scoped memory for tpu_custom_call.1']
    #allocation14 [shape = 'u8[1024]{0}', space=vmem, size = 0x400, scoped, tag = 'input window, operand 3, single buffered']
    #allocation15 [shape = 'u8[8192]{0}', space=vmem, size = 0x2000, scoped, tag = 'input window, operand 10, single buffered']
    #allocation16 [shape = 's32[1]{0}', space=sflag, size = 0x4, scoped, tag = 'scoped memory for tpu_custom_call.1']
    #allocation17 [shape = 'u8[8192]{0}', space=vmem, size = 0x2000, scoped, tag = 'input window, operand 12, single buffered']
    #allocation18 [shape = 'u8[32768]{0}', space=vmem, size = 0x8000, scoped, tag = 'output window, operand 0']
    %20 = vsyncpa [#allocation10], 0
    %s21 = scalar_lea.sflag [#allocation10], 1
    %22 = vsyncpa %s21, 0
    %23 = vsyncpa [#allocation13], 0
    %24 = vsyncpa [#allocation16], 0
    %25 = vsyncpa [#allocation11], 0
    %s26 = scalar_lea.sflag [#allocation11], 1
    %27 = vsyncpa %s26, 0
    loop: start=0, step=1, limit=4
    $region2: #{tpu_custom_call.1} parent=1 // loop_pre_header
      _
    $region3: #{tpu_custom_call.1} parent=1 // loop_header
      %s29 = sphi 0, %s33
      %p30 = scmp.ge.s32.totalorder %s29, 4
      %s39 = sphi 0, %s41
      %s42 = sphi 0, %s39
      %s43 = sphi 0, %s42
      %s59 = sphi 0, %s43
      %s65 = sphi 0, %s67
      %s68 = sphi 0, %s65
      %s69 = sphi 0, %s68
      %s85 = sphi 0, %s69
      %s89 = sphi 0, %s89
      %s91 = sphi 0, %s89
      %s92 = sphi 0, %s91
      %s106 = sphi 0, %s92
      %s110 = sphi 0, %s110
      %s112 = sphi 0, %s110
      %s113 = sphi 0, %s112
      %s127 = sphi 0, %s113
      %s131 = sphi 0, %s131
      %s133 = sphi 0, %s131
      %s134 = sphi 0, %s133
      %s148 = sphi 0, %s134
      %s152 = sphi 0, %s152
      %s154 = sphi 0, %s152
      %s155 = sphi 0, %s154
      %s169 = sphi 0, %s155
      %s173 = sphi 0, %s173
      %s175 = sphi 0, %s173
      %s176 = sphi 0, %s175
      %s190 = sphi 0, %s176
      %s194 = sphi 0, %s194
      %s196 = sphi 0, %s194
      %s197 = sphi 0, %s196
      %s211 = sphi 0, %s197
      %s215 = sphi 0, %s215
      %s217 = sphi 0, %s215
      %s218 = sphi 0, %s217
      %s232 = sphi 0, %s218
      %s236 = sphi 0, %s236
      %s238 = sphi 0, %s236
      %s239 = sphi 0, %s238
      %s253 = sphi 0, %s239
      %s257 = sphi 0, %s257
      %s259 = sphi 0, %s257
      %s260 = sphi 0, %s259
      %s274 = sphi 0, %s260
      %s278 = sphi 0, %s278
      %s280 = sphi 0, %s278
      %s281 = sphi 0, %s280
      %s295 = sphi 0, %s281
      %s299 = sphi 0, %s299
      %s301 = sphi 0, %s299
      %s302 = sphi 0, %s301
      %s316 = sphi 0, %s302
      %s320 = sphi 0, %s320
      %s322 = sphi 0, %s320
      %s323 = sphi 0, %s322
      %s337 = sphi 0, %s323
      %s343 = sphi 0, %s345
      %s346 = sphi 0, %s343
      %s347 = sphi 0, %s346
      %s363 = sphi 0, %s347
    $region4: #{tpu_custom_call.1} parent=1 // loop_header_branch
      %32 = sbr.rel (%p30) target = $region8
    $region5: #{tpu_custom_call.1} parent=1 // loop_body
      %s34 = ssub.s32 %s29, 1
      %s35 = ssub.s32 %s29, 2
      %s36 = sadd.s32 %s29, 1
      %s37 = ssub.s32 %s29, %s36
      %p38 = scmp.eq.s32.totalorder %s37, 0
      %s40 = sadd.s32 %s39, 1
      %s41 = scalar_select %p38, %s39, %s40
      %p44 = pneg %p38
      %p45 = scmp.eq.s32.totalorder %s29, 1
      %p46 = por %p44, %p45
      %p47 = scmp.ne.s32.totalorder %s39, %s42
      %p48 = scmp.eq.s32.totalorder %s29, 0
      %p49 = por %p47, %p48
      %p50 = scmp.ne.s32.totalorder %s39, %s42
      %p51 = scmp.eq.s32.totalorder %s34, 1
      %p52 = por %p50, %p51
      %p53 = scmp.ne.s32.totalorder %s42, %s43
      %p54 = scmp.eq.s32.totalorder %s34, 0
      %p55 = por %p53, %p54
      %p56 = scmp.ne.s32.totalorder %s42, %s43
      %p57 = scmp.eq.s32.totalorder %s35, 1
      %p58 = por %p56, %p57
      %p60 = scmp.ne.s32.totalorder %s43, %s59
      %p61 = scmp.eq.s32.totalorder %s35, 0
      %p62 = por %p60, %p61
      %s63 = ssub.s32 %s29, %s36
      %p64 = scmp.eq.s32.totalorder %s63, 0
      %s66 = sadd.s32 %s65, 1
      %s67 = scalar_select %p64, %s65, %s66
      %p70 = pneg %p64
      %p71 = scmp.eq.s32.totalorder %s29, 1
      %p72 = por %p70, %p71
      %p73 = scmp.ne.s32.totalorder %s65, %s68
      %p74 = scmp.eq.s32.totalorder %s29, 0
      %p75 = por %p73, %p74
      %p76 = scmp.ne.s32.totalorder %s65, %s68
      %p77 = scmp.eq.s32.totalorder %s34, 1
      %p78 = por %p76, %p77
      %p79 = scmp.ne.s32.totalorder %s68, %s69
      %p80 = scmp.eq.s32.totalorder %s34, 0
      %p81 = por %p79, %p80
      %p82 = scmp.ne.s32.totalorder %s68, %s69
      %p83 = scmp.eq.s32.totalorder %s35, 1
      %p84 = por %p82, %p83
      %p86 = scmp.ne.s32.totalorder %s69, %s85
      %p87 = scmp.eq.s32.totalorder %s35, 0
      %p88 = por %p86, %p87
      %s90 = sadd.s32 %s89, 1
      %p93 = scmp.eq.s32.totalorder %s29, 1
      %p94 = scmp.ne.s32.totalorder %s89, %s91
      %p95 = scmp.eq.s32.totalorder %s29, 0
      %p96 = por %p94, %p95
      %p97 = scmp.ne.s32.totalorder %s89, %s91
      %p98 = scmp.eq.s32.totalorder %s34, 1
      %p99 = por %p97, %p98
      %p100 = scmp.ne.s32.totalorder %s91, %s92
      %p101 = scmp.eq.s32.totalorder %s34, 0
      %p102 = por %p100, %p101
      %p103 = scmp.ne.s32.totalorder %s91, %s92
      %p104 = scmp.eq.s32.totalorder %s35, 1
      %p105 = por %p103, %p104
      %p107 = scmp.ne.s32.totalorder %s92, %s106
      %p108 = scmp.eq.s32.totalorder %s35, 0
      %p109 = por %p107, %p108
      %s111 = sadd.s32 %s110, 1
      %p114 = scmp.eq.s32.totalorder %s29, 1
      %p115 = scmp.ne.s32.totalorder %s110, %s112
      %p116 = scmp.eq.s32.totalorder %s29, 0
      %p117 = por %p115, %p116
      %p118 = scmp.ne.s32.totalorder %s110, %s112
      %p119 = scmp.eq.s32.totalorder %s34, 1
      %p120 = por %p118, %p119
      %p121 = scmp.ne.s32.totalorder %s112, %s113
      %p122 = scmp.eq.s32.totalorder %s34, 0
      %p123 = por %p121, %p122
      %p124 = scmp.ne.s32.totalorder %s112, %s113
      %p125 = scmp.eq.s32.totalorder %s35, 1
      %p126 = por %p124, %p125
      %p128 = scmp.ne.s32.totalorder %s113, %s127
      %p129 = scmp.eq.s32.totalorder %s35, 0
      %p130 = por %p128, %p129
      %s132 = sadd.s32 %s131, 1
      %p135 = scmp.eq.s32.totalorder %s29, 1
      %p136 = scmp.ne.s32.totalorder %s131, %s133
      %p137 = scmp.eq.s32.totalorder %s29, 0
      %p138 = por %p136, %p137
      %p139 = scmp.ne.s32.totalorder %s131, %s133
      %p140 = scmp.eq.s32.totalorder %s34, 1
      %p141 = por %p139, %p140
      %p142 = scmp.ne.s32.totalorder %s133, %s134
      %p143 = scmp.eq.s32.totalorder %s34, 0
      %p144 = por %p142, %p143
      %p145 = scmp.ne.s32.totalorder %s133, %s134
      %p146 = scmp.eq.s32.totalorder %s35, 1
      %p147 = por %p145, %p146
      %p149 = scmp.ne.s32.totalorder %s134, %s148
      %p150 = scmp.eq.s32.totalorder %s35, 0
      %p151 = por %p149, %p150
      %s153 = sadd.s32 %s152, 1
      %p156 = scmp.eq.s32.totalorder %s29, 1
      %p157 = scmp.ne.s32.totalorder %s152, %s154
      %p158 = scmp.eq.s32.totalorder %s29, 0
      %p159 = por %p157, %p158
      %p160 = scmp.ne.s32.totalorder %s152, %s154
      %p161 = scmp.eq.s32.totalorder %s34, 1
      %p162 = por %p160, %p161
      %p163 = scmp.ne.s32.totalorder %s154, %s155
      %p164 = scmp.eq.s32.totalorder %s34, 0
      %p165 = por %p163, %p164
      %p166 = scmp.ne.s32.totalorder %s154, %s155
      %p167 = scmp.eq.s32.totalorder %s35, 1
      %p168 = por %p166, %p167
      %p170 = scmp.ne.s32.totalorder %s155, %s169
      %p171 = scmp.eq.s32.totalorder %s35, 0
      %p172 = por %p170, %p171
      %s174 = sadd.s32 %s173, 1
      %p177 = scmp.eq.s32.totalorder %s29, 1
      %p178 = scmp.ne.s32.totalorder %s173, %s175
      %p179 = scmp.eq.s32.totalorder %s29, 0
      %p180 = por %p178, %p179
      %p181 = scmp.ne.s32.totalorder %s173, %s175
      %p182 = scmp.eq.s32.totalorder %s34, 1
      %p183 = por %p181, %p182
      %p184 = scmp.ne.s32.totalorder %s175, %s176
      %p185 = scmp.eq.s32.totalorder %s34, 0
      %p186 = por %p184, %p185
      %p187 = scmp.ne.s32.totalorder %s175, %s176
      %p188 = scmp.eq.s32.totalorder %s35, 1
      %p189 = por %p187, %p188
      %p191 = scmp.ne.s32.totalorder %s176, %s190
      %p192 = scmp.eq.s32.totalorder %s35, 0
      %p193 = por %p191, %p192
      %s195 = sadd.s32 %s194, 1
      %p198 = scmp.eq.s32.totalorder %s29, 1
      %p199 = scmp.ne.s32.totalorder %s194, %s196
      %p200 = scmp.eq.s32.totalorder %s29, 0
      %p201 = por %p199, %p200
      %p202 = scmp.ne.s32.totalorder %s194, %s196
      %p203 = scmp.eq.s32.totalorder %s34, 1
      %p204 = por %p202, %p203
      %p205 = scmp.ne.s32.totalorder %s196, %s197
      %p206 = scmp.eq.s32.totalorder %s34, 0
      %p207 = por %p205, %p206
      %p208 = scmp.ne.s32.totalorder %s196, %s197
      %p209 = scmp.eq.s32.totalorder %s35, 1
      %p210 = por %p208, %p209
      %p212 = scmp.ne.s32.totalorder %s197, %s211
      %p213 = scmp.eq.s32.totalorder %s35, 0
      %p214 = por %p212, %p213
      %s216 = sadd.s32 %s215, 1
      %p219 = scmp.eq.s32.totalorder %s29, 1
      %p220 = scmp.ne.s32.totalorder %s215, %s217
      %p221 = scmp.eq.s32.totalorder %s29, 0
      %p222 = por %p220, %p221
      %p223 = scmp.ne.s32.totalorder %s215, %s217
      %p224 = scmp.eq.s32.totalorder %s34, 1
      %p225 = por %p223, %p224
      %p226 = scmp.ne.s32.totalorder %s217, %s218
      %p227 = scmp.eq.s32.totalorder %s34, 0
      %p228 = por %p226, %p227
      %p229 = scmp.ne.s32.totalorder %s217, %s218
      %p230 = scmp.eq.s32.totalorder %s35, 1
      %p231 = por %p229, %p230
      %p233 = scmp.ne.s32.totalorder %s218, %s232
      %p234 = scmp.eq.s32.totalorder %s35, 0
      %p235 = por %p233, %p234
      %s237 = sadd.s32 %s236, 1
      %p240 = scmp.eq.s32.totalorder %s29, 1
      %p241 = scmp.ne.s32.totalorder %s236, %s238
      %p242 = scmp.eq.s32.totalorder %s29, 0
      %p243 = por %p241, %p242
      %p244 = scmp.ne.s32.totalorder %s236, %s238
      %p245 = scmp.eq.s32.totalorder %s34, 1
      %p246 = por %p244, %p245
      %p247 = scmp.ne.s32.totalorder %s238, %s239
      %p248 = scmp.eq.s32.totalorder %s34, 0
      %p249 = por %p247, %p248
      %p250 = scmp.ne.s32.totalorder %s238, %s239
      %p251 = scmp.eq.s32.totalorder %s35, 1
      %p252 = por %p250, %p251
      %p254 = scmp.ne.s32.totalorder %s239, %s253
      %p255 = scmp.eq.s32.totalorder %s35, 0
      %p256 = por %p254, %p255
      %s258 = sadd.s32 %s257, 1
      %p261 = scmp.eq.s32.totalorder %s29, 1
      %p262 = scmp.ne.s32.totalorder %s257, %s259
      %p263 = scmp.eq.s32.totalorder %s29, 0
      %p264 = por %p262, %p263
      %p265 = scmp.ne.s32.totalorder %s257, %s259
      %p266 = scmp.eq.s32.totalorder %s34, 1
      %p267 = por %p265, %p266
      %p268 = scmp.ne.s32.totalorder %s259, %s260
      %p269 = scmp.eq.s32.totalorder %s34, 0
      %p270 = por %p268, %p269
      %p271 = scmp.ne.s32.totalorder %s259, %s260
      %p272 = scmp.eq.s32.totalorder %s35, 1
      %p273 = por %p271, %p272
      %p275 = scmp.ne.s32.totalorder %s260, %s274
      %p276 = scmp.eq.s32.totalorder %s35, 0
      %p277 = por %p275, %p276
      %s279 = sadd.s32 %s278, 1
      %p282 = scmp.eq.s32.totalorder %s29, 1
      %p283 = scmp.ne.s32.totalorder %s278, %s280
      %p284 = scmp.eq.s32.totalorder %s29, 0
      %p285 = por %p283, %p284
      %p286 = scmp.ne.s32.totalorder %s278, %s280
      %p287 = scmp.eq.s32.totalorder %s34, 1
      %p288 = por %p286, %p287
      %p289 = scmp.ne.s32.totalorder %s280, %s281
      %p290 = scmp.eq.s32.totalorder %s34, 0
      %p291 = por %p289, %p290
      %p292 = scmp.ne.s32.totalorder %s280, %s281
      %p293 = scmp.eq.s32.totalorder %s35, 1
      %p294 = por %p292, %p293
      %p296 = scmp.ne.s32.totalorder %s281, %s295
      %p297 = scmp.eq.s32.totalorder %s35, 0
      %p298 = por %p296, %p297
      %s300 = sadd.s32 %s299, 1
      %p303 = scmp.eq.s32.totalorder %s29, 1
      %p304 = scmp.ne.s32.totalorder %s299, %s301
      %p305 = scmp.eq.s32.totalorder %s29, 0
      %p306 = por %p304, %p305
      %p307 = scmp.ne.s32.totalorder %s299, %s301
      %p308 = scmp.eq.s32.totalorder %s34, 1
      %p309 = por %p307, %p308
      %p310 = scmp.ne.s32.totalorder %s301, %s302
      %p311 = scmp.eq.s32.totalorder %s34, 0
      %p312 = por %p310, %p311
      %p313 = scmp.ne.s32.totalorder %s301, %s302
      %p314 = scmp.eq.s32.totalorder %s35, 1
      %p315 = por %p313, %p314
      %p317 = scmp.ne.s32.totalorder %s302, %s316
      %p318 = scmp.eq.s32.totalorder %s35, 0
      %p319 = por %p317, %p318
      %s321 = sadd.s32 %s320, 1
      %p324 = scmp.eq.s32.totalorder %s29, 1
      %p325 = scmp.ne.s32.totalorder %s320, %s322
      %p326 = scmp.eq.s32.totalorder %s29, 0
      %p327 = por %p325, %p326
      %p328 = scmp.ne.s32.totalorder %s320, %s322
      %p329 = scmp.eq.s32.totalorder %s34, 1
      %p330 = por %p328, %p329
      %p331 = scmp.ne.s32.totalorder %s322, %s323
      %p332 = scmp.eq.s32.totalorder %s34, 0
      %p333 = por %p331, %p332
      %p334 = scmp.ne.s32.totalorder %s322, %s323
      %p335 = scmp.eq.s32.totalorder %s35, 1
      %p336 = por %p334, %p335
      %p338 = scmp.ne.s32.totalorder %s323, %s337
      %p339 = scmp.eq.s32.totalorder %s35, 0
      %p340 = por %p338, %p339
      %s341 = ssub.s32 %s29, %s36
      %p342 = scmp.eq.s32.totalorder %s341, 0
      %s344 = sadd.s32 %s343, 1
      %s345 = scalar_select %p342, %s343, %s344
      %p348 = pneg %p342
      %p349 = scmp.eq.s32.totalorder %s29, 1
      %p350 = por %p348, %p349
      %p351 = scmp.ne.s32.totalorder %s343, %s346
      %p352 = scmp.eq.s32.totalorder %s29, 0
      %p353 = por %p351, %p352
      %p354 = scmp.ne.s32.totalorder %s343, %s346
      %p355 = scmp.eq.s32.totalorder %s34, 1
      %p356 = por %p354, %p355
      %p357 = scmp.ne.s32.totalorder %s346, %s347
      %p358 = scmp.eq.s32.totalorder %s34, 0
      %p359 = por %p357, %p358
      %p360 = scmp.ne.s32.totalorder %s346, %s347
      %p361 = scmp.eq.s32.totalorder %s35, 1
      %p362 = por %p360, %p361
      %p364 = scmp.ne.s32.totalorder %s347, %s363
      %p365 = scmp.eq.s32.totalorder %s35, 0
      %p366 = por %p364, %p365
      %p367 = scmp.le.s32.totalorder 1, %s29
      %p368 = scmp.lt.s32.totalorder %s29, 3
      %p369 = pnand %p367, %p368
      %p370 = pneg %p369
      // Predicated region
      $region9: #{tpu_custom_call.1} parent=5 // pred_check
        _
      $region10: #{tpu_custom_call.1} parent=5 // pred_check_branch
        %372 = sbr.rel (%p369) target = $region12
      $region11: #{tpu_custom_call.1} parent=5 // pred_region
        %s373 = ssub.s32 %s29, 1
        // Predicated region
        $region13: #{tpu_custom_call.1} parent=11 // pred_check
          %p374 = pneg %p102
        $region14: #{tpu_custom_call.1} parent=11 // pred_check_branch
          %376 = sbr.rel (%p374) target = $region16
        $region15: #{tpu_custom_call.1} parent=11 // pred_region
          %s378 = ssub.s32 64, 64
          %379 = vsyncadd [#allocation13], %s378
          %s381 = sshll.u32 [#allocation12], 4
          %s382 = int_to_ptr.vmem [resolvable:$true] %s381
          %384 = dma.hbm_to_vmem [thread:$0]  %s2, 64, %s382, [#allocation13]
        $region16: #{tpu_custom_call.1} parent=11 // pred_fallthru
          _
        // Predicated region
        $region17: #{tpu_custom_call.1} parent=11 // pred_check
          %p385 = pneg %p123
        $region18: #{tpu_custom_call.1} parent=11 // pred_check_branch
          %387 = sbr.rel (%p385) target = $region20
        $region19: #{tpu_custom_call.1} parent=11 // pred_region
          %s389 = ssub.s32 32, 32
          %390 = vsyncadd [#allocation13], %s389
          %s392 = sshll.u32 [#allocation14], 4
          %s393 = int_to_ptr.vmem [resolvable:$true] %s392
          %395 = dma.hbm_to_vmem [thread:$0]  %s3, 32, %s393, [#allocation13]
        $region20: #{tpu_custom_call.1} parent=11 // pred_fallthru
          _
        // Predicated region
        $region21: #{tpu_custom_call.1} parent=11 // pred_check
          %p396 = pneg %p144
        $region22: #{tpu_custom_call.1} parent=11 // pred_check_branch
          %398 = sbr.rel (%p396) target = $region24
        $region23: #{tpu_custom_call.1} parent=11 // pred_region
          _
        $region24: #{tpu_custom_call.1} parent=11 // pred_fallthru
          _
        // Predicated region
        $region25: #{tpu_custom_call.1} parent=11 // pred_check
          %p399 = pneg %p165
        $region26: #{tpu_custom_call.1} parent=11 // pred_check_branch
          %401 = sbr.rel (%p399) target = $region28
        $region27: #{tpu_custom_call.1} parent=11 // pred_region
          _
        $region28: #{tpu_custom_call.1} parent=11 // pred_fallthru
          _
        // Predicated region
        $region29: #{tpu_custom_call.1} parent=11 // pred_check
          %p402 = pneg %p186
        $region30: #{tpu_custom_call.1} parent=11 // pred_check_branch
          %404 = sbr.rel (%p402) target = $region32
        $region31: #{tpu_custom_call.1} parent=11 // pred_region
          _
        $region32: #{tpu_custom_call.1} parent=11 // pred_fallthru
          _
        // Predicated region
        $region33: #{tpu_custom_call.1} parent=11 // pred_check
          %p405 = pneg %p207
        $region34: #{tpu_custom_call.1} parent=11 // pred_check_branch
          %407 = sbr.rel (%p405) target = $region36
        $region35: #{tpu_custom_call.1} parent=11 // pred_region
          _
        $region36: #{tpu_custom_call.1} parent=11 // pred_fallthru
          _
        // Predicated region
        $region37: #{tpu_custom_call.1} parent=11 // pred_check
          %p408 = pneg %p228
        $region38: #{tpu_custom_call.1} parent=11 // pred_check_branch
          %410 = sbr.rel (%p408) target = $region40
        $region39: #{tpu_custom_call.1} parent=11 // pred_region
          _
        $region40: #{tpu_custom_call.1} parent=11 // pred_fallthru
          _
        // Predicated region
        $region41: #{tpu_custom_call.1} parent=11 // pred_check
          %p411 = pneg %p249
        $region42: #{tpu_custom_call.1} parent=11 // pred_check_branch
          %413 = sbr.rel (%p411) target = $region44
        $region43: #{tpu_custom_call.1} parent=11 // pred_region
          _
        $region44: #{tpu_custom_call.1} parent=11 // pred_fallthru
          _
        // Predicated region
        $region45: #{tpu_custom_call.1} parent=11 // pred_check
          %p414 = pneg %p270
        $region46: #{tpu_custom_call.1} parent=11 // pred_check_branch
          %416 = sbr.rel (%p414) target = $region48
        $region47: #{tpu_custom_call.1} parent=11 // pred_region
          %s418 = ssub.s32 256, 256
          %419 = vsyncadd [#allocation16], %s418
          %s420 = sshll.u32 [#allocation15], 4
          %s421 = int_to_ptr.vmem [resolvable:$true] %s420
          %426 = dma.hbm_to_vmem [thread:$0]  %s10, 256, %s421, [#allocation16], 128, 128, 8
        $region48: #{tpu_custom_call.1} parent=11 // pred_fallthru
          _
        // Predicated region
        $region49: #{tpu_custom_call.1} parent=11 // pred_check
          %p427 = pneg %p291
        $region50: #{tpu_custom_call.1} parent=11 // pred_check_branch
          %429 = sbr.rel (%p427) target = $region52
        $region51: #{tpu_custom_call.1} parent=11 // pred_region
          _
        $region52: #{tpu_custom_call.1} parent=11 // pred_fallthru
          _
        // Predicated region
        $region53: #{tpu_custom_call.1} parent=11 // pred_check
          %p430 = pneg %p312
        $region54: #{tpu_custom_call.1} parent=11 // pred_check_branch
          %432 = sbr.rel (%p430) target = $region56
        $region55: #{tpu_custom_call.1} parent=11 // pred_region
          %s434 = ssub.s32 256, 256
          %435 = vsyncadd [#allocation16], %s434
          %s436 = sshll.u32 [#allocation17], 4
          %s437 = int_to_ptr.vmem [resolvable:$true] %s436
          %442 = dma.hbm_to_vmem [thread:$0]  %s12, 256, %s437, [#allocation16], 128, 128, 8
        $region56: #{tpu_custom_call.1} parent=11 // pred_fallthru
          _
        // Predicated region
        $region57: #{tpu_custom_call.1} parent=11 // pred_check
          %p443 = pneg %p333
        $region58: #{tpu_custom_call.1} parent=11 // pred_check_branch
          %445 = sbr.rel (%p443) target = $region60
        $region59: #{tpu_custom_call.1} parent=11 // pred_region
          _
        $region60: #{tpu_custom_call.1} parent=11 // pred_fallthru
          _
      $region12: #{tpu_custom_call.1} parent=5 // pred_fallthru
        _
      %p446 = scmp.lt.s32.totalorder %s29, 2
      // Predicated region
      $region61: #{tpu_custom_call.1} parent=5 // pred_check
        %p447 = pneg %p446
      $region62: #{tpu_custom_call.1} parent=5 // pred_check_branch
        %449 = sbr.rel (%p447) target = $region64
      $region63: #{tpu_custom_call.1} parent=5 // pred_region
        // Predicated region
        $region65: #{tpu_custom_call.1} parent=63 // pred_check
          %p450 = pneg %p49
        $region66: #{tpu_custom_call.1} parent=63 // pred_check_branch
          %452 = sbr.rel (%p450) target = $region68
        $region67: #{tpu_custom_call.1} parent=63 // pred_region
          %p453 = scmp.lt.s32.totalorder %s29, 1
          %s454 = scalar_select %p453, %s29, 1
          %s455 = smul.addr %s454, 4
          %s456 = smul.addr %s455, 8
          %s457 = scalar_lea.vmem %s0, %s456
        $region68: #{tpu_custom_call.1} parent=63 // pred_fallthru
          _
        // Predicated region
        $region69: #{tpu_custom_call.1} parent=63 // pred_check
          %p458 = pneg %p75
        $region70: #{tpu_custom_call.1} parent=63 // pred_check_branch
          %460 = sbr.rel (%p458) target = $region72
        $region71: #{tpu_custom_call.1} parent=63 // pred_region
          %s461 = sand.u32 %s65, 1
          %s462 = scalar_lea.sflag [#allocation10], %s461
          %s463 = sand.u32 %s65, 1
          %s464 = smul.addr %s463, 32
          %s465 = scalar_lea.vmem [#allocation9], %s464
          %s467 = ssub.s32 512, 512
          %468 = vsyncadd %s462, %s467
          %s469 = smul.addr %s29, 4
          %s470 = smul.addr %s469, 128
          %s471 = scalar_lea.hbm %s1, %s470
          %s472 = sshll.u32 %s465, 4
          %s473 = int_to_ptr.vmem [resolvable:$true] %s472
          %478 = dma.hbm_to_vmem [thread:$0]  %s471, 512, %s473, %s462, 256, 256, 16
        $region72: #{tpu_custom_call.1} parent=63 // pred_fallthru
          _
      $region64: #{tpu_custom_call.1} parent=5 // pred_fallthru
        _
      %p479 = scmp.le.s32.totalorder 1, %s29
      %p480 = scmp.lt.s32.totalorder %s29, 3
      %p481 = pnand %p479, %p480
      %p482 = pneg %p481
      // Predicated region
      $region73: #{tpu_custom_call.1} parent=5 // pred_check
        _
      $region74: #{tpu_custom_call.1} parent=5 // pred_check_branch
        %484 = sbr.rel (%p481) target = $region76
      $region75: #{tpu_custom_call.1} parent=5 // pred_region
        %s485 = ssub.s32 %s29, 1
        %s486 = sand.u32 %s68, 1
        %s487 = scalar_lea.sflag [#allocation10], %s486
        %s488 = sand.u32 %s68, 1
        %s489 = smul.addr %s488, 32
        %s490 = scalar_lea.vmem [#allocation9], %s489
        // Predicated region
        $region77: #{tpu_custom_call.1} parent=75 // pred_check
          %p491 = pneg %p81
        $region78: #{tpu_custom_call.1} parent=75 // pred_check_branch
          %493 = sbr.rel (%p491) target = $region80
        $region79: #{tpu_custom_call.1} parent=75 // pred_region
          %494 = dma.done %s487, 512
        $region80: #{tpu_custom_call.1} parent=75 // pred_fallthru
          _
        // Predicated region
        $region81: #{tpu_custom_call.1} parent=75 // pred_check
          %p495 = pneg %p102
        $region82: #{tpu_custom_call.1} parent=75 // pred_check_branch
          %497 = sbr.rel (%p495) target = $region84
        $region83: #{tpu_custom_call.1} parent=75 // pred_region
          %498 = dma.done [#allocation13], 64
        $region84: #{tpu_custom_call.1} parent=75 // pred_fallthru
          _
        // Predicated region
        $region85: #{tpu_custom_call.1} parent=75 // pred_check
          %p499 = pneg %p123
        $region86: #{tpu_custom_call.1} parent=75 // pred_check_branch
          %501 = sbr.rel (%p499) target = $region88
        $region87: #{tpu_custom_call.1} parent=75 // pred_region
          %502 = dma.done [#allocation13], 32
        $region88: #{tpu_custom_call.1} parent=75 // pred_fallthru
          _
        // Predicated region
        $region89: #{tpu_custom_call.1} parent=75 // pred_check
          %p503 = pneg %p270
        $region90: #{tpu_custom_call.1} parent=75 // pred_check_branch
          %505 = sbr.rel (%p503) target = $region92
        $region91: #{tpu_custom_call.1} parent=75 // pred_region
          %506 = dma.done [#allocation16], 256
        $region92: #{tpu_custom_call.1} parent=75 // pred_fallthru
          _
        // Predicated region
        $region93: #{tpu_custom_call.1} parent=75 // pred_check
          %p507 = pneg %p312
        $region94: #{tpu_custom_call.1} parent=75 // pred_check_branch
          %509 = sbr.rel (%p507) target = $region96
        $region95: #{tpu_custom_call.1} parent=75 // pred_region
          %510 = dma.done [#allocation16], 256
        $region96: #{tpu_custom_call.1} parent=75 // pred_fallthru
          _
        %p511 = scmp.lt.s32.totalorder %s34, 1
        %s512 = scalar_select %p511, %s34, 1
        %s513 = smul.addr %s512, 4
        %s514 = smul.addr %s513, 8
        %s515 = scalar_lea.vmem %s0, %s514
        %p516 = pneg %p55
        %p517 = pneg %p52
        %s518 = sand.u32 %s68, 1
        %s519 = scalar_lea.sflag [#allocation10], %s518
        %s520 = sand.u32 %s68, 1
        %s521 = smul.addr %s520, 32
        %s522 = scalar_lea.vmem [#allocation9], %s521
        %p523 = pneg %p81
        %p524 = pneg %p78
        %p525 = pneg %p102
        %p526 = pneg %p99
        %p527 = pneg %p123
        %p528 = pneg %p120
        %p529 = pneg %p144
        %p530 = pneg %p141
        %p531 = pneg %p165
        %p532 = pneg %p162
        %p533 = pneg %p186
        %p534 = pneg %p183
        %p535 = pneg %p207
        %p536 = pneg %p204
        %p537 = pneg %p228
        %p538 = pneg %p225
        %p539 = pneg %p249
        %p540 = pneg %p246
        %p541 = pneg %p270
        %p542 = pneg %p267
        %p543 = pneg %p291
        %p544 = pneg %p288
        %p545 = pneg %p312
        %p546 = pneg %p309
        %p547 = pneg %p333
        %p548 = pneg %p330
        %p549 = pneg %p359
        %p550 = pneg %p356
        %s551 = sand.u32 %s346, 1
        %s552 = scalar_lea.sflag [#allocation11], %s551
        %s553 = sand.u32 %s346, 1
        %s554 = smul.addr %s553, 32
        %s555 = scalar_lea.vmem [#allocation18], %s554
        %p556 = scmp.lt.s32.totalorder %s34, 1
        %s557 = scalar_select %p556, %s34, 1
        %s558 = smul.addr %s557, 4
        %s559 = smul.addr %s558, 8
        %s560 = scalar_lea.vmem %s0, %s559
        %v561 = vld [vmem:[%s560] sm:$0xff]
        %v562 = vld [vmem:[%s560 + $0x8] sm:$0xff]
        %v563 = vld [vmem:[%s560 + $0x10] sm:$0xff]
        %v564 = vld [vmem:[%s560 + $0x18] sm:$0xff]
        %v565 = vld [vmem:[%s490] sm:$0xff]
        %v566 = vld [vmem:[%s490 + $0x8] sm:$0xff]
        %v567 = vld [vmem:[%s490 + $0x10] sm:$0xff]
        %v568 = vld [vmem:[%s490 + $0x18] sm:$0xff]
        %v569 = vadd.f32 %v561, %v565
        %v570 = vadd.f32 %v562, %v566
        %v571 = vadd.f32 %v563, %v567
        %v572 = vadd.f32 %v564, %v568
        %v573 = vld [vmem:[#allocation12] sm:$0xf]
        %574 = vst [vmem:[#allocation2] sm:$0xff] 0.0
        %575 = vst [vmem:[#allocation2 + $0x8] sm:$0xff] 0.0
        %576 = vst [vmem:[#allocation2 + $0x10] sm:$0xff] 0.0
        %577 = vst [vmem:[#allocation2 + $0x18] sm:$0xff] 0.0
        %578 = vst [vmem:[#allocation2 + $0x20] sm:$0xff] 0.0
        %579 = vst [vmem:[#allocation2 + $0x28] sm:$0xff] 0.0
        %580 = vst [vmem:[#allocation2 + $0x30] sm:$0xff] 0.0
        %581 = vst [vmem:[#allocation2 + $0x38] sm:$0xff] 0.0
        %582 = vst [vmem:[#allocation3] sm:$0xff] 0.0
        %v583 = vlaneseq
        %vm584 = vcmp.ge.s32.totalorder %v583, 0
        %vm585 = vcmp.lt.s32.totalorder %v583, 512
        %vm586 = vmand %vm584, %vm585
        %587 = vst.msk [vmem:[#allocation4] sm:$0xf] %vm586, 0.0
        %v588 = vadd.f32 %v569, %v570
        %589 = vadd.xlane.f32.xlu0 %v588
        %v590 = vpop.xlane.xlu0 %589
        %v591 = vadd.f32 %v571, %v572
        %592 = vadd.xlane.f32.xlu0 %v591
        %v593 = vpop.xlane.xlu0 %592
        %v594 = vmul.f32 %v590, 0.00390625
        %v595 = vmul.f32 %v593, 0.00390625
        %v596 = vld [vmem:[#allocation14] sm:$0x3]
        %v597 = vld [vmem:[%s4] sm:$0x3]
        %vm598 = vcmask 130048
        %v600 = vsel %vm598, %v596, 0
        %602 = vmatprep.subr.mxu0 0.0
        %603 = vmatpush1.msra.mxu0 0.0
        %604 = vmatprep.subr.mxu0 0.0
        %605 = vmatpush1.msra.mxu0 0.0
        %606 = vmatprep.subr.mxu0 0.0
        %607 = vmatpush1.msra.mxu0 0.0
        %608 = vmatprep.subr.mxu0 0.0
        %609 = vmatpush1.msra.mxu0 0.0
        %610 = vmatprep.subr.mxu0 0.0
        %611 = vmatpush1.msra.mxu0 0.0
        %612 = vmatprep.subr.mxu0 0.0
        %613 = vmatpush1.msra.mxu0 0.0
        %614 = vmatprep.subr.mxu0 0.0
        %615 = vmatpush1.msra.mxu0 0.0
        %616 = vmatprep.subr.mxu0 0.0
        %617 = vmatpush1.msra.mxu0 0.0
        %618 = vmatprep.subr.mxu0 0.0
        %619 = vmatpush1.msra.mxu0 0.0
        %620 = vmatprep.subr.mxu0 0.0
        %621 = vmatpush1.msra.mxu0 0.0
        %622 = vmatprep.subr.mxu0 0.0
        %623 = vmatpush1.msra.mxu0 0.0
        %624 = vmatprep.subr.mxu0 0.0
        %625 = vmatpush1.msra.mxu0 0.0
        %626 = vmatprep.subr.mxu0 0.0
        %627 = vmatpush1.msra.mxu0 0.0
        %628 = vmatprep.subr.mxu0 0.0
        %629 = vmatpush1.msra.mxu0 0.0
        %630 = vmatprep.subr.mxu0 0.0
        %631 = vmatpush1.msra.mxu0 %v595
        %632 = vmatprep.subr.mxu0 0.0
        %633 = vmatpush1.msra.mxu0 %v594
        %634 = vmatprep.subr.mxu0 0.0
        %635 = vmatpush2.msra.mxu0 0.0
        %636 = vmatprep.subr.mxu0 0.0
        %637 = vmatpush2.msra.mxu0 0.0
        %638 = vmatprep.subr.mxu0 0.0
        %639 = vmatpush2.msra.mxu0 0.0
        %640 = vmatprep.subr.mxu0 0.0
        %641 = vmatpush2.msra.mxu0 0.0
        %642 = vmatprep.subr.mxu0 0.0
        %643 = vmatpush2.msra.mxu0 0.0
        %644 = vmatprep.subr.mxu0 0.0
        %645 = vmatpush2.msra.mxu0 0.0
        %646 = vmatprep.subr.mxu0 0.0
        %647 = vmatpush2.msra.mxu0 0.0
        %648 = vmatprep.subr.mxu0 0.0
        %649 = vmatpush2.msra.mxu0 0.0
        %650 = vmatprep.subr.mxu0 0.0
        %651 = vmatpush2.msra.mxu0 0.0
        %652 = vmatprep.subr.mxu0 0.0
        %653 = vmatpush2.msra.mxu0 0.0
        %654 = vmatprep.subr.mxu0 0.0
        %655 = vmatpush2.msra.mxu0 0.0
        %656 = vmatprep.subr.mxu0 0.0
        %657 = vmatpush2.msra.mxu0 0.0
        %658 = vmatprep.subr.mxu0 0.0
        %659 = vmatpush2.msra.mxu0 0.0
        %660 = vmatprep.subr.mxu0 0.0
        %661 = vmatpush2.msra.mxu0 0.0
        %662 = vmatprep.subr.mxu0 0.0
        %663 = vmatpush2.msra.mxu0 0.0
        %664 = vmatprep.subr.mxu0 0.0
        %665 = vmatpush2.msra.mxu0 0.0
        %666 = vmatprep.mubr.f32.mxu0 0.0
        %667 = vmatmul.mubr.f32.gmra.mxu0 %v600
        %v668 = vpop.f32.mrf.mxu0
        %v669 = vadd.f32 %v597, %v668
        %v670 = vpop.f32.mrf.mxu0
        %671 = vdwg.mxu0
        %v672 = vmax.f32 %v669, 0.0
        %v673 = vld [vmem:[%s5] sm:$0xff]
        %v674 = vld [vmem:[%s5 + $0x8] sm:$0xff]
        %v675 = vld [vmem:[%s6] sm:$0xff]
        %v676 = vld [vmem:[%s6 + $0x8] sm:$0xff]
        %vm677 = vcmask 15360
        %v679 = vsel %vm677, %v673, 0
        %v682 = vsel %vm677, %v674, 0
        %vm684 = vcmask 1041408
        %v686 = vsel %vm684, %v672, 0
        %688 = vmatprep.subr.mxu0 0.0
        %689 = vmatpush1.msra.mxu0 0.0
        %690 = vmatprep.subr.mxu0 0.0
        %691 = vmatpush1.msra.mxu0 0.0
        %692 = vmatprep.subr.mxu0 0.0
        %693 = vmatpush1.msra.mxu0 0.0
        %694 = vmatprep.subr.mxu0 0.0
        %695 = vmatpush1.msra.mxu0 0.0
        %696 = vmatprep.subr.mxu0 0.0
        %697 = vmatpush1.msra.mxu0 0.0
        %698 = vmatprep.subr.mxu0 0.0
        %699 = vmatpush1.msra.mxu0 0.0
        %700 = vmatprep.subr.mxu0 0.0
        %701 = vmatpush1.msra.mxu0 0.0
        %702 = vmatprep.subr.mxu0 0.0
        %703 = vmatpush1.msra.mxu0 0.0
        %704 = vmatprep.subr.mxu0 0.0
        %705 = vmatpush1.msra.mxu0 0.0
        %706 = vmatprep.subr.mxu0 0.0
        %707 = vmatpush1.msra.mxu0 0.0
        %708 = vmatprep.subr.mxu0 0.0
        %709 = vmatpush1.msra.mxu0 0.0
        %710 = vmatprep.subr.mxu0 0.0
        %711 = vmatpush1.msra.mxu0 0.0
        %712 = vmatprep.subr.mxu0 0.0
        %713 = vmatpush1.msra.mxu0 0.0
        %714 = vmatprep.subr.mxu0 0.0
        %715 = vmatpush1.msra.mxu0 0.0
        %716 = vmatprep.subr.mxu0 0.0
        %717 = vmatpush1.msra.mxu0 0.0
        %718 = vmatprep.subr.mxu0 0.0
        %719 = vmatpush1.msra.mxu0 %v686
        %720 = vmatprep.subr.mxu0 0.0
        %721 = vmatpush2.msra.mxu0 0.0
        %722 = vmatprep.subr.mxu0 0.0
        %723 = vmatpush2.msra.mxu0 0.0
        %724 = vmatprep.subr.mxu0 0.0
        %725 = vmatpush2.msra.mxu0 0.0
        %726 = vmatprep.subr.mxu0 0.0
        %727 = vmatpush2.msra.mxu0 0.0
        %728 = vmatprep.subr.mxu0 0.0
        %729 = vmatpush2.msra.mxu0 0.0
        %730 = vmatprep.subr.mxu0 0.0
        %731 = vmatpush2.msra.mxu0 0.0
        %732 = vmatprep.subr.mxu0 0.0
        %733 = vmatpush2.msra.mxu0 0.0
        %734 = vmatprep.subr.mxu0 0.0
        %735 = vmatpush2.msra.mxu0 0.0
        %736 = vmatprep.subr.mxu0 0.0
        %737 = vmatpush2.msra.mxu0 0.0
        %738 = vmatprep.subr.mxu0 0.0
        %739 = vmatpush2.msra.mxu0 0.0
        %740 = vmatprep.subr.mxu0 0.0
        %741 = vmatpush2.msra.mxu0 0.0
        %742 = vmatprep.subr.mxu0 0.0
        %743 = vmatpush2.msra.mxu0 0.0
        %744 = vmatprep.subr.mxu0 0.0
        %745 = vmatpush2.msra.mxu0 0.0
        %746 = vmatprep.subr.mxu0 0.0
        %747 = vmatpush2.msra.mxu0 0.0
        %748 = vmatprep.subr.mxu0 0.0
        %749 = vmatpush2.msra.mxu0 0.0
        %750 = vmatprep.subr.mxu0 0.0
        %751 = vmatpush2.msra.mxu0 0.0
        %752 = vmatprep.mubr.f32.mxu0 0.0
        %753 = vmatmul.mubr.f32.gmra.mxu0 %v679
        %v754 = vpop.f32.mrf.mxu0
        %v755 = vadd.f32 %v675, %v754
        %v756 = vpop.f32.mrf.mxu0
        %757 = vmatprep.mubr.f32.mxu0 0.0
        %758 = vmatmul.mubr.f32.gmra.mxu0 %v682
        %v759 = vpop.f32.mrf.mxu0
        %v760 = vadd.f32 %v676, %v759
        %v761 = vpop.f32.mrf.mxu0
        %762 = vdwg.mxu0
        %v763 = vadd.f32 %v569, %v571
        %v764 = vadd.f32 %v570, %v572
        %v767 = vrot.slane %v763, 4
        %v768 = vrot.slane %v764, 4
        %v771 = vadd.f32 %v763, %v767
        %v772 = vadd.f32 %v764, %v768
        %v775 = vrot.slane %v771, 2
        %v776 = vrot.slane %v772, 2
        %v779 = vadd.f32 %v771, %v775
        %v780 = vadd.f32 %v772, %v776
        %v783 = vrot.slane %v779, 1
        %v784 = vrot.slane %v780, 1
        %v787 = vadd.f32 %v779, %v783
        %v788 = vadd.f32 %v780, %v784
        %v789 = vmul.f32 %v787, 0.0625
        %v790 = vmul.f32 %v788, 0.0625
        %v791 = vmax.f32 %v569, %v571
        %v792 = vmax.f32 %v570, %v572
        %v795 = vrot.slane %v791, 4
        %v796 = vrot.slane %v792, 4
        %v799 = vmax.f32 %v791, %v795
        %v800 = vmax.f32 %v792, %v796
        %v803 = vrot.slane %v799, 2
        %v804 = vrot.slane %v800, 2
        %v807 = vmax.f32 %v799, %v803
        %v808 = vmax.f32 %v800, %v804
        %v811 = vrot.slane %v807, 1
        %v812 = vrot.slane %v808, 1
        %v815 = vmax.f32 %v807, %v811
        %v816 = vmax.f32 %v808, %v812
        %v819 = vunpack.c.l.s4 1983009808
        %v820 = vunpack.c.0.s8 %v819
        %v821 = vlaneseq
        %v822 = vshrl.u32 %v821, 7
        %v823 = vsub.s32 %v820, %v822
        %v824 = vrot.slane %v789, %v823
        %825 = vrot.lane.b32.xlu0 %v824, 91
        %v826 = vpop.permute.xlu0 %825
        %vm828 = vcmask 213080
        %829 = vst.msk [vmem:[#allocation3] sm:$0x1] %vm828, %v826
        %v832 = vunpack.c.l.s4 1983009808
        %v833 = vunpack.c.0.s8 %v832
        %v834 = vlaneseq
        %v835 = vshrl.u32 %v834, 7
        %v836 = vsub.s32 %v833, %v835
        %v837 = vrot.slane %v815, %v836
        %838 = vrot.lane.b32.xlu0 %v837, 91
        %v839 = vpop.permute.xlu0 %838
        %841 = vst.msk [vmem:[#allocation3 + $0x1] sm:$0x1] %vm828, %v839
        %842 = vrot.lane.b32.xlu0 %v824, 1
        %v843 = vpop.permute.xlu0 %842
        %vm845 = vcmask 393480
        %846 = vst.msk [vmem:[#allocation3] sm:$0x1] %vm845, %v843
        %847 = vrot.lane.b32.xlu0 %v837, 1
        %v848 = vpop.permute.xlu0 %847
        %850 = vst.msk [vmem:[#allocation3 + $0x1] sm:$0x1] %vm845, %v848
        %851 = vrot.lane.b32.xlu0 %v824, 39
        %v852 = vpop.permute.xlu0 %851
        %vm854 = vcmask 573880
        %855 = vst.msk [vmem:[#allocation3] sm:$0x1] %vm854, %v852
        %856 = vrot.lane.b32.xlu0 %v837, 39
        %v857 = vpop.permute.xlu0 %856
        %859 = vst.msk [vmem:[#allocation3 + $0x1] sm:$0x1] %vm854, %v857
        %860 = vrot.lane.b32.xlu0 %v824, 77
        %v861 = vpop.permute.xlu0 %860
        %vm863 = vcmask 754280
        %864 = vst.msk [vmem:[#allocation3] sm:$0x1] %vm863, %v861
        %865 = vrot.lane.b32.xlu0 %v837, 77
        %v866 = vpop.permute.xlu0 %865
        %868 = vst.msk [vmem:[#allocation3 + $0x1] sm:$0x1] %vm863, %v866
        %869 = vrot.lane.b32.xlu0 %v824, 83
        %v870 = vpop.permute.xlu0 %869
        %vm872 = vcmask 934680
        %873 = vst.msk [vmem:[#allocation3] sm:$0x1] %vm872, %v870
        %874 = vrot.lane.b32.xlu0 %v837, 83
        %v875 = vpop.permute.xlu0 %874
        %877 = vst.msk [vmem:[#allocation3 + $0x1] sm:$0x1] %vm872, %v875
        %878 = vrot.lane.b32.xlu0 %v824, 89
        %v879 = vpop.permute.xlu0 %878
        %v880 = vrot.slane %v879, 6
        %vm881 = vcmask 728064
        %v882 = vsel %vm881, %v880, %v879
        %vm884 = vcmask 1041352
        %vm885 = vcmask 67586
        %vm886 = vmor %vm885, %vm884
        %887 = vst.msk [vmem:[#allocation3] sm:$0x5] %vm886, %v882
        %888 = vrot.lane.b32.xlu0 %v837, 89
        %v889 = vpop.permute.xlu0 %888
        %v890 = vrot.slane %v889, 6
        %v891 = vsel %vm881, %v890, %v889
        %893 = vst.msk [vmem:[#allocation3 + $0x1] sm:$0x5] %vm886, %v891
        %894 = vrot.lane.b32.xlu0 %v824, 95
        %v895 = vpop.permute.xlu0 %894
        %vm897 = vcmask 245880
        %898 = vst.msk [vmem:[#allocation3 + $0x2] sm:$0x1] %vm897, %v895
        %899 = vrot.lane.b32.xlu0 %v837, 95
        %v900 = vpop.permute.xlu0 %899
        %902 = vst.msk [vmem:[#allocation3 + $0x3] sm:$0x1] %vm897, %v900
        %903 = vrot.lane.b32.xlu0 %v824, 101
        %v904 = vpop.permute.xlu0 %903
        %vm906 = vcmask 426280
        %907 = vst.msk [vmem:[#allocation3 + $0x2] sm:$0x1] %vm906, %v904
        %908 = vrot.lane.b32.xlu0 %v837, 101
        %v909 = vpop.permute.xlu0 %908
        %911 = vst.msk [vmem:[#allocation3 + $0x3] sm:$0x1] %vm906, %v909
        %912 = vrot.lane.b32.xlu0 %v824, 107
        %v913 = vpop.permute.xlu0 %912
        %vm915 = vcmask 606680
        %916 = vst.msk [vmem:[#allocation3 + $0x2] sm:$0x1] %vm915, %v913
        %917 = vrot.lane.b32.xlu0 %v837, 107
        %v918 = vpop.permute.xlu0 %917
        %920 = vst.msk [vmem:[#allocation3 + $0x3] sm:$0x1] %vm915, %v918
        %921 = vrot.lane.b32.xlu0 %v824, 113
        %v922 = vpop.permute.xlu0 %921
        %vm924 = vcmask 787080
        %925 = vst.msk [vmem:[#allocation3 + $0x2] sm:$0x1] %vm924, %v922
        %926 = vrot.lane.b32.xlu0 %v837, 113
        %v927 = vpop.permute.xlu0 %926
        %929 = vst.msk [vmem:[#allocation3 + $0x3] sm:$0x1] %vm924, %v927
        %930 = vrot.lane.b32.xlu0 %v824, 119
        %v931 = vpop.permute.xlu0 %930
        %vm933 = vcmask 967480
        %934 = vst.msk [vmem:[#allocation3 + $0x2] sm:$0x1] %vm933, %v931
        %935 = vrot.lane.b32.xlu0 %v837, 119
        %v936 = vpop.permute.xlu0 %935
        %938 = vst.msk [vmem:[#allocation3 + $0x3] sm:$0x1] %vm933, %v936
        %v941 = vunpack.c.l.s4 1983009808
        %v942 = vunpack.c.0.s8 %v941
        %v943 = vlaneseq
        %v944 = vshrl.u32 %v943, 7
        %v945 = vsub.s32 %v942, %v944
        %v946 = vrot.slane %v790, %v945
        %947 = vrot.lane.b32.xlu0 %v946, 125
        %v948 = vpop.permute.xlu0 %947
        %v949 = vrot.slane %v948, 6
        %vm950 = vcmask 1022976
        %v951 = vsel %vm950, %v949, %v948
        %vm953 = vcmask 1041384
        %vm954 = vcmask 100354
        %vm955 = vmor %vm954, %vm953
        %956 = vst.msk [vmem:[#allocation3 + $0x2] sm:$0x5] %vm955, %v951
        %v959 = vunpack.c.l.s4 1983009808
        %v960 = vunpack.c.0.s8 %v959
        %v961 = vlaneseq
        %v962 = vshrl.u32 %v961, 7
        %v963 = vsub.s32 %v960, %v962
        %v964 = vrot.slane %v816, %v963
        %965 = vrot.lane.b32.xlu0 %v964, 125
        %v966 = vpop.permute.xlu0 %965
        %v967 = vrot.slane %v966, 6
        %v968 = vsel %vm950, %v967, %v966
        %970 = vst.msk [vmem:[#allocation3 + $0x3] sm:$0x5] %vm955, %v968
        %971 = vrot.lane.b32.xlu0 %v946, 3
        %v972 = vpop.permute.xlu0 %971
        %vm974 = vcmask 278680
        %975 = vst.msk [vmem:[#allocation3 + $0x4] sm:$0x1] %vm974, %v972
        %976 = vrot.lane.b32.xlu0 %v964, 3
        %v977 = vpop.permute.xlu0 %976
        %979 = vst.msk [vmem:[#allocation3 + $0x5] sm:$0x1] %vm974, %v977
        %980 = vrot.lane.b32.xlu0 %v946, 9
        %v981 = vpop.permute.xlu0 %980
        %vm983 = vcmask 459080
        %984 = vst.msk [vmem:[#allocation3 + $0x4] sm:$0x1] %vm983, %v981
        %985 = vrot.lane.b32.xlu0 %v964, 9
        %v986 = vpop.permute.xlu0 %985
        %988 = vst.msk [vmem:[#allocation3 + $0x5] sm:$0x1] %vm983, %v986
        %989 = vrot.lane.b32.xlu0 %v946, 15
        %v990 = vpop.permute.xlu0 %989
        %vm992 = vcmask 639480
        %993 = vst.msk [vmem:[#allocation3 + $0x4] sm:$0x1] %vm992, %v990
        %994 = vrot.lane.b32.xlu0 %v964, 15
        %v995 = vpop.permute.xlu0 %994
        %997 = vst.msk [vmem:[#allocation3 + $0x5] sm:$0x1] %vm992, %v995
        %998 = vrot.lane.b32.xlu0 %v946, 21
        %v999 = vpop.permute.xlu0 %998
        %vm1001 = vcmask 819880
        %1002 = vst.msk [vmem:[#allocation3 + $0x4] sm:$0x1] %vm1001, %v999
        %1003 = vrot.lane.b32.xlu0 %v964, 21
        %v1004 = vpop.permute.xlu0 %1003
        %1006 = vst.msk [vmem:[#allocation3 + $0x5] sm:$0x1] %vm1001, %v1004
        %1007 = vrot.lane.b32.xlu0 %v946, 27
        %v1008 = vpop.permute.xlu0 %1007
        %vm1010 = vcmask 1000280
        %1011 = vst.msk [vmem:[#allocation3 + $0x4] sm:$0x1] %vm1010, %v1008
        %1012 = vrot.lane.b32.xlu0 %v964, 27
        %v1013 = vpop.permute.xlu0 %1012
        %1015 = vst.msk [vmem:[#allocation3 + $0x5] sm:$0x1] %vm1010, %v1013
        %1016 = vrot.lane.b32.xlu0 %v946, 33
        %v1017 = vpop.permute.xlu0 %1016
        %vm1019 = vcmask 131080
        %1020 = vst.msk [vmem:[#allocation3 + $0x6] sm:$0x1] %vm1019, %v1017
        %1021 = vrot.lane.b32.xlu0 %v964, 33
        %v1022 = vpop.permute.xlu0 %1021
        %1024 = vst.msk [vmem:[#allocation3 + $0x7] sm:$0x1] %vm1019, %v1022
        %1025 = vrot.lane.b32.xlu0 %v946, 39
        %v1026 = vpop.permute.xlu0 %1025
        %vm1028 = vcmask 311480
        %1029 = vst.msk [vmem:[#allocation3 + $0x6] sm:$0x1] %vm1028, %v1026
        %1030 = vrot.lane.b32.xlu0 %v964, 39
        %v1031 = vpop.permute.xlu0 %1030
        %1033 = vst.msk [vmem:[#allocation3 + $0x7] sm:$0x1] %vm1028, %v1031
        %1034 = vrot.lane.b32.xlu0 %v946, 77
        %v1035 = vpop.permute.xlu0 %1034
        %vm1037 = vcmask 491880
        %1038 = vst.msk [vmem:[#allocation3 + $0x6] sm:$0x1] %vm1037, %v1035
        %1039 = vrot.lane.b32.xlu0 %v964, 77
        %v1040 = vpop.permute.xlu0 %1039
        %1042 = vst.msk [vmem:[#allocation3 + $0x7] sm:$0x1] %vm1037, %v1040
        %1043 = vrot.lane.b32.xlu0 %v946, 115
        %v1044 = vpop.permute.xlu0 %1043
        %vm1046 = vcmask 672280
        %1047 = vst.msk [vmem:[#allocation3 + $0x6] sm:$0x1] %vm1046, %v1044
        %1048 = vrot.lane.b32.xlu0 %v964, 115
        %v1049 = vpop.permute.xlu0 %1048
        %1051 = vst.msk [vmem:[#allocation3 + $0x7] sm:$0x1] %vm1046, %v1049
        %1052 = vrot.lane.b32.xlu0 %v946, 25
        %v1053 = vpop.permute.xlu0 %1052
        %vm1055 = vcmask 852680
        %1056 = vst.msk [vmem:[#allocation3 + $0x6] sm:$0x1] %vm1055, %v1053
        %1057 = vrot.lane.b32.xlu0 %v964, 25
        %v1058 = vpop.permute.xlu0 %1057
        %1060 = vst.msk [vmem:[#allocation3 + $0x7] sm:$0x1] %vm1055, %v1058
        %v1061 = vld [vmem:[#allocation3] sm:$0xff]
        %v1062 = vlaneseq
        %v1063 = vshrl.u32 %v1062, 7
        %v1064 = vsub.s32 0, %v1063
        %v1065 = vrot.slane %v573, %v1064
        %v1066 = vlaneseq
        %v1067 = vshrl.u32 %v1066, 7
        %v1068 = vsub.s32 1, %v1067
        %v1069 = vrot.slane %v573, %v1068
        %v1070 = vlaneseq
        %v1071 = vshrl.u32 %v1070, 7
        %v1072 = vsub.s32 2, %v1071
        %v1073 = vrot.slane %v573, %v1072
        %v1074 = vlaneseq
        %v1075 = vshrl.u32 %v1074, 7
        %v1076 = vsub.s32 3, %v1075
        %v1077 = vrot.slane %v573, %v1076
        %vm1078 = vcmp.eq.s32.totalorder %v1065, 2
        %vm1079 = vcmp.eq.s32.totalorder %v1069, 2
        %vm1080 = vcmp.eq.s32.totalorder %v1073, 2
        %vm1081 = vcmp.eq.s32.totalorder %v1077, 2
        %v1083 = vcombine.high %v1061, %v1061
        %v1085 = vunpack.c.l.s4 1983009808
        %v1086 = vunpack.c.0.s8 %v1085
        %v1087 = vlaneseq
        %v1088 = vshrl.u32 %v1087, 7
        %v1089 = vsub.s32 %v1086, %v1088
        %v1090 = vrot.slane %v1061, %v1089
        %v1092 = vunpack.c.l.s4 1983009808
        %v1093 = vunpack.c.0.s8 %v1092
        %v1094 = vlaneseq
        %v1095 = vshrl.u32 %v1094, 7
        %v1096 = vsub.s32 %v1093, %v1095
        %v1097 = vrot.slane %v1083, %v1096
        %v1098 = vcombine.high %v1090, %v1090
        %v1099 = vcombine.high %v1097, %v1097
        %1100 = vrot.lane.b32.xlu0 %v1090, 118
        %v1101 = vpop.permute.xlu0 %1100
        %1102 = vrot.lane.b32.xlu0 %v1098, 118
        %v1103 = vpop.permute.xlu0 %1102
        %1104 = vrot.lane.b32.xlu0 %v1097, 118
        %v1105 = vpop.permute.xlu0 %1104
        %1106 = vrot.lane.b32.xlu0 %v1099, 118
        %v1107 = vpop.permute.xlu0 %1106
        %vm1108 = vcmask 965632
        %v1109 = vsel %vm1108, %v1101, %v1103
        %v1110 = vsel %vm1108, %v1103, %v1105
        %v1111 = vsel %vm1108, %v1105, %v1107
        %1116 = vrot.lane.b32.xlu0 %v1090, 120
        %v1117 = vpop.permute.xlu0 %1116
        %1118 = vrot.lane.b32.xlu0 %v1098, 120
        %v1119 = vpop.permute.xlu0 %1118
        %1120 = vrot.lane.b32.xlu0 %v1097, 120
        %v1121 = vpop.permute.xlu0 %1120
        %1122 = vrot.lane.b32.xlu0 %v1099, 120
        %v1123 = vpop.permute.xlu0 %1122
        %vm1124 = vcmask 982016
        %v1125 = vsel %vm1124, %v1117, %v1119
        %v1126 = vsel %vm1124, %v1119, %v1121
        %v1127 = vsel %vm1124, %v1121, %v1123
        %v1132 = vsel %vm1078, %v1109, %v1125
        %v1133 = vsel %vm1079, %v1110, %v1126
        %v1134 = vsel %vm1080, %v1111, %v1127
        %v1135 = vsel %vm1081, %v1107, %v1123
        %vm1136 = vcmp.eq.s32.totalorder %v1065, 19
        %vm1137 = vcmp.eq.s32.totalorder %v1069, 19
        %vm1138 = vcmp.eq.s32.totalorder %v1073, 19
        %vm1139 = vcmp.eq.s32.totalorder %v1077, 19
        %1140 = vrot.lane.b32.xlu0 %v1090, 122
        %v1141 = vpop.permute.xlu0 %1140
        %1142 = vrot.lane.b32.xlu0 %v1098, 122
        %v1143 = vpop.permute.xlu0 %1142
        %1144 = vrot.lane.b32.xlu0 %v1097, 122
        %v1145 = vpop.permute.xlu0 %1144
        %1146 = vrot.lane.b32.xlu0 %v1099, 122
        %v1147 = vpop.permute.xlu0 %1146
        %vm1148 = vcmask 998400
        %v1149 = vsel %vm1148, %v1141, %v1143
        %v1150 = vsel %vm1148, %v1143, %v1145
        %v1151 = vsel %vm1148, %v1145, %v1147
        %v1156 = vsel %vm1136, %v1149, %v1132
        %v1157 = vsel %vm1137, %v1150, %v1133
        %v1158 = vsel %vm1138, %v1151, %v1134
        %v1159 = vsel %vm1139, %v1147, %v1135
        %vm1160 = vcmp.eq.s32.totalorder %v1065, 1
        %vm1161 = vcmp.eq.s32.totalorder %v1069, 1
        %vm1162 = vcmp.eq.s32.totalorder %v1073, 1
        %vm1163 = vcmp.eq.s32.totalorder %v1077, 1
        %1164 = vrot.lane.b32.xlu0 %v1090, 116
        %v1165 = vpop.permute.xlu0 %1164
        %1166 = vrot.lane.b32.xlu0 %v1098, 116
        %v1167 = vpop.permute.xlu0 %1166
        %1168 = vrot.lane.b32.xlu0 %v1097, 116
        %v1169 = vpop.permute.xlu0 %1168
        %1170 = vrot.lane.b32.xlu0 %v1099, 116
        %v1171 = vpop.permute.xlu0 %1170
        %vm1172 = vcmask 949248
        %v1173 = vsel %vm1172, %v1165, %v1167
        %v1174 = vsel %vm1172, %v1167, %v1169
        %v1175 = vsel %vm1172, %v1169, %v1171
        %v1180 = vsel %vm1160, %v1173, %v1156
        %v1181 = vsel %vm1161, %v1174, %v1157
        %v1182 = vsel %vm1162, %v1175, %v1158
        %v1183 = vsel %vm1163, %v1171, %v1159
        %vm1184 = vcmp.eq.s32.totalorder %v1065, 20
        %vm1185 = vcmp.eq.s32.totalorder %v1069, 20
        %vm1186 = vcmp.eq.s32.totalorder %v1073, 20
        %vm1187 = vcmp.eq.s32.totalorder %v1077, 20
        %1188 = vrot.lane.b32.xlu0 %v1090, 124
        %v1189 = vpop.permute.xlu0 %1188
        %1190 = vrot.lane.b32.xlu0 %v1098, 124
        %v1191 = vpop.permute.xlu0 %1190
        %1192 = vrot.lane.b32.xlu0 %v1097, 124
        %v1193 = vpop.permute.xlu0 %1192
        %1194 = vrot.lane.b32.xlu0 %v1099, 124
        %v1195 = vpop.permute.xlu0 %1194
        %vm1196 = vcmask 1014784
        %v1197 = vsel %vm1196, %v1189, %v1191
        %v1198 = vsel %vm1196, %v1191, %v1193
        %v1199 = vsel %vm1196, %v1193, %v1195
        %v1204 = vsel %vm1184, %v1197, %v1180
        %v1205 = vsel %vm1185, %v1198, %v1181
        %v1206 = vsel %vm1186, %v1199, %v1182
        %v1207 = vsel %vm1187, %v1195, %v1183
        %vm1208 = vcmp.eq.s32.totalorder %v1065, 0
        %vm1209 = vcmp.eq.s32.totalorder %v1069, 0
        %vm1210 = vcmp.eq.s32.totalorder %v1073, 0
        %vm1211 = vcmp.eq.s32.totalorder %v1077, 0
        %1212 = vrot.lane.b32.xlu0 %v1090, 114
        %v1213 = vpop.permute.xlu0 %1212
        %1214 = vrot.lane.b32.xlu0 %v1098, 114
        %v1215 = vpop.permute.xlu0 %1214
        %1216 = vrot.lane.b32.xlu0 %v1097, 114
        %v1217 = vpop.permute.xlu0 %1216
        %1218 = vrot.lane.b32.xlu0 %v1099, 114
        %v1219 = vpop.permute.xlu0 %1218
        %vm1220 = vcmask 932864
        %v1221 = vsel %vm1220, %v1213, %v1215
        %v1222 = vsel %vm1220, %v1215, %v1217
        %v1223 = vsel %vm1220, %v1217, %v1219
        %v1228 = vsel %vm1208, %v1221, %v1204
        %v1229 = vsel %vm1209, %v1222, %v1205
        %v1230 = vsel %vm1210, %v1223, %v1206
        %v1231 = vsel %vm1211, %v1219, %v1207
        %vm1232 = vcmp.eq.s32.totalorder %v1065, 21
        %vm1233 = vcmp.eq.s32.totalorder %v1069, 21
        %vm1234 = vcmp.eq.s32.totalorder %v1073, 21
        %vm1235 = vcmp.eq.s32.totalorder %v1077, 21
        %1236 = vrot.lane.b32.xlu0 %v1090, 126
        %v1237 = vpop.permute.xlu0 %1236
        %1238 = vrot.lane.b32.xlu0 %v1098, 126
        %v1239 = vpop.permute.xlu0 %1238
        %1240 = vrot.lane.b32.xlu0 %v1097, 126
        %v1241 = vpop.permute.xlu0 %1240
        %1242 = vrot.lane.b32.xlu0 %v1099, 126
        %v1243 = vpop.permute.xlu0 %1242
        %vm1244 = vcmask 1031168
        %v1245 = vsel %vm1244, %v1237, %v1239
        %v1246 = vsel %vm1244, %v1239, %v1241
        %v1247 = vsel %vm1244, %v1241, %v1243
        %v1252 = vsel %vm1232, %v1245, %v1228
        %v1253 = vsel %vm1233, %v1246, %v1229
        %v1254 = vsel %vm1234, %v1247, %v1230
        %v1255 = vsel %vm1235, %v1243, %v1231
        %v1260 = vcombine.low %v1252, %v1253
        %v1261 = vcombine.low %v1254, %v1255
        %v1263 = vunpack.c.l.s4 1983009808
        %v1264 = vunpack.c.0.s8 %v1263
        %v1265 = vlaneseq
        %v1266 = vshrl.u32 %v1265, 7
        %v1267 = vsub.s32 %v1264, %v1266
        %v1268 = vrot.slane %v1260, %v1267
        %v1270 = vunpack.c.l.s4 1983009808
        %v1271 = vunpack.c.0.s8 %v1270
        %v1272 = vlaneseq
        %v1273 = vshrl.u32 %v1272, 7
        %v1274 = vsub.s32 %v1271, %v1273
        %v1275 = vrot.slane %v1261, %v1274
        %v1276 = vcombine.low %v1268, %v1275
        %1277 = vrot.lane.b32.xlu0 %v1276, 8
        %v1278 = vpop.permute.xlu0 %1277
        %v1279 = vrot.slane %v1278, 6
        %vm1280 = vcmask 64512
        %v1281 = vsel %vm1280, %v1279, %v1278
        %vm1283 = vcmask 1041472
        %vm1284 = vcmask 1043458
        %vm1285 = vmor %vm1284, %vm1283
        %vm1286 = vcmask 1045508
        %vm1287 = vmor %vm1286, %vm1285
        %vm1288 = vcmask 883718
        %vm1289 = vmor %vm1288, %vm1287
        %1290 = vst.msk [vmem:[#allocation3] sm:$0xff] %vm1289, %v1281
        %v1291 = vld [vmem:[%s7] sm:$0x3]
        %v1292 = vld [vmem:[#allocation3] sm:$0x3f]
        %1294 = vset.pattern.permute.xlu0 0
        %1295 = vperm.xlu0 %1294, %v1291
        %v1296 = vpop.permute.xlu0 %1295
        %v1299 = vcombine.high %v1292, %v1292
        %v1301 = vunpack.c.l.s4 1983009808
        %v1302 = vunpack.c.0.s8 %v1301
        %v1303 = vlaneseq
        %v1304 = vshrl.u32 %v1303, 7
        %v1305 = vsub.s32 %v1302, %v1304
        %v1306 = vrot.slane %v1292, %v1305
        %v1308 = vunpack.c.l.s4 1983009808
        %v1309 = vunpack.c.0.s8 %v1308
        %v1310 = vlaneseq
        %v1311 = vshrl.u32 %v1310, 7
        %v1312 = vsub.s32 %v1309, %v1311
        %v1313 = vrot.slane %v1299, %v1312
        %v1314 = vcombine.high %v1306, %v1306
        %1315 = vrot.lane.b32.xlu0 %v1306, 120
        %v1316 = vpop.permute.xlu0 %1315
        %1317 = vrot.lane.b32.xlu0 %v1314, 120
        %v1318 = vpop.permute.xlu0 %1317
        %1319 = vrot.lane.b32.xlu0 %v1313, 120
        %v1320 = vpop.permute.xlu0 %1319
        %v1321 = vsel %vm1124, %v1316, %v1318
        %v1322 = vsel %vm1124, %v1318, %v1320
        %v1326 = vmul.f32 %v1296, %v1321
        %v1327 = vmul.f32 %v1296, %v1322
        %v1328 = vmul.f32 %v1296, %v1320
        %v1329 = vadd.f32 %v1326, 0.0
        %v1330 = vadd.f32 %v1327, 0.0
        %v1331 = vadd.f32 %v1328, 0.0
        %v1332 = vld [vmem:[%s7] sm:$0x3]
        %v1333 = vld [vmem:[#allocation3] sm:$0x3f]
        %1335 = vset.pattern.permute.xlu0 1
        %1336 = vperm.xlu0 %1335, %v1332
        %v1337 = vpop.permute.xlu0 %1336
        %v1340 = vcombine.high %v1333, %v1333
        %v1342 = vunpack.c.l.s4 1983009808
        %v1343 = vunpack.c.0.s8 %v1342
        %v1344 = vlaneseq
        %v1345 = vshrl.u32 %v1344, 7
        %v1346 = vsub.s32 %v1343, %v1345
        %v1347 = vrot.slane %v1333, %v1346
        %v1349 = vunpack.c.l.s4 1983009808
        %v1350 = vunpack.c.0.s8 %v1349
        %v1351 = vlaneseq
        %v1352 = vshrl.u32 %v1351, 7
        %v1353 = vsub.s32 %v1350, %v1352
        %v1354 = vrot.slane %v1340, %v1353
        %v1355 = vcombine.high %v1347, %v1347
        %1356 = vrot.lane.b32.xlu0 %v1347, 119
        %v1357 = vpop.permute.xlu0 %1356
        %1358 = vrot.lane.b32.xlu0 %v1355, 119
        %v1359 = vpop.permute.xlu0 %1358
        %1360 = vrot.lane.b32.xlu0 %v1354, 119
        %v1361 = vpop.permute.xlu0 %1360
        %vm1362 = vcmask 973824
        %v1363 = vsel %vm1362, %v1357, %v1359
        %v1364 = vsel %vm1362, %v1359, %v1361
        %v1368 = vmul.f32 %v1337, %v1363
        %v1369 = vmul.f32 %v1337, %v1364
        %v1370 = vmul.f32 %v1337, %v1361
        %v1371 = vadd.f32 %v1368, 0.0
        %v1372 = vadd.f32 %v1369, 0.0
        %v1373 = vadd.f32 %v1370, 0.0
        %v1374 = vld [vmem:[%s7] sm:$0x3]
        %v1375 = vld [vmem:[#allocation3] sm:$0x3f]
        %1377 = vset.pattern.permute.xlu0 2
        %1378 = vperm.xlu0 %1377, %v1374
        %v1379 = vpop.permute.xlu0 %1378
        %v1382 = vcombine.high %v1375, %v1375
        %v1384 = vunpack.c.l.s4 1983009808
        %v1385 = vunpack.c.0.s8 %v1384
        %v1386 = vlaneseq
        %v1387 = vshrl.u32 %v1386, 7
        %v1388 = vsub.s32 %v1385, %v1387
        %v1389 = vrot.slane %v1375, %v1388
        %v1391 = vunpack.c.l.s4 1983009808
        %v1392 = vunpack.c.0.s8 %v1391
        %v1393 = vlaneseq
        %v1394 = vshrl.u32 %v1393, 7
        %v1395 = vsub.s32 %v1392, %v1394
        %v1396 = vrot.slane %v1382, %v1395
        %v1397 = vcombine.high %v1389, %v1389
        %1398 = vrot.lane.b32.xlu0 %v1389, 118
        %v1399 = vpop.permute.xlu0 %1398
        %1400 = vrot.lane.b32.xlu0 %v1397, 118
        %v1401 = vpop.permute.xlu0 %1400
        %1402 = vrot.lane.b32.xlu0 %v1396, 118
        %v1403 = vpop.permute.xlu0 %1402
        %v1404 = vsel %vm1108, %v1399, %v1401
        %v1405 = vsel %vm1108, %v1401, %v1403
        %v1409 = vmul.f32 %v1379, %v1404
        %v1410 = vmul.f32 %v1379, %v1405
        %v1411 = vmul.f32 %v1379, %v1403
        %v1412 = vadd.f32 %v1409, 0.0
        %v1413 = vadd.f32 %v1410, 0.0
        %v1414 = vadd.f32 %v1411, 0.0
        %v1415 = vld [vmem:[%s7] sm:$0x3]
        %v1416 = vld [vmem:[#allocation3] sm:$0x3f]
        %1418 = vset.pattern.permute.xlu0 3
        %1419 = vperm.xlu0 %1418, %v1415
        %v1420 = vpop.permute.xlu0 %1419
        %v1423 = vcombine.high %v1416, %v1416
        %v1425 = vunpack.c.l.s4 1983009808
        %v1426 = vunpack.c.0.s8 %v1425
        %v1427 = vlaneseq
        %v1428 = vshrl.u32 %v1427, 7
        %v1429 = vsub.s32 %v1426, %v1428
        %v1430 = vrot.slane %v1416, %v1429
        %v1432 = vunpack.c.l.s4 1983009808
        %v1433 = vunpack.c.0.s8 %v1432
        %v1434 = vlaneseq
        %v1435 = vshrl.u32 %v1434, 7
        %v1436 = vsub.s32 %v1433, %v1435
        %v1437 = vrot.slane %v1423, %v1436
        %v1438 = vcombine.high %v1430, %v1430
        %1439 = vrot.lane.b32.xlu0 %v1430, 117
        %v1440 = vpop.permute.xlu0 %1439
        %1441 = vrot.lane.b32.xlu0 %v1438, 117
        %v1442 = vpop.permute.xlu0 %1441
        %1443 = vrot.lane.b32.xlu0 %v1437, 117
        %v1444 = vpop.permute.xlu0 %1443
        %vm1445 = vcmask 957440
        %v1446 = vsel %vm1445, %v1440, %v1442
        %v1447 = vsel %vm1445, %v1442, %v1444
        %v1451 = vmul.f32 %v1420, %v1446
        %v1452 = vmul.f32 %v1420, %v1447
        %v1453 = vmul.f32 %v1420, %v1444
        %v1454 = vadd.f32 %v1451, 0.0
        %v1455 = vadd.f32 %v1452, 0.0
        %v1456 = vadd.f32 %v1453, 0.0
        %v1457 = vld [vmem:[%s7] sm:$0x3]
        %v1458 = vld [vmem:[#allocation3] sm:$0x3f]
        %1460 = vset.pattern.permute.xlu0 4
        %1461 = vperm.xlu0 %1460, %v1457
        %v1462 = vpop.permute.xlu0 %1461
        %v1465 = vcombine.high %v1458, %v1458
        %v1467 = vunpack.c.l.s4 1983009808
        %v1468 = vunpack.c.0.s8 %v1467
        %v1469 = vlaneseq
        %v1470 = vshrl.u32 %v1469, 7
        %v1471 = vsub.s32 %v1468, %v1470
        %v1472 = vrot.slane %v1458, %v1471
        %v1474 = vunpack.c.l.s4 1983009808
        %v1475 = vunpack.c.0.s8 %v1474
        %v1476 = vlaneseq
        %v1477 = vshrl.u32 %v1476, 7
        %v1478 = vsub.s32 %v1475, %v1477
        %v1479 = vrot.slane %v1465, %v1478
        %v1480 = vcombine.high %v1472, %v1472
        %1481 = vrot.lane.b32.xlu0 %v1472, 116
        %v1482 = vpop.permute.xlu0 %1481
        %1483 = vrot.lane.b32.xlu0 %v1480, 116
        %v1484 = vpop.permute.xlu0 %1483
        %1485 = vrot.lane.b32.xlu0 %v1479, 116
        %v1486 = vpop.permute.xlu0 %1485
        %v1487 = vsel %vm1172, %v1482, %v1484
        %v1488 = vsel %vm1172, %v1484, %v1486
        %v1492 = vmul.f32 %v1462, %v1487
        %v1493 = vmul.f32 %v1462, %v1488
        %v1494 = vmul.f32 %v1462, %v1486
        %v1495 = vadd.f32 %v1329, %v1492
        %v1496 = vadd.f32 %v1330, %v1493
        %v1497 = vadd.f32 %v1331, %v1494
        %v1498 = vld [vmem:[%s7] sm:$0x3]
        %v1499 = vld [vmem:[#allocation3] sm:$0x3f]
        %1501 = vset.pattern.permute.xlu0 5
        %1502 = vperm.xlu0 %1501, %v1498
        %v1503 = vpop.permute.xlu0 %1502
        %v1506 = vcombine.high %v1499, %v1499
        %v1508 = vunpack.c.l.s4 1983009808
        %v1509 = vunpack.c.0.s8 %v1508
        %v1510 = vlaneseq
        %v1511 = vshrl.u32 %v1510, 7
        %v1512 = vsub.s32 %v1509, %v1511
        %v1513 = vrot.slane %v1499, %v1512
        %v1515 = vunpack.c.l.s4 1983009808
        %v1516 = vunpack.c.0.s8 %v1515
        %v1517 = vlaneseq
        %v1518 = vshrl.u32 %v1517, 7
        %v1519 = vsub.s32 %v1516, %v1518
        %v1520 = vrot.slane %v1506, %v1519
        %v1521 = vcombine.high %v1513, %v1513
        %1522 = vrot.lane.b32.xlu0 %v1513, 115
        %v1523 = vpop.permute.xlu0 %1522
        %1524 = vrot.lane.b32.xlu0 %v1521, 115
        %v1525 = vpop.permute.xlu0 %1524
        %1526 = vrot.lane.b32.xlu0 %v1520, 115
        %v1527 = vpop.permute.xlu0 %1526
        %vm1528 = vcmask 941056
        %v1529 = vsel %vm1528, %v1523, %v1525
        %v1530 = vsel %vm1528, %v1525, %v1527
        %v1534 = vmul.f32 %v1503, %v1529
        %v1535 = vmul.f32 %v1503, %v1530
        %v1536 = vmul.f32 %v1503, %v1527
        %v1537 = vadd.f32 %v1371, %v1534
        %v1538 = vadd.f32 %v1372, %v1535
        %v1539 = vadd.f32 %v1373, %v1536
        %v1540 = vld [vmem:[%s7] sm:$0x3]
        %v1541 = vld [vmem:[#allocation3] sm:$0x3f]
        %1543 = vset.pattern.permute.xlu0 6
        %1544 = vperm.xlu0 %1543, %v1540
        %v1545 = vpop.permute.xlu0 %1544
        %v1548 = vcombine.high %v1541, %v1541
        %v1550 = vunpack.c.l.s4 1983009808
        %v1551 = vunpack.c.0.s8 %v1550
        %v1552 = vlaneseq
        %v1553 = vshrl.u32 %v1552, 7
        %v1554 = vsub.s32 %v1551, %v1553
        %v1555 = vrot.slane %v1541, %v1554
        %v1557 = vunpack.c.l.s4 1983009808
        %v1558 = vunpack.c.0.s8 %v1557
        %v1559 = vlaneseq
        %v1560 = vshrl.u32 %v1559, 7
        %v1561 = vsub.s32 %v1558, %v1560
        %v1562 = vrot.slane %v1548, %v1561
        %v1563 = vcombine.high %v1555, %v1555
        %1564 = vrot.lane.b32.xlu0 %v1555, 114
        %v1565 = vpop.permute.xlu0 %1564
        %1566 = vrot.lane.b32.xlu0 %v1563, 114
        %v1567 = vpop.permute.xlu0 %1566
        %1568 = vrot.lane.b32.xlu0 %v1562, 114
        %v1569 = vpop.permute.xlu0 %1568
        %v1570 = vsel %vm1220, %v1565, %v1567
        %v1571 = vsel %vm1220, %v1567, %v1569
        %v1575 = vmul.f32 %v1545, %v1570
        %v1576 = vmul.f32 %v1545, %v1571
        %v1577 = vmul.f32 %v1545, %v1569
        %v1578 = vadd.f32 %v1412, %v1575
        %v1579 = vadd.f32 %v1413, %v1576
        %v1580 = vadd.f32 %v1414, %v1577
        %v1581 = vld [vmem:[%s7] sm:$0x3]
        %v1582 = vld [vmem:[#allocation3] sm:$0x3f]
        %1584 = vset.pattern.permute.xlu0 7
        %1585 = vperm.xlu0 %1584, %v1581
        %v1586 = vpop.permute.xlu0 %1585
        %v1589 = vcombine.high %v1582, %v1582
        %v1591 = vunpack.c.l.s4 1983009808
        %v1592 = vunpack.c.0.s8 %v1591
        %v1593 = vlaneseq
        %v1594 = vshrl.u32 %v1593, 7
        %v1595 = vsub.s32 %v1592, %v1594
        %v1596 = vrot.slane %v1582, %v1595
        %v1598 = vunpack.c.l.s4 1983009808
        %v1599 = vunpack.c.0.s8 %v1598
        %v1600 = vlaneseq
        %v1601 = vshrl.u32 %v1600, 7
        %v1602 = vsub.s32 %v1599, %v1601
        %v1603 = vrot.slane %v1589, %v1602
        %v1604 = vcombine.high %v1596, %v1596
        %1605 = vrot.lane.b32.xlu0 %v1596, 98
        %v1606 = vpop.permute.xlu0 %1605
        %1607 = vrot.lane.b32.xlu0 %v1604, 98
        %v1608 = vpop.permute.xlu0 %1607
        %1609 = vrot.lane.b32.xlu0 %v1603, 98
        %v1610 = vpop.permute.xlu0 %1609
        %vm1611 = vcmask 801792
        %v1612 = vsel %vm1611, %v1606, %v1608
        %v1613 = vsel %vm1611, %v1608, %v1610
        %v1617 = vmul.f32 %v1586, %v1612
        %v1618 = vmul.f32 %v1586, %v1613
        %v1619 = vmul.f32 %v1586, %v1610
        %v1620 = vadd.f32 %v1454, %v1617
        %v1621 = vadd.f32 %v1455, %v1618
        %v1622 = vadd.f32 %v1456, %v1619
        %v1623 = vld [vmem:[%s7] sm:$0x3]
        %v1624 = vld [vmem:[#allocation3] sm:$0x3f]
        %1626 = vset.pattern.permute.xlu0 8
        %1627 = vperm.xlu0 %1626, %v1623
        %v1628 = vpop.permute.xlu0 %1627
        %v1631 = vcombine.high %v1624, %v1624
        %v1633 = vunpack.c.l.s4 1983009808
        %v1634 = vunpack.c.0.s8 %v1633
        %v1635 = vlaneseq
        %v1636 = vshrl.u32 %v1635, 7
        %v1637 = vsub.s32 %v1634, %v1636
        %v1638 = vrot.slane %v1624, %v1637
        %v1640 = vunpack.c.l.s4 1983009808
        %v1641 = vunpack.c.0.s8 %v1640
        %v1642 = vlaneseq
        %v1643 = vshrl.u32 %v1642, 7
        %v1644 = vsub.s32 %v1641, %v1643
        %v1645 = vrot.slane %v1631, %v1644
        %v1646 = vcombine.high %v1638, %v1638
        %1647 = vrot.lane.b32.xlu0 %v1638, 97
        %v1648 = vpop.permute.xlu0 %1647
        %1649 = vrot.lane.b32.xlu0 %v1646, 97
        %v1650 = vpop.permute.xlu0 %1649
        %1651 = vrot.lane.b32.xlu0 %v1645, 97
        %v1652 = vpop.permute.xlu0 %1651
        %vm1653 = vcmask 793600
        %v1654 = vsel %vm1653, %v1648, %v1650
        %v1655 = vsel %vm1653, %v1650, %v1652
        %v1659 = vmul.f32 %v1628, %v1654
        %v1660 = vmul.f32 %v1628, %v1655
        %v1661 = vmul.f32 %v1628, %v1652
        %v1662 = vadd.f32 %v1495, %v1659
        %v1663 = vadd.f32 %v1496, %v1660
        %v1664 = vadd.f32 %v1497, %v1661
        %v1665 = vld [vmem:[%s7] sm:$0x3]
        %v1666 = vld [vmem:[#allocation3] sm:$0x3f]
        %1668 = vset.pattern.permute.xlu0 9
        %1669 = vperm.xlu0 %1668, %v1665
        %v1670 = vpop.permute.xlu0 %1669
        %v1673 = vcombine.high %v1666, %v1666
        %v1675 = vunpack.c.l.s4 1983009808
        %v1676 = vunpack.c.0.s8 %v1675
        %v1677 = vlaneseq
        %v1678 = vshrl.u32 %v1677, 7
        %v1679 = vsub.s32 %v1676, %v1678
        %v1680 = vrot.slane %v1666, %v1679
        %v1682 = vunpack.c.l.s4 1983009808
        %v1683 = vunpack.c.0.s8 %v1682
        %v1684 = vlaneseq
        %v1685 = vshrl.u32 %v1684, 7
        %v1686 = vsub.s32 %v1683, %v1685
        %v1687 = vrot.slane %v1673, %v1686
        %v1688 = vcombine.high %v1680, %v1680
        %1689 = vrot.lane.b32.xlu0 %v1680, 96
        %v1690 = vpop.permute.xlu0 %1689
        %1691 = vrot.lane.b32.xlu0 %v1688, 96
        %v1692 = vpop.permute.xlu0 %1691
        %1693 = vrot.lane.b32.xlu0 %v1687, 96
        %v1694 = vpop.permute.xlu0 %1693
        %vm1695 = vcmask 785408
        %v1696 = vsel %vm1695, %v1690, %v1692
        %v1697 = vsel %vm1695, %v1692, %v1694
        %v1701 = vmul.f32 %v1670, %v1696
        %v1702 = vmul.f32 %v1670, %v1697
        %v1703 = vmul.f32 %v1670, %v1694
        %v1704 = vadd.f32 %v1537, %v1701
        %v1705 = vadd.f32 %v1538, %v1702
        %v1706 = vadd.f32 %v1539, %v1703
        %v1707 = vld [vmem:[%s7] sm:$0x3]
        %v1708 = vld [vmem:[#allocation3] sm:$0xff]
        %1710 = vset.pattern.permute.xlu0 10
        %1711 = vperm.xlu0 %1710, %v1707
        %v1712 = vpop.permute.xlu0 %1711
        %v1715 = vcombine.high %v1708, %v1708
        %v1717 = vunpack.c.l.s4 1983009808
        %v1718 = vunpack.c.0.s8 %v1717
        %v1719 = vlaneseq
        %v1720 = vshrl.u32 %v1719, 7
        %v1721 = vsub.s32 %v1718, %v1720
        %v1722 = vrot.slane %v1708, %v1721
        %v1724 = vunpack.c.l.s4 1983009808
        %v1725 = vunpack.c.0.s8 %v1724
        %v1726 = vlaneseq
        %v1727 = vshrl.u32 %v1726, 7
        %v1728 = vsub.s32 %v1725, %v1727
        %v1729 = vrot.slane %v1715, %v1728
        %v1730 = vcombine.high %v1722, %v1722
        %v1731 = vcombine.high %v1729, %v1729
        %1732 = vrot.lane.b32.xlu0 %v1722, 95
        %v1733 = vpop.permute.xlu0 %1732
        %1734 = vrot.lane.b32.xlu0 %v1730, 95
        %v1735 = vpop.permute.xlu0 %1734
        %1736 = vrot.lane.b32.xlu0 %v1729, 95
        %v1737 = vpop.permute.xlu0 %1736
        %1738 = vrot.lane.b32.xlu0 %v1731, 95
        %v1739 = vpop.permute.xlu0 %1738
        %vm1740 = vcmask 777216
        %v1741 = vsel %vm1740, %v1733, %v1735
        %v1742 = vsel %vm1740, %v1735, %v1737
        %v1743 = vsel %vm1740, %v1737, %v1739
        %v1747 = vmul.f32 %v1712, %v1741
        %v1748 = vmul.f32 %v1712, %v1742
        %v1749 = vmul.f32 %v1712, %v1743
        %v1750 = vadd.f32 %v1578, %v1747
        %v1751 = vadd.f32 %v1579, %v1748
        %v1752 = vadd.f32 %v1580, %v1749
        %v1753 = vld [vmem:[%s7] sm:$0x3]
        %v1754 = vld [vmem:[#allocation3] sm:$0xff]
        %1756 = vset.pattern.permute.xlu0 11
        %1757 = vperm.xlu0 %1756, %v1753
        %v1758 = vpop.permute.xlu0 %1757
        %v1761 = vcombine.high %v1754, %v1754
        %v1763 = vunpack.c.l.s4 1983009808
        %v1764 = vunpack.c.0.s8 %v1763
        %v1765 = vlaneseq
        %v1766 = vshrl.u32 %v1765, 7
        %v1767 = vsub.s32 %v1764, %v1766
        %v1768 = vrot.slane %v1754, %v1767
        %v1770 = vunpack.c.l.s4 1983009808
        %v1771 = vunpack.c.0.s8 %v1770
        %v1772 = vlaneseq
        %v1773 = vshrl.u32 %v1772, 7
        %v1774 = vsub.s32 %v1771, %v1773
        %v1775 = vrot.slane %v1761, %v1774
        %v1776 = vcombine.high %v1768, %v1768
        %v1777 = vcombine.high %v1775, %v1775
        %1778 = vrot.lane.b32.xlu0 %v1768, 94
        %v1779 = vpop.permute.xlu0 %1778
        %1780 = vrot.lane.b32.xlu0 %v1776, 94
        %v1781 = vpop.permute.xlu0 %1780
        %1782 = vrot.lane.b32.xlu0 %v1775, 94
        %v1783 = vpop.permute.xlu0 %1782
        %1784 = vrot.lane.b32.xlu0 %v1777, 94
        %v1785 = vpop.permute.xlu0 %1784
        %vm1786 = vcmask 769024
        %v1787 = vsel %vm1786, %v1779, %v1781
        %v1788 = vsel %vm1786, %v1781, %v1783
        %v1789 = vsel %vm1786, %v1783, %v1785
        %v1793 = vmul.f32 %v1758, %v1787
        %v1794 = vmul.f32 %v1758, %v1788
        %v1795 = vmul.f32 %v1758, %v1789
        %v1796 = vadd.f32 %v1620, %v1793
        %v1797 = vadd.f32 %v1621, %v1794
        %v1798 = vadd.f32 %v1622, %v1795
        %v1799 = vld [vmem:[%s7] sm:$0x3]
        %v1800 = vld [vmem:[#allocation3] sm:$0xff]
        %1802 = vset.pattern.permute.xlu0 12
        %1803 = vperm.xlu0 %1802, %v1799
        %v1804 = vpop.permute.xlu0 %1803
        %v1807 = vcombine.high %v1800, %v1800
        %v1809 = vunpack.c.l.s4 1983009808
        %v1810 = vunpack.c.0.s8 %v1809
        %v1811 = vlaneseq
        %v1812 = vshrl.u32 %v1811, 7
        %v1813 = vsub.s32 %v1810, %v1812
        %v1814 = vrot.slane %v1800, %v1813
        %v1816 = vunpack.c.l.s4 1983009808
        %v1817 = vunpack.c.0.s8 %v1816
        %v1818 = vlaneseq
        %v1819 = vshrl.u32 %v1818, 7
        %v1820 = vsub.s32 %v1817, %v1819
        %v1821 = vrot.slane %v1807, %v1820
        %v1822 = vcombine.high %v1814, %v1814
        %v1823 = vcombine.high %v1821, %v1821
        %1824 = vrot.lane.b32.xlu0 %v1814, 93
        %v1825 = vpop.permute.xlu0 %1824
        %1826 = vrot.lane.b32.xlu0 %v1822, 93
        %v1827 = vpop.permute.xlu0 %1826
        %1828 = vrot.lane.b32.xlu0 %v1821, 93
        %v1829 = vpop.permute.xlu0 %1828
        %1830 = vrot.lane.b32.xlu0 %v1823, 93
        %v1831 = vpop.permute.xlu0 %1830
        %vm1832 = vcmask 760832
        %v1833 = vsel %vm1832, %v1825, %v1827
        %v1834 = vsel %vm1832, %v1827, %v1829
        %v1835 = vsel %vm1832, %v1829, %v1831
        %v1839 = vmul.f32 %v1804, %v1833
        %v1840 = vmul.f32 %v1804, %v1834
        %v1841 = vmul.f32 %v1804, %v1835
        %v1842 = vadd.f32 %v1662, %v1839
        %v1843 = vadd.f32 %v1663, %v1840
        %v1844 = vadd.f32 %v1664, %v1841
        %v1845 = vld [vmem:[%s7] sm:$0x3]
        %v1846 = vld [vmem:[#allocation3] sm:$0xff]
        %1848 = vset.pattern.permute.xlu0 13
        %1849 = vperm.xlu0 %1848, %v1845
        %v1850 = vpop.permute.xlu0 %1849
        %v1853 = vcombine.high %v1846, %v1846
        %v1855 = vunpack.c.l.s4 1983009808
        %v1856 = vunpack.c.0.s8 %v1855
        %v1857 = vlaneseq
        %v1858 = vshrl.u32 %v1857, 7
        %v1859 = vsub.s32 %v1856, %v1858
        %v1860 = vrot.slane %v1846, %v1859
        %v1862 = vunpack.c.l.s4 1983009808
        %v1863 = vunpack.c.0.s8 %v1862
        %v1864 = vlaneseq
        %v1865 = vshrl.u32 %v1864, 7
        %v1866 = vsub.s32 %v1863, %v1865
        %v1867 = vrot.slane %v1853, %v1866
        %v1868 = vcombine.high %v1860, %v1860
        %v1869 = vcombine.high %v1867, %v1867
        %1870 = vrot.lane.b32.xlu0 %v1860, 92
        %v1871 = vpop.permute.xlu0 %1870
        %1872 = vrot.lane.b32.xlu0 %v1868, 92
        %v1873 = vpop.permute.xlu0 %1872
        %1874 = vrot.lane.b32.xlu0 %v1867, 92
        %v1875 = vpop.permute.xlu0 %1874
        %1876 = vrot.lane.b32.xlu0 %v1869, 92
        %v1877 = vpop.permute.xlu0 %1876
        %vm1878 = vcmask 752640
        %v1879 = vsel %vm1878, %v1871, %v1873
        %v1880 = vsel %vm1878, %v1873, %v1875
        %v1881 = vsel %vm1878, %v1875, %v1877
        %v1885 = vmul.f32 %v1850, %v1879
        %v1886 = vmul.f32 %v1850, %v1880
        %v1887 = vmul.f32 %v1850, %v1881
        %v1888 = vadd.f32 %v1704, %v1885
        %v1889 = vadd.f32 %v1705, %v1886
        %v1890 = vadd.f32 %v1706, %v1887
        %v1891 = vld [vmem:[%s7] sm:$0x3]
        %v1892 = vld [vmem:[#allocation3] sm:$0xff]
        %1894 = vset.pattern.permute.xlu0 14
        %1895 = vperm.xlu0 %1894, %v1891
        %v1896 = vpop.permute.xlu0 %1895
        %v1899 = vcombine.high %v1892, %v1892
        %v1901 = vunpack.c.l.s4 1983009808
        %v1902 = vunpack.c.0.s8 %v1901
        %v1903 = vlaneseq
        %v1904 = vshrl.u32 %v1903, 7
        %v1905 = vsub.s32 %v1902, %v1904
        %v1906 = vrot.slane %v1892, %v1905
        %v1908 = vunpack.c.l.s4 1983009808
        %v1909 = vunpack.c.0.s8 %v1908
        %v1910 = vlaneseq
        %v1911 = vshrl.u32 %v1910, 7
        %v1912 = vsub.s32 %v1909, %v1911
        %v1913 = vrot.slane %v1899, %v1912
        %v1914 = vcombine.high %v1906, %v1906
        %v1915 = vcombine.high %v1913, %v1913
        %1916 = vrot.lane.b32.xlu0 %v1906, 76
        %v1917 = vpop.permute.xlu0 %1916
        %1918 = vrot.lane.b32.xlu0 %v1914, 76
        %v1919 = vpop.permute.xlu0 %1918
        %1920 = vrot.lane.b32.xlu0 %v1913, 76
        %v1921 = vpop.permute.xlu0 %1920
        %1922 = vrot.lane.b32.xlu0 %v1915, 76
        %v1923 = vpop.permute.xlu0 %1922
        %vm1924 = vcmask 621568
        %v1925 = vsel %vm1924, %v1917, %v1919
        %v1926 = vsel %vm1924, %v1919, %v1921
        %v1927 = vsel %vm1924, %v1921, %v1923
        %v1931 = vmul.f32 %v1896, %v1925
        %v1932 = vmul.f32 %v1896, %v1926
        %v1933 = vmul.f32 %v1896, %v1927
        %v1934 = vadd.f32 %v1750, %v1931
        %v1935 = vadd.f32 %v1751, %v1932
        %v1936 = vadd.f32 %v1752, %v1933
        %v1937 = vld [vmem:[%s7] sm:$0x3]
        %v1938 = vld [vmem:[#allocation3] sm:$0xff]
        %1940 = vset.pattern.permute.xlu0 15
        %1941 = vperm.xlu0 %1940, %v1937
        %v1942 = vpop.permute.xlu0 %1941
        %v1945 = vcombine.high %v1938, %v1938
        %v1947 = vunpack.c.l.s4 1983009808
        %v1948 = vunpack.c.0.s8 %v1947
        %v1949 = vlaneseq
        %v1950 = vshrl.u32 %v1949, 7
        %v1951 = vsub.s32 %v1948, %v1950
        %v1952 = vrot.slane %v1938, %v1951
        %v1954 = vunpack.c.l.s4 1983009808
        %v1955 = vunpack.c.0.s8 %v1954
        %v1956 = vlaneseq
        %v1957 = vshrl.u32 %v1956, 7
        %v1958 = vsub.s32 %v1955, %v1957
        %v1959 = vrot.slane %v1945, %v1958
        %v1960 = vcombine.high %v1952, %v1952
        %v1961 = vcombine.high %v1959, %v1959
        %1962 = vrot.lane.b32.xlu0 %v1952, 75
        %v1963 = vpop.permute.xlu0 %1962
        %1964 = vrot.lane.b32.xlu0 %v1960, 75
        %v1965 = vpop.permute.xlu0 %1964
        %1966 = vrot.lane.b32.xlu0 %v1959, 75
        %v1967 = vpop.permute.xlu0 %1966
        %1968 = vrot.lane.b32.xlu0 %v1961, 75
        %v1969 = vpop.permute.xlu0 %1968
        %vm1970 = vcmask 613376
        %v1971 = vsel %vm1970, %v1963, %v1965
        %v1972 = vsel %vm1970, %v1965, %v1967
        %v1973 = vsel %vm1970, %v1967, %v1969
        %v1977 = vmul.f32 %v1942, %v1971
        %v1978 = vmul.f32 %v1942, %v1972
        %v1979 = vmul.f32 %v1942, %v1973
        %v1980 = vadd.f32 %v1796, %v1977
        %v1981 = vadd.f32 %v1797, %v1978
        %v1982 = vadd.f32 %v1798, %v1979
        %v1983 = vld [vmem:[%s7] sm:$0x3]
        %v1984 = vld [vmem:[#allocation3] sm:$0xff]
        %1986 = vset.pattern.permute.xlu0 16
        %1987 = vperm.xlu0 %1986, %v1983
        %v1988 = vpop.permute.xlu0 %1987
        %v1991 = vcombine.high %v1984, %v1984
        %v1993 = vunpack.c.l.s4 1983009808
        %v1994 = vunpack.c.0.s8 %v1993
        %v1995 = vlaneseq
        %v1996 = vshrl.u32 %v1995, 7
        %v1997 = vsub.s32 %v1994, %v1996
        %v1998 = vrot.slane %v1984, %v1997
        %v2000 = vunpack.c.l.s4 1983009808
        %v2001 = vunpack.c.0.s8 %v2000
        %v2002 = vlaneseq
        %v2003 = vshrl.u32 %v2002, 7
        %v2004 = vsub.s32 %v2001, %v2003
        %v2005 = vrot.slane %v1991, %v2004
        %v2006 = vcombine.high %v1998, %v1998
        %v2007 = vcombine.high %v2005, %v2005
        %2008 = vrot.lane.b32.xlu0 %v1998, 74
        %v2009 = vpop.permute.xlu0 %2008
        %2010 = vrot.lane.b32.xlu0 %v2006, 74
        %v2011 = vpop.permute.xlu0 %2010
        %2012 = vrot.lane.b32.xlu0 %v2005, 74
        %v2013 = vpop.permute.xlu0 %2012
        %2014 = vrot.lane.b32.xlu0 %v2007, 74
        %v2015 = vpop.permute.xlu0 %2014
        %vm2016 = vcmask 605184
        %v2017 = vsel %vm2016, %v2009, %v2011
        %v2018 = vsel %vm2016, %v2011, %v2013
        %v2019 = vsel %vm2016, %v2013, %v2015
        %v2023 = vmul.f32 %v1988, %v2017
        %v2024 = vmul.f32 %v1988, %v2018
        %v2025 = vmul.f32 %v1988, %v2019
        %v2026 = vadd.f32 %v1842, %v2023
        %v2027 = vadd.f32 %v1843, %v2024
        %v2028 = vadd.f32 %v1844, %v2025
        %v2029 = vld [vmem:[%s7] sm:$0x3]
        %v2030 = vld [vmem:[#allocation3] sm:$0xff]
        %2032 = vset.pattern.permute.xlu0 17
        %2033 = vperm.xlu0 %2032, %v2029
        %v2034 = vpop.permute.xlu0 %2033
        %v2037 = vcombine.high %v2030, %v2030
        %v2039 = vunpack.c.l.s4 1983009808
        %v2040 = vunpack.c.0.s8 %v2039
        %v2041 = vlaneseq
        %v2042 = vshrl.u32 %v2041, 7
        %v2043 = vsub.s32 %v2040, %v2042
        %v2044 = vrot.slane %v2030, %v2043
        %v2046 = vunpack.c.l.s4 1983009808
        %v2047 = vunpack.c.0.s8 %v2046
        %v2048 = vlaneseq
        %v2049 = vshrl.u32 %v2048, 7
        %v2050 = vsub.s32 %v2047, %v2049
        %v2051 = vrot.slane %v2037, %v2050
        %v2052 = vcombine.high %v2044, %v2044
        %v2053 = vcombine.high %v2051, %v2051
        %2054 = vrot.lane.b32.xlu0 %v2044, 73
        %v2055 = vpop.permute.xlu0 %2054
        %2056 = vrot.lane.b32.xlu0 %v2052, 73
        %v2057 = vpop.permute.xlu0 %2056
        %2058 = vrot.lane.b32.xlu0 %v2051, 73
        %v2059 = vpop.permute.xlu0 %2058
        %2060 = vrot.lane.b32.xlu0 %v2053, 73
        %v2061 = vpop.permute.xlu0 %2060
        %vm2062 = vcmask 596992
        %v2063 = vsel %vm2062, %v2055, %v2057
        %v2064 = vsel %vm2062, %v2057, %v2059
        %v2065 = vsel %vm2062, %v2059, %v2061
        %v2069 = vmul.f32 %v2034, %v2063
        %v2070 = vmul.f32 %v2034, %v2064
        %v2071 = vmul.f32 %v2034, %v2065
        %v2072 = vadd.f32 %v1888, %v2069
        %v2073 = vadd.f32 %v1889, %v2070
        %v2074 = vadd.f32 %v1890, %v2071
        %v2075 = vld [vmem:[%s7] sm:$0x3]
        %v2076 = vld [vmem:[#allocation3] sm:$0xff]
        %2078 = vset.pattern.permute.xlu0 18
        %2079 = vperm.xlu0 %2078, %v2075
        %v2080 = vpop.permute.xlu0 %2079
        %v2083 = vcombine.high %v2076, %v2076
        %v2085 = vunpack.c.l.s4 1983009808
        %v2086 = vunpack.c.0.s8 %v2085
        %v2087 = vlaneseq
        %v2088 = vshrl.u32 %v2087, 7
        %v2089 = vsub.s32 %v2086, %v2088
        %v2090 = vrot.slane %v2076, %v2089
        %v2092 = vunpack.c.l.s4 1983009808
        %v2093 = vunpack.c.0.s8 %v2092
        %v2094 = vlaneseq
        %v2095 = vshrl.u32 %v2094, 7
        %v2096 = vsub.s32 %v2093, %v2095
        %v2097 = vrot.slane %v2083, %v2096
        %v2098 = vcombine.high %v2090, %v2090
        %v2099 = vcombine.high %v2097, %v2097
        %2100 = vrot.lane.b32.xlu0 %v2090, 72
        %v2101 = vpop.permute.xlu0 %2100
        %2102 = vrot.lane.b32.xlu0 %v2098, 72
        %v2103 = vpop.permute.xlu0 %2102
        %2104 = vrot.lane.b32.xlu0 %v2097, 72
        %v2105 = vpop.permute.xlu0 %2104
        %2106 = vrot.lane.b32.xlu0 %v2099, 72
        %v2107 = vpop.permute.xlu0 %2106
        %vm2108 = vcmask 588800
        %v2109 = vsel %vm2108, %v2101, %v2103
        %v2110 = vsel %vm2108, %v2103, %v2105
        %v2111 = vsel %vm2108, %v2105, %v2107
        %v2115 = vmul.f32 %v2080, %v2109
        %v2116 = vmul.f32 %v2080, %v2110
        %v2117 = vmul.f32 %v2080, %v2111
        %v2118 = vadd.f32 %v1934, %v2115
        %v2119 = vadd.f32 %v1935, %v2116
        %v2120 = vadd.f32 %v1936, %v2117
        %v2121 = vld [vmem:[%s7] sm:$0x3]
        %v2122 = vld [vmem:[#allocation3] sm:$0xff]
        %2124 = vset.pattern.permute.xlu0 19
        %2125 = vperm.xlu0 %2124, %v2121
        %v2126 = vpop.permute.xlu0 %2125
        %v2129 = vcombine.high %v2122, %v2122
        %v2131 = vunpack.c.l.s4 1983009808
        %v2132 = vunpack.c.0.s8 %v2131
        %v2133 = vlaneseq
        %v2134 = vshrl.u32 %v2133, 7
        %v2135 = vsub.s32 %v2132, %v2134
        %v2136 = vrot.slane %v2122, %v2135
        %v2138 = vunpack.c.l.s4 1983009808
        %v2139 = vunpack.c.0.s8 %v2138
        %v2140 = vlaneseq
        %v2141 = vshrl.u32 %v2140, 7
        %v2142 = vsub.s32 %v2139, %v2141
        %v2143 = vrot.slane %v2129, %v2142
        %v2144 = vcombine.high %v2136, %v2136
        %v2145 = vcombine.high %v2143, %v2143
        %2146 = vrot.lane.b32.xlu0 %v2136, 71
        %v2147 = vpop.permute.xlu0 %2146
        %2148 = vrot.lane.b32.xlu0 %v2144, 71
        %v2149 = vpop.permute.xlu0 %2148
        %2150 = vrot.lane.b32.xlu0 %v2143, 71
        %v2151 = vpop.permute.xlu0 %2150
        %2152 = vrot.lane.b32.xlu0 %v2145, 71
        %v2153 = vpop.permute.xlu0 %2152
        %vm2154 = vcmask 580608
        %v2155 = vsel %vm2154, %v2147, %v2149
        %v2156 = vsel %vm2154, %v2149, %v2151
        %v2157 = vsel %vm2154, %v2151, %v2153
        %v2161 = vmul.f32 %v2126, %v2155
        %v2162 = vmul.f32 %v2126, %v2156
        %v2163 = vmul.f32 %v2126, %v2157
        %v2164 = vadd.f32 %v1980, %v2161
        %v2165 = vadd.f32 %v1981, %v2162
        %v2166 = vadd.f32 %v1982, %v2163
        %v2167 = vld [vmem:[%s7] sm:$0x3]
        %v2168 = vld [vmem:[#allocation3] sm:$0xff]
        %2170 = vset.pattern.permute.xlu0 20
        %2171 = vperm.xlu0 %2170, %v2167
        %v2172 = vpop.permute.xlu0 %2171
        %v2175 = vcombine.high %v2168, %v2168
        %v2177 = vunpack.c.l.s4 1983009808
        %v2178 = vunpack.c.0.s8 %v2177
        %v2179 = vlaneseq
        %v2180 = vshrl.u32 %v2179, 7
        %v2181 = vsub.s32 %v2178, %v2180
        %v2182 = vrot.slane %v2168, %v2181
        %v2184 = vunpack.c.l.s4 1983009808
        %v2185 = vunpack.c.0.s8 %v2184
        %v2186 = vlaneseq
        %v2187 = vshrl.u32 %v2186, 7
        %v2188 = vsub.s32 %v2185, %v2187
        %v2189 = vrot.slane %v2175, %v2188
        %v2190 = vcombine.high %v2182, %v2182
        %v2191 = vcombine.high %v2189, %v2189
        %2192 = vrot.lane.b32.xlu0 %v2182, 70
        %v2193 = vpop.permute.xlu0 %2192
        %2194 = vrot.lane.b32.xlu0 %v2190, 70
        %v2195 = vpop.permute.xlu0 %2194
        %2196 = vrot.lane.b32.xlu0 %v2189, 70
        %v2197 = vpop.permute.xlu0 %2196
        %2198 = vrot.lane.b32.xlu0 %v2191, 70
        %v2199 = vpop.permute.xlu0 %2198
        %vm2200 = vcmask 572416
        %v2201 = vsel %vm2200, %v2193, %v2195
        %v2202 = vsel %vm2200, %v2195, %v2197
        %v2203 = vsel %vm2200, %v2197, %v2199
        %v2207 = vmul.f32 %v2172, %v2201
        %v2208 = vmul.f32 %v2172, %v2202
        %v2209 = vmul.f32 %v2172, %v2203
        %v2210 = vadd.f32 %v2026, %v2207
        %v2211 = vadd.f32 %v2027, %v2208
        %v2212 = vadd.f32 %v2028, %v2209
        %v2213 = vld [vmem:[%s7] sm:$0x3]
        %v2214 = vld [vmem:[#allocation3] sm:$0xff]
        %2216 = vset.pattern.permute.xlu0 21
        %2217 = vperm.xlu0 %2216, %v2213
        %v2218 = vpop.permute.xlu0 %2217
        %v2221 = vcombine.high %v2214, %v2214
        %v2223 = vunpack.c.l.s4 1983009808
        %v2224 = vunpack.c.0.s8 %v2223
        %v2225 = vlaneseq
        %v2226 = vshrl.u32 %v2225, 7
        %v2227 = vsub.s32 %v2224, %v2226
        %v2228 = vrot.slane %v2214, %v2227
        %v2230 = vunpack.c.l.s4 1983009808
        %v2231 = vunpack.c.0.s8 %v2230
        %v2232 = vlaneseq
        %v2233 = vshrl.u32 %v2232, 7
        %v2234 = vsub.s32 %v2231, %v2233
        %v2235 = vrot.slane %v2221, %v2234
        %v2236 = vcombine.high %v2228, %v2228
        %v2237 = vcombine.high %v2235, %v2235
        %2238 = vrot.lane.b32.xlu0 %v2228, 54
        %v2239 = vpop.permute.xlu0 %2238
        %2240 = vrot.lane.b32.xlu0 %v2236, 54
        %v2241 = vpop.permute.xlu0 %2240
        %2242 = vrot.lane.b32.xlu0 %v2235, 54
        %v2243 = vpop.permute.xlu0 %2242
        %2244 = vrot.lane.b32.xlu0 %v2237, 54
        %v2245 = vpop.permute.xlu0 %2244
        %vm2246 = vcmask 441344
        %v2247 = vsel %vm2246, %v2239, %v2241
        %v2248 = vsel %vm2246, %v2241, %v2243
        %v2249 = vsel %vm2246, %v2243, %v2245
        %v2253 = vmul.f32 %v2218, %v2247
        %v2254 = vmul.f32 %v2218, %v2248
        %v2255 = vmul.f32 %v2218, %v2249
        %v2256 = vadd.f32 %v2072, %v2253
        %v2257 = vadd.f32 %v2073, %v2254
        %v2258 = vadd.f32 %v2074, %v2255
        %v2259 = vld [vmem:[%s7] sm:$0x3]
        %v2260 = vld [vmem:[#allocation3] sm:$0xff]
        %2262 = vset.pattern.permute.xlu0 22
        %2263 = vperm.xlu0 %2262, %v2259
        %v2264 = vpop.permute.xlu0 %2263
        %v2267 = vcombine.high %v2260, %v2260
        %v2269 = vunpack.c.l.s4 1983009808
        %v2270 = vunpack.c.0.s8 %v2269
        %v2271 = vlaneseq
        %v2272 = vshrl.u32 %v2271, 7
        %v2273 = vsub.s32 %v2270, %v2272
        %v2274 = vrot.slane %v2260, %v2273
        %v2276 = vunpack.c.l.s4 1983009808
        %v2277 = vunpack.c.0.s8 %v2276
        %v2278 = vlaneseq
        %v2279 = vshrl.u32 %v2278, 7
        %v2280 = vsub.s32 %v2277, %v2279
        %v2281 = vrot.slane %v2267, %v2280
        %v2282 = vcombine.high %v2274, %v2274
        %v2283 = vcombine.high %v2281, %v2281
        %2284 = vrot.lane.b32.xlu0 %v2274, 53
        %v2285 = vpop.permute.xlu0 %2284
        %2286 = vrot.lane.b32.xlu0 %v2282, 53
        %v2287 = vpop.permute.xlu0 %2286
        %2288 = vrot.lane.b32.xlu0 %v2281, 53
        %v2289 = vpop.permute.xlu0 %2288
        %2290 = vrot.lane.b32.xlu0 %v2283, 53
        %v2291 = vpop.permute.xlu0 %2290
        %vm2292 = vcmask 433152
        %v2293 = vsel %vm2292, %v2285, %v2287
        %v2294 = vsel %vm2292, %v2287, %v2289
        %v2295 = vsel %vm2292, %v2289, %v2291
        %v2299 = vmul.f32 %v2264, %v2293
        %v2300 = vmul.f32 %v2264, %v2294
        %v2301 = vmul.f32 %v2264, %v2295
        %v2302 = vadd.f32 %v2118, %v2299
        %v2303 = vadd.f32 %v2119, %v2300
        %v2304 = vadd.f32 %v2120, %v2301
        %v2305 = vld [vmem:[%s7] sm:$0x3]
        %v2306 = vld [vmem:[#allocation3] sm:$0xff]
        %2308 = vset.pattern.permute.xlu0 23
        %2309 = vperm.xlu0 %2308, %v2305
        %v2310 = vpop.permute.xlu0 %2309
        %v2313 = vcombine.high %v2306, %v2306
        %v2315 = vunpack.c.l.s4 1983009808
        %v2316 = vunpack.c.0.s8 %v2315
        %v2317 = vlaneseq
        %v2318 = vshrl.u32 %v2317, 7
        %v2319 = vsub.s32 %v2316, %v2318
        %v2320 = vrot.slane %v2306, %v2319
        %v2322 = vunpack.c.l.s4 1983009808
        %v2323 = vunpack.c.0.s8 %v2322
        %v2324 = vlaneseq
        %v2325 = vshrl.u32 %v2324, 7
        %v2326 = vsub.s32 %v2323, %v2325
        %v2327 = vrot.slane %v2313, %v2326
        %v2328 = vcombine.high %v2320, %v2320
        %v2329 = vcombine.high %v2327, %v2327
        %2330 = vrot.lane.b32.xlu0 %v2320, 52
        %v2331 = vpop.permute.xlu0 %2330
        %2332 = vrot.lane.b32.xlu0 %v2328, 52
        %v2333 = vpop.permute.xlu0 %2332
        %2334 = vrot.lane.b32.xlu0 %v2327, 52
        %v2335 = vpop.permute.xlu0 %2334
        %2336 = vrot.lane.b32.xlu0 %v2329, 52
        %v2337 = vpop.permute.xlu0 %2336
        %vm2338 = vcmask 424960
        %v2339 = vsel %vm2338, %v2331, %v2333
        %v2340 = vsel %vm2338, %v2333, %v2335
        %v2341 = vsel %vm2338, %v2335, %v2337
        %v2345 = vmul.f32 %v2310, %v2339
        %v2346 = vmul.f32 %v2310, %v2340
        %v2347 = vmul.f32 %v2310, %v2341
        %v2348 = vadd.f32 %v2164, %v2345
        %v2349 = vadd.f32 %v2165, %v2346
        %v2350 = vadd.f32 %v2166, %v2347
        %v2351 = vld [vmem:[%s7] sm:$0x3]
        %v2352 = vld [vmem:[#allocation3] sm:$0xff]
        %2354 = vset.pattern.permute.xlu0 24
        %2355 = vperm.xlu0 %2354, %v2351
        %v2356 = vpop.permute.xlu0 %2355
        %v2359 = vcombine.high %v2352, %v2352
        %v2361 = vunpack.c.l.s4 1983009808
        %v2362 = vunpack.c.0.s8 %v2361
        %v2363 = vlaneseq
        %v2364 = vshrl.u32 %v2363, 7
        %v2365 = vsub.s32 %v2362, %v2364
        %v2366 = vrot.slane %v2352, %v2365
        %v2368 = vunpack.c.l.s4 1983009808
        %v2369 = vunpack.c.0.s8 %v2368
        %v2370 = vlaneseq
        %v2371 = vshrl.u32 %v2370, 7
        %v2372 = vsub.s32 %v2369, %v2371
        %v2373 = vrot.slane %v2359, %v2372
        %v2374 = vcombine.high %v2366, %v2366
        %v2375 = vcombine.high %v2373, %v2373
        %2376 = vrot.lane.b32.xlu0 %v2366, 51
        %v2377 = vpop.permute.xlu0 %2376
        %2378 = vrot.lane.b32.xlu0 %v2374, 51
        %v2379 = vpop.permute.xlu0 %2378
        %2380 = vrot.lane.b32.xlu0 %v2373, 51
        %v2381 = vpop.permute.xlu0 %2380
        %2382 = vrot.lane.b32.xlu0 %v2375, 51
        %v2383 = vpop.permute.xlu0 %2382
        %vm2384 = vcmask 416768
        %v2385 = vsel %vm2384, %v2377, %v2379
        %v2386 = vsel %vm2384, %v2379, %v2381
        %v2387 = vsel %vm2384, %v2381, %v2383
        %v2391 = vmul.f32 %v2356, %v2385
        %v2392 = vmul.f32 %v2356, %v2386
        %v2393 = vmul.f32 %v2356, %v2387
        %v2394 = vadd.f32 %v2210, %v2391
        %v2395 = vadd.f32 %v2211, %v2392
        %v2396 = vadd.f32 %v2212, %v2393
        %v2397 = vld [vmem:[%s7] sm:$0x3]
        %v2398 = vld [vmem:[#allocation3] sm:$0xff]
        %2400 = vset.pattern.permute.xlu0 25
        %2401 = vperm.xlu0 %2400, %v2397
        %v2402 = vpop.permute.xlu0 %2401
        %v2405 = vcombine.high %v2398, %v2398
        %v2407 = vunpack.c.l.s4 1983009808
        %v2408 = vunpack.c.0.s8 %v2407
        %v2409 = vlaneseq
        %v2410 = vshrl.u32 %v2409, 7
        %v2411 = vsub.s32 %v2408, %v2410
        %v2412 = vrot.slane %v2398, %v2411
        %v2414 = vunpack.c.l.s4 1983009808
        %v2415 = vunpack.c.0.s8 %v2414
        %v2416 = vlaneseq
        %v2417 = vshrl.u32 %v2416, 7
        %v2418 = vsub.s32 %v2415, %v2417
        %v2419 = vrot.slane %v2405, %v2418
        %v2420 = vcombine.high %v2412, %v2412
        %v2421 = vcombine.high %v2419, %v2419
        %2422 = vrot.lane.b32.xlu0 %v2412, 50
        %v2423 = vpop.permute.xlu0 %2422
        %2424 = vrot.lane.b32.xlu0 %v2420, 50
        %v2425 = vpop.permute.xlu0 %2424
        %2426 = vrot.lane.b32.xlu0 %v2419, 50
        %v2427 = vpop.permute.xlu0 %2426
        %2428 = vrot.lane.b32.xlu0 %v2421, 50
        %v2429 = vpop.permute.xlu0 %2428
        %vm2430 = vcmask 408576
        %v2431 = vsel %vm2430, %v2423, %v2425
        %v2432 = vsel %vm2430, %v2425, %v2427
        %v2433 = vsel %vm2430, %v2427, %v2429
        %v2437 = vmul.f32 %v2402, %v2431
        %v2438 = vmul.f32 %v2402, %v2432
        %v2439 = vmul.f32 %v2402, %v2433
        %v2440 = vadd.f32 %v2256, %v2437
        %v2441 = vadd.f32 %v2257, %v2438
        %v2442 = vadd.f32 %v2258, %v2439
        %v2443 = vld [vmem:[%s7] sm:$0x3]
        %v2444 = vld [vmem:[#allocation3] sm:$0xff]
        %2446 = vset.pattern.permute.xlu0 26
        %2447 = vperm.xlu0 %2446, %v2443
        %v2448 = vpop.permute.xlu0 %2447
        %v2451 = vcombine.high %v2444, %v2444
        %v2453 = vunpack.c.l.s4 1983009808
        %v2454 = vunpack.c.0.s8 %v2453
        %v2455 = vlaneseq
        %v2456 = vshrl.u32 %v2455, 7
        %v2457 = vsub.s32 %v2454, %v2456
        %v2458 = vrot.slane %v2444, %v2457
        %v2460 = vunpack.c.l.s4 1983009808
        %v2461 = vunpack.c.0.s8 %v2460
        %v2462 = vlaneseq
        %v2463 = vshrl.u32 %v2462, 7
        %v2464 = vsub.s32 %v2461, %v2463
        %v2465 = vrot.slane %v2451, %v2464
        %v2466 = vcombine.high %v2458, %v2458
        %v2467 = vcombine.high %v2465, %v2465
        %2468 = vrot.lane.b32.xlu0 %v2458, 49
        %v2469 = vpop.permute.xlu0 %2468
        %2470 = vrot.lane.b32.xlu0 %v2466, 49
        %v2471 = vpop.permute.xlu0 %2470
        %2472 = vrot.lane.b32.xlu0 %v2465, 49
        %v2473 = vpop.permute.xlu0 %2472
        %2474 = vrot.lane.b32.xlu0 %v2467, 49
        %v2475 = vpop.permute.xlu0 %2474
        %vm2476 = vcmask 400384
        %v2477 = vsel %vm2476, %v2469, %v2471
        %v2478 = vsel %vm2476, %v2471, %v2473
        %v2479 = vsel %vm2476, %v2473, %v2475
        %v2483 = vmul.f32 %v2448, %v2477
        %v2484 = vmul.f32 %v2448, %v2478
        %v2485 = vmul.f32 %v2448, %v2479
        %v2486 = vadd.f32 %v2302, %v2483
        %v2487 = vadd.f32 %v2303, %v2484
        %v2488 = vadd.f32 %v2304, %v2485
        %v2489 = vld [vmem:[%s7] sm:$0x3]
        %v2490 = vld [vmem:[#allocation3] sm:$0xff]
        %2492 = vset.pattern.permute.xlu0 27
        %2493 = vperm.xlu0 %2492, %v2489
        %v2494 = vpop.permute.xlu0 %2493
        %v2497 = vcombine.high %v2490, %v2490
        %v2499 = vunpack.c.l.s4 1983009808
        %v2500 = vunpack.c.0.s8 %v2499
        %v2501 = vlaneseq
        %v2502 = vshrl.u32 %v2501, 7
        %v2503 = vsub.s32 %v2500, %v2502
        %v2504 = vrot.slane %v2490, %v2503
        %v2506 = vunpack.c.l.s4 1983009808
        %v2507 = vunpack.c.0.s8 %v2506
        %v2508 = vlaneseq
        %v2509 = vshrl.u32 %v2508, 7
        %v2510 = vsub.s32 %v2507, %v2509
        %v2511 = vrot.slane %v2497, %v2510
        %v2512 = vcombine.high %v2504, %v2504
        %v2513 = vcombine.high %v2511, %v2511
        %2514 = vrot.lane.b32.xlu0 %v2504, 48
        %v2515 = vpop.permute.xlu0 %2514
        %2516 = vrot.lane.b32.xlu0 %v2512, 48
        %v2517 = vpop.permute.xlu0 %2516
        %2518 = vrot.lane.b32.xlu0 %v2511, 48
        %v2519 = vpop.permute.xlu0 %2518
        %2520 = vrot.lane.b32.xlu0 %v2513, 48
        %v2521 = vpop.permute.xlu0 %2520
        %vm2522 = vcmask 392192
        %v2523 = vsel %vm2522, %v2515, %v2517
        %v2524 = vsel %vm2522, %v2517, %v2519
        %v2525 = vsel %vm2522, %v2519, %v2521
        %v2529 = vmul.f32 %v2494, %v2523
        %v2530 = vmul.f32 %v2494, %v2524
        %v2531 = vmul.f32 %v2494, %v2525
        %v2532 = vadd.f32 %v2348, %v2529
        %v2533 = vadd.f32 %v2349, %v2530
        %v2534 = vadd.f32 %v2350, %v2531
        %v2535 = vld [vmem:[%s7] sm:$0x3]
        %v2536 = vld [vmem:[#allocation3] sm:$0xff]
        %2538 = vset.pattern.permute.xlu0 28
        %2539 = vperm.xlu0 %2538, %v2535
        %v2540 = vpop.permute.xlu0 %2539
        %v2543 = vcombine.high %v2536, %v2536
        %v2545 = vunpack.c.l.s4 1983009808
        %v2546 = vunpack.c.0.s8 %v2545
        %v2547 = vlaneseq
        %v2548 = vshrl.u32 %v2547, 7
        %v2549 = vsub.s32 %v2546, %v2548
        %v2550 = vrot.slane %v2536, %v2549
        %v2552 = vunpack.c.l.s4 1983009808
        %v2553 = vunpack.c.0.s8 %v2552
        %v2554 = vlaneseq
        %v2555 = vshrl.u32 %v2554, 7
        %v2556 = vsub.s32 %v2553, %v2555
        %v2557 = vrot.slane %v2543, %v2556
        %v2558 = vcombine.high %v2550, %v2550
        %v2559 = vcombine.high %v2557, %v2557
        %2560 = vrot.lane.b32.xlu0 %v2550, 32
        %v2561 = vpop.permute.xlu0 %2560
        %2562 = vrot.lane.b32.xlu0 %v2558, 32
        %v2563 = vpop.permute.xlu0 %2562
        %2564 = vrot.lane.b32.xlu0 %v2557, 32
        %v2565 = vpop.permute.xlu0 %2564
        %2566 = vrot.lane.b32.xlu0 %v2559, 32
        %v2567 = vpop.permute.xlu0 %2566
        %vm2568 = vcmask 261120
        %v2569 = vsel %vm2568, %v2561, %v2563
        %v2570 = vsel %vm2568, %v2563, %v2565
        %v2571 = vsel %vm2568, %v2565, %v2567
        %v2575 = vmul.f32 %v2540, %v2569
        %v2576 = vmul.f32 %v2540, %v2570
        %v2577 = vmul.f32 %v2540, %v2571
        %v2578 = vadd.f32 %v2394, %v2575
        %v2579 = vadd.f32 %v2395, %v2576
        %v2580 = vadd.f32 %v2396, %v2577
        %v2581 = vld [vmem:[%s7] sm:$0x3]
        %v2582 = vld [vmem:[#allocation3] sm:$0xff]
        %2584 = vset.pattern.permute.xlu0 29
        %2585 = vperm.xlu0 %2584, %v2581
        %v2586 = vpop.permute.xlu0 %2585
        %v2589 = vcombine.high %v2582, %v2582
        %v2591 = vunpack.c.l.s4 1983009808
        %v2592 = vunpack.c.0.s8 %v2591
        %v2593 = vlaneseq
        %v2594 = vshrl.u32 %v2593, 7
        %v2595 = vsub.s32 %v2592, %v2594
        %v2596 = vrot.slane %v2582, %v2595
        %v2598 = vunpack.c.l.s4 1983009808
        %v2599 = vunpack.c.0.s8 %v2598
        %v2600 = vlaneseq
        %v2601 = vshrl.u32 %v2600, 7
        %v2602 = vsub.s32 %v2599, %v2601
        %v2603 = vrot.slane %v2589, %v2602
        %v2604 = vcombine.high %v2596, %v2596
        %v2605 = vcombine.high %v2603, %v2603
        %2606 = vrot.lane.b32.xlu0 %v2596, 31
        %v2607 = vpop.permute.xlu0 %2606
        %2608 = vrot.lane.b32.xlu0 %v2604, 31
        %v2609 = vpop.permute.xlu0 %2608
        %2610 = vrot.lane.b32.xlu0 %v2603, 31
        %v2611 = vpop.permute.xlu0 %2610
        %2612 = vrot.lane.b32.xlu0 %v2605, 31
        %v2613 = vpop.permute.xlu0 %2612
        %vm2614 = vcmask 252928
        %v2615 = vsel %vm2614, %v2607, %v2609
        %v2616 = vsel %vm2614, %v2609, %v2611
        %v2617 = vsel %vm2614, %v2611, %v2613
        %v2621 = vmul.f32 %v2586, %v2615
        %v2622 = vmul.f32 %v2586, %v2616
        %v2623 = vmul.f32 %v2586, %v2617
        %v2624 = vadd.f32 %v2440, %v2621
        %v2625 = vadd.f32 %v2441, %v2622
        %v2626 = vadd.f32 %v2442, %v2623
        %v2627 = vld [vmem:[%s7] sm:$0x3]
        %v2628 = vld [vmem:[#allocation3] sm:$0xff]
        %2630 = vset.pattern.permute.xlu0 30
        %2631 = vperm.xlu0 %2630, %v2627
        %v2632 = vpop.permute.xlu0 %2631
        %v2635 = vcombine.high %v2628, %v2628
        %v2637 = vunpack.c.l.s4 1983009808
        %v2638 = vunpack.c.0.s8 %v2637
        %v2639 = vlaneseq
        %v2640 = vshrl.u32 %v2639, 7
        %v2641 = vsub.s32 %v2638, %v2640
        %v2642 = vrot.slane %v2628, %v2641
        %v2644 = vunpack.c.l.s4 1983009808
        %v2645 = vunpack.c.0.s8 %v2644
        %v2646 = vlaneseq
        %v2647 = vshrl.u32 %v2646, 7
        %v2648 = vsub.s32 %v2645, %v2647
        %v2649 = vrot.slane %v2635, %v2648
        %v2650 = vcombine.high %v2642, %v2642
        %v2651 = vcombine.high %v2649, %v2649
        %2652 = vrot.lane.b32.xlu0 %v2642, 30
        %v2653 = vpop.permute.xlu0 %2652
        %2654 = vrot.lane.b32.xlu0 %v2650, 30
        %v2655 = vpop.permute.xlu0 %2654
        %2656 = vrot.lane.b32.xlu0 %v2649, 30
        %v2657 = vpop.permute.xlu0 %2656
        %2658 = vrot.lane.b32.xlu0 %v2651, 30
        %v2659 = vpop.permute.xlu0 %2658
        %vm2660 = vcmask 244736
        %v2661 = vsel %vm2660, %v2653, %v2655
        %v2662 = vsel %vm2660, %v2655, %v2657
        %v2663 = vsel %vm2660, %v2657, %v2659
        %v2667 = vmul.f32 %v2632, %v2661
        %v2668 = vmul.f32 %v2632, %v2662
        %v2669 = vmul.f32 %v2632, %v2663
        %v2670 = vadd.f32 %v2486, %v2667
        %v2671 = vadd.f32 %v2487, %v2668
        %v2672 = vadd.f32 %v2488, %v2669
        %v2673 = vld [vmem:[%s7] sm:$0x3]
        %v2674 = vld [vmem:[#allocation3] sm:$0xff]
        %2676 = vset.pattern.permute.xlu0 31
        %2677 = vperm.xlu0 %2676, %v2673
        %v2678 = vpop.permute.xlu0 %2677
        %v2681 = vcombine.high %v2674, %v2674
        %v2683 = vunpack.c.l.s4 1983009808
        %v2684 = vunpack.c.0.s8 %v2683
        %v2685 = vlaneseq
        %v2686 = vshrl.u32 %v2685, 7
        %v2687 = vsub.s32 %v2684, %v2686
        %v2688 = vrot.slane %v2674, %v2687
        %v2690 = vunpack.c.l.s4 1983009808
        %v2691 = vunpack.c.0.s8 %v2690
        %v2692 = vlaneseq
        %v2693 = vshrl.u32 %v2692, 7
        %v2694 = vsub.s32 %v2691, %v2693
        %v2695 = vrot.slane %v2681, %v2694
        %v2696 = vcombine.high %v2688, %v2688
        %v2697 = vcombine.high %v2695, %v2695
        %2698 = vrot.lane.b32.xlu0 %v2688, 29
        %v2699 = vpop.permute.xlu0 %2698
        %2700 = vrot.lane.b32.xlu0 %v2696, 29
        %v2701 = vpop.permute.xlu0 %2700
        %2702 = vrot.lane.b32.xlu0 %v2695, 29
        %v2703 = vpop.permute.xlu0 %2702
        %2704 = vrot.lane.b32.xlu0 %v2697, 29
        %v2705 = vpop.permute.xlu0 %2704
        %vm2706 = vcmask 236544
        %v2707 = vsel %vm2706, %v2699, %v2701
        %v2708 = vsel %vm2706, %v2701, %v2703
        %v2709 = vsel %vm2706, %v2703, %v2705
        %v2713 = vmul.f32 %v2678, %v2707
        %v2714 = vmul.f32 %v2678, %v2708
        %v2715 = vmul.f32 %v2678, %v2709
        %v2716 = vadd.f32 %v2532, %v2713
        %v2717 = vadd.f32 %v2533, %v2714
        %v2718 = vadd.f32 %v2534, %v2715
        %v2719 = vld [vmem:[%s7] sm:$0x3]
        %v2720 = vld [vmem:[#allocation3] sm:$0xff]
        %2722 = vset.pattern.permute.xlu0 32
        %2723 = vperm.xlu0 %2722, %v2719
        %v2724 = vpop.permute.xlu0 %2723
        %v2727 = vcombine.high %v2720, %v2720
        %v2729 = vunpack.c.l.s4 1983009808
        %v2730 = vunpack.c.0.s8 %v2729
        %v2731 = vlaneseq
        %v2732 = vshrl.u32 %v2731, 7
        %v2733 = vsub.s32 %v2730, %v2732
        %v2734 = vrot.slane %v2720, %v2733
        %v2736 = vunpack.c.l.s4 1983009808
        %v2737 = vunpack.c.0.s8 %v2736
        %v2738 = vlaneseq
        %v2739 = vshrl.u32 %v2738, 7
        %v2740 = vsub.s32 %v2737, %v2739
        %v2741 = vrot.slane %v2727, %v2740
        %v2742 = vcombine.high %v2734, %v2734
        %v2743 = vcombine.high %v2741, %v2741
        %2744 = vrot.lane.b32.xlu0 %v2734, 28
        %v2745 = vpop.permute.xlu0 %2744
        %2746 = vrot.lane.b32.xlu0 %v2742, 28
        %v2747 = vpop.permute.xlu0 %2746
        %2748 = vrot.lane.b32.xlu0 %v2741, 28
        %v2749 = vpop.permute.xlu0 %2748
        %2750 = vrot.lane.b32.xlu0 %v2743, 28
        %v2751 = vpop.permute.xlu0 %2750
        %vm2752 = vcmask 228352
        %v2753 = vsel %vm2752, %v2745, %v2747
        %v2754 = vsel %vm2752, %v2747, %v2749
        %v2755 = vsel %vm2752, %v2749, %v2751
        %v2759 = vmul.f32 %v2724, %v2753
        %v2760 = vmul.f32 %v2724, %v2754
        %v2761 = vmul.f32 %v2724, %v2755
        %v2762 = vadd.f32 %v2578, %v2759
        %v2763 = vadd.f32 %v2579, %v2760
        %v2764 = vadd.f32 %v2580, %v2761
        %v2765 = vld [vmem:[%s7] sm:$0x3]
        %v2766 = vld [vmem:[#allocation3] sm:$0xff]
        %2768 = vset.pattern.permute.xlu0 33
        %2769 = vperm.xlu0 %2768, %v2765
        %v2770 = vpop.permute.xlu0 %2769
        %v2773 = vcombine.high %v2766, %v2766
        %v2775 = vunpack.c.l.s4 1983009808
        %v2776 = vunpack.c.0.s8 %v2775
        %v2777 = vlaneseq
        %v2778 = vshrl.u32 %v2777, 7
        %v2779 = vsub.s32 %v2776, %v2778
        %v2780 = vrot.slane %v2766, %v2779
        %v2782 = vunpack.c.l.s4 1983009808
        %v2783 = vunpack.c.0.s8 %v2782
        %v2784 = vlaneseq
        %v2785 = vshrl.u32 %v2784, 7
        %v2786 = vsub.s32 %v2783, %v2785
        %v2787 = vrot.slane %v2773, %v2786
        %v2788 = vcombine.high %v2780, %v2780
        %v2789 = vcombine.high %v2787, %v2787
        %2790 = vrot.lane.b32.xlu0 %v2780, 27
        %v2791 = vpop.permute.xlu0 %2790
        %2792 = vrot.lane.b32.xlu0 %v2788, 27
        %v2793 = vpop.permute.xlu0 %2792
        %2794 = vrot.lane.b32.xlu0 %v2787, 27
        %v2795 = vpop.permute.xlu0 %2794
        %2796 = vrot.lane.b32.xlu0 %v2789, 27
        %v2797 = vpop.permute.xlu0 %2796
        %vm2798 = vcmask 220160
        %v2799 = vsel %vm2798, %v2791, %v2793
        %v2800 = vsel %vm2798, %v2793, %v2795
        %v2801 = vsel %vm2798, %v2795, %v2797
        %v2805 = vmul.f32 %v2770, %v2799
        %v2806 = vmul.f32 %v2770, %v2800
        %v2807 = vmul.f32 %v2770, %v2801
        %v2808 = vadd.f32 %v2624, %v2805
        %v2809 = vadd.f32 %v2625, %v2806
        %v2810 = vadd.f32 %v2626, %v2807
        %v2811 = vld [vmem:[%s7] sm:$0x3]
        %v2812 = vld [vmem:[#allocation3] sm:$0xff]
        %2814 = vset.pattern.permute.xlu0 34
        %2815 = vperm.xlu0 %2814, %v2811
        %v2816 = vpop.permute.xlu0 %2815
        %v2819 = vcombine.high %v2812, %v2812
        %v2821 = vunpack.c.l.s4 1983009808
        %v2822 = vunpack.c.0.s8 %v2821
        %v2823 = vlaneseq
        %v2824 = vshrl.u32 %v2823, 7
        %v2825 = vsub.s32 %v2822, %v2824
        %v2826 = vrot.slane %v2812, %v2825
        %v2828 = vunpack.c.l.s4 1983009808
        %v2829 = vunpack.c.0.s8 %v2828
        %v2830 = vlaneseq
        %v2831 = vshrl.u32 %v2830, 7
        %v2832 = vsub.s32 %v2829, %v2831
        %v2833 = vrot.slane %v2819, %v2832
        %v2834 = vcombine.high %v2826, %v2826
        %v2835 = vcombine.high %v2833, %v2833
        %2836 = vrot.lane.b32.xlu0 %v2826, 26
        %v2837 = vpop.permute.xlu0 %2836
        %2838 = vrot.lane.b32.xlu0 %v2834, 26
        %v2839 = vpop.permute.xlu0 %2838
        %2840 = vrot.lane.b32.xlu0 %v2833, 26
        %v2841 = vpop.permute.xlu0 %2840
        %2842 = vrot.lane.b32.xlu0 %v2835, 26
        %v2843 = vpop.permute.xlu0 %2842
        %vm2844 = vcmask 211968
        %v2845 = vsel %vm2844, %v2837, %v2839
        %v2846 = vsel %vm2844, %v2839, %v2841
        %v2847 = vsel %vm2844, %v2841, %v2843
        %v2851 = vmul.f32 %v2816, %v2845
        %v2852 = vmul.f32 %v2816, %v2846
        %v2853 = vmul.f32 %v2816, %v2847
        %v2854 = vadd.f32 %v2670, %v2851
        %v2855 = vadd.f32 %v2671, %v2852
        %v2856 = vadd.f32 %v2672, %v2853
        %v2857 = vld [vmem:[%s7] sm:$0x3]
        %v2858 = vld [vmem:[#allocation3] sm:$0xff]
        %2860 = vset.pattern.permute.xlu0 35
        %2861 = vperm.xlu0 %2860, %v2857
        %v2862 = vpop.permute.xlu0 %2861
        %v2865 = vcombine.high %v2858, %v2858
        %v2867 = vunpack.c.l.s4 1983009808
        %v2868 = vunpack.c.0.s8 %v2867
        %v2869 = vlaneseq
        %v2870 = vshrl.u32 %v2869, 7
        %v2871 = vsub.s32 %v2868, %v2870
        %v2872 = vrot.slane %v2858, %v2871
        %v2874 = vunpack.c.l.s4 1983009808
        %v2875 = vunpack.c.0.s8 %v2874
        %v2876 = vlaneseq
        %v2877 = vshrl.u32 %v2876, 7
        %v2878 = vsub.s32 %v2875, %v2877
        %v2879 = vrot.slane %v2865, %v2878
        %v2880 = vcombine.high %v2872, %v2872
        %v2881 = vcombine.high %v2879, %v2879
        %2882 = vrot.lane.b32.xlu0 %v2872, 10
        %v2883 = vpop.permute.xlu0 %2882
        %2884 = vrot.lane.b32.xlu0 %v2880, 10
        %v2885 = vpop.permute.xlu0 %2884
        %2886 = vrot.lane.b32.xlu0 %v2879, 10
        %v2887 = vpop.permute.xlu0 %2886
        %2888 = vrot.lane.b32.xlu0 %v2881, 10
        %v2889 = vpop.permute.xlu0 %2888
        %vm2890 = vcmask 80896
        %v2891 = vsel %vm2890, %v2883, %v2885
        %v2892 = vsel %vm2890, %v2885, %v2887
        %v2893 = vsel %vm2890, %v2887, %v2889
        %v2897 = vmul.f32 %v2862, %v2891
        %v2898 = vmul.f32 %v2862, %v2892
        %v2899 = vmul.f32 %v2862, %v2893
        %v2900 = vadd.f32 %v2716, %v2897
        %v2901 = vadd.f32 %v2717, %v2898
        %v2902 = vadd.f32 %v2718, %v2899
        %v2903 = vld [vmem:[%s7] sm:$0x3]
        %v2904 = vld [vmem:[#allocation3] sm:$0xff]
        %2906 = vset.pattern.permute.xlu0 36
        %2907 = vperm.xlu0 %2906, %v2903
        %v2908 = vpop.permute.xlu0 %2907
        %v2911 = vcombine.high %v2904, %v2904
        %v2913 = vunpack.c.l.s4 1983009808
        %v2914 = vunpack.c.0.s8 %v2913
        %v2915 = vlaneseq
        %v2916 = vshrl.u32 %v2915, 7
        %v2917 = vsub.s32 %v2914, %v2916
        %v2918 = vrot.slane %v2904, %v2917
        %v2920 = vunpack.c.l.s4 1983009808
        %v2921 = vunpack.c.0.s8 %v2920
        %v2922 = vlaneseq
        %v2923 = vshrl.u32 %v2922, 7
        %v2924 = vsub.s32 %v2921, %v2923
        %v2925 = vrot.slane %v2911, %v2924
        %v2926 = vcombine.high %v2918, %v2918
        %v2927 = vcombine.high %v2925, %v2925
        %2928 = vrot.lane.b32.xlu0 %v2918, 9
        %v2929 = vpop.permute.xlu0 %2928
        %2930 = vrot.lane.b32.xlu0 %v2926, 9
        %v2931 = vpop.permute.xlu0 %2930
        %2932 = vrot.lane.b32.xlu0 %v2925, 9
        %v2933 = vpop.permute.xlu0 %2932
        %2934 = vrot.lane.b32.xlu0 %v2927, 9
        %v2935 = vpop.permute.xlu0 %2934
        %vm2936 = vcmask 72704
        %v2937 = vsel %vm2936, %v2929, %v2931
        %v2938 = vsel %vm2936, %v2931, %v2933
        %v2939 = vsel %vm2936, %v2933, %v2935
        %v2943 = vmul.f32 %v2908, %v2937
        %v2944 = vmul.f32 %v2908, %v2938
        %v2945 = vmul.f32 %v2908, %v2939
        %v2946 = vadd.f32 %v2762, %v2943
        %v2947 = vadd.f32 %v2763, %v2944
        %v2948 = vadd.f32 %v2764, %v2945
        %v2949 = vld [vmem:[%s7] sm:$0x3]
        %v2950 = vld [vmem:[#allocation3] sm:$0xff]
        %2952 = vset.pattern.permute.xlu0 37
        %2953 = vperm.xlu0 %2952, %v2949
        %v2954 = vpop.permute.xlu0 %2953
        %v2957 = vcombine.high %v2950, %v2950
        %v2959 = vunpack.c.l.s4 1983009808
        %v2960 = vunpack.c.0.s8 %v2959
        %v2961 = vlaneseq
        %v2962 = vshrl.u32 %v2961, 7
        %v2963 = vsub.s32 %v2960, %v2962
        %v2964 = vrot.slane %v2950, %v2963
        %v2966 = vunpack.c.l.s4 1983009808
        %v2967 = vunpack.c.0.s8 %v2966
        %v2968 = vlaneseq
        %v2969 = vshrl.u32 %v2968, 7
        %v2970 = vsub.s32 %v2967, %v2969
        %v2971 = vrot.slane %v2957, %v2970
        %v2972 = vcombine.high %v2964, %v2964
        %v2973 = vcombine.high %v2971, %v2971
        %2974 = vrot.lane.b32.xlu0 %v2964, 8
        %v2975 = vpop.permute.xlu0 %2974
        %2976 = vrot.lane.b32.xlu0 %v2972, 8
        %v2977 = vpop.permute.xlu0 %2976
        %2978 = vrot.lane.b32.xlu0 %v2971, 8
        %v2979 = vpop.permute.xlu0 %2978
        %2980 = vrot.lane.b32.xlu0 %v2973, 8
        %v2981 = vpop.permute.xlu0 %2980
        %v2982 = vsel %vm1280, %v2975, %v2977
        %v2983 = vsel %vm1280, %v2977, %v2979
        %v2984 = vsel %vm1280, %v2979, %v2981
        %v2988 = vmul.f32 %v2954, %v2982
        %v2989 = vmul.f32 %v2954, %v2983
        %v2990 = vmul.f32 %v2954, %v2984
        %v2991 = vadd.f32 %v2808, %v2988
        %v2992 = vadd.f32 %v2809, %v2989
        %v2993 = vadd.f32 %v2810, %v2990
        %v2994 = vld [vmem:[%s7] sm:$0x3]
        %v2995 = vld [vmem:[#allocation3] sm:$0xff]
        %2997 = vset.pattern.permute.xlu0 38
        %2998 = vperm.xlu0 %2997, %v2994
        %v2999 = vpop.permute.xlu0 %2998
        %v3002 = vcombine.high %v2995, %v2995
        %v3004 = vunpack.c.l.s4 1983009808
        %v3005 = vunpack.c.0.s8 %v3004
        %v3006 = vlaneseq
        %v3007 = vshrl.u32 %v3006, 7
        %v3008 = vsub.s32 %v3005, %v3007
        %v3009 = vrot.slane %v2995, %v3008
        %v3011 = vunpack.c.l.s4 1983009808
        %v3012 = vunpack.c.0.s8 %v3011
        %v3013 = vlaneseq
        %v3014 = vshrl.u32 %v3013, 7
        %v3015 = vsub.s32 %v3012, %v3014
        %v3016 = vrot.slane %v3002, %v3015
        %v3017 = vcombine.high %v3009, %v3009
        %v3018 = vcombine.high %v3016, %v3016
        %3019 = vrot.lane.b32.xlu0 %v3009, 7
        %v3020 = vpop.permute.xlu0 %3019
        %3021 = vrot.lane.b32.xlu0 %v3017, 7
        %v3022 = vpop.permute.xlu0 %3021
        %3023 = vrot.lane.b32.xlu0 %v3016, 7
        %v3024 = vpop.permute.xlu0 %3023
        %3025 = vrot.lane.b32.xlu0 %v3018, 7
        %v3026 = vpop.permute.xlu0 %3025
        %vm3027 = vcmask 56320
        %v3028 = vsel %vm3027, %v3020, %v3022
        %v3029 = vsel %vm3027, %v3022, %v3024
        %v3030 = vsel %vm3027, %v3024, %v3026
        %v3034 = vmul.f32 %v2999, %v3028
        %v3035 = vmul.f32 %v2999, %v3029
        %v3036 = vmul.f32 %v2999, %v3030
        %v3037 = vadd.f32 %v2854, %v3034
        %v3038 = vadd.f32 %v2855, %v3035
        %v3039 = vadd.f32 %v2856, %v3036
        %v3040 = vld [vmem:[%s7] sm:$0x3]
        %v3041 = vld [vmem:[#allocation3] sm:$0xff]
        %3043 = vset.pattern.permute.xlu0 39
        %3044 = vperm.xlu0 %3043, %v3040
        %v3045 = vpop.permute.xlu0 %3044
        %v3048 = vcombine.high %v3041, %v3041
        %v3050 = vunpack.c.l.s4 1983009808
        %v3051 = vunpack.c.0.s8 %v3050
        %v3052 = vlaneseq
        %v3053 = vshrl.u32 %v3052, 7
        %v3054 = vsub.s32 %v3051, %v3053
        %v3055 = vrot.slane %v3041, %v3054
        %v3057 = vunpack.c.l.s4 1983009808
        %v3058 = vunpack.c.0.s8 %v3057
        %v3059 = vlaneseq
        %v3060 = vshrl.u32 %v3059, 7
        %v3061 = vsub.s32 %v3058, %v3060
        %v3062 = vrot.slane %v3048, %v3061
        %v3063 = vcombine.high %v3055, %v3055
        %v3064 = vcombine.high %v3062, %v3062
        %3065 = vrot.lane.b32.xlu0 %v3055, 6
        %v3066 = vpop.permute.xlu0 %3065
        %3067 = vrot.lane.b32.xlu0 %v3063, 6
        %v3068 = vpop.permute.xlu0 %3067
        %3069 = vrot.lane.b32.xlu0 %v3062, 6
        %v3070 = vpop.permute.xlu0 %3069
        %3071 = vrot.lane.b32.xlu0 %v3064, 6
        %v3072 = vpop.permute.xlu0 %3071
        %vm3073 = vcmask 48128
        %v3074 = vsel %vm3073, %v3066, %v3068
        %v3075 = vsel %vm3073, %v3068, %v3070
        %v3076 = vsel %vm3073, %v3070, %v3072
        %v3080 = vmul.f32 %v3045, %v3074
        %v3081 = vmul.f32 %v3045, %v3075
        %v3082 = vmul.f32 %v3045, %v3076
        %v3083 = vadd.f32 %v2900, %v3080
        %v3084 = vadd.f32 %v2901, %v3081
        %v3085 = vadd.f32 %v2902, %v3082
        %v3086 = vld [vmem:[%s7] sm:$0x3]
        %v3087 = vld [vmem:[#allocation3] sm:$0xff]
        %3089 = vset.pattern.permute.xlu0 40
        %3090 = vperm.xlu0 %3089, %v3086
        %v3091 = vpop.permute.xlu0 %3090
        %v3094 = vcombine.high %v3087, %v3087
        %v3096 = vunpack.c.l.s4 1983009808
        %v3097 = vunpack.c.0.s8 %v3096
        %v3098 = vlaneseq
        %v3099 = vshrl.u32 %v3098, 7
        %v3100 = vsub.s32 %v3097, %v3099
        %v3101 = vrot.slane %v3087, %v3100
        %v3103 = vunpack.c.l.s4 1983009808
        %v3104 = vunpack.c.0.s8 %v3103
        %v3105 = vlaneseq
        %v3106 = vshrl.u32 %v3105, 7
        %v3107 = vsub.s32 %v3104, %v3106
        %v3108 = vrot.slane %v3094, %v3107
        %v3109 = vcombine.high %v3101, %v3101
        %v3110 = vcombine.high %v3108, %v3108
        %3111 = vrot.lane.b32.xlu0 %v3101, 5
        %v3112 = vpop.permute.xlu0 %3111
        %3113 = vrot.lane.b32.xlu0 %v3109, 5
        %v3114 = vpop.permute.xlu0 %3113
        %3115 = vrot.lane.b32.xlu0 %v3108, 5
        %v3116 = vpop.permute.xlu0 %3115
        %3117 = vrot.lane.b32.xlu0 %v3110, 5
        %v3118 = vpop.permute.xlu0 %3117
        %vm3119 = vcmask 39936
        %v3120 = vsel %vm3119, %v3112, %v3114
        %v3121 = vsel %vm3119, %v3114, %v3116
        %v3122 = vsel %vm3119, %v3116, %v3118
        %v3126 = vmul.f32 %v3091, %v3120
        %v3127 = vmul.f32 %v3091, %v3121
        %v3128 = vmul.f32 %v3091, %v3122
        %v3129 = vadd.f32 %v2946, %v3126
        %v3130 = vadd.f32 %v2947, %v3127
        %v3131 = vadd.f32 %v2948, %v3128
        %v3132 = vld [vmem:[%s7] sm:$0x3]
        %v3133 = vld [vmem:[#allocation3] sm:$0xff]
        %3135 = vset.pattern.permute.xlu0 41
        %3136 = vperm.xlu0 %3135, %v3132
        %v3137 = vpop.permute.xlu0 %3136
        %v3140 = vcombine.high %v3133, %v3133
        %v3142 = vunpack.c.l.s4 1983009808
        %v3143 = vunpack.c.0.s8 %v3142
        %v3144 = vlaneseq
        %v3145 = vshrl.u32 %v3144, 7
        %v3146 = vsub.s32 %v3143, %v3145
        %v3147 = vrot.slane %v3133, %v3146
        %v3149 = vunpack.c.l.s4 1983009808
        %v3150 = vunpack.c.0.s8 %v3149
        %v3151 = vlaneseq
        %v3152 = vshrl.u32 %v3151, 7
        %v3153 = vsub.s32 %v3150, %v3152
        %v3154 = vrot.slane %v3140, %v3153
        %v3155 = vcombine.high %v3147, %v3147
        %v3156 = vcombine.high %v3154, %v3154
        %3157 = vrot.lane.b32.xlu0 %v3147, 4
        %v3158 = vpop.permute.xlu0 %3157
        %3159 = vrot.lane.b32.xlu0 %v3155, 4
        %v3160 = vpop.permute.xlu0 %3159
        %3161 = vrot.lane.b32.xlu0 %v3154, 4
        %v3162 = vpop.permute.xlu0 %3161
        %3163 = vrot.lane.b32.xlu0 %v3156, 4
        %v3164 = vpop.permute.xlu0 %3163
        %vm3165 = vcmask 31744
        %v3166 = vsel %vm3165, %v3158, %v3160
        %v3167 = vsel %vm3165, %v3160, %v3162
        %v3168 = vsel %vm3165, %v3162, %v3164
        %v3172 = vmul.f32 %v3137, %v3166
        %v3173 = vmul.f32 %v3137, %v3167
        %v3174 = vmul.f32 %v3137, %v3168
        %v3175 = vadd.f32 %v2991, %v3172
        %v3176 = vadd.f32 %v2992, %v3173
        %v3177 = vadd.f32 %v2993, %v3174
        %v3178 = vld [vmem:[%s7] sm:$0x3]
        %v3179 = vld [vmem:[#allocation3 + $0x2] sm:$0x3f]
        %3181 = vset.pattern.permute.xlu0 42
        %3182 = vperm.xlu0 %3181, %v3178
        %v3183 = vpop.permute.xlu0 %3182
        %v3186 = vcombine.high %v3179, %v3179
        %v3188 = vunpack.c.l.s4 1983009808
        %v3189 = vunpack.c.0.s8 %v3188
        %v3190 = vlaneseq
        %v3191 = vshrl.u32 %v3190, 7
        %v3192 = vsub.s32 %v3189, %v3191
        %v3193 = vrot.slane %v3179, %v3192
        %v3195 = vunpack.c.l.s4 1983009808
        %v3196 = vunpack.c.0.s8 %v3195
        %v3197 = vlaneseq
        %v3198 = vshrl.u32 %v3197, 7
        %v3199 = vsub.s32 %v3196, %v3198
        %v3200 = vrot.slane %v3186, %v3199
        %v3201 = vcombine.high %v3193, %v3193
        %3202 = vrot.lane.b32.xlu0 %v3193, 116
        %v3203 = vpop.permute.xlu0 %3202
        %3204 = vrot.lane.b32.xlu0 %v3201, 116
        %v3205 = vpop.permute.xlu0 %3204
        %3206 = vrot.lane.b32.xlu0 %v3200, 116
        %v3207 = vpop.permute.xlu0 %3206
        %v3208 = vsel %vm1172, %v3203, %v3205
        %v3209 = vsel %vm1172, %v3205, %v3207
        %v3213 = vmul.f32 %v3183, %v3208
        %v3214 = vmul.f32 %v3183, %v3209
        %v3215 = vmul.f32 %v3183, %v3207
        %v3216 = vadd.f32 %v3037, %v3213
        %v3217 = vadd.f32 %v3038, %v3214
        %v3218 = vadd.f32 %v3039, %v3215
        %v3219 = vld [vmem:[%s7] sm:$0x3]
        %v3220 = vld [vmem:[#allocation3 + $0x2] sm:$0x3f]
        %3222 = vset.pattern.permute.xlu0 43
        %3223 = vperm.xlu0 %3222, %v3219
        %v3224 = vpop.permute.xlu0 %3223
        %v3227 = vcombine.high %v3220, %v3220
        %v3229 = vunpack.c.l.s4 1983009808
        %v3230 = vunpack.c.0.s8 %v3229
        %v3231 = vlaneseq
        %v3232 = vshrl.u32 %v3231, 7
        %v3233 = vsub.s32 %v3230, %v3232
        %v3234 = vrot.slane %v3220, %v3233
        %v3236 = vunpack.c.l.s4 1983009808
        %v3237 = vunpack.c.0.s8 %v3236
        %v3238 = vlaneseq
        %v3239 = vshrl.u32 %v3238, 7
        %v3240 = vsub.s32 %v3237, %v3239
        %v3241 = vrot.slane %v3227, %v3240
        %v3242 = vcombine.high %v3234, %v3234
        %3243 = vrot.lane.b32.xlu0 %v3234, 115
        %v3244 = vpop.permute.xlu0 %3243
        %3245 = vrot.lane.b32.xlu0 %v3242, 115
        %v3246 = vpop.permute.xlu0 %3245
        %3247 = vrot.lane.b32.xlu0 %v3241, 115
        %v3248 = vpop.permute.xlu0 %3247
        %v3249 = vsel %vm1528, %v3244, %v3246
        %v3250 = vsel %vm1528, %v3246, %v3248
        %v3254 = vmul.f32 %v3224, %v3249
        %v3255 = vmul.f32 %v3224, %v3250
        %v3256 = vmul.f32 %v3224, %v3248
        %v3257 = vadd.f32 %v3083, %v3254
        %v3258 = vadd.f32 %v3084, %v3255
        %v3259 = vadd.f32 %v3085, %v3256
        %v3260 = vld [vmem:[%s7] sm:$0x3]
        %v3261 = vld [vmem:[#allocation3 + $0x2] sm:$0x3f]
        %3263 = vset.pattern.permute.xlu0 44
        %3264 = vperm.xlu0 %3263, %v3260
        %v3265 = vpop.permute.xlu0 %3264
        %v3268 = vcombine.high %v3261, %v3261
        %v3270 = vunpack.c.l.s4 1983009808
        %v3271 = vunpack.c.0.s8 %v3270
        %v3272 = vlaneseq
        %v3273 = vshrl.u32 %v3272, 7
        %v3274 = vsub.s32 %v3271, %v3273
        %v3275 = vrot.slane %v3261, %v3274
        %v3277 = vunpack.c.l.s4 1983009808
        %v3278 = vunpack.c.0.s8 %v3277
        %v3279 = vlaneseq
        %v3280 = vshrl.u32 %v3279, 7
        %v3281 = vsub.s32 %v3278, %v3280
        %v3282 = vrot.slane %v3268, %v3281
        %v3283 = vcombine.high %v3275, %v3275
        %3284 = vrot.lane.b32.xlu0 %v3275, 114
        %v3285 = vpop.permute.xlu0 %3284
        %3286 = vrot.lane.b32.xlu0 %v3283, 114
        %v3287 = vpop.permute.xlu0 %3286
        %3288 = vrot.lane.b32.xlu0 %v3282, 114
        %v3289 = vpop.permute.xlu0 %3288
        %v3290 = vsel %vm1220, %v3285, %v3287
        %v3291 = vsel %vm1220, %v3287, %v3289
        %v3295 = vmul.f32 %v3265, %v3290
        %v3296 = vmul.f32 %v3265, %v3291
        %v3297 = vmul.f32 %v3265, %v3289
        %v3298 = vadd.f32 %v3129, %v3295
        %v3299 = vadd.f32 %v3130, %v3296
        %v3300 = vadd.f32 %v3131, %v3297
        %v3301 = vld [vmem:[%s7] sm:$0x3]
        %v3302 = vld [vmem:[#allocation3 + $0x2] sm:$0x3f]
        %3304 = vset.pattern.permute.xlu0 45
        %3305 = vperm.xlu0 %3304, %v3301
        %v3306 = vpop.permute.xlu0 %3305
        %v3309 = vcombine.high %v3302, %v3302
        %v3311 = vunpack.c.l.s4 1983009808
        %v3312 = vunpack.c.0.s8 %v3311
        %v3313 = vlaneseq
        %v3314 = vshrl.u32 %v3313, 7
        %v3315 = vsub.s32 %v3312, %v3314
        %v3316 = vrot.slane %v3302, %v3315
        %v3318 = vunpack.c.l.s4 1983009808
        %v3319 = vunpack.c.0.s8 %v3318
        %v3320 = vlaneseq
        %v3321 = vshrl.u32 %v3320, 7
        %v3322 = vsub.s32 %v3319, %v3321
        %v3323 = vrot.slane %v3309, %v3322
        %v3324 = vcombine.high %v3316, %v3316
        %3325 = vrot.lane.b32.xlu0 %v3316, 113
        %v3326 = vpop.permute.xlu0 %3325
        %3327 = vrot.lane.b32.xlu0 %v3324, 113
        %v3328 = vpop.permute.xlu0 %3327
        %3329 = vrot.lane.b32.xlu0 %v3323, 113
        %v3330 = vpop.permute.xlu0 %3329
        %vm3331 = vcmask 924672
        %v3332 = vsel %vm3331, %v3326, %v3328
        %v3333 = vsel %vm3331, %v3328, %v3330
        %v3337 = vmul.f32 %v3306, %v3332
        %v3338 = vmul.f32 %v3306, %v3333
        %v3339 = vmul.f32 %v3306, %v3330
        %v3340 = vadd.f32 %v3175, %v3337
        %v3341 = vadd.f32 %v3176, %v3338
        %v3342 = vadd.f32 %v3177, %v3339
        %v3343 = vld [vmem:[%s7] sm:$0x3]
        %v3344 = vld [vmem:[#allocation3 + $0x2] sm:$0x3f]
        %3346 = vset.pattern.permute.xlu0 46
        %3347 = vperm.xlu0 %3346, %v3343
        %v3348 = vpop.permute.xlu0 %3347
        %v3351 = vcombine.high %v3344, %v3344
        %v3353 = vunpack.c.l.s4 1983009808
        %v3354 = vunpack.c.0.s8 %v3353
        %v3355 = vlaneseq
        %v3356 = vshrl.u32 %v3355, 7
        %v3357 = vsub.s32 %v3354, %v3356
        %v3358 = vrot.slane %v3344, %v3357
        %v3360 = vunpack.c.l.s4 1983009808
        %v3361 = vunpack.c.0.s8 %v3360
        %v3362 = vlaneseq
        %v3363 = vshrl.u32 %v3362, 7
        %v3364 = vsub.s32 %v3361, %v3363
        %v3365 = vrot.slane %v3351, %v3364
        %v3366 = vcombine.high %v3358, %v3358
        %3367 = vrot.lane.b32.xlu0 %v3358, 112
        %v3368 = vpop.permute.xlu0 %3367
        %3369 = vrot.lane.b32.xlu0 %v3366, 112
        %v3370 = vpop.permute.xlu0 %3369
        %3371 = vrot.lane.b32.xlu0 %v3365, 112
        %v3372 = vpop.permute.xlu0 %3371
        %vm3373 = vcmask 916480
        %v3374 = vsel %vm3373, %v3368, %v3370
        %v3375 = vsel %vm3373, %v3370, %v3372
        %v3379 = vmul.f32 %v3348, %v3374
        %v3380 = vmul.f32 %v3348, %v3375
        %v3381 = vmul.f32 %v3348, %v3372
        %v3382 = vadd.f32 %v3216, %v3379
        %v3383 = vadd.f32 %v3217, %v3380
        %v3384 = vadd.f32 %v3218, %v3381
        %v3385 = vld [vmem:[%s7] sm:$0x3]
        %v3386 = vld [vmem:[#allocation3 + $0x2] sm:$0x3f]
        %3388 = vset.pattern.permute.xlu0 47
        %3389 = vperm.xlu0 %3388, %v3385
        %v3390 = vpop.permute.xlu0 %3389
        %v3393 = vcombine.high %v3386, %v3386
        %v3395 = vunpack.c.l.s4 1983009808
        %v3396 = vunpack.c.0.s8 %v3395
        %v3397 = vlaneseq
        %v3398 = vshrl.u32 %v3397, 7
        %v3399 = vsub.s32 %v3396, %v3398
        %v3400 = vrot.slane %v3386, %v3399
        %v3402 = vunpack.c.l.s4 1983009808
        %v3403 = vunpack.c.0.s8 %v3402
        %v3404 = vlaneseq
        %v3405 = vshrl.u32 %v3404, 7
        %v3406 = vsub.s32 %v3403, %v3405
        %v3407 = vrot.slane %v3393, %v3406
        %v3408 = vcombine.high %v3400, %v3400
        %3409 = vrot.lane.b32.xlu0 %v3400, 111
        %v3410 = vpop.permute.xlu0 %3409
        %3411 = vrot.lane.b32.xlu0 %v3408, 111
        %v3412 = vpop.permute.xlu0 %3411
        %3413 = vrot.lane.b32.xlu0 %v3407, 111
        %v3414 = vpop.permute.xlu0 %3413
        %vm3415 = vcmask 908288
        %v3416 = vsel %vm3415, %v3410, %v3412
        %v3417 = vsel %vm3415, %v3412, %v3414
        %v3421 = vmul.f32 %v3390, %v3416
        %v3422 = vmul.f32 %v3390, %v3417
        %v3423 = vmul.f32 %v3390, %v3414
        %v3424 = vadd.f32 %v3257, %v3421
        %v3425 = vadd.f32 %v3258, %v3422
        %v3426 = vadd.f32 %v3259, %v3423
        %v3427 = vld [vmem:[%s7] sm:$0x3]
        %v3428 = vld [vmem:[#allocation3 + $0x2] sm:$0x3f]
        %3430 = vset.pattern.permute.xlu0 48
        %3431 = vperm.xlu0 %3430, %v3427
        %v3432 = vpop.permute.xlu0 %3431
        %v3435 = vcombine.high %v3428, %v3428
        %v3437 = vunpack.c.l.s4 1983009808
        %v3438 = vunpack.c.0.s8 %v3437
        %v3439 = vlaneseq
        %v3440 = vshrl.u32 %v3439, 7
        %v3441 = vsub.s32 %v3438, %v3440
        %v3442 = vrot.slane %v3428, %v3441
        %v3444 = vunpack.c.l.s4 1983009808
        %v3445 = vunpack.c.0.s8 %v3444
        %v3446 = vlaneseq
        %v3447 = vshrl.u32 %v3446, 7
        %v3448 = vsub.s32 %v3445, %v3447
        %v3449 = vrot.slane %v3435, %v3448
        %v3450 = vcombine.high %v3442, %v3442
        %3451 = vrot.lane.b32.xlu0 %v3442, 110
        %v3452 = vpop.permute.xlu0 %3451
        %3453 = vrot.lane.b32.xlu0 %v3450, 110
        %v3454 = vpop.permute.xlu0 %3453
        %3455 = vrot.lane.b32.xlu0 %v3449, 110
        %v3456 = vpop.permute.xlu0 %3455
        %vm3457 = vcmask 900096
        %v3458 = vsel %vm3457, %v3452, %v3454
        %v3459 = vsel %vm3457, %v3454, %v3456
        %v3463 = vmul.f32 %v3432, %v3458
        %v3464 = vmul.f32 %v3432, %v3459
        %v3465 = vmul.f32 %v3432, %v3456
        %v3466 = vadd.f32 %v3298, %v3463
        %v3467 = vadd.f32 %v3299, %v3464
        %v3468 = vadd.f32 %v3300, %v3465
        %v3469 = vadd.f32 %v3466, %v3340
        %v3470 = vadd.f32 %v3467, %v3341
        %v3471 = vadd.f32 %v3468, %v3342
        %v3472 = vadd.f32 %v3382, %v3424
        %v3473 = vadd.f32 %v3383, %v3425
        %v3474 = vadd.f32 %v3384, %v3426
        %v3475 = vadd.f32 %v3469, %v3472
        %v3476 = vadd.f32 %v3470, %v3473
        %v3477 = vadd.f32 %v3471, %v3474
        %v3481 = vrot.slane %v3475, 1
        %v3482 = vrot.slane %v3476, 1
        %v3483 = vrot.slane %v3477, 1
        %v3487 = vadd.f32 %v3475, %v3481
        %v3488 = vadd.f32 %v3476, %v3482
        %v3489 = vadd.f32 %v3477, %v3483
        %s3490 = sld [smem:[#allocation8]]
        %v3491 = vstv %s3490
        %v3492 = vadd.f32 %v3487, %v3491
        %v3493 = vadd.f32 %v3488, %v3491
        %v3494 = vadd.f32 %v3489, %v3491
        %v3498 = vcombine.low %v3492, %v3493
        %v3500 = vunpack.c.l.s4 1966171168
        %v3501 = vunpack.c.0.s8 %v3500
        %v3502 = vlaneseq
        %v3503 = vshrl.u32 %v3502, 7
        %v3504 = vsub.s32 %v3501, %v3503
        %v3505 = vrot.slane %v3498, %v3504
        %v3507 = vunpack.c.l.s4 1966171168
        %v3508 = vunpack.c.0.s8 %v3507
        %v3509 = vlaneseq
        %v3510 = vshrl.u32 %v3509, 7
        %v3511 = vsub.s32 %v3508, %v3510
        %v3512 = vrot.slane %v3494, %v3511
        %v3513 = vcombine.low %v3505, %v3512
        %v3515 = vunpack.c.l.s4 1966171168
        %v3516 = vunpack.c.0.s8 %v3515
        %v3517 = vlaneseq
        %v3518 = vshrl.u32 %v3517, 7
        %v3519 = vsub.s32 %v3516, %v3518
        %v3520 = vrot.slane %v3513, %v3519
        %3521 = vrot.lane.b32.xlu0 %v3520, 77
        %v3522 = vpop.permute.xlu0 %3521
        %v3523 = vrot.slane %v3522, 7
        %vm3524 = vcmask 629760
        %v3525 = vsel %vm3524, %v3523, %v3522
        %vm3527 = vcmp.ge.s32.totalorder %v583, 77
        %vm3528 = vcmp.lt.s32.totalorder %v583, 429
        %vm3529 = vmand %vm3527, %vm3528
        %3530 = vst.msk [vmem:[#allocation4] sm:$0xf] %vm3529, %v3525
        %v3532 = vunpack.c.l.s4 1966171168
        %v3533 = vunpack.c.0.s8 %v3532
        %v3534 = vlaneseq
        %v3535 = vshrl.u32 %v3534, 7
        %v3536 = vsub.s32 %v3533, %v3535
        %v3537 = vrot.slane %v3492, %v3536
        %v3539 = vunpack.c.l.s4 1966171168
        %v3540 = vunpack.c.0.s8 %v3539
        %v3541 = vlaneseq
        %v3542 = vshrl.u32 %v3541, 7
        %v3543 = vsub.s32 %v3540, %v3542
        %v3544 = vrot.slane %v3537, %v3543
        %3545 = vrot.lane.b32.xlu0 %v3544, 73
        %v3546 = vpop.permute.xlu0 %3545
        %vm3548 = vcmp.ge.s32.totalorder %v583, 11
        %vm3549 = vcmp.lt.s32.totalorder %v583, 27
        %vm3550 = vmand %vm3548, %vm3549
        %3551 = vst.msk [vmem:[#allocation4] sm:$0x1] %vm3550, %v3546
        %3552 = vrot.lane.b32.xlu0 %v3544, 117
        %v3553 = vpop.permute.xlu0 %3552
        %vm3555 = vcmp.ge.s32.totalorder %v583, 33
        %vm3556 = vcmp.lt.s32.totalorder %v583, 49
        %vm3557 = vmand %vm3555, %vm3556
        %3558 = vst.msk [vmem:[#allocation4] sm:$0x1] %vm3557, %v3553
        %3559 = vrot.lane.b32.xlu0 %v3544, 33
        %v3560 = vpop.permute.xlu0 %3559
        %vm3562 = vcmp.ge.s32.totalorder %v583, 55
        %vm3563 = vcmp.lt.s32.totalorder %v583, 71
        %vm3564 = vmand %vm3562, %vm3563
        %3565 = vst.msk [vmem:[#allocation4] sm:$0x1] %vm3564, %v3560
        %v3567 = vunpack.c.l.s4 1966171168
        %v3568 = vunpack.c.0.s8 %v3567
        %v3569 = vlaneseq
        %v3570 = vshrl.u32 %v3569, 7
        %v3571 = vsub.s32 %v3568, %v3570
        %v3572 = vrot.slane %v3512, %v3571
        %3573 = vrot.lane.b32.xlu0 %v3572, 121
        %v3574 = vpop.permute.xlu0 %3573
        %vm3576 = vcmp.ge.s32.totalorder %v583, 45
        %vm3577 = vcmp.lt.s32.totalorder %v583, 61
        %vm3578 = vmand %vm3576, %vm3577
        %3579 = vst.msk [vmem:[#allocation4 + $0x3] sm:$0x1] %vm3578, %v3574
        %3580 = vrot.lane.b32.xlu0 %v3572, 37
        %v3581 = vpop.permute.xlu0 %3580
        %vm3583 = vcmp.ge.s32.totalorder %v583, 67
        %vm3584 = vcmp.lt.s32.totalorder %v583, 83
        %vm3585 = vmand %vm3583, %vm3584
        %3586 = vst.msk [vmem:[#allocation4 + $0x3] sm:$0x1] %vm3585, %v3581
        %3587 = vrot.lane.b32.xlu0 %v3572, 81
        %v3588 = vpop.permute.xlu0 %3587
        %vm3590 = vcmp.ge.s32.totalorder %v583, 89
        %vm3591 = vcmp.lt.s32.totalorder %v583, 105
        %vm3592 = vmand %vm3590, %vm3591
        %3593 = vst.msk [vmem:[#allocation4 + $0x3] sm:$0x1] %vm3592, %v3588
        %v3594 = vld [vmem:[#allocation4] sm:$0xf]
        %vm3595 = vcmp.eq.s32.totalorder %v573, 2
        %3597 = vrot.lane.b32.xlu0 %v3594, 118
        %v3598 = vpop.permute.xlu0 %3597
        %v3599 = vrot.slane %v3598, 1
        %v3600 = vsel %vm1108, %v3598, %v3599
        %3602 = vrot.lane.b32.xlu0 %v3594, 120
        %v3603 = vpop.permute.xlu0 %3602
        %v3604 = vrot.slane %v3603, 1
        %v3605 = vsel %vm1124, %v3603, %v3604
        %v3607 = vsel %vm3595, %v3600, %v3605
        %vm3608 = vcmp.eq.s32.totalorder %v573, 19
        %3609 = vrot.lane.b32.xlu0 %v3594, 122
        %v3610 = vpop.permute.xlu0 %3609
        %v3611 = vrot.slane %v3610, 1
        %v3612 = vsel %vm1148, %v3610, %v3611
        %v3614 = vsel %vm3608, %v3612, %v3607
        %vm3615 = vcmp.eq.s32.totalorder %v573, 1
        %3616 = vrot.lane.b32.xlu0 %v3594, 116
        %v3617 = vpop.permute.xlu0 %3616
        %v3618 = vrot.slane %v3617, 1
        %v3619 = vsel %vm1172, %v3617, %v3618
        %v3621 = vsel %vm3615, %v3619, %v3614
        %vm3622 = vcmp.eq.s32.totalorder %v573, 20
        %3623 = vrot.lane.b32.xlu0 %v3594, 124
        %v3624 = vpop.permute.xlu0 %3623
        %v3625 = vrot.slane %v3624, 1
        %v3626 = vsel %vm1196, %v3624, %v3625
        %v3628 = vsel %vm3622, %v3626, %v3621
        %vm3629 = vcmp.eq.s32.totalorder %v573, 0
        %3630 = vrot.lane.b32.xlu0 %v3594, 114
        %v3631 = vpop.permute.xlu0 %3630
        %v3632 = vrot.slane %v3631, 1
        %v3633 = vsel %vm1220, %v3631, %v3632
        %v3635 = vsel %vm3629, %v3633, %v3628
        %vm3636 = vcmp.eq.s32.totalorder %v573, 21
        %3637 = vrot.lane.b32.xlu0 %v3594, 126
        %v3638 = vpop.permute.xlu0 %3637
        %v3639 = vrot.slane %v3638, 1
        %v3640 = vsel %vm1244, %v3638, %v3639
        %v3642 = vsel %vm3636, %v3640, %v3635
        %3644 = vrot.lane.b32.xlu0 %v3642, 8
        %v3645 = vpop.permute.xlu0 %3644
        %v3646 = vrot.slane %v3645, 7
        %v3647 = vsel %vm1280, %v3646, %v3645
        %vm3649 = vcmp.ge.s32.totalorder %v583, 8
        %vm3650 = vcmp.lt.s32.totalorder %v583, 492
        %vm3651 = vmand %vm3649, %vm3650
        %3652 = vst.msk [vmem:[#allocation4] sm:$0xf] %vm3651, %v3647
        %v3653 = vld [vmem:[#allocation4] sm:$0x7]
        %3655 = vrot.lane.b32.xlu0 %v3653, 120
        %v3656 = vpop.permute.xlu0 %3655
        %v3657 = vrot.slane %v3656, 1
        %v3658 = vsel %vm1124, %v3656, %v3657
        %vm3660 = vcmp.lt.s32.totalorder %v583, 352
        %vm3661 = vmand %vm584, %vm3660
        %3662 = vst.msk [vmem:[#allocation5] ss:$8 sm:$0x7] %vm3661, %v3658
        %3663 = vst.msk [vmem:[#allocation5] ss:$8 sm:$0x0] %vm3661, %v3658
        %v3664 = vld [vmem:[#allocation4] sm:$0x7]
        %3666 = vrot.lane.b32.xlu0 %v3664, 119
        %v3667 = vpop.permute.xlu0 %3666
        %v3668 = vrot.slane %v3667, 1
        %v3669 = vsel %vm1362, %v3667, %v3668
        %s3671 = scalar_lea.vmem [#allocation5], 1
        %3672 = vst.msk [vmem:[%s3671] ss:$8 sm:$0x7] %vm3661, %v3669
        %3673 = vst.msk [vmem:[%s3671] ss:$8 sm:$0x0] %vm3661, %v3669
        %v3674 = vld [vmem:[#allocation4] sm:$0x7]
        %3676 = vrot.lane.b32.xlu0 %v3674, 118
        %v3677 = vpop.permute.xlu0 %3676
        %v3678 = vrot.slane %v3677, 1
        %v3679 = vsel %vm1108, %v3677, %v3678
        %s3681 = scalar_lea.vmem [#allocation5], 2
        %3682 = vst.msk [vmem:[%s3681] ss:$8 sm:$0x7] %vm3661, %v3679
        %3683 = vst.msk [vmem:[%s3681] ss:$8 sm:$0x0] %vm3661, %v3679
        %v3684 = vld [vmem:[#allocation4] sm:$0x7]
        %3686 = vrot.lane.b32.xlu0 %v3684, 117
        %v3687 = vpop.permute.xlu0 %3686
        %v3688 = vrot.slane %v3687, 1
        %v3689 = vsel %vm1445, %v3687, %v3688
        %s3691 = scalar_lea.vmem [#allocation5], 3
        %3692 = vst.msk [vmem:[%s3691] ss:$8 sm:$0x7] %vm3661, %v3689
        %3693 = vst.msk [vmem:[%s3691] ss:$8 sm:$0x0] %vm3661, %v3689
        %v3694 = vld [vmem:[#allocation4] sm:$0x7]
        %3696 = vrot.lane.b32.xlu0 %v3694, 116
        %v3697 = vpop.permute.xlu0 %3696
        %v3698 = vrot.slane %v3697, 1
        %v3699 = vsel %vm1172, %v3697, %v3698
        %s3701 = scalar_lea.vmem [#allocation5], 4
        %3702 = vst.msk [vmem:[%s3701] ss:$8 sm:$0x7] %vm3661, %v3699
        %3703 = vst.msk [vmem:[%s3701] ss:$8 sm:$0x0] %vm3661, %v3699
        %v3704 = vld [vmem:[#allocation4] sm:$0x7]
        %3706 = vrot.lane.b32.xlu0 %v3704, 115
        %v3707 = vpop.permute.xlu0 %3706
        %v3708 = vrot.slane %v3707, 1
        %v3709 = vsel %vm1528, %v3707, %v3708
        %s3711 = scalar_lea.vmem [#allocation5], 5
        %3712 = vst.msk [vmem:[%s3711] ss:$8 sm:$0x7] %vm3661, %v3709
        %3713 = vst.msk [vmem:[%s3711] ss:$8 sm:$0x0] %vm3661, %v3709
        %v3714 = vld [vmem:[#allocation4] sm:$0x7]
        %3716 = vrot.lane.b32.xlu0 %v3714, 114
        %v3717 = vpop.permute.xlu0 %3716
        %v3718 = vrot.slane %v3717, 1
        %v3719 = vsel %vm1220, %v3717, %v3718
        %s3721 = scalar_lea.vmem [#allocation5], 6
        %3722 = vst.msk [vmem:[%s3721] ss:$8 sm:$0x7] %vm3661, %v3719
        %3723 = vst.msk [vmem:[%s3721] ss:$8 sm:$0x0] %vm3661, %v3719
        %v3724 = vld [vmem:[#allocation4] sm:$0x7]
        %3726 = vrot.lane.b32.xlu0 %v3724, 98
        %v3727 = vpop.permute.xlu0 %3726
        %v3728 = vrot.slane %v3727, 1
        %v3729 = vsel %vm1611, %v3727, %v3728
        %s3731 = scalar_lea.vmem [#allocation5], 7
        %3732 = vst.msk [vmem:[%s3731] ss:$8 sm:$0x7] %vm3661, %v3729
        %3733 = vst.msk [vmem:[%s3731] ss:$8 sm:$0x0] %vm3661, %v3729
        %v3734 = vld [vmem:[#allocation4] sm:$0x7]
        %3736 = vrot.lane.b32.xlu0 %v3734, 97
        %v3737 = vpop.permute.xlu0 %3736
        %v3738 = vrot.slane %v3737, 1
        %v3739 = vsel %vm1653, %v3737, %v3738
        %s3741 = scalar_lea.vmem [#allocation5], 24
        %3742 = vst.msk [vmem:[%s3741] ss:$8 sm:$0x7] %vm3661, %v3739
        %3743 = vst.msk [vmem:[%s3741] ss:$8 sm:$0x0] %vm3661, %v3739
        %v3744 = vld [vmem:[#allocation4] sm:$0x7]
        %3746 = vrot.lane.b32.xlu0 %v3744, 96
        %v3747 = vpop.permute.xlu0 %3746
        %v3748 = vrot.slane %v3747, 1
        %v3749 = vsel %vm1695, %v3747, %v3748
        %s3751 = scalar_lea.vmem [#allocation5], 25
        %3752 = vst.msk [vmem:[%s3751] ss:$8 sm:$0x7] %vm3661, %v3749
        %3753 = vst.msk [vmem:[%s3751] ss:$8 sm:$0x0] %vm3661, %v3749
        %v3754 = vld [vmem:[#allocation4] sm:$0xf]
        %3756 = vrot.lane.b32.xlu0 %v3754, 95
        %v3757 = vpop.permute.xlu0 %3756
        %v3758 = vrot.slane %v3757, 1
        %v3759 = vsel %vm1740, %v3757, %v3758
        %s3761 = scalar_lea.vmem [#allocation5], 26
        %3762 = vst.msk [vmem:[%s3761] ss:$8 sm:$0x7] %vm3661, %v3759
        %3763 = vst.msk [vmem:[%s3761] ss:$8 sm:$0x0] %vm3661, %v3759
        %v3764 = vld [vmem:[#allocation4] sm:$0xf]
        %3766 = vrot.lane.b32.xlu0 %v3764, 94
        %v3767 = vpop.permute.xlu0 %3766
        %v3768 = vrot.slane %v3767, 1
        %v3769 = vsel %vm1786, %v3767, %v3768
        %s3771 = scalar_lea.vmem [#allocation5], 27
        %3772 = vst.msk [vmem:[%s3771] ss:$8 sm:$0x7] %vm3661, %v3769
        %3773 = vst.msk [vmem:[%s3771] ss:$8 sm:$0x0] %vm3661, %v3769
        %v3774 = vld [vmem:[#allocation4] sm:$0xf]
        %3776 = vrot.lane.b32.xlu0 %v3774, 93
        %v3777 = vpop.permute.xlu0 %3776
        %v3778 = vrot.slane %v3777, 1
        %v3779 = vsel %vm1832, %v3777, %v3778
        %s3781 = scalar_lea.vmem [#allocation5], 28
        %3782 = vst.msk [vmem:[%s3781] ss:$8 sm:$0x7] %vm3661, %v3779
        %3783 = vst.msk [vmem:[%s3781] ss:$8 sm:$0x0] %vm3661, %v3779
        %v3784 = vld [vmem:[#allocation4] sm:$0xf]
        %3786 = vrot.lane.b32.xlu0 %v3784, 92
        %v3787 = vpop.permute.xlu0 %3786
        %v3788 = vrot.slane %v3787, 1
        %v3789 = vsel %vm1878, %v3787, %v3788
        %s3791 = scalar_lea.vmem [#allocation5], 29
        %3792 = vst.msk [vmem:[%s3791] ss:$8 sm:$0x7] %vm3661, %v3789
        %3793 = vst.msk [vmem:[%s3791] ss:$8 sm:$0x0] %vm3661, %v3789
        %v3794 = vld [vmem:[#allocation4] sm:$0xf]
        %3796 = vrot.lane.b32.xlu0 %v3794, 76
        %v3797 = vpop.permute.xlu0 %3796
        %v3798 = vrot.slane %v3797, 1
        %v3799 = vsel %vm1924, %v3797, %v3798
        %s3801 = scalar_lea.vmem [#allocation5], 30
        %3802 = vst.msk [vmem:[%s3801] ss:$8 sm:$0x7] %vm3661, %v3799
        %3803 = vst.msk [vmem:[%s3801] ss:$8 sm:$0x0] %vm3661, %v3799
        %v3804 = vld [vmem:[#allocation4] sm:$0xf]
        %3806 = vrot.lane.b32.xlu0 %v3804, 75
        %v3807 = vpop.permute.xlu0 %3806
        %v3808 = vrot.slane %v3807, 1
        %v3809 = vsel %vm1970, %v3807, %v3808
        %s3811 = scalar_lea.vmem [#allocation5], 31
        %3812 = vst.msk [vmem:[%s3811] ss:$8 sm:$0x7] %vm3661, %v3809
        %3813 = vst.msk [vmem:[%s3811] ss:$8 sm:$0x0] %vm3661, %v3809
        %v3814 = vld [vmem:[#allocation4] sm:$0xf]
        %3816 = vrot.lane.b32.xlu0 %v3814, 74
        %v3817 = vpop.permute.xlu0 %3816
        %v3818 = vrot.slane %v3817, 1
        %v3819 = vsel %vm2016, %v3817, %v3818
        %s3821 = scalar_lea.vmem [#allocation5], 48
        %3822 = vst.msk [vmem:[%s3821] ss:$8 sm:$0x7] %vm3661, %v3819
        %3823 = vst.msk [vmem:[%s3821] ss:$8 sm:$0x0] %vm3661, %v3819
        %v3824 = vld [vmem:[#allocation4] sm:$0xf]
        %3826 = vrot.lane.b32.xlu0 %v3824, 73
        %v3827 = vpop.permute.xlu0 %3826
        %v3828 = vrot.slane %v3827, 1
        %v3829 = vsel %vm2062, %v3827, %v3828
        %s3831 = scalar_lea.vmem [#allocation5], 49
        %3832 = vst.msk [vmem:[%s3831] ss:$8 sm:$0x7] %vm3661, %v3829
        %3833 = vst.msk [vmem:[%s3831] ss:$8 sm:$0x0] %vm3661, %v3829
        %v3834 = vld [vmem:[#allocation4] sm:$0xf]
        %3836 = vrot.lane.b32.xlu0 %v3834, 72
        %v3837 = vpop.permute.xlu0 %3836
        %v3838 = vrot.slane %v3837, 1
        %v3839 = vsel %vm2108, %v3837, %v3838
        %s3841 = scalar_lea.vmem [#allocation5], 50
        %3842 = vst.msk [vmem:[%s3841] ss:$8 sm:$0x7] %vm3661, %v3839
        %3843 = vst.msk [vmem:[%s3841] ss:$8 sm:$0x0] %vm3661, %v3839
        %v3844 = vld [vmem:[#allocation4] sm:$0xf]
        %3846 = vrot.lane.b32.xlu0 %v3844, 71
        %v3847 = vpop.permute.xlu0 %3846
        %v3848 = vrot.slane %v3847, 1
        %v3849 = vsel %vm2154, %v3847, %v3848
        %s3851 = scalar_lea.vmem [#allocation5], 51
        %3852 = vst.msk [vmem:[%s3851] ss:$8 sm:$0x7] %vm3661, %v3849
        %3853 = vst.msk [vmem:[%s3851] ss:$8 sm:$0x0] %vm3661, %v3849
        %v3854 = vld [vmem:[#allocation4] sm:$0xf]
        %3856 = vrot.lane.b32.xlu0 %v3854, 70
        %v3857 = vpop.permute.xlu0 %3856
        %v3858 = vrot.slane %v3857, 1
        %v3859 = vsel %vm2200, %v3857, %v3858
        %s3861 = scalar_lea.vmem [#allocation5], 52
        %3862 = vst.msk [vmem:[%s3861] ss:$8 sm:$0x7] %vm3661, %v3859
        %3863 = vst.msk [vmem:[%s3861] ss:$8 sm:$0x0] %vm3661, %v3859
        %v3864 = vld [vmem:[#allocation4] sm:$0xf]
        %3866 = vrot.lane.b32.xlu0 %v3864, 54
        %v3867 = vpop.permute.xlu0 %3866
        %v3868 = vrot.slane %v3867, 1
        %v3869 = vsel %vm2246, %v3867, %v3868
        %s3871 = scalar_lea.vmem [#allocation5], 53
        %3872 = vst.msk [vmem:[%s3871] ss:$8 sm:$0x7] %vm3661, %v3869
        %3873 = vst.msk [vmem:[%s3871] ss:$8 sm:$0x0] %vm3661, %v3869
        %v3874 = vld [vmem:[#allocation4] sm:$0xf]
        %3876 = vrot.lane.b32.xlu0 %v3874, 53
        %v3877 = vpop.permute.xlu0 %3876
        %v3878 = vrot.slane %v3877, 1
        %v3879 = vsel %vm2292, %v3877, %v3878
        %s3881 = scalar_lea.vmem [#allocation5], 54
        %3882 = vst.msk [vmem:[%s3881] ss:$8 sm:$0x7] %vm3661, %v3879
        %3883 = vst.msk [vmem:[%s3881] ss:$8 sm:$0x0] %vm3661, %v3879
        %v3884 = vld [vmem:[#allocation4] sm:$0xf]
        %3886 = vrot.lane.b32.xlu0 %v3884, 52
        %v3887 = vpop.permute.xlu0 %3886
        %v3888 = vrot.slane %v3887, 1
        %v3889 = vsel %vm2338, %v3887, %v3888
        %s3891 = scalar_lea.vmem [#allocation5], 55
        %3892 = vst.msk [vmem:[%s3891] ss:$8 sm:$0x7] %vm3661, %v3889
        %3893 = vst.msk [vmem:[%s3891] ss:$8 sm:$0x0] %vm3661, %v3889
        %v3894 = vld [vmem:[#allocation4] sm:$0xf]
        %3896 = vrot.lane.b32.xlu0 %v3894, 51
        %v3897 = vpop.permute.xlu0 %3896
        %v3898 = vrot.slane %v3897, 1
        %v3899 = vsel %vm2384, %v3897, %v3898
        %s3901 = scalar_lea.vmem [#allocation5], 72
        %3902 = vst.msk [vmem:[%s3901] ss:$8 sm:$0x7] %vm3661, %v3899
        %3903 = vst.msk [vmem:[%s3901] ss:$8 sm:$0x0] %vm3661, %v3899
        %v3904 = vld [vmem:[#allocation4] sm:$0xf]
        %3906 = vrot.lane.b32.xlu0 %v3904, 50
        %v3907 = vpop.permute.xlu0 %3906
        %v3908 = vrot.slane %v3907, 1
        %v3909 = vsel %vm2430, %v3907, %v3908
        %s3911 = scalar_lea.vmem [#allocation5], 73
        %3912 = vst.msk [vmem:[%s3911] ss:$8 sm:$0x7] %vm3661, %v3909
        %3913 = vst.msk [vmem:[%s3911] ss:$8 sm:$0x0] %vm3661, %v3909
        %v3914 = vld [vmem:[#allocation4] sm:$0xf]
        %3916 = vrot.lane.b32.xlu0 %v3914, 49
        %v3917 = vpop.permute.xlu0 %3916
        %v3918 = vrot.slane %v3917, 1
        %v3919 = vsel %vm2476, %v3917, %v3918
        %s3921 = scalar_lea.vmem [#allocation5], 74
        %3922 = vst.msk [vmem:[%s3921] ss:$8 sm:$0x7] %vm3661, %v3919
        %3923 = vst.msk [vmem:[%s3921] ss:$8 sm:$0x0] %vm3661, %v3919
        %v3924 = vld [vmem:[#allocation4] sm:$0xf]
        %3926 = vrot.lane.b32.xlu0 %v3924, 48
        %v3927 = vpop.permute.xlu0 %3926
        %v3928 = vrot.slane %v3927, 1
        %v3929 = vsel %vm2522, %v3927, %v3928
        %s3931 = scalar_lea.vmem [#allocation5], 75
        %3932 = vst.msk [vmem:[%s3931] ss:$8 sm:$0x7] %vm3661, %v3929
        %3933 = vst.msk [vmem:[%s3931] ss:$8 sm:$0x0] %vm3661, %v3929
        %v3934 = vld [vmem:[#allocation4] sm:$0xf]
        %3936 = vrot.lane.b32.xlu0 %v3934, 32
        %v3937 = vpop.permute.xlu0 %3936
        %v3938 = vrot.slane %v3937, 1
        %v3939 = vsel %vm2568, %v3937, %v3938
        %s3941 = scalar_lea.vmem [#allocation5], 76
        %3942 = vst.msk [vmem:[%s3941] ss:$8 sm:$0x7] %vm3661, %v3939
        %3943 = vst.msk [vmem:[%s3941] ss:$8 sm:$0x0] %vm3661, %v3939
        %v3944 = vld [vmem:[#allocation4] sm:$0xf]
        %3946 = vrot.lane.b32.xlu0 %v3944, 31
        %v3947 = vpop.permute.xlu0 %3946
        %v3948 = vrot.slane %v3947, 1
        %v3949 = vsel %vm2614, %v3947, %v3948
        %s3951 = scalar_lea.vmem [#allocation5], 77
        %3952 = vst.msk [vmem:[%s3951] ss:$8 sm:$0x7] %vm3661, %v3949
        %3953 = vst.msk [vmem:[%s3951] ss:$8 sm:$0x0] %vm3661, %v3949
        %v3954 = vld [vmem:[#allocation4] sm:$0xf]
        %3956 = vrot.lane.b32.xlu0 %v3954, 30
        %v3957 = vpop.permute.xlu0 %3956
        %v3958 = vrot.slane %v3957, 1
        %v3959 = vsel %vm2660, %v3957, %v3958
        %s3961 = scalar_lea.vmem [#allocation5], 78
        %3962 = vst.msk [vmem:[%s3961] ss:$8 sm:$0x7] %vm3661, %v3959
        %3963 = vst.msk [vmem:[%s3961] ss:$8 sm:$0x0] %vm3661, %v3959
        %v3964 = vld [vmem:[#allocation4] sm:$0xf]
        %3966 = vrot.lane.b32.xlu0 %v3964, 29
        %v3967 = vpop.permute.xlu0 %3966
        %v3968 = vrot.slane %v3967, 1
        %v3969 = vsel %vm2706, %v3967, %v3968
        %s3971 = scalar_lea.vmem [#allocation5], 79
        %3972 = vst.msk [vmem:[%s3971] ss:$8 sm:$0x7] %vm3661, %v3969
        %3973 = vst.msk [vmem:[%s3971] ss:$8 sm:$0x0] %vm3661, %v3969
        %v3974 = vld [vmem:[#allocation4] sm:$0xf]
        %3976 = vrot.lane.b32.xlu0 %v3974, 28
        %v3977 = vpop.permute.xlu0 %3976
        %v3978 = vrot.slane %v3977, 1
        %v3979 = vsel %vm2752, %v3977, %v3978
        %s3981 = scalar_lea.vmem [#allocation5], 96
        %3982 = vst.msk [vmem:[%s3981] ss:$8 sm:$0x7] %vm3661, %v3979
        %3983 = vst.msk [vmem:[%s3981] ss:$8 sm:$0x0] %vm3661, %v3979
        %v3984 = vld [vmem:[#allocation4] sm:$0xf]
        %3986 = vrot.lane.b32.xlu0 %v3984, 27
        %v3987 = vpop.permute.xlu0 %3986
        %v3988 = vrot.slane %v3987, 1
        %v3989 = vsel %vm2798, %v3987, %v3988
        %s3991 = scalar_lea.vmem [#allocation5], 97
        %3992 = vst.msk [vmem:[%s3991] ss:$8 sm:$0x7] %vm3661, %v3989
        %3993 = vst.msk [vmem:[%s3991] ss:$8 sm:$0x0] %vm3661, %v3989
        %v3994 = vld [vmem:[#allocation4] sm:$0xf]
        %3996 = vrot.lane.b32.xlu0 %v3994, 26
        %v3997 = vpop.permute.xlu0 %3996
        %v3998 = vrot.slane %v3997, 1
        %v3999 = vsel %vm2844, %v3997, %v3998
        %s4001 = scalar_lea.vmem [#allocation5], 98
        %4002 = vst.msk [vmem:[%s4001] ss:$8 sm:$0x7] %vm3661, %v3999
        %4003 = vst.msk [vmem:[%s4001] ss:$8 sm:$0x0] %vm3661, %v3999
        %v4004 = vld [vmem:[#allocation4] sm:$0xf]
        %4006 = vrot.lane.b32.xlu0 %v4004, 10
        %v4007 = vpop.permute.xlu0 %4006
        %v4008 = vrot.slane %v4007, 1
        %v4009 = vsel %vm2890, %v4007, %v4008
        %s4011 = scalar_lea.vmem [#allocation5], 99
        %4012 = vst.msk [vmem:[%s4011] ss:$8 sm:$0x7] %vm3661, %v4009
        %4013 = vst.msk [vmem:[%s4011] ss:$8 sm:$0x0] %vm3661, %v4009
        %v4014 = vld [vmem:[#allocation4] sm:$0xf]
        %4016 = vrot.lane.b32.xlu0 %v4014, 9
        %v4017 = vpop.permute.xlu0 %4016
        %v4018 = vrot.slane %v4017, 1
        %v4019 = vsel %vm2936, %v4017, %v4018
        %s4021 = scalar_lea.vmem [#allocation5], 100
        %4022 = vst.msk [vmem:[%s4021] ss:$8 sm:$0x7] %vm3661, %v4019
        %4023 = vst.msk [vmem:[%s4021] ss:$8 sm:$0x0] %vm3661, %v4019
        %v4024 = vld [vmem:[#allocation4] sm:$0xf]
        %4026 = vrot.lane.b32.xlu0 %v4024, 8
        %v4027 = vpop.permute.xlu0 %4026
        %v4028 = vrot.slane %v4027, 1
        %v4029 = vsel %vm1280, %v4027, %v4028
        %s4031 = scalar_lea.vmem [#allocation5], 101
        %4032 = vst.msk [vmem:[%s4031] ss:$8 sm:$0x7] %vm3661, %v4029
        %4033 = vst.msk [vmem:[%s4031] ss:$8 sm:$0x0] %vm3661, %v4029
        %v4034 = vld [vmem:[#allocation4] sm:$0xf]
        %4036 = vrot.lane.b32.xlu0 %v4034, 7
        %v4037 = vpop.permute.xlu0 %4036
        %v4038 = vrot.slane %v4037, 1
        %v4039 = vsel %vm3027, %v4037, %v4038
        %s4041 = scalar_lea.vmem [#allocation5], 102
        %4042 = vst.msk [vmem:[%s4041] ss:$8 sm:$0x7] %vm3661, %v4039
        %4043 = vst.msk [vmem:[%s4041] ss:$8 sm:$0x0] %vm3661, %v4039
        %v4044 = vld [vmem:[#allocation4] sm:$0xf]
        %4046 = vrot.lane.b32.xlu0 %v4044, 6
        %v4047 = vpop.permute.xlu0 %4046
        %v4048 = vrot.slane %v4047, 1
        %v4049 = vsel %vm3073, %v4047, %v4048
        %s4051 = scalar_lea.vmem [#allocation5], 103
        %4052 = vst.msk [vmem:[%s4051] ss:$8 sm:$0x7] %vm3661, %v4049
        %4053 = vst.msk [vmem:[%s4051] ss:$8 sm:$0x0] %vm3661, %v4049
        %v4054 = vld [vmem:[#allocation4] sm:$0xf]
        %4056 = vrot.lane.b32.xlu0 %v4054, 5
        %v4057 = vpop.permute.xlu0 %4056
        %v4058 = vrot.slane %v4057, 1
        %v4059 = vsel %vm3119, %v4057, %v4058
        %s4061 = scalar_lea.vmem [#allocation5], 120
        %4062 = vst.msk [vmem:[%s4061] ss:$8 sm:$0x7] %vm3661, %v4059
        %4063 = vst.msk [vmem:[%s4061] ss:$8 sm:$0x0] %vm3661, %v4059
        %v4064 = vld [vmem:[#allocation4] sm:$0xf]
        %4066 = vrot.lane.b32.xlu0 %v4064, 4
        %v4067 = vpop.permute.xlu0 %4066
        %v4068 = vrot.slane %v4067, 1
        %v4069 = vsel %vm3165, %v4067, %v4068
        %s4071 = scalar_lea.vmem [#allocation5], 121
        %4072 = vst.msk [vmem:[%s4071] ss:$8 sm:$0x7] %vm3661, %v4069
        %4073 = vst.msk [vmem:[%s4071] ss:$8 sm:$0x0] %vm3661, %v4069
        %v4074 = vld [vmem:[#allocation4 + $0x1] sm:$0x7]
        %4076 = vrot.lane.b32.xlu0 %v4074, 116
        %v4077 = vpop.permute.xlu0 %4076
        %v4078 = vrot.slane %v4077, 1
        %v4079 = vsel %vm1172, %v4077, %v4078
        %s4081 = scalar_lea.vmem [#allocation5], 122
        %4082 = vst.msk [vmem:[%s4081] ss:$8 sm:$0x7] %vm3661, %v4079
        %4083 = vst.msk [vmem:[%s4081] ss:$8 sm:$0x0] %vm3661, %v4079
        %v4084 = vld [vmem:[#allocation4 + $0x1] sm:$0x7]
        %4086 = vrot.lane.b32.xlu0 %v4084, 115
        %v4087 = vpop.permute.xlu0 %4086
        %v4088 = vrot.slane %v4087, 1
        %v4089 = vsel %vm1528, %v4087, %v4088
        %s4091 = scalar_lea.vmem [#allocation5], 123
        %4092 = vst.msk [vmem:[%s4091] ss:$8 sm:$0x7] %vm3661, %v4089
        %4093 = vst.msk [vmem:[%s4091] ss:$8 sm:$0x0] %vm3661, %v4089
        %v4094 = vld [vmem:[#allocation4 + $0x1] sm:$0x7]
        %4096 = vrot.lane.b32.xlu0 %v4094, 114
        %v4097 = vpop.permute.xlu0 %4096
        %v4098 = vrot.slane %v4097, 1
        %v4099 = vsel %vm1220, %v4097, %v4098
        %s4101 = scalar_lea.vmem [#allocation5], 124
        %4102 = vst.msk [vmem:[%s4101] ss:$8 sm:$0x7] %vm3661, %v4099
        %4103 = vst.msk [vmem:[%s4101] ss:$8 sm:$0x0] %vm3661, %v4099
        %v4104 = vld [vmem:[#allocation4 + $0x1] sm:$0x7]
        %4106 = vrot.lane.b32.xlu0 %v4104, 113
        %v4107 = vpop.permute.xlu0 %4106
        %v4108 = vrot.slane %v4107, 1
        %v4109 = vsel %vm3331, %v4107, %v4108
        %s4111 = scalar_lea.vmem [#allocation5], 125
        %4112 = vst.msk [vmem:[%s4111] ss:$8 sm:$0x7] %vm3661, %v4109
        %4113 = vst.msk [vmem:[%s4111] ss:$8 sm:$0x0] %vm3661, %v4109
        %v4114 = vld [vmem:[#allocation4 + $0x1] sm:$0x7]
        %4116 = vrot.lane.b32.xlu0 %v4114, 112
        %v4117 = vpop.permute.xlu0 %4116
        %v4118 = vrot.slane %v4117, 1
        %v4119 = vsel %vm3373, %v4117, %v4118
        %s4121 = scalar_lea.vmem [#allocation5], 126
        %4122 = vst.msk [vmem:[%s4121] ss:$8 sm:$0x7] %vm3661, %v4119
        %4123 = vst.msk [vmem:[%s4121] ss:$8 sm:$0x0] %vm3661, %v4119
        %v4124 = vld [vmem:[#allocation4 + $0x1] sm:$0x7]
        %4126 = vrot.lane.b32.xlu0 %v4124, 111
        %v4127 = vpop.permute.xlu0 %4126
        %v4128 = vrot.slane %v4127, 1
        %v4129 = vsel %vm3415, %v4127, %v4128
        %s4131 = scalar_lea.vmem [#allocation5], 127
        %4132 = vst.msk [vmem:[%s4131] ss:$8 sm:$0x7] %vm3661, %v4129
        %4133 = vst.msk [vmem:[%s4131] ss:$8 sm:$0x0] %vm3661, %v4129
        %v4134 = vld [vmem:[#allocation4 + $0x1] sm:$0x7]
        %4136 = vrot.lane.b32.xlu0 %v4134, 110
        %v4137 = vpop.permute.xlu0 %4136
        %v4138 = vrot.slane %v4137, 1
        %v4139 = vsel %vm3457, %v4137, %v4138
        %s4141 = scalar_lea.vmem [#allocation5], 144
        %4142 = vst.msk [vmem:[%s4141] ss:$8 sm:$0x7] %vm3661, %v4139
        %4143 = vst.msk [vmem:[%s4141] ss:$8 sm:$0x0] %vm3661, %v4139
        %v4144 = vld [vmem:[#allocation15] sm:$0xff]
        %v4145 = vld [vmem:[#allocation15 + $0x8] sm:$0xff]
        %v4146 = vsel %vm2476, %v4144, 0.0
        %4147 = vadd.xlane.f32.xlu0 %v4146
        %v4148 = vpop.xlane.xlu0 %4147
        %v4149 = vsel %vm2476, %v4145, 0.0
        %4150 = vadd.xlane.f32.xlu0 %v4149
        %v4151 = vpop.xlane.xlu0 %4150
        %v4152 = vld [vmem:[#allocation5] sm:$0xff]
        %v4153 = vld [vmem:[#allocation5 + $0x8] sm:$0xff]
        %v4154 = vld [vmem:[#allocation5 + $0x10] sm:$0xff]
        %v4155 = vld [vmem:[#allocation5 + $0x18] sm:$0xff]
        %v4156 = vld [vmem:[#allocation5 + $0x20] sm:$0xff]
        %v4157 = vld [vmem:[#allocation5 + $0x28] sm:$0xff]
        %v4158 = vld [vmem:[#allocation5 + $0x30] sm:$0xff]
        %v4159 = vld [vmem:[#allocation5 + $0x38] sm:$0xff]
        %v4160 = vld [vmem:[#allocation5 + $0x40] sm:$0xff]
        %v4161 = vld [vmem:[#allocation5 + $0x48] sm:$0xff]
        %v4162 = vld [vmem:[#allocation5 + $0x50] sm:$0xff]
        %v4163 = vld [vmem:[#allocation5 + $0x58] sm:$0xff]
        %v4164 = vld [vmem:[#allocation5 + $0x60] sm:$0xff]
        %v4165 = vld [vmem:[#allocation5 + $0x68] sm:$0xff]
        %v4166 = vld [vmem:[#allocation5 + $0x70] sm:$0xff]
        %v4167 = vld [vmem:[#allocation5 + $0x78] sm:$0xff]
        %v4168 = vld [vmem:[#allocation5 + $0x80] sm:$0xff]
        %v4169 = vld [vmem:[#allocation5 + $0x88] sm:$0xff]
        %v4170 = vld [vmem:[#allocation5 + $0x90] sm:$0x1]
        %v4171 = vld [vmem:[#allocation5 + $0x98] sm:$0x1]
        %v4172 = vld [vmem:[#allocation5 + $0xa0] sm:$0x1]
        %v4173 = vmul.f32 %v4148, %v755
        %v4174 = vmul.f32 %v4151, %v760
        %4176 = vset.pattern.permute.xlu0 0
        %4177 = vperm.xlu0 %4176, %v4173
        %v4178 = vpop.permute.xlu0 %4177
        %4181 = vset.pattern.permute.xlu0 0
        %4182 = vperm.xlu0 %4181, %v4174
        %v4183 = vpop.permute.xlu0 %4182
        %v4186 = vsel %vm2476, %v4144, 0
        %v4189 = vsel %vm2476, %v4145, 0
        %vm4191 = vcmask 1040384
        %v4193 = vsel %vm4191, %v4170, 0
        %v4196 = vsel %vm4191, %v4171, 0
        %v4199 = vsel %vm4191, %v4172, 0
        %4201 = vmatprep.subr.mxu0 0.0
        %4202 = vmatpush1.msra.mxu0 0.0
        %4203 = vmatprep.subr.mxu0 0.0
        %4204 = vmatpush1.msra.mxu0 0.0
        %4205 = vmatprep.subr.mxu0 0.0
        %4206 = vmatpush1.msra.mxu0 0.0
        %4207 = vmatprep.subr.mxu0 0.0
        %4208 = vmatpush1.msra.mxu0 0.0
        %4209 = vmatprep.subr.mxu0 0.0
        %4210 = vmatpush1.msra.mxu0 0.0
        %4211 = vmatprep.subr.mxu0 0.0
        %4212 = vmatpush1.msra.mxu0 0.0
        %4213 = vmatprep.subr.mxu0 0.0
        %4214 = vmatpush1.msra.mxu0 0.0
        %4215 = vmatprep.subr.mxu0 0.0
        %4216 = vmatpush1.msra.mxu0 0.0
        %4217 = vmatprep.subr.mxu0 0.0
        %4218 = vmatpush1.msra.mxu0 0.0
        %4219 = vmatprep.subr.mxu0 %v4196
        %4220 = vmatpush1.msra.mxu0 %v4193
        %4221 = vmatprep.subr.mxu0 %v4168
        %4222 = vmatpush1.msra.mxu0 %v4167
        %4223 = vmatprep.subr.mxu0 %v4165
        %4224 = vmatpush1.msra.mxu0 %v4164
        %4225 = vmatprep.subr.mxu0 %v4162
        %4226 = vmatpush1.msra.mxu0 %v4161
        %4227 = vmatprep.subr.mxu0 %v4159
        %4228 = vmatpush1.msra.mxu0 %v4158
        %4229 = vmatprep.subr.mxu0 %v4156
        %4230 = vmatpush1.msra.mxu0 %v4155
        %4231 = vmatprep.subr.mxu0 %v4153
        %4232 = vmatpush1.msra.mxu0 %v4152
        %4233 = vmatprep.subr.mxu0 0.0
        %4234 = vmatpush2.msra.mxu0 0.0
        %4235 = vmatprep.subr.mxu0 0.0
        %4236 = vmatpush2.msra.mxu0 0.0
        %4237 = vmatprep.subr.mxu0 0.0
        %4238 = vmatpush2.msra.mxu0 0.0
        %4239 = vmatprep.subr.mxu0 0.0
        %4240 = vmatpush2.msra.mxu0 0.0
        %4241 = vmatprep.subr.mxu0 0.0
        %4242 = vmatpush2.msra.mxu0 0.0
        %4243 = vmatprep.subr.mxu0 0.0
        %4244 = vmatpush2.msra.mxu0 0.0
        %4245 = vmatprep.subr.mxu0 0.0
        %4246 = vmatpush2.msra.mxu0 0.0
        %4247 = vmatprep.subr.mxu0 0.0
        %4248 = vmatpush2.msra.mxu0 0.0
        %4249 = vmatprep.subr.mxu0 0.0
        %4250 = vmatpush2.msra.mxu0 0.0
        %4251 = vmatprep.subr.mxu0 0.0
        %4252 = vmatpush2.msra.mxu0 0.0
        %4253 = vmatprep.subr.mxu0 0.0
        %4254 = vmatpush2.msra.mxu0 0.0
        %4255 = vmatprep.subr.mxu0 0.0
        %4256 = vmatpush2.msra.mxu0 0.0
        %4257 = vmatprep.subr.mxu0 0.0
        %4258 = vmatpush2.msra.mxu0 0.0
        %4259 = vmatprep.subr.mxu0 0.0
        %4260 = vmatpush2.msra.mxu0 0.0
        %4261 = vmatprep.subr.mxu0 0.0
        %4262 = vmatpush2.msra.mxu0 0.0
        %4263 = vmatprep.subr.mxu0 0.0
        %4264 = vmatpush2.msra.mxu0 0.0
        %4265 = vmatprep.mubr.f32.mxu0 0.0
        %4266 = vmatmul.mubr.f32.gmra.mxu0 %v4186
        %v4267 = vpop.f32.mrf.mxu0
        %v4268 = vadd.f32 %v4178, %v4267
        %v4269 = vpop.f32.mrf.mxu0
        %v4270 = vadd.f32 %v4178, %v4269
        %4271 = vmatprep.mubr.f32.mxu0 0.0
        %4272 = vmatmul.mubr.f32.gmra.mxu0 %v4189
        %v4273 = vpop.f32.mrf.mxu0
        %v4274 = vadd.f32 %v4183, %v4273
        %v4275 = vpop.f32.mrf.mxu0
        %v4276 = vadd.f32 %v4183, %v4275
        %4277 = vdwg.mxu0
        %4278 = vmatprep.subr.mxu0 0.0
        %4279 = vmatpush1.msra.mxu0 0.0
        %4280 = vmatprep.subr.mxu0 0.0
        %4281 = vmatpush1.msra.mxu0 0.0
        %4282 = vmatprep.subr.mxu0 0.0
        %4283 = vmatpush1.msra.mxu0 0.0
        %4284 = vmatprep.subr.mxu0 0.0
        %4285 = vmatpush1.msra.mxu0 0.0
        %4286 = vmatprep.subr.mxu0 0.0
        %4287 = vmatpush1.msra.mxu0 0.0
        %4288 = vmatprep.subr.mxu0 0.0
        %4289 = vmatpush1.msra.mxu0 0.0
        %4290 = vmatprep.subr.mxu0 0.0
        %4291 = vmatpush1.msra.mxu0 0.0
        %4292 = vmatprep.subr.mxu0 0.0
        %4293 = vmatpush1.msra.mxu0 0.0
        %4294 = vmatprep.subr.mxu0 0.0
        %4295 = vmatpush1.msra.mxu0 0.0
        %4296 = vmatprep.subr.mxu0 0.0
        %4297 = vmatpush1.msra.mxu0 %v4199
        %4298 = vmatprep.subr.mxu0 0.0
        %4299 = vmatpush1.msra.mxu0 %v4169
        %4300 = vmatprep.subr.mxu0 0.0
        %4301 = vmatpush1.msra.mxu0 %v4166
        %4302 = vmatprep.subr.mxu0 0.0
        %4303 = vmatpush1.msra.mxu0 %v4163
        %4304 = vmatprep.subr.mxu0 0.0
        %4305 = vmatpush1.msra.mxu0 %v4160
        %4306 = vmatprep.subr.mxu0 0.0
        %4307 = vmatpush1.msra.mxu0 %v4157
        %4308 = vmatprep.subr.mxu0 0.0
        %4309 = vmatpush1.msra.mxu0 %v4154
        %4310 = vmatprep.subr.mxu0 0.0
        %4311 = vmatpush2.msra.mxu0 0.0
        %4312 = vmatprep.subr.mxu0 0.0
        %4313 = vmatpush2.msra.mxu0 0.0
        %4314 = vmatprep.subr.mxu0 0.0
        %4315 = vmatpush2.msra.mxu0 0.0
        %4316 = vmatprep.subr.mxu0 0.0
        %4317 = vmatpush2.msra.mxu0 0.0
        %4318 = vmatprep.subr.mxu0 0.0
        %4319 = vmatpush2.msra.mxu0 0.0
        %4320 = vmatprep.subr.mxu0 0.0
        %4321 = vmatpush2.msra.mxu0 0.0
        %4322 = vmatprep.subr.mxu0 0.0
        %4323 = vmatpush2.msra.mxu0 0.0
        %4324 = vmatprep.subr.mxu0 0.0
        %4325 = vmatpush2.msra.mxu0 0.0
        %4326 = vmatprep.subr.mxu0 0.0
        %4327 = vmatpush2.msra.mxu0 0.0
        %4328 = vmatprep.subr.mxu0 0.0
        %4329 = vmatpush2.msra.mxu0 0.0
        %4330 = vmatprep.subr.mxu0 0.0
        %4331 = vmatpush2.msra.mxu0 0.0
        %4332 = vmatprep.subr.mxu0 0.0
        %4333 = vmatpush2.msra.mxu0 0.0
        %4334 = vmatprep.subr.mxu0 0.0
        %4335 = vmatpush2.msra.mxu0 0.0
        %4336 = vmatprep.subr.mxu0 0.0
        %4337 = vmatpush2.msra.mxu0 0.0
        %4338 = vmatprep.subr.mxu0 0.0
        %4339 = vmatpush2.msra.mxu0 0.0
        %4340 = vmatprep.subr.mxu0 0.0
        %4341 = vmatpush2.msra.mxu0 0.0
        %4342 = vmatprep.mubr.f32.mxu0 0.0
        %4343 = vmatmul.mubr.f32.gmra.mxu0 %v4186
        %v4344 = vpop.f32.mrf.mxu0
        %v4345 = vadd.f32 %v4178, %v4344
        %v4346 = vpop.f32.mrf.mxu0
        %4347 = vmatprep.mubr.f32.mxu0 0.0
        %4348 = vmatmul.mubr.f32.gmra.mxu0 %v4189
        %v4349 = vpop.f32.mrf.mxu0
        %v4350 = vadd.f32 %v4183, %v4349
        %v4351 = vpop.f32.mrf.mxu0
        %4352 = vdwg.mxu0
        %4355 = vrot.lane.b32.xlu0 %v569, 91
        %v4356 = vpop.permute.xlu0 %4355
        %4357 = vrot.lane.b32.xlu0 %v571, 91
        %v4358 = vpop.permute.xlu0 %4357
        %vm4361 = vcmask 220248
        %4362 = vst.msk [vmem:[#allocation2] sm:$0xff] %vm4361, %v4356
        %4363 = vst.msk [vmem:[#allocation2 + $0x20] sm:$0xff] %vm4361, %v4358
        %4364 = vrot.lane.b32.xlu0 %v569, 1
        %v4365 = vpop.permute.xlu0 %4364
        %4366 = vrot.lane.b32.xlu0 %v571, 1
        %v4367 = vpop.permute.xlu0 %4366
        %vm4370 = vcmask 400648
        %4371 = vst.msk [vmem:[#allocation2] sm:$0xff] %vm4370, %v4365
        %4372 = vst.msk [vmem:[#allocation2 + $0x20] sm:$0xff] %vm4370, %v4367
        %4373 = vrot.lane.b32.xlu0 %v569, 39
        %v4374 = vpop.permute.xlu0 %4373
        %4375 = vrot.lane.b32.xlu0 %v571, 39
        %v4376 = vpop.permute.xlu0 %4375
        %vm4379 = vcmask 581048
        %4380 = vst.msk [vmem:[#allocation2] sm:$0xff] %vm4379, %v4374
        %4381 = vst.msk [vmem:[#allocation2 + $0x20] sm:$0xff] %vm4379, %v4376
        %4382 = vrot.lane.b32.xlu0 %v569, 77
        %v4383 = vpop.permute.xlu0 %4382
        %4384 = vrot.lane.b32.xlu0 %v571, 77
        %v4385 = vpop.permute.xlu0 %4384
        %vm4388 = vcmask 761448
        %4389 = vst.msk [vmem:[#allocation2] sm:$0xff] %vm4388, %v4383
        %4390 = vst.msk [vmem:[#allocation2 + $0x20] sm:$0xff] %vm4388, %v4385
        %4391 = vrot.lane.b32.xlu0 %v569, 83
        %v4392 = vpop.permute.xlu0 %4391
        %4393 = vrot.lane.b32.xlu0 %v571, 83
        %v4394 = vpop.permute.xlu0 %4393
        %vm4397 = vcmask 941848
        %4398 = vst.msk [vmem:[#allocation2] sm:$0xff] %vm4397, %v4392
        %4399 = vst.msk [vmem:[#allocation2 + $0x20] sm:$0xff] %vm4397, %v4394
        %4400 = vrot.lane.b32.xlu0 %v569, 89
        %v4401 = vpop.permute.xlu0 %4400
        %4402 = vrot.lane.b32.xlu0 %v571, 89
        %v4403 = vpop.permute.xlu0 %4402
        %vm4406 = vcmask 1048520
        %4407 = vst.msk [vmem:[#allocation2] sm:$0xff] %vm4406, %v4401
        %4408 = vst.msk [vmem:[#allocation2 + $0x8] sm:$0xff] %vm2936, %v4401
        %4409 = vst.msk [vmem:[#allocation2 + $0x20] sm:$0xff] %vm4406, %v4403
        %4410 = vst.msk [vmem:[#allocation2 + $0x28] sm:$0xff] %vm2936, %v4403
        %4411 = vrot.lane.b32.xlu0 %v569, 95
        %v4412 = vpop.permute.xlu0 %4411
        %4413 = vrot.lane.b32.xlu0 %v571, 95
        %v4414 = vpop.permute.xlu0 %4413
        %vm4417 = vcmask 253048
        %4418 = vst.msk [vmem:[#allocation2 + $0x8] sm:$0xff] %vm4417, %v4412
        %4419 = vst.msk [vmem:[#allocation2 + $0x28] sm:$0xff] %vm4417, %v4414
        %4420 = vrot.lane.b32.xlu0 %v569, 101
        %v4421 = vpop.permute.xlu0 %4420
        %4422 = vrot.lane.b32.xlu0 %v571, 101
        %v4423 = vpop.permute.xlu0 %4422
        %vm4426 = vcmask 433448
        %4427 = vst.msk [vmem:[#allocation2 + $0x8] sm:$0xff] %vm4426, %v4421
        %4428 = vst.msk [vmem:[#allocation2 + $0x28] sm:$0xff] %vm4426, %v4423
        %4429 = vrot.lane.b32.xlu0 %v569, 107
        %v4430 = vpop.permute.xlu0 %4429
        %4431 = vrot.lane.b32.xlu0 %v571, 107
        %v4432 = vpop.permute.xlu0 %4431
        %vm4435 = vcmask 613848
        %4436 = vst.msk [vmem:[#allocation2 + $0x8] sm:$0xff] %vm4435, %v4430
        %4437 = vst.msk [vmem:[#allocation2 + $0x28] sm:$0xff] %vm4435, %v4432
        %4438 = vrot.lane.b32.xlu0 %v569, 113
        %v4439 = vpop.permute.xlu0 %4438
        %4440 = vrot.lane.b32.xlu0 %v571, 113
        %v4441 = vpop.permute.xlu0 %4440
        %vm4444 = vcmask 794248
        %4445 = vst.msk [vmem:[#allocation2 + $0x8] sm:$0xff] %vm4444, %v4439
        %4446 = vst.msk [vmem:[#allocation2 + $0x28] sm:$0xff] %vm4444, %v4441
        %4447 = vrot.lane.b32.xlu0 %v569, 119
        %v4448 = vpop.permute.xlu0 %4447
        %4449 = vrot.lane.b32.xlu0 %v571, 119
        %v4450 = vpop.permute.xlu0 %4449
        %vm4453 = vcmask 974648
        %4454 = vst.msk [vmem:[#allocation2 + $0x8] sm:$0xff] %vm4453, %v4448
        %4455 = vst.msk [vmem:[#allocation2 + $0x28] sm:$0xff] %vm4453, %v4450
        %4458 = vrot.lane.b32.xlu0 %v570, 125
        %v4459 = vpop.permute.xlu0 %4458
        %4460 = vrot.lane.b32.xlu0 %v572, 125
        %v4461 = vpop.permute.xlu0 %4460
        %vm4464 = vcmask 1048552
        %4465 = vst.msk [vmem:[#allocation2 + $0x8] sm:$0xff] %vm4464, %v4459
        %vm4466 = vcmask 105472
        %4467 = vst.msk [vmem:[#allocation2 + $0x10] sm:$0xff] %vm4466, %v4459
        %4468 = vst.msk [vmem:[#allocation2 + $0x28] sm:$0xff] %vm4464, %v4461
        %4469 = vst.msk [vmem:[#allocation2 + $0x30] sm:$0xff] %vm4466, %v4461
        %4470 = vrot.lane.b32.xlu0 %v570, 3
        %v4471 = vpop.permute.xlu0 %4470
        %4472 = vrot.lane.b32.xlu0 %v572, 3
        %v4473 = vpop.permute.xlu0 %4472
        %vm4476 = vcmask 285848
        %4477 = vst.msk [vmem:[#allocation2 + $0x10] sm:$0xff] %vm4476, %v4471
        %4478 = vst.msk [vmem:[#allocation2 + $0x30] sm:$0xff] %vm4476, %v4473
        %4479 = vrot.lane.b32.xlu0 %v570, 9
        %v4480 = vpop.permute.xlu0 %4479
        %4481 = vrot.lane.b32.xlu0 %v572, 9
        %v4482 = vpop.permute.xlu0 %4481
        %vm4485 = vcmask 466248
        %4486 = vst.msk [vmem:[#allocation2 + $0x10] sm:$0xff] %vm4485, %v4480
        %4487 = vst.msk [vmem:[#allocation2 + $0x30] sm:$0xff] %vm4485, %v4482
        %4488 = vrot.lane.b32.xlu0 %v570, 15
        %v4489 = vpop.permute.xlu0 %4488
        %4490 = vrot.lane.b32.xlu0 %v572, 15
        %v4491 = vpop.permute.xlu0 %4490
        %vm4494 = vcmask 646648
        %4495 = vst.msk [vmem:[#allocation2 + $0x10] sm:$0xff] %vm4494, %v4489
        %4496 = vst.msk [vmem:[#allocation2 + $0x30] sm:$0xff] %vm4494, %v4491
        %4497 = vrot.lane.b32.xlu0 %v570, 21
        %v4498 = vpop.permute.xlu0 %4497
        %4499 = vrot.lane.b32.xlu0 %v572, 21
        %v4500 = vpop.permute.xlu0 %4499
        %vm4503 = vcmask 827048
        %4504 = vst.msk [vmem:[#allocation2 + $0x10] sm:$0xff] %vm4503, %v4498
        %4505 = vst.msk [vmem:[#allocation2 + $0x30] sm:$0xff] %vm4503, %v4500
        %4506 = vrot.lane.b32.xlu0 %v570, 27
        %v4507 = vpop.permute.xlu0 %4506
        %4508 = vrot.lane.b32.xlu0 %v572, 27
        %v4509 = vpop.permute.xlu0 %4508
        %vm4512 = vcmask 1007448
        %4513 = vst.msk [vmem:[#allocation2 + $0x10] sm:$0xff] %vm4512, %v4507
        %4514 = vst.msk [vmem:[#allocation2 + $0x30] sm:$0xff] %vm4512, %v4509
        %4515 = vrot.lane.b32.xlu0 %v570, 33
        %v4516 = vpop.permute.xlu0 %4515
        %4517 = vrot.lane.b32.xlu0 %v572, 33
        %v4518 = vpop.permute.xlu0 %4517
        %vm4521 = vcmask 138248
        %4522 = vst.msk [vmem:[#allocation2 + $0x18] sm:$0xff] %vm4521, %v4516
        %4523 = vst.msk [vmem:[#allocation2 + $0x38] sm:$0xff] %vm4521, %v4518
        %4524 = vrot.lane.b32.xlu0 %v570, 39
        %v4525 = vpop.permute.xlu0 %4524
        %4526 = vrot.lane.b32.xlu0 %v572, 39
        %v4527 = vpop.permute.xlu0 %4526
        %vm4530 = vcmask 318648
        %4531 = vst.msk [vmem:[#allocation2 + $0x18] sm:$0xff] %vm4530, %v4525
        %4532 = vst.msk [vmem:[#allocation2 + $0x38] sm:$0xff] %vm4530, %v4527
        %4533 = vrot.lane.b32.xlu0 %v570, 77
        %v4534 = vpop.permute.xlu0 %4533
        %4535 = vrot.lane.b32.xlu0 %v572, 77
        %v4536 = vpop.permute.xlu0 %4535
        %vm4539 = vcmask 499048
        %4540 = vst.msk [vmem:[#allocation2 + $0x18] sm:$0xff] %vm4539, %v4534
        %4541 = vst.msk [vmem:[#allocation2 + $0x38] sm:$0xff] %vm4539, %v4536
        %4542 = vrot.lane.b32.xlu0 %v570, 115
        %v4543 = vpop.permute.xlu0 %4542
        %4544 = vrot.lane.b32.xlu0 %v572, 115
        %v4545 = vpop.permute.xlu0 %4544
        %vm4548 = vcmask 679448
        %4549 = vst.msk [vmem:[#allocation2 + $0x18] sm:$0xff] %vm4548, %v4543
        %4550 = vst.msk [vmem:[#allocation2 + $0x38] sm:$0xff] %vm4548, %v4545
        %4551 = vrot.lane.b32.xlu0 %v570, 25
        %v4552 = vpop.permute.xlu0 %4551
        %4553 = vrot.lane.b32.xlu0 %v572, 25
        %v4554 = vpop.permute.xlu0 %4553
        %vm4557 = vcmask 859848
        %4558 = vst.msk [vmem:[#allocation2 + $0x18] sm:$0xff] %vm4557, %v4552
        %4559 = vst.msk [vmem:[#allocation2 + $0x38] sm:$0xff] %vm4557, %v4554
        %v4560 = vld [vmem:[#allocation2] sm:$0xff]
        %v4561 = vld [vmem:[#allocation2 + $0x8] sm:$0xff]
        %v4562 = vld [vmem:[#allocation2 + $0x10] sm:$0xff]
        %v4563 = vld [vmem:[#allocation2 + $0x18] sm:$0xff]
        %v4564 = vld [vmem:[#allocation2 + $0x20] sm:$0xff]
        %v4565 = vld [vmem:[#allocation2 + $0x28] sm:$0xff]
        %v4566 = vld [vmem:[#allocation2 + $0x30] sm:$0xff]
        %v4567 = vld [vmem:[#allocation2 + $0x38] sm:$0xff]
        %4576 = vrot.lane.b32.xlu0 %v4560, 118
        %v4577 = vpop.permute.xlu0 %4576
        %4578 = vrot.lane.b32.xlu0 %v4561, 118
        %v4579 = vpop.permute.xlu0 %4578
        %4580 = vrot.lane.b32.xlu0 %v4562, 118
        %v4581 = vpop.permute.xlu0 %4580
        %4582 = vrot.lane.b32.xlu0 %v4563, 118
        %v4583 = vpop.permute.xlu0 %4582
        %4584 = vrot.lane.b32.xlu0 %v4564, 118
        %v4585 = vpop.permute.xlu0 %4584
        %4586 = vrot.lane.b32.xlu0 %v4565, 118
        %v4587 = vpop.permute.xlu0 %4586
        %4588 = vrot.lane.b32.xlu0 %v4566, 118
        %v4589 = vpop.permute.xlu0 %4588
        %4590 = vrot.lane.b32.xlu0 %v4567, 118
        %v4591 = vpop.permute.xlu0 %4590
        %v4592 = vsel %vm1108, %v4577, %v4579
        %v4593 = vsel %vm1108, %v4579, %v4581
        %v4594 = vsel %vm1108, %v4581, %v4583
        %v4595 = vsel %vm1108, %v4585, %v4587
        %v4596 = vsel %vm1108, %v4587, %v4589
        %v4597 = vsel %vm1108, %v4589, %v4591
        %4606 = vrot.lane.b32.xlu0 %v4560, 120
        %v4607 = vpop.permute.xlu0 %4606
        %4608 = vrot.lane.b32.xlu0 %v4561, 120
        %v4609 = vpop.permute.xlu0 %4608
        %4610 = vrot.lane.b32.xlu0 %v4562, 120
        %v4611 = vpop.permute.xlu0 %4610
        %4612 = vrot.lane.b32.xlu0 %v4563, 120
        %v4613 = vpop.permute.xlu0 %4612
        %4614 = vrot.lane.b32.xlu0 %v4564, 120
        %v4615 = vpop.permute.xlu0 %4614
        %4616 = vrot.lane.b32.xlu0 %v4565, 120
        %v4617 = vpop.permute.xlu0 %4616
        %4618 = vrot.lane.b32.xlu0 %v4566, 120
        %v4619 = vpop.permute.xlu0 %4618
        %4620 = vrot.lane.b32.xlu0 %v4567, 120
        %v4621 = vpop.permute.xlu0 %4620
        %v4622 = vsel %vm1124, %v4607, %v4609
        %v4623 = vsel %vm1124, %v4609, %v4611
        %v4624 = vsel %vm1124, %v4611, %v4613
        %v4625 = vsel %vm1124, %v4615, %v4617
        %v4626 = vsel %vm1124, %v4617, %v4619
        %v4627 = vsel %vm1124, %v4619, %v4621
        %v4636 = vsel %vm1078, %v4592, %v4622
        %v4637 = vsel %vm1079, %v4593, %v4623
        %v4638 = vsel %vm1080, %v4594, %v4624
        %v4639 = vsel %vm1081, %v4583, %v4613
        %v4640 = vsel %vm1078, %v4595, %v4625
        %v4641 = vsel %vm1079, %v4596, %v4626
        %v4642 = vsel %vm1080, %v4597, %v4627
        %v4643 = vsel %vm1081, %v4591, %v4621
        %4644 = vrot.lane.b32.xlu0 %v4560, 122
        %v4645 = vpop.permute.xlu0 %4644
        %4646 = vrot.lane.b32.xlu0 %v4561, 122
        %v4647 = vpop.permute.xlu0 %4646
        %4648 = vrot.lane.b32.xlu0 %v4562, 122
        %v4649 = vpop.permute.xlu0 %4648
        %4650 = vrot.lane.b32.xlu0 %v4563, 122
        %v4651 = vpop.permute.xlu0 %4650
        %4652 = vrot.lane.b32.xlu0 %v4564, 122
        %v4653 = vpop.permute.xlu0 %4652
        %4654 = vrot.lane.b32.xlu0 %v4565, 122
        %v4655 = vpop.permute.xlu0 %4654
        %4656 = vrot.lane.b32.xlu0 %v4566, 122
        %v4657 = vpop.permute.xlu0 %4656
        %4658 = vrot.lane.b32.xlu0 %v4567, 122
        %v4659 = vpop.permute.xlu0 %4658
        %v4660 = vsel %vm1148, %v4645, %v4647
        %v4661 = vsel %vm1148, %v4647, %v4649
        %v4662 = vsel %vm1148, %v4649, %v4651
        %v4663 = vsel %vm1148, %v4653, %v4655
        %v4664 = vsel %vm1148, %v4655, %v4657
        %v4665 = vsel %vm1148, %v4657, %v4659
        %v4674 = vsel %vm1136, %v4660, %v4636
        %v4675 = vsel %vm1137, %v4661, %v4637
        %v4676 = vsel %vm1138, %v4662, %v4638
        %v4677 = vsel %vm1139, %v4651, %v4639
        %v4678 = vsel %vm1136, %v4663, %v4640
        %v4679 = vsel %vm1137, %v4664, %v4641
        %v4680 = vsel %vm1138, %v4665, %v4642
        %v4681 = vsel %vm1139, %v4659, %v4643
        %4682 = vrot.lane.b32.xlu0 %v4560, 116
        %v4683 = vpop.permute.xlu0 %4682
        %4684 = vrot.lane.b32.xlu0 %v4561, 116
        %v4685 = vpop.permute.xlu0 %4684
        %4686 = vrot.lane.b32.xlu0 %v4562, 116
        %v4687 = vpop.permute.xlu0 %4686
        %4688 = vrot.lane.b32.xlu0 %v4563, 116
        %v4689 = vpop.permute.xlu0 %4688
        %4690 = vrot.lane.b32.xlu0 %v4564, 116
        %v4691 = vpop.permute.xlu0 %4690
        %4692 = vrot.lane.b32.xlu0 %v4565, 116
        %v4693 = vpop.permute.xlu0 %4692
        %4694 = vrot.lane.b32.xlu0 %v4566, 116
        %v4695 = vpop.permute.xlu0 %4694
        %4696 = vrot.lane.b32.xlu0 %v4567, 116
        %v4697 = vpop.permute.xlu0 %4696
        %v4698 = vsel %vm1172, %v4683, %v4685
        %v4699 = vsel %vm1172, %v4685, %v4687
        %v4700 = vsel %vm1172, %v4687, %v4689
        %v4701 = vsel %vm1172, %v4691, %v4693
        %v4702 = vsel %vm1172, %v4693, %v4695
        %v4703 = vsel %vm1172, %v4695, %v4697
        %v4712 = vsel %vm1160, %v4698, %v4674
        %v4713 = vsel %vm1161, %v4699, %v4675
        %v4714 = vsel %vm1162, %v4700, %v4676
        %v4715 = vsel %vm1163, %v4689, %v4677
        %v4716 = vsel %vm1160, %v4701, %v4678
        %v4717 = vsel %vm1161, %v4702, %v4679
        %v4718 = vsel %vm1162, %v4703, %v4680
        %v4719 = vsel %vm1163, %v4697, %v4681
        %4720 = vrot.lane.b32.xlu0 %v4560, 124
        %v4721 = vpop.permute.xlu0 %4720
        %4722 = vrot.lane.b32.xlu0 %v4561, 124
        %v4723 = vpop.permute.xlu0 %4722
        %4724 = vrot.lane.b32.xlu0 %v4562, 124
        %v4725 = vpop.permute.xlu0 %4724
        %4726 = vrot.lane.b32.xlu0 %v4563, 124
        %v4727 = vpop.permute.xlu0 %4726
        %4728 = vrot.lane.b32.xlu0 %v4564, 124
        %v4729 = vpop.permute.xlu0 %4728
        %4730 = vrot.lane.b32.xlu0 %v4565, 124
        %v4731 = vpop.permute.xlu0 %4730
        %4732 = vrot.lane.b32.xlu0 %v4566, 124
        %v4733 = vpop.permute.xlu0 %4732
        %4734 = vrot.lane.b32.xlu0 %v4567, 124
        %v4735 = vpop.permute.xlu0 %4734
        %v4736 = vsel %vm1196, %v4721, %v4723
        %v4737 = vsel %vm1196, %v4723, %v4725
        %v4738 = vsel %vm1196, %v4725, %v4727
        %v4739 = vsel %vm1196, %v4729, %v4731
        %v4740 = vsel %vm1196, %v4731, %v4733
        %v4741 = vsel %vm1196, %v4733, %v4735
        %v4750 = vsel %vm1184, %v4736, %v4712
        %v4751 = vsel %vm1185, %v4737, %v4713
        %v4752 = vsel %vm1186, %v4738, %v4714
        %v4753 = vsel %vm1187, %v4727, %v4715
        %v4754 = vsel %vm1184, %v4739, %v4716
        %v4755 = vsel %vm1185, %v4740, %v4717
        %v4756 = vsel %vm1186, %v4741, %v4718
        %v4757 = vsel %vm1187, %v4735, %v4719
        %4758 = vrot.lane.b32.xlu0 %v4560, 114
        %v4759 = vpop.permute.xlu0 %4758
        %4760 = vrot.lane.b32.xlu0 %v4561, 114
        %v4761 = vpop.permute.xlu0 %4760
        %4762 = vrot.lane.b32.xlu0 %v4562, 114
        %v4763 = vpop.permute.xlu0 %4762
        %4764 = vrot.lane.b32.xlu0 %v4563, 114
        %v4765 = vpop.permute.xlu0 %4764
        %4766 = vrot.lane.b32.xlu0 %v4564, 114
        %v4767 = vpop.permute.xlu0 %4766
        %4768 = vrot.lane.b32.xlu0 %v4565, 114
        %v4769 = vpop.permute.xlu0 %4768
        %4770 = vrot.lane.b32.xlu0 %v4566, 114
        %v4771 = vpop.permute.xlu0 %4770
        %4772 = vrot.lane.b32.xlu0 %v4567, 114
        %v4773 = vpop.permute.xlu0 %4772
        %v4774 = vsel %vm1220, %v4759, %v4761
        %v4775 = vsel %vm1220, %v4761, %v4763
        %v4776 = vsel %vm1220, %v4763, %v4765
        %v4777 = vsel %vm1220, %v4767, %v4769
        %v4778 = vsel %vm1220, %v4769, %v4771
        %v4779 = vsel %vm1220, %v4771, %v4773
        %v4788 = vsel %vm1208, %v4774, %v4750
        %v4789 = vsel %vm1209, %v4775, %v4751
        %v4790 = vsel %vm1210, %v4776, %v4752
        %v4791 = vsel %vm1211, %v4765, %v4753
        %v4792 = vsel %vm1208, %v4777, %v4754
        %v4793 = vsel %vm1209, %v4778, %v4755
        %v4794 = vsel %vm1210, %v4779, %v4756
        %v4795 = vsel %vm1211, %v4773, %v4757
        %4796 = vrot.lane.b32.xlu0 %v4560, 126
        %v4797 = vpop.permute.xlu0 %4796
        %4798 = vrot.lane.b32.xlu0 %v4561, 126
        %v4799 = vpop.permute.xlu0 %4798
        %4800 = vrot.lane.b32.xlu0 %v4562, 126
        %v4801 = vpop.permute.xlu0 %4800
        %4802 = vrot.lane.b32.xlu0 %v4563, 126
        %v4803 = vpop.permute.xlu0 %4802
        %4804 = vrot.lane.b32.xlu0 %v4564, 126
        %v4805 = vpop.permute.xlu0 %4804
        %4806 = vrot.lane.b32.xlu0 %v4565, 126
        %v4807 = vpop.permute.xlu0 %4806
        %4808 = vrot.lane.b32.xlu0 %v4566, 126
        %v4809 = vpop.permute.xlu0 %4808
        %4810 = vrot.lane.b32.xlu0 %v4567, 126
        %v4811 = vpop.permute.xlu0 %4810
        %v4812 = vsel %vm1244, %v4797, %v4799
        %v4813 = vsel %vm1244, %v4799, %v4801
        %v4814 = vsel %vm1244, %v4801, %v4803
        %v4815 = vsel %vm1244, %v4805, %v4807
        %v4816 = vsel %vm1244, %v4807, %v4809
        %v4817 = vsel %vm1244, %v4809, %v4811
        %v4826 = vsel %vm1232, %v4812, %v4788
        %v4827 = vsel %vm1233, %v4813, %v4789
        %v4828 = vsel %vm1234, %v4814, %v4790
        %v4829 = vsel %vm1235, %v4803, %v4791
        %v4830 = vsel %vm1232, %v4815, %v4792
        %v4831 = vsel %vm1233, %v4816, %v4793
        %v4832 = vsel %vm1234, %v4817, %v4794
        %v4833 = vsel %vm1235, %v4811, %v4795
        %4842 = vrot.lane.b32.xlu0 %v4826, 8
        %v4843 = vpop.permute.xlu0 %4842
        %4844 = vrot.lane.b32.xlu0 %v4827, 8
        %v4845 = vpop.permute.xlu0 %4844
        %4846 = vrot.lane.b32.xlu0 %v4828, 8
        %v4847 = vpop.permute.xlu0 %4846
        %4848 = vrot.lane.b32.xlu0 %v4829, 8
        %v4849 = vpop.permute.xlu0 %4848
        %4850 = vrot.lane.b32.xlu0 %v4830, 8
        %v4851 = vpop.permute.xlu0 %4850
        %4852 = vrot.lane.b32.xlu0 %v4831, 8
        %v4853 = vpop.permute.xlu0 %4852
        %4854 = vrot.lane.b32.xlu0 %v4832, 8
        %v4855 = vpop.permute.xlu0 %4854
        %4856 = vrot.lane.b32.xlu0 %v4833, 8
        %v4857 = vpop.permute.xlu0 %4856
        %v4858 = vsel %vm1280, %v4843, %v4845
        %v4859 = vsel %vm1280, %v4845, %v4847
        %v4860 = vsel %vm1280, %v4847, %v4849
        %v4861 = vsel %vm1280, %v4851, %v4853
        %v4862 = vsel %vm1280, %v4853, %v4855
        %v4863 = vsel %vm1280, %v4855, %v4857
        %vm4872 = vcmask 1047616
        %4873 = vst.msk [vmem:[#allocation2] sm:$0xff] %vm4872, %v4843
        %4874 = vst [vmem:[#allocation2 + $0x8] sm:$0xff] %v4858
        %4875 = vst [vmem:[#allocation2 + $0x10] sm:$0xff] %v4859
        %vm4876 = vcmask 883712
        %4877 = vst.msk [vmem:[#allocation2 + $0x18] sm:$0xff] %vm4876, %v4860
        %4878 = vst.msk [vmem:[#allocation2 + $0x20] sm:$0xff] %vm4872, %v4851
        %4879 = vst [vmem:[#allocation2 + $0x28] sm:$0xff] %v4861
        %4880 = vst [vmem:[#allocation2 + $0x30] sm:$0xff] %v4862
        %4881 = vst.msk [vmem:[#allocation2 + $0x38] sm:$0xff] %vm4876, %v4863
        %v4882 = vld [vmem:[%s9] sm:$0xff]
        %v4883 = vld [vmem:[%s9 + $0x8] sm:$0xff]
        %v4884 = vld [vmem:[#allocation2] sm:$0xff]
        %v4885 = vld [vmem:[#allocation2 + $0x8] sm:$0xff]
        %v4886 = vld [vmem:[#allocation2 + $0x10] sm:$0xff]
        %v4887 = vld [vmem:[#allocation2 + $0x20] sm:$0xff]
        %v4888 = vld [vmem:[#allocation2 + $0x28] sm:$0xff]
        %v4889 = vld [vmem:[#allocation2 + $0x30] sm:$0xff]
        %4891 = vset.pattern.permute.xlu0 0
        %4892 = vperm.xlu0 %4891, %v4882
        %v4893 = vpop.permute.xlu0 %4892
        %4896 = vset.pattern.permute.xlu0 0
        %4897 = vperm.xlu0 %4896, %v4883
        %v4898 = vpop.permute.xlu0 %4897
        %v4900 = vmul.f32 %v4893, %v4884
        %v4901 = vmul.f32 %v4893, %v4885
        %v4902 = vmul.f32 %v4893, %v4886
        %v4903 = vmul.f32 %v4898, %v4887
        %v4904 = vmul.f32 %v4898, %v4888
        %v4905 = vmul.f32 %v4898, %v4889
        %v4906 = vadd.f32 %v4900, 0.0
        %v4907 = vadd.f32 %v4901, 0.0
        %v4908 = vadd.f32 %v4902, 0.0
        %v4909 = vadd.f32 %v4903, 0.0
        %v4910 = vadd.f32 %v4904, 0.0
        %v4911 = vadd.f32 %v4905, 0.0
        %4912 = vset.pattern.permute.xlu0 1
        %4913 = vperm.xlu0 %4912, %v4882
        %v4914 = vpop.permute.xlu0 %4913
        %4916 = vset.pattern.permute.xlu0 1
        %4917 = vperm.xlu0 %4916, %v4883
        %v4918 = vpop.permute.xlu0 %4917
        %v4920 = vmul.f32 %v4914, %v4884
        %v4921 = vmul.f32 %v4914, %v4885
        %v4922 = vmul.f32 %v4914, %v4886
        %v4923 = vmul.f32 %v4918, %v4887
        %v4924 = vmul.f32 %v4918, %v4888
        %v4925 = vmul.f32 %v4918, %v4889
        %v4926 = vadd.f32 %v4920, 0.0
        %v4927 = vadd.f32 %v4921, 0.0
        %v4928 = vadd.f32 %v4922, 0.0
        %v4929 = vadd.f32 %v4923, 0.0
        %v4930 = vadd.f32 %v4924, 0.0
        %v4931 = vadd.f32 %v4925, 0.0
        %4932 = vset.pattern.permute.xlu0 2
        %4933 = vperm.xlu0 %4932, %v4882
        %v4934 = vpop.permute.xlu0 %4933
        %4936 = vset.pattern.permute.xlu0 2
        %4937 = vperm.xlu0 %4936, %v4883
        %v4938 = vpop.permute.xlu0 %4937
        %v4940 = vmul.f32 %v4934, %v4884
        %v4941 = vmul.f32 %v4934, %v4885
        %v4942 = vmul.f32 %v4934, %v4886
        %v4943 = vmul.f32 %v4938, %v4887
        %v4944 = vmul.f32 %v4938, %v4888
        %v4945 = vmul.f32 %v4938, %v4889
        %v4946 = vadd.f32 %v4940, 0.0
        %v4947 = vadd.f32 %v4941, 0.0
        %v4948 = vadd.f32 %v4942, 0.0
        %v4949 = vadd.f32 %v4943, 0.0
        %v4950 = vadd.f32 %v4944, 0.0
        %v4951 = vadd.f32 %v4945, 0.0
        %4952 = vset.pattern.permute.xlu0 3
        %4953 = vperm.xlu0 %4952, %v4882
        %v4954 = vpop.permute.xlu0 %4953
        %4956 = vset.pattern.permute.xlu0 3
        %4957 = vperm.xlu0 %4956, %v4883
        %v4958 = vpop.permute.xlu0 %4957
        %v4960 = vmul.f32 %v4954, %v4884
        %v4961 = vmul.f32 %v4954, %v4885
        %v4962 = vmul.f32 %v4954, %v4886
        %v4963 = vmul.f32 %v4958, %v4887
        %v4964 = vmul.f32 %v4958, %v4888
        %v4965 = vmul.f32 %v4958, %v4889
        %v4966 = vadd.f32 %v4960, 0.0
        %v4967 = vadd.f32 %v4961, 0.0
        %v4968 = vadd.f32 %v4962, 0.0
        %v4969 = vadd.f32 %v4963, 0.0
        %v4970 = vadd.f32 %v4964, 0.0
        %v4971 = vadd.f32 %v4965, 0.0
        %4972 = vset.pattern.permute.xlu0 4
        %4973 = vperm.xlu0 %4972, %v4882
        %v4974 = vpop.permute.xlu0 %4973
        %4976 = vset.pattern.permute.xlu0 4
        %4977 = vperm.xlu0 %4976, %v4883
        %v4978 = vpop.permute.xlu0 %4977
        %v4980 = vmul.f32 %v4974, %v4884
        %v4981 = vmul.f32 %v4974, %v4885
        %v4982 = vmul.f32 %v4974, %v4886
        %v4983 = vmul.f32 %v4978, %v4887
        %v4984 = vmul.f32 %v4978, %v4888
        %v4985 = vmul.f32 %v4978, %v4889
        %4992 = vrot.lane.b32.xlu0 %v4980, 124
        %v4993 = vpop.permute.xlu0 %4992
        %4994 = vrot.lane.b32.xlu0 %v4981, 124
        %v4995 = vpop.permute.xlu0 %4994
        %4996 = vrot.lane.b32.xlu0 %v4982, 124
        %v4997 = vpop.permute.xlu0 %4996
        %4998 = vrot.lane.b32.xlu0 %v4983, 124
        %v4999 = vpop.permute.xlu0 %4998
        %5000 = vrot.lane.b32.xlu0 %v4984, 124
        %v5001 = vpop.permute.xlu0 %5000
        %5002 = vrot.lane.b32.xlu0 %v4985, 124
        %v5003 = vpop.permute.xlu0 %5002
        %v5004 = vsel %vm1196, %v4993, %v4995
        %v5005 = vsel %vm1196, %v4995, %v4997
        %v5006 = vsel %vm1196, %v4999, %v5001
        %v5007 = vsel %vm1196, %v5001, %v5003
        %v5014 = vadd.f32 %v4906, %v5004
        %v5015 = vadd.f32 %v4907, %v5005
        %v5016 = vadd.f32 %v4908, %v4997
        %v5017 = vadd.f32 %v4909, %v5006
        %v5018 = vadd.f32 %v4910, %v5007
        %v5019 = vadd.f32 %v4911, %v5003
        %5020 = vset.pattern.permute.xlu0 5
        %5021 = vperm.xlu0 %5020, %v4882
        %v5022 = vpop.permute.xlu0 %5021
        %5024 = vset.pattern.permute.xlu0 5
        %5025 = vperm.xlu0 %5024, %v4883
        %v5026 = vpop.permute.xlu0 %5025
        %v5028 = vmul.f32 %v5022, %v4884
        %v5029 = vmul.f32 %v5022, %v4885
        %v5030 = vmul.f32 %v5022, %v4886
        %v5031 = vmul.f32 %v5026, %v4887
        %v5032 = vmul.f32 %v5026, %v4888
        %v5033 = vmul.f32 %v5026, %v4889
        %5040 = vrot.lane.b32.xlu0 %v5028, 124
        %v5041 = vpop.permute.xlu0 %5040
        %5042 = vrot.lane.b32.xlu0 %v5029, 124
        %v5043 = vpop.permute.xlu0 %5042
        %5044 = vrot.lane.b32.xlu0 %v5030, 124
        %v5045 = vpop.permute.xlu0 %5044
        %5046 = vrot.lane.b32.xlu0 %v5031, 124
        %v5047 = vpop.permute.xlu0 %5046
        %5048 = vrot.lane.b32.xlu0 %v5032, 124
        %v5049 = vpop.permute.xlu0 %5048
        %5050 = vrot.lane.b32.xlu0 %v5033, 124
        %v5051 = vpop.permute.xlu0 %5050
        %v5052 = vsel %vm1196, %v5041, %v5043
        %v5053 = vsel %vm1196, %v5043, %v5045
        %v5054 = vsel %vm1196, %v5047, %v5049
        %v5055 = vsel %vm1196, %v5049, %v5051
        %v5062 = vadd.f32 %v4926, %v5052
        %v5063 = vadd.f32 %v4927, %v5053
        %v5064 = vadd.f32 %v4928, %v5045
        %v5065 = vadd.f32 %v4929, %v5054
        %v5066 = vadd.f32 %v4930, %v5055
        %v5067 = vadd.f32 %v4931, %v5051
        %5068 = vset.pattern.permute.xlu0 6
        %5069 = vperm.xlu0 %5068, %v4882
        %v5070 = vpop.permute.xlu0 %5069
        %5072 = vset.pattern.permute.xlu0 6
        %5073 = vperm.xlu0 %5072, %v4883
        %v5074 = vpop.permute.xlu0 %5073
        %v5076 = vmul.f32 %v5070, %v4884
        %v5077 = vmul.f32 %v5070, %v4885
        %v5078 = vmul.f32 %v5070, %v4886
        %v5079 = vmul.f32 %v5074, %v4887
        %v5080 = vmul.f32 %v5074, %v4888
        %v5081 = vmul.f32 %v5074, %v4889
        %5088 = vrot.lane.b32.xlu0 %v5076, 124
        %v5089 = vpop.permute.xlu0 %5088
        %5090 = vrot.lane.b32.xlu0 %v5077, 124
        %v5091 = vpop.permute.xlu0 %5090
        %5092 = vrot.lane.b32.xlu0 %v5078, 124
        %v5093 = vpop.permute.xlu0 %5092
        %5094 = vrot.lane.b32.xlu0 %v5079, 124
        %v5095 = vpop.permute.xlu0 %5094
        %5096 = vrot.lane.b32.xlu0 %v5080, 124
        %v5097 = vpop.permute.xlu0 %5096
        %5098 = vrot.lane.b32.xlu0 %v5081, 124
        %v5099 = vpop.permute.xlu0 %5098
        %v5100 = vsel %vm1196, %v5089, %v5091
        %v5101 = vsel %vm1196, %v5091, %v5093
        %v5102 = vsel %vm1196, %v5095, %v5097
        %v5103 = vsel %vm1196, %v5097, %v5099
        %v5110 = vadd.f32 %v4946, %v5100
        %v5111 = vadd.f32 %v4947, %v5101
        %v5112 = vadd.f32 %v4948, %v5093
        %v5113 = vadd.f32 %v4949, %v5102
        %v5114 = vadd.f32 %v4950, %v5103
        %v5115 = vadd.f32 %v4951, %v5099
        %5116 = vset.pattern.permute.xlu0 7
        %5117 = vperm.xlu0 %5116, %v4882
        %v5118 = vpop.permute.xlu0 %5117
        %5120 = vset.pattern.permute.xlu0 7
        %5121 = vperm.xlu0 %5120, %v4883
        %v5122 = vpop.permute.xlu0 %5121
        %v5124 = vmul.f32 %v5118, %v4884
        %v5125 = vmul.f32 %v5118, %v4885
        %v5126 = vmul.f32 %v5118, %v4886
        %v5127 = vmul.f32 %v5122, %v4887
        %v5128 = vmul.f32 %v5122, %v4888
        %v5129 = vmul.f32 %v5122, %v4889
        %5136 = vrot.lane.b32.xlu0 %v5124, 109
        %v5137 = vpop.permute.xlu0 %5136
        %5138 = vrot.lane.b32.xlu0 %v5125, 109
        %v5139 = vpop.permute.xlu0 %5138
        %5140 = vrot.lane.b32.xlu0 %v5126, 109
        %v5141 = vpop.permute.xlu0 %5140
        %5142 = vrot.lane.b32.xlu0 %v5127, 109
        %v5143 = vpop.permute.xlu0 %5142
        %5144 = vrot.lane.b32.xlu0 %v5128, 109
        %v5145 = vpop.permute.xlu0 %5144
        %5146 = vrot.lane.b32.xlu0 %v5129, 109
        %v5147 = vpop.permute.xlu0 %5146
        %vm5148 = vcmask 891904
        %v5149 = vsel %vm5148, %v5137, %v5139
        %v5150 = vsel %vm5148, %v5139, %v5141
        %v5151 = vsel %vm5148, %v5143, %v5145
        %v5152 = vsel %vm5148, %v5145, %v5147
        %v5159 = vadd.f32 %v4966, %v5149
        %v5160 = vadd.f32 %v4967, %v5150
        %v5161 = vadd.f32 %v4968, %v5141
        %v5162 = vadd.f32 %v4969, %v5151
        %v5163 = vadd.f32 %v4970, %v5152
        %v5164 = vadd.f32 %v4971, %v5147
        %5165 = vset.pattern.permute.xlu0 8
        %5166 = vperm.xlu0 %5165, %v4882
        %v5167 = vpop.permute.xlu0 %5166
        %5169 = vset.pattern.permute.xlu0 8
        %5170 = vperm.xlu0 %5169, %v4883
        %v5171 = vpop.permute.xlu0 %5170
        %v5173 = vmul.f32 %v5167, %v4884
        %v5174 = vmul.f32 %v5167, %v4885
        %v5175 = vmul.f32 %v5167, %v4886
        %v5176 = vmul.f32 %v5171, %v4887
        %v5177 = vmul.f32 %v5171, %v4888
        %v5178 = vmul.f32 %v5171, %v4889
        %5185 = vrot.lane.b32.xlu0 %v5173, 105
        %v5186 = vpop.permute.xlu0 %5185
        %5187 = vrot.lane.b32.xlu0 %v5174, 105
        %v5188 = vpop.permute.xlu0 %5187
        %5189 = vrot.lane.b32.xlu0 %v5175, 105
        %v5190 = vpop.permute.xlu0 %5189
        %5191 = vrot.lane.b32.xlu0 %v5176, 105
        %v5192 = vpop.permute.xlu0 %5191
        %5193 = vrot.lane.b32.xlu0 %v5177, 105
        %v5194 = vpop.permute.xlu0 %5193
        %5195 = vrot.lane.b32.xlu0 %v5178, 105
        %v5196 = vpop.permute.xlu0 %5195
        %vm5197 = vcmask 859136
        %v5198 = vsel %vm5197, %v5186, %v5188
        %v5199 = vsel %vm5197, %v5188, %v5190
        %v5200 = vsel %vm5197, %v5192, %v5194
        %v5201 = vsel %vm5197, %v5194, %v5196
        %v5208 = vadd.f32 %v5014, %v5198
        %v5209 = vadd.f32 %v5015, %v5199
        %v5210 = vadd.f32 %v5016, %v5190
        %v5211 = vadd.f32 %v5017, %v5200
        %v5212 = vadd.f32 %v5018, %v5201
        %v5213 = vadd.f32 %v5019, %v5196
        %5214 = vset.pattern.permute.xlu0 9
        %5215 = vperm.xlu0 %5214, %v4882
        %v5216 = vpop.permute.xlu0 %5215
        %5218 = vset.pattern.permute.xlu0 9
        %5219 = vperm.xlu0 %5218, %v4883
        %v5220 = vpop.permute.xlu0 %5219
        %v5222 = vmul.f32 %v5216, %v4884
        %v5223 = vmul.f32 %v5216, %v4885
        %v5224 = vmul.f32 %v5216, %v4886
        %v5225 = vmul.f32 %v5220, %v4887
        %v5226 = vmul.f32 %v5220, %v4888
        %v5227 = vmul.f32 %v5220, %v4889
        %5234 = vrot.lane.b32.xlu0 %v5222, 105
        %v5235 = vpop.permute.xlu0 %5234
        %5236 = vrot.lane.b32.xlu0 %v5223, 105
        %v5237 = vpop.permute.xlu0 %5236
        %5238 = vrot.lane.b32.xlu0 %v5224, 105
        %v5239 = vpop.permute.xlu0 %5238
        %5240 = vrot.lane.b32.xlu0 %v5225, 105
        %v5241 = vpop.permute.xlu0 %5240
        %5242 = vrot.lane.b32.xlu0 %v5226, 105
        %v5243 = vpop.permute.xlu0 %5242
        %5244 = vrot.lane.b32.xlu0 %v5227, 105
        %v5245 = vpop.permute.xlu0 %5244
        %v5246 = vsel %vm5197, %v5235, %v5237
        %v5247 = vsel %vm5197, %v5237, %v5239
        %v5248 = vsel %vm5197, %v5241, %v5243
        %v5249 = vsel %vm5197, %v5243, %v5245
        %v5256 = vadd.f32 %v5062, %v5246
        %v5257 = vadd.f32 %v5063, %v5247
        %v5258 = vadd.f32 %v5064, %v5239
        %v5259 = vadd.f32 %v5065, %v5248
        %v5260 = vadd.f32 %v5066, %v5249
        %v5261 = vadd.f32 %v5067, %v5245
        %v5262 = vld [vmem:[#allocation2] sm:$0xff]
        %v5263 = vld [vmem:[#allocation2 + $0x8] sm:$0xff]
        %v5264 = vld [vmem:[#allocation2 + $0x10] sm:$0xff]
        %v5265 = vld [vmem:[#allocation2 + $0x18] sm:$0xff]
        %v5266 = vld [vmem:[#allocation2 + $0x20] sm:$0xff]
        %v5267 = vld [vmem:[#allocation2 + $0x28] sm:$0xff]
        %v5268 = vld [vmem:[#allocation2 + $0x30] sm:$0xff]
        %v5269 = vld [vmem:[#allocation2 + $0x38] sm:$0xff]
        %5270 = vset.pattern.permute.xlu0 10
        %5271 = vperm.xlu0 %5270, %v4882
        %v5272 = vpop.permute.xlu0 %5271
        %5274 = vset.pattern.permute.xlu0 10
        %5275 = vperm.xlu0 %5274, %v4883
        %v5276 = vpop.permute.xlu0 %5275
        %v5278 = vmul.f32 %v5272, %v5262
        %v5279 = vmul.f32 %v5272, %v5263
        %v5280 = vmul.f32 %v5272, %v5264
        %v5281 = vmul.f32 %v5272, %v5265
        %v5282 = vmul.f32 %v5276, %v5266
        %v5283 = vmul.f32 %v5276, %v5267
        %v5284 = vmul.f32 %v5276, %v5268
        %v5285 = vmul.f32 %v5276, %v5269
        %5294 = vrot.lane.b32.xlu0 %v5278, 105
        %v5295 = vpop.permute.xlu0 %5294
        %5296 = vrot.lane.b32.xlu0 %v5279, 105
        %v5297 = vpop.permute.xlu0 %5296
        %5298 = vrot.lane.b32.xlu0 %v5280, 105
        %v5299 = vpop.permute.xlu0 %5298
        %5300 = vrot.lane.b32.xlu0 %v5281, 105
        %v5301 = vpop.permute.xlu0 %5300
        %5302 = vrot.lane.b32.xlu0 %v5282, 105
        %v5303 = vpop.permute.xlu0 %5302
        %5304 = vrot.lane.b32.xlu0 %v5283, 105
        %v5305 = vpop.permute.xlu0 %5304
        %5306 = vrot.lane.b32.xlu0 %v5284, 105
        %v5307 = vpop.permute.xlu0 %5306
        %5308 = vrot.lane.b32.xlu0 %v5285, 105
        %v5309 = vpop.permute.xlu0 %5308
        %v5310 = vsel %vm5197, %v5295, %v5297
        %v5311 = vsel %vm5197, %v5297, %v5299
        %v5312 = vsel %vm5197, %v5299, %v5301
        %v5313 = vsel %vm5197, %v5303, %v5305
        %v5314 = vsel %vm5197, %v5305, %v5307
        %v5315 = vsel %vm5197, %v5307, %v5309
        %v5322 = vadd.f32 %v5110, %v5310
        %v5323 = vadd.f32 %v5111, %v5311
        %v5324 = vadd.f32 %v5112, %v5312
        %v5325 = vadd.f32 %v5113, %v5313
        %v5326 = vadd.f32 %v5114, %v5314
        %v5327 = vadd.f32 %v5115, %v5315
        %5328 = vset.pattern.permute.xlu0 11
        %5329 = vperm.xlu0 %5328, %v4882
        %v5330 = vpop.permute.xlu0 %5329
        %5332 = vset.pattern.permute.xlu0 11
        %5333 = vperm.xlu0 %5332, %v4883
        %v5334 = vpop.permute.xlu0 %5333
        %v5336 = vmul.f32 %v5330, %v5262
        %v5337 = vmul.f32 %v5330, %v5263
        %v5338 = vmul.f32 %v5330, %v5264
        %v5339 = vmul.f32 %v5330, %v5265
        %v5340 = vmul.f32 %v5334, %v5266
        %v5341 = vmul.f32 %v5334, %v5267
        %v5342 = vmul.f32 %v5334, %v5268
        %v5343 = vmul.f32 %v5334, %v5269
        %5352 = vrot.lane.b32.xlu0 %v5336, 105
        %v5353 = vpop.permute.xlu0 %5352
        %5354 = vrot.lane.b32.xlu0 %v5337, 105
        %v5355 = vpop.permute.xlu0 %5354
        %5356 = vrot.lane.b32.xlu0 %v5338, 105
        %v5357 = vpop.permute.xlu0 %5356
        %5358 = vrot.lane.b32.xlu0 %v5339, 105
        %v5359 = vpop.permute.xlu0 %5358
        %5360 = vrot.lane.b32.xlu0 %v5340, 105
        %v5361 = vpop.permute.xlu0 %5360
        %5362 = vrot.lane.b32.xlu0 %v5341, 105
        %v5363 = vpop.permute.xlu0 %5362
        %5364 = vrot.lane.b32.xlu0 %v5342, 105
        %v5365 = vpop.permute.xlu0 %5364
        %5366 = vrot.lane.b32.xlu0 %v5343, 105
        %v5367 = vpop.permute.xlu0 %5366
        %v5368 = vsel %vm5197, %v5353, %v5355
        %v5369 = vsel %vm5197, %v5355, %v5357
        %v5370 = vsel %vm5197, %v5357, %v5359
        %v5371 = vsel %vm5197, %v5361, %v5363
        %v5372 = vsel %vm5197, %v5363, %v5365
        %v5373 = vsel %vm5197, %v5365, %v5367
        %v5380 = vadd.f32 %v5159, %v5368
        %v5381 = vadd.f32 %v5160, %v5369
        %v5382 = vadd.f32 %v5161, %v5370
        %v5383 = vadd.f32 %v5162, %v5371
        %v5384 = vadd.f32 %v5163, %v5372
        %v5385 = vadd.f32 %v5164, %v5373
        %5386 = vset.pattern.permute.xlu0 12
        %5387 = vperm.xlu0 %5386, %v4882
        %v5388 = vpop.permute.xlu0 %5387
        %5390 = vset.pattern.permute.xlu0 12
        %5391 = vperm.xlu0 %5390, %v4883
        %v5392 = vpop.permute.xlu0 %5391
        %v5394 = vmul.f32 %v5388, %v5262
        %v5395 = vmul.f32 %v5388, %v5263
        %v5396 = vmul.f32 %v5388, %v5264
        %v5397 = vmul.f32 %v5388, %v5265
        %v5398 = vmul.f32 %v5392, %v5266
        %v5399 = vmul.f32 %v5392, %v5267
        %v5400 = vmul.f32 %v5392, %v5268
        %v5401 = vmul.f32 %v5392, %v5269
        %5410 = vrot.lane.b32.xlu0 %v5394, 101
        %v5411 = vpop.permute.xlu0 %5410
        %5412 = vrot.lane.b32.xlu0 %v5395, 101
        %v5413 = vpop.permute.xlu0 %5412
        %5414 = vrot.lane.b32.xlu0 %v5396, 101
        %v5415 = vpop.permute.xlu0 %5414
        %5416 = vrot.lane.b32.xlu0 %v5397, 101
        %v5417 = vpop.permute.xlu0 %5416
        %5418 = vrot.lane.b32.xlu0 %v5398, 101
        %v5419 = vpop.permute.xlu0 %5418
        %5420 = vrot.lane.b32.xlu0 %v5399, 101
        %v5421 = vpop.permute.xlu0 %5420
        %5422 = vrot.lane.b32.xlu0 %v5400, 101
        %v5423 = vpop.permute.xlu0 %5422
        %5424 = vrot.lane.b32.xlu0 %v5401, 101
        %v5425 = vpop.permute.xlu0 %5424
        %vm5426 = vcmask 826368
        %v5427 = vsel %vm5426, %v5411, %v5413
        %v5428 = vsel %vm5426, %v5413, %v5415
        %v5429 = vsel %vm5426, %v5415, %v5417
        %v5430 = vsel %vm5426, %v5419, %v5421
        %v5431 = vsel %vm5426, %v5421, %v5423
        %v5432 = vsel %vm5426, %v5423, %v5425
        %v5439 = vadd.f32 %v5208, %v5427
        %v5440 = vadd.f32 %v5209, %v5428
        %v5441 = vadd.f32 %v5210, %v5429
        %v5442 = vadd.f32 %v5211, %v5430
        %v5443 = vadd.f32 %v5212, %v5431
        %v5444 = vadd.f32 %v5213, %v5432
        %5445 = vset.pattern.permute.xlu0 13
        %5446 = vperm.xlu0 %5445, %v4882
        %v5447 = vpop.permute.xlu0 %5446
        %5449 = vset.pattern.permute.xlu0 13
        %5450 = vperm.xlu0 %5449, %v4883
        %v5451 = vpop.permute.xlu0 %5450
        %v5453 = vmul.f32 %v5447, %v5262
        %v5454 = vmul.f32 %v5447, %v5263
        %v5455 = vmul.f32 %v5447, %v5264
        %v5456 = vmul.f32 %v5447, %v5265
        %v5457 = vmul.f32 %v5451, %v5266
        %v5458 = vmul.f32 %v5451, %v5267
        %v5459 = vmul.f32 %v5451, %v5268
        %v5460 = vmul.f32 %v5451, %v5269
        %5469 = vrot.lane.b32.xlu0 %v5453, 101
        %v5470 = vpop.permute.xlu0 %5469
        %5471 = vrot.lane.b32.xlu0 %v5454, 101
        %v5472 = vpop.permute.xlu0 %5471
        %5473 = vrot.lane.b32.xlu0 %v5455, 101
        %v5474 = vpop.permute.xlu0 %5473
        %5475 = vrot.lane.b32.xlu0 %v5456, 101
        %v5476 = vpop.permute.xlu0 %5475
        %5477 = vrot.lane.b32.xlu0 %v5457, 101
        %v5478 = vpop.permute.xlu0 %5477
        %5479 = vrot.lane.b32.xlu0 %v5458, 101
        %v5480 = vpop.permute.xlu0 %5479
        %5481 = vrot.lane.b32.xlu0 %v5459, 101
        %v5482 = vpop.permute.xlu0 %5481
        %5483 = vrot.lane.b32.xlu0 %v5460, 101
        %v5484 = vpop.permute.xlu0 %5483
        %v5485 = vsel %vm5426, %v5470, %v5472
        %v5486 = vsel %vm5426, %v5472, %v5474
        %v5487 = vsel %vm5426, %v5474, %v5476
        %v5488 = vsel %vm5426, %v5478, %v5480
        %v5489 = vsel %vm5426, %v5480, %v5482
        %v5490 = vsel %vm5426, %v5482, %v5484
        %v5497 = vadd.f32 %v5256, %v5485
        %v5498 = vadd.f32 %v5257, %v5486
        %v5499 = vadd.f32 %v5258, %v5487
        %v5500 = vadd.f32 %v5259, %v5488
        %v5501 = vadd.f32 %v5260, %v5489
        %v5502 = vadd.f32 %v5261, %v5490
        %5503 = vset.pattern.permute.xlu0 14
        %5504 = vperm.xlu0 %5503, %v4882
        %v5505 = vpop.permute.xlu0 %5504
        %5507 = vset.pattern.permute.xlu0 14
        %5508 = vperm.xlu0 %5507, %v4883
        %v5509 = vpop.permute.xlu0 %5508
        %v5511 = vmul.f32 %v5505, %v5262
        %v5512 = vmul.f32 %v5505, %v5263
        %v5513 = vmul.f32 %v5505, %v5264
        %v5514 = vmul.f32 %v5505, %v5265
        %v5515 = vmul.f32 %v5509, %v5266
        %v5516 = vmul.f32 %v5509, %v5267
        %v5517 = vmul.f32 %v5509, %v5268
        %v5518 = vmul.f32 %v5509, %v5269
        %5527 = vrot.lane.b32.xlu0 %v5511, 86
        %v5528 = vpop.permute.xlu0 %5527
        %5529 = vrot.lane.b32.xlu0 %v5512, 86
        %v5530 = vpop.permute.xlu0 %5529
        %5531 = vrot.lane.b32.xlu0 %v5513, 86
        %v5532 = vpop.permute.xlu0 %5531
        %5533 = vrot.lane.b32.xlu0 %v5514, 86
        %v5534 = vpop.permute.xlu0 %5533
        %5535 = vrot.lane.b32.xlu0 %v5515, 86
        %v5536 = vpop.permute.xlu0 %5535
        %5537 = vrot.lane.b32.xlu0 %v5516, 86
        %v5538 = vpop.permute.xlu0 %5537
        %5539 = vrot.lane.b32.xlu0 %v5517, 86
        %v5540 = vpop.permute.xlu0 %5539
        %5541 = vrot.lane.b32.xlu0 %v5518, 86
        %v5542 = vpop.permute.xlu0 %5541
        %vm5543 = vcmask 703488
        %v5544 = vsel %vm5543, %v5528, %v5530
        %v5545 = vsel %vm5543, %v5530, %v5532
        %v5546 = vsel %vm5543, %v5532, %v5534
        %v5547 = vsel %vm5543, %v5536, %v5538
        %v5548 = vsel %vm5543, %v5538, %v5540
        %v5549 = vsel %vm5543, %v5540, %v5542
        %v5556 = vadd.f32 %v5322, %v5544
        %v5557 = vadd.f32 %v5323, %v5545
        %v5558 = vadd.f32 %v5324, %v5546
        %v5559 = vadd.f32 %v5325, %v5547
        %v5560 = vadd.f32 %v5326, %v5548
        %v5561 = vadd.f32 %v5327, %v5549
        %5562 = vset.pattern.permute.xlu0 15
        %5563 = vperm.xlu0 %5562, %v4882
        %v5564 = vpop.permute.xlu0 %5563
        %5566 = vset.pattern.permute.xlu0 15
        %5567 = vperm.xlu0 %5566, %v4883
        %v5568 = vpop.permute.xlu0 %5567
        %v5570 = vmul.f32 %v5564, %v5262
        %v5571 = vmul.f32 %v5564, %v5263
        %v5572 = vmul.f32 %v5564, %v5264
        %v5573 = vmul.f32 %v5564, %v5265
        %v5574 = vmul.f32 %v5568, %v5266
        %v5575 = vmul.f32 %v5568, %v5267
        %v5576 = vmul.f32 %v5568, %v5268
        %v5577 = vmul.f32 %v5568, %v5269
        %5586 = vrot.lane.b32.xlu0 %v5570, 86
        %v5587 = vpop.permute.xlu0 %5586
        %5588 = vrot.lane.b32.xlu0 %v5571, 86
        %v5589 = vpop.permute.xlu0 %5588
        %5590 = vrot.lane.b32.xlu0 %v5572, 86
        %v5591 = vpop.permute.xlu0 %5590
        %5592 = vrot.lane.b32.xlu0 %v5573, 86
        %v5593 = vpop.permute.xlu0 %5592
        %5594 = vrot.lane.b32.xlu0 %v5574, 86
        %v5595 = vpop.permute.xlu0 %5594
        %5596 = vrot.lane.b32.xlu0 %v5575, 86
        %v5597 = vpop.permute.xlu0 %5596
        %5598 = vrot.lane.b32.xlu0 %v5576, 86
        %v5599 = vpop.permute.xlu0 %5598
        %5600 = vrot.lane.b32.xlu0 %v5577, 86
        %v5601 = vpop.permute.xlu0 %5600
        %v5602 = vsel %vm5543, %v5587, %v5589
        %v5603 = vsel %vm5543, %v5589, %v5591
        %v5604 = vsel %vm5543, %v5591, %v5593
        %v5605 = vsel %vm5543, %v5595, %v5597
        %v5606 = vsel %vm5543, %v5597, %v5599
        %v5607 = vsel %vm5543, %v5599, %v5601
        %v5614 = vadd.f32 %v5380, %v5602
        %v5615 = vadd.f32 %v5381, %v5603
        %v5616 = vadd.f32 %v5382, %v5604
        %v5617 = vadd.f32 %v5383, %v5605
        %v5618 = vadd.f32 %v5384, %v5606
        %v5619 = vadd.f32 %v5385, %v5607
        %5620 = vset.pattern.permute.xlu0 16
        %5621 = vperm.xlu0 %5620, %v4882
        %v5622 = vpop.permute.xlu0 %5621
        %5624 = vset.pattern.permute.xlu0 16
        %5625 = vperm.xlu0 %5624, %v4883
        %v5626 = vpop.permute.xlu0 %5625
        %v5628 = vmul.f32 %v5622, %v5262
        %v5629 = vmul.f32 %v5622, %v5263
        %v5630 = vmul.f32 %v5622, %v5264
        %v5631 = vmul.f32 %v5622, %v5265
        %v5632 = vmul.f32 %v5626, %v5266
        %v5633 = vmul.f32 %v5626, %v5267
        %v5634 = vmul.f32 %v5626, %v5268
        %v5635 = vmul.f32 %v5626, %v5269
        %5644 = vrot.lane.b32.xlu0 %v5628, 82
        %v5645 = vpop.permute.xlu0 %5644
        %5646 = vrot.lane.b32.xlu0 %v5629, 82
        %v5647 = vpop.permute.xlu0 %5646
        %5648 = vrot.lane.b32.xlu0 %v5630, 82
        %v5649 = vpop.permute.xlu0 %5648
        %5650 = vrot.lane.b32.xlu0 %v5631, 82
        %v5651 = vpop.permute.xlu0 %5650
        %5652 = vrot.lane.b32.xlu0 %v5632, 82
        %v5653 = vpop.permute.xlu0 %5652
        %5654 = vrot.lane.b32.xlu0 %v5633, 82
        %v5655 = vpop.permute.xlu0 %5654
        %5656 = vrot.lane.b32.xlu0 %v5634, 82
        %v5657 = vpop.permute.xlu0 %5656
        %5658 = vrot.lane.b32.xlu0 %v5635, 82
        %v5659 = vpop.permute.xlu0 %5658
        %vm5660 = vcmask 670720
        %v5661 = vsel %vm5660, %v5645, %v5647
        %v5662 = vsel %vm5660, %v5647, %v5649
        %v5663 = vsel %vm5660, %v5649, %v5651
        %v5664 = vsel %vm5660, %v5653, %v5655
        %v5665 = vsel %vm5660, %v5655, %v5657
        %v5666 = vsel %vm5660, %v5657, %v5659
        %v5673 = vadd.f32 %v5439, %v5661
        %v5674 = vadd.f32 %v5440, %v5662
        %v5675 = vadd.f32 %v5441, %v5663
        %v5676 = vadd.f32 %v5442, %v5664
        %v5677 = vadd.f32 %v5443, %v5665
        %v5678 = vadd.f32 %v5444, %v5666
        %5679 = vset.pattern.permute.xlu0 17
        %5680 = vperm.xlu0 %5679, %v4882
        %v5681 = vpop.permute.xlu0 %5680
        %5683 = vset.pattern.permute.xlu0 17
        %5684 = vperm.xlu0 %5683, %v4883
        %v5685 = vpop.permute.xlu0 %5684
        %v5687 = vmul.f32 %v5681, %v5262
        %v5688 = vmul.f32 %v5681, %v5263
        %v5689 = vmul.f32 %v5681, %v5264
        %v5690 = vmul.f32 %v5681, %v5265
        %v5691 = vmul.f32 %v5685, %v5266
        %v5692 = vmul.f32 %v5685, %v5267
        %v5693 = vmul.f32 %v5685, %v5268
        %v5694 = vmul.f32 %v5685, %v5269
        %5703 = vrot.lane.b32.xlu0 %v5687, 82
        %v5704 = vpop.permute.xlu0 %5703
        %5705 = vrot.lane.b32.xlu0 %v5688, 82
        %v5706 = vpop.permute.xlu0 %5705
        %5707 = vrot.lane.b32.xlu0 %v5689, 82
        %v5708 = vpop.permute.xlu0 %5707
        %5709 = vrot.lane.b32.xlu0 %v5690, 82
        %v5710 = vpop.permute.xlu0 %5709
        %5711 = vrot.lane.b32.xlu0 %v5691, 82
        %v5712 = vpop.permute.xlu0 %5711
        %5713 = vrot.lane.b32.xlu0 %v5692, 82
        %v5714 = vpop.permute.xlu0 %5713
        %5715 = vrot.lane.b32.xlu0 %v5693, 82
        %v5716 = vpop.permute.xlu0 %5715
        %5717 = vrot.lane.b32.xlu0 %v5694, 82
        %v5718 = vpop.permute.xlu0 %5717
        %v5719 = vsel %vm5660, %v5704, %v5706
        %v5720 = vsel %vm5660, %v5706, %v5708
        %v5721 = vsel %vm5660, %v5708, %v5710
        %v5722 = vsel %vm5660, %v5712, %v5714
        %v5723 = vsel %vm5660, %v5714, %v5716
        %v5724 = vsel %vm5660, %v5716, %v5718
        %v5731 = vadd.f32 %v5497, %v5719
        %v5732 = vadd.f32 %v5498, %v5720
        %v5733 = vadd.f32 %v5499, %v5721
        %v5734 = vadd.f32 %v5500, %v5722
        %v5735 = vadd.f32 %v5501, %v5723
        %v5736 = vadd.f32 %v5502, %v5724
        %5737 = vset.pattern.permute.xlu0 18
        %5738 = vperm.xlu0 %5737, %v4882
        %v5739 = vpop.permute.xlu0 %5738
        %5741 = vset.pattern.permute.xlu0 18
        %5742 = vperm.xlu0 %5741, %v4883
        %v5743 = vpop.permute.xlu0 %5742
        %v5745 = vmul.f32 %v5739, %v5262
        %v5746 = vmul.f32 %v5739, %v5263
        %v5747 = vmul.f32 %v5739, %v5264
        %v5748 = vmul.f32 %v5739, %v5265
        %v5749 = vmul.f32 %v5743, %v5266
        %v5750 = vmul.f32 %v5743, %v5267
        %v5751 = vmul.f32 %v5743, %v5268
        %v5752 = vmul.f32 %v5743, %v5269
        %5761 = vrot.lane.b32.xlu0 %v5745, 82
        %v5762 = vpop.permute.xlu0 %5761
        %5763 = vrot.lane.b32.xlu0 %v5746, 82
        %v5764 = vpop.permute.xlu0 %5763
        %5765 = vrot.lane.b32.xlu0 %v5747, 82
        %v5766 = vpop.permute.xlu0 %5765
        %5767 = vrot.lane.b32.xlu0 %v5748, 82
        %v5768 = vpop.permute.xlu0 %5767
        %5769 = vrot.lane.b32.xlu0 %v5749, 82
        %v5770 = vpop.permute.xlu0 %5769
        %5771 = vrot.lane.b32.xlu0 %v5750, 82
        %v5772 = vpop.permute.xlu0 %5771
        %5773 = vrot.lane.b32.xlu0 %v5751, 82
        %v5774 = vpop.permute.xlu0 %5773
        %5775 = vrot.lane.b32.xlu0 %v5752, 82
        %v5776 = vpop.permute.xlu0 %5775
        %v5777 = vsel %vm5660, %v5762, %v5764
        %v5778 = vsel %vm5660, %v5764, %v5766
        %v5779 = vsel %vm5660, %v5766, %v5768
        %v5780 = vsel %vm5660, %v5770, %v5772
        %v5781 = vsel %vm5660, %v5772, %v5774
        %v5782 = vsel %vm5660, %v5774, %v5776
        %v5789 = vadd.f32 %v5556, %v5777
        %v5790 = vadd.f32 %v5557, %v5778
        %v5791 = vadd.f32 %v5558, %v5779
        %v5792 = vadd.f32 %v5559, %v5780
        %v5793 = vadd.f32 %v5560, %v5781
        %v5794 = vadd.f32 %v5561, %v5782
        %5795 = vset.pattern.permute.xlu0 19
        %5796 = vperm.xlu0 %5795, %v4882
        %v5797 = vpop.permute.xlu0 %5796
        %5799 = vset.pattern.permute.xlu0 19
        %5800 = vperm.xlu0 %5799, %v4883
        %v5801 = vpop.permute.xlu0 %5800
        %v5803 = vmul.f32 %v5797, %v5262
        %v5804 = vmul.f32 %v5797, %v5263
        %v5805 = vmul.f32 %v5797, %v5264
        %v5806 = vmul.f32 %v5797, %v5265
        %v5807 = vmul.f32 %v5801, %v5266
        %v5808 = vmul.f32 %v5801, %v5267
        %v5809 = vmul.f32 %v5801, %v5268
        %v5810 = vmul.f32 %v5801, %v5269
        %5819 = vrot.lane.b32.xlu0 %v5803, 82
        %v5820 = vpop.permute.xlu0 %5819
        %5821 = vrot.lane.b32.xlu0 %v5804, 82
        %v5822 = vpop.permute.xlu0 %5821
        %5823 = vrot.lane.b32.xlu0 %v5805, 82
        %v5824 = vpop.permute.xlu0 %5823
        %5825 = vrot.lane.b32.xlu0 %v5806, 82
        %v5826 = vpop.permute.xlu0 %5825
        %5827 = vrot.lane.b32.xlu0 %v5807, 82
        %v5828 = vpop.permute.xlu0 %5827
        %5829 = vrot.lane.b32.xlu0 %v5808, 82
        %v5830 = vpop.permute.xlu0 %5829
        %5831 = vrot.lane.b32.xlu0 %v5809, 82
        %v5832 = vpop.permute.xlu0 %5831
        %5833 = vrot.lane.b32.xlu0 %v5810, 82
        %v5834 = vpop.permute.xlu0 %5833
        %v5835 = vsel %vm5660, %v5820, %v5822
        %v5836 = vsel %vm5660, %v5822, %v5824
        %v5837 = vsel %vm5660, %v5824, %v5826
        %v5838 = vsel %vm5660, %v5828, %v5830
        %v5839 = vsel %vm5660, %v5830, %v5832
        %v5840 = vsel %vm5660, %v5832, %v5834
        %v5847 = vadd.f32 %v5614, %v5835
        %v5848 = vadd.f32 %v5615, %v5836
        %v5849 = vadd.f32 %v5616, %v5837
        %v5850 = vadd.f32 %v5617, %v5838
        %v5851 = vadd.f32 %v5618, %v5839
        %v5852 = vadd.f32 %v5619, %v5840
        %5853 = vset.pattern.permute.xlu0 20
        %5854 = vperm.xlu0 %5853, %v4882
        %v5855 = vpop.permute.xlu0 %5854
        %5857 = vset.pattern.permute.xlu0 20
        %5858 = vperm.xlu0 %5857, %v4883
        %v5859 = vpop.permute.xlu0 %5858
        %v5861 = vmul.f32 %v5855, %v5262
        %v5862 = vmul.f32 %v5855, %v5263
        %v5863 = vmul.f32 %v5855, %v5264
        %v5864 = vmul.f32 %v5855, %v5265
        %v5865 = vmul.f32 %v5859, %v5266
        %v5866 = vmul.f32 %v5859, %v5267
        %v5867 = vmul.f32 %v5859, %v5268
        %v5868 = vmul.f32 %v5859, %v5269
        %5877 = vrot.lane.b32.xlu0 %v5861, 78
        %v5878 = vpop.permute.xlu0 %5877
        %5879 = vrot.lane.b32.xlu0 %v5862, 78
        %v5880 = vpop.permute.xlu0 %5879
        %5881 = vrot.lane.b32.xlu0 %v5863, 78
        %v5882 = vpop.permute.xlu0 %5881
        %5883 = vrot.lane.b32.xlu0 %v5864, 78
        %v5884 = vpop.permute.xlu0 %5883
        %5885 = vrot.lane.b32.xlu0 %v5865, 78
        %v5886 = vpop.permute.xlu0 %5885
        %5887 = vrot.lane.b32.xlu0 %v5866, 78
        %v5888 = vpop.permute.xlu0 %5887
        %5889 = vrot.lane.b32.xlu0 %v5867, 78
        %v5890 = vpop.permute.xlu0 %5889
        %5891 = vrot.lane.b32.xlu0 %v5868, 78
        %v5892 = vpop.permute.xlu0 %5891
        %vm5893 = vcmask 637952
        %v5894 = vsel %vm5893, %v5878, %v5880
        %v5895 = vsel %vm5893, %v5880, %v5882
        %v5896 = vsel %vm5893, %v5882, %v5884
        %v5897 = vsel %vm5893, %v5886, %v5888
        %v5898 = vsel %vm5893, %v5888, %v5890
        %v5899 = vsel %vm5893, %v5890, %v5892
        %v5906 = vadd.f32 %v5673, %v5894
        %v5907 = vadd.f32 %v5674, %v5895
        %v5908 = vadd.f32 %v5675, %v5896
        %v5909 = vadd.f32 %v5676, %v5897
        %v5910 = vadd.f32 %v5677, %v5898
        %v5911 = vadd.f32 %v5678, %v5899
        %5912 = vset.pattern.permute.xlu0 21
        %5913 = vperm.xlu0 %5912, %v4882
        %v5914 = vpop.permute.xlu0 %5913
        %5916 = vset.pattern.permute.xlu0 21
        %5917 = vperm.xlu0 %5916, %v4883
        %v5918 = vpop.permute.xlu0 %5917
        %v5920 = vmul.f32 %v5914, %v5262
        %v5921 = vmul.f32 %v5914, %v5263
        %v5922 = vmul.f32 %v5914, %v5264
        %v5923 = vmul.f32 %v5914, %v5265
        %v5924 = vmul.f32 %v5918, %v5266
        %v5925 = vmul.f32 %v5918, %v5267
        %v5926 = vmul.f32 %v5918, %v5268
        %v5927 = vmul.f32 %v5918, %v5269
        %5936 = vrot.lane.b32.xlu0 %v5920, 63
        %v5937 = vpop.permute.xlu0 %5936
        %5938 = vrot.lane.b32.xlu0 %v5921, 63
        %v5939 = vpop.permute.xlu0 %5938
        %5940 = vrot.lane.b32.xlu0 %v5922, 63
        %v5941 = vpop.permute.xlu0 %5940
        %5942 = vrot.lane.b32.xlu0 %v5923, 63
        %v5943 = vpop.permute.xlu0 %5942
        %5944 = vrot.lane.b32.xlu0 %v5924, 63
        %v5945 = vpop.permute.xlu0 %5944
        %5946 = vrot.lane.b32.xlu0 %v5925, 63
        %v5947 = vpop.permute.xlu0 %5946
        %5948 = vrot.lane.b32.xlu0 %v5926, 63
        %v5949 = vpop.permute.xlu0 %5948
        %5950 = vrot.lane.b32.xlu0 %v5927, 63
        %v5951 = vpop.permute.xlu0 %5950
        %vm5952 = vcmask 515072
        %v5953 = vsel %vm5952, %v5937, %v5939
        %v5954 = vsel %vm5952, %v5939, %v5941
        %v5955 = vsel %vm5952, %v5941, %v5943
        %v5956 = vsel %vm5952, %v5945, %v5947
        %v5957 = vsel %vm5952, %v5947, %v5949
        %v5958 = vsel %vm5952, %v5949, %v5951
        %v5965 = vadd.f32 %v5731, %v5953
        %v5966 = vadd.f32 %v5732, %v5954
        %v5967 = vadd.f32 %v5733, %v5955
        %v5968 = vadd.f32 %v5734, %v5956
        %v5969 = vadd.f32 %v5735, %v5957
        %v5970 = vadd.f32 %v5736, %v5958
        %5971 = vset.pattern.permute.xlu0 22
        %5972 = vperm.xlu0 %5971, %v4882
        %v5973 = vpop.permute.xlu0 %5972
        %5975 = vset.pattern.permute.xlu0 22
        %5976 = vperm.xlu0 %5975, %v4883
        %v5977 = vpop.permute.xlu0 %5976
        %v5979 = vmul.f32 %v5973, %v5262
        %v5980 = vmul.f32 %v5973, %v5263
        %v5981 = vmul.f32 %v5973, %v5264
        %v5982 = vmul.f32 %v5973, %v5265
        %v5983 = vmul.f32 %v5977, %v5266
        %v5984 = vmul.f32 %v5977, %v5267
        %v5985 = vmul.f32 %v5977, %v5268
        %v5986 = vmul.f32 %v5977, %v5269
        %5995 = vrot.lane.b32.xlu0 %v5979, 63
        %v5996 = vpop.permute.xlu0 %5995
        %5997 = vrot.lane.b32.xlu0 %v5980, 63
        %v5998 = vpop.permute.xlu0 %5997
        %5999 = vrot.lane.b32.xlu0 %v5981, 63
        %v6000 = vpop.permute.xlu0 %5999
        %6001 = vrot.lane.b32.xlu0 %v5982, 63
        %v6002 = vpop.permute.xlu0 %6001
        %6003 = vrot.lane.b32.xlu0 %v5983, 63
        %v6004 = vpop.permute.xlu0 %6003
        %6005 = vrot.lane.b32.xlu0 %v5984, 63
        %v6006 = vpop.permute.xlu0 %6005
        %6007 = vrot.lane.b32.xlu0 %v5985, 63
        %v6008 = vpop.permute.xlu0 %6007
        %6009 = vrot.lane.b32.xlu0 %v5986, 63
        %v6010 = vpop.permute.xlu0 %6009
        %v6011 = vsel %vm5952, %v5996, %v5998
        %v6012 = vsel %vm5952, %v5998, %v6000
        %v6013 = vsel %vm5952, %v6000, %v6002
        %v6014 = vsel %vm5952, %v6004, %v6006
        %v6015 = vsel %vm5952, %v6006, %v6008
        %v6016 = vsel %vm5952, %v6008, %v6010
        %v6023 = vadd.f32 %v5789, %v6011
        %v6024 = vadd.f32 %v5790, %v6012
        %v6025 = vadd.f32 %v5791, %v6013
        %v6026 = vadd.f32 %v5792, %v6014
        %v6027 = vadd.f32 %v5793, %v6015
        %v6028 = vadd.f32 %v5794, %v6016
        %6029 = vset.pattern.permute.xlu0 23
        %6030 = vperm.xlu0 %6029, %v4882
        %v6031 = vpop.permute.xlu0 %6030
        %6033 = vset.pattern.permute.xlu0 23
        %6034 = vperm.xlu0 %6033, %v4883
        %v6035 = vpop.permute.xlu0 %6034
        %v6037 = vmul.f32 %v6031, %v5262
        %v6038 = vmul.f32 %v6031, %v5263
        %v6039 = vmul.f32 %v6031, %v5264
        %v6040 = vmul.f32 %v6031, %v5265
        %v6041 = vmul.f32 %v6035, %v5266
        %v6042 = vmul.f32 %v6035, %v5267
        %v6043 = vmul.f32 %v6035, %v5268
        %v6044 = vmul.f32 %v6035, %v5269
        %6053 = vrot.lane.b32.xlu0 %v6037, 63
        %v6054 = vpop.permute.xlu0 %6053
        %6055 = vrot.lane.b32.xlu0 %v6038, 63
        %v6056 = vpop.permute.xlu0 %6055
        %6057 = vrot.lane.b32.xlu0 %v6039, 63
        %v6058 = vpop.permute.xlu0 %6057
        %6059 = vrot.lane.b32.xlu0 %v6040, 63
        %v6060 = vpop.permute.xlu0 %6059
        %6061 = vrot.lane.b32.xlu0 %v6041, 63
        %v6062 = vpop.permute.xlu0 %6061
        %6063 = vrot.lane.b32.xlu0 %v6042, 63
        %v6064 = vpop.permute.xlu0 %6063
        %6065 = vrot.lane.b32.xlu0 %v6043, 63
        %v6066 = vpop.permute.xlu0 %6065
        %6067 = vrot.lane.b32.xlu0 %v6044, 63
        %v6068 = vpop.permute.xlu0 %6067
        %v6069 = vsel %vm5952, %v6054, %v6056
        %v6070 = vsel %vm5952, %v6056, %v6058
        %v6071 = vsel %vm5952, %v6058, %v6060
        %v6072 = vsel %vm5952, %v6062, %v6064
        %v6073 = vsel %vm5952, %v6064, %v6066
        %v6074 = vsel %vm5952, %v6066, %v6068
        %v6081 = vadd.f32 %v5847, %v6069
        %v6082 = vadd.f32 %v5848, %v6070
        %v6083 = vadd.f32 %v5849, %v6071
        %v6084 = vadd.f32 %v5850, %v6072
        %v6085 = vadd.f32 %v5851, %v6073
        %v6086 = vadd.f32 %v5852, %v6074
        %6087 = vset.pattern.permute.xlu0 24
        %6088 = vperm.xlu0 %6087, %v4882
        %v6089 = vpop.permute.xlu0 %6088
        %6091 = vset.pattern.permute.xlu0 24
        %6092 = vperm.xlu0 %6091, %v4883
        %v6093 = vpop.permute.xlu0 %6092
        %v6095 = vmul.f32 %v6089, %v5262
        %v6096 = vmul.f32 %v6089, %v5263
        %v6097 = vmul.f32 %v6089, %v5264
        %v6098 = vmul.f32 %v6089, %v5265
        %v6099 = vmul.f32 %v6093, %v5266
        %v6100 = vmul.f32 %v6093, %v5267
        %v6101 = vmul.f32 %v6093, %v5268
        %v6102 = vmul.f32 %v6093, %v5269
        %6111 = vrot.lane.b32.xlu0 %v6095, 59
        %v6112 = vpop.permute.xlu0 %6111
        %6113 = vrot.lane.b32.xlu0 %v6096, 59
        %v6114 = vpop.permute.xlu0 %6113
        %6115 = vrot.lane.b32.xlu0 %v6097, 59
        %v6116 = vpop.permute.xlu0 %6115
        %6117 = vrot.lane.b32.xlu0 %v6098, 59
        %v6118 = vpop.permute.xlu0 %6117
        %6119 = vrot.lane.b32.xlu0 %v6099, 59
        %v6120 = vpop.permute.xlu0 %6119
        %6121 = vrot.lane.b32.xlu0 %v6100, 59
        %v6122 = vpop.permute.xlu0 %6121
        %6123 = vrot.lane.b32.xlu0 %v6101, 59
        %v6124 = vpop.permute.xlu0 %6123
        %6125 = vrot.lane.b32.xlu0 %v6102, 59
        %v6126 = vpop.permute.xlu0 %6125
        %vm6127 = vcmask 482304
        %v6128 = vsel %vm6127, %v6112, %v6114
        %v6129 = vsel %vm6127, %v6114, %v6116
        %v6130 = vsel %vm6127, %v6116, %v6118
        %v6131 = vsel %vm6127, %v6120, %v6122
        %v6132 = vsel %vm6127, %v6122, %v6124
        %v6133 = vsel %vm6127, %v6124, %v6126
        %v6140 = vadd.f32 %v5906, %v6128
        %v6141 = vadd.f32 %v5907, %v6129
        %v6142 = vadd.f32 %v5908, %v6130
        %v6143 = vadd.f32 %v5909, %v6131
        %v6144 = vadd.f32 %v5910, %v6132
        %v6145 = vadd.f32 %v5911, %v6133
        %6146 = vset.pattern.permute.xlu0 25
        %6147 = vperm.xlu0 %6146, %v4882
        %v6148 = vpop.permute.xlu0 %6147
        %6150 = vset.pattern.permute.xlu0 25
        %6151 = vperm.xlu0 %6150, %v4883
        %v6152 = vpop.permute.xlu0 %6151
        %v6154 = vmul.f32 %v6148, %v5262
        %v6155 = vmul.f32 %v6148, %v5263
        %v6156 = vmul.f32 %v6148, %v5264
        %v6157 = vmul.f32 %v6148, %v5265
        %v6158 = vmul.f32 %v6152, %v5266
        %v6159 = vmul.f32 %v6152, %v5267
        %v6160 = vmul.f32 %v6152, %v5268
        %v6161 = vmul.f32 %v6152, %v5269
        %6170 = vrot.lane.b32.xlu0 %v6154, 59
        %v6171 = vpop.permute.xlu0 %6170
        %6172 = vrot.lane.b32.xlu0 %v6155, 59
        %v6173 = vpop.permute.xlu0 %6172
        %6174 = vrot.lane.b32.xlu0 %v6156, 59
        %v6175 = vpop.permute.xlu0 %6174
        %6176 = vrot.lane.b32.xlu0 %v6157, 59
        %v6177 = vpop.permute.xlu0 %6176
        %6178 = vrot.lane.b32.xlu0 %v6158, 59
        %v6179 = vpop.permute.xlu0 %6178
        %6180 = vrot.lane.b32.xlu0 %v6159, 59
        %v6181 = vpop.permute.xlu0 %6180
        %6182 = vrot.lane.b32.xlu0 %v6160, 59
        %v6183 = vpop.permute.xlu0 %6182
        %6184 = vrot.lane.b32.xlu0 %v6161, 59
        %v6185 = vpop.permute.xlu0 %6184
        %v6186 = vsel %vm6127, %v6171, %v6173
        %v6187 = vsel %vm6127, %v6173, %v6175
        %v6188 = vsel %vm6127, %v6175, %v6177
        %v6189 = vsel %vm6127, %v6179, %v6181
        %v6190 = vsel %vm6127, %v6181, %v6183
        %v6191 = vsel %vm6127, %v6183, %v6185
        %v6198 = vadd.f32 %v5965, %v6186
        %v6199 = vadd.f32 %v5966, %v6187
        %v6200 = vadd.f32 %v5967, %v6188
        %v6201 = vadd.f32 %v5968, %v6189
        %v6202 = vadd.f32 %v5969, %v6190
        %v6203 = vadd.f32 %v5970, %v6191
        %6204 = vset.pattern.permute.xlu0 26
        %6205 = vperm.xlu0 %6204, %v4882
        %v6206 = vpop.permute.xlu0 %6205
        %6208 = vset.pattern.permute.xlu0 26
        %6209 = vperm.xlu0 %6208, %v4883
        %v6210 = vpop.permute.xlu0 %6209
        %v6212 = vmul.f32 %v6206, %v5262
        %v6213 = vmul.f32 %v6206, %v5263
        %v6214 = vmul.f32 %v6206, %v5264
        %v6215 = vmul.f32 %v6206, %v5265
        %v6216 = vmul.f32 %v6210, %v5266
        %v6217 = vmul.f32 %v6210, %v5267
        %v6218 = vmul.f32 %v6210, %v5268
        %v6219 = vmul.f32 %v6210, %v5269
        %6228 = vrot.lane.b32.xlu0 %v6212, 59
        %v6229 = vpop.permute.xlu0 %6228
        %6230 = vrot.lane.b32.xlu0 %v6213, 59
        %v6231 = vpop.permute.xlu0 %6230
        %6232 = vrot.lane.b32.xlu0 %v6214, 59
        %v6233 = vpop.permute.xlu0 %6232
        %6234 = vrot.lane.b32.xlu0 %v6215, 59
        %v6235 = vpop.permute.xlu0 %6234
        %6236 = vrot.lane.b32.xlu0 %v6216, 59
        %v6237 = vpop.permute.xlu0 %6236
        %6238 = vrot.lane.b32.xlu0 %v6217, 59
        %v6239 = vpop.permute.xlu0 %6238
        %6240 = vrot.lane.b32.xlu0 %v6218, 59
        %v6241 = vpop.permute.xlu0 %6240
        %6242 = vrot.lane.b32.xlu0 %v6219, 59
        %v6243 = vpop.permute.xlu0 %6242
        %v6244 = vsel %vm6127, %v6229, %v6231
        %v6245 = vsel %vm6127, %v6231, %v6233
        %v6246 = vsel %vm6127, %v6233, %v6235
        %v6247 = vsel %vm6127, %v6237, %v6239
        %v6248 = vsel %vm6127, %v6239, %v6241
        %v6249 = vsel %vm6127, %v6241, %v6243
        %v6256 = vadd.f32 %v6023, %v6244
        %v6257 = vadd.f32 %v6024, %v6245
        %v6258 = vadd.f32 %v6025, %v6246
        %v6259 = vadd.f32 %v6026, %v6247
        %v6260 = vadd.f32 %v6027, %v6248
        %v6261 = vadd.f32 %v6028, %v6249
        %6262 = vset.pattern.permute.xlu0 27
        %6263 = vperm.xlu0 %6262, %v4882
        %v6264 = vpop.permute.xlu0 %6263
        %6266 = vset.pattern.permute.xlu0 27
        %6267 = vperm.xlu0 %6266, %v4883
        %v6268 = vpop.permute.xlu0 %6267
        %v6270 = vmul.f32 %v6264, %v5262
        %v6271 = vmul.f32 %v6264, %v5263
        %v6272 = vmul.f32 %v6264, %v5264
        %v6273 = vmul.f32 %v6264, %v5265
        %v6274 = vmul.f32 %v6268, %v5266
        %v6275 = vmul.f32 %v6268, %v5267
        %v6276 = vmul.f32 %v6268, %v5268
        %v6277 = vmul.f32 %v6268, %v5269
        %6286 = vrot.lane.b32.xlu0 %v6270, 59
        %v6287 = vpop.permute.xlu0 %6286
        %6288 = vrot.lane.b32.xlu0 %v6271, 59
        %v6289 = vpop.permute.xlu0 %6288
        %6290 = vrot.lane.b32.xlu0 %v6272, 59
        %v6291 = vpop.permute.xlu0 %6290
        %6292 = vrot.lane.b32.xlu0 %v6273, 59
        %v6293 = vpop.permute.xlu0 %6292
        %6294 = vrot.lane.b32.xlu0 %v6274, 59
        %v6295 = vpop.permute.xlu0 %6294
        %6296 = vrot.lane.b32.xlu0 %v6275, 59
        %v6297 = vpop.permute.xlu0 %6296
        %6298 = vrot.lane.b32.xlu0 %v6276, 59
        %v6299 = vpop.permute.xlu0 %6298
        %6300 = vrot.lane.b32.xlu0 %v6277, 59
        %v6301 = vpop.permute.xlu0 %6300
        %v6302 = vsel %vm6127, %v6287, %v6289
        %v6303 = vsel %vm6127, %v6289, %v6291
        %v6304 = vsel %vm6127, %v6291, %v6293
        %v6305 = vsel %vm6127, %v6295, %v6297
        %v6306 = vsel %vm6127, %v6297, %v6299
        %v6307 = vsel %vm6127, %v6299, %v6301
        %v6314 = vadd.f32 %v6081, %v6302
        %v6315 = vadd.f32 %v6082, %v6303
        %v6316 = vadd.f32 %v6083, %v6304
        %v6317 = vadd.f32 %v6084, %v6305
        %v6318 = vadd.f32 %v6085, %v6306
        %v6319 = vadd.f32 %v6086, %v6307
        %6320 = vset.pattern.permute.xlu0 28
        %6321 = vperm.xlu0 %6320, %v4882
        %v6322 = vpop.permute.xlu0 %6321
        %6324 = vset.pattern.permute.xlu0 28
        %6325 = vperm.xlu0 %6324, %v4883
        %v6326 = vpop.permute.xlu0 %6325
        %v6328 = vmul.f32 %v6322, %v5262
        %v6329 = vmul.f32 %v6322, %v5263
        %v6330 = vmul.f32 %v6322, %v5264
        %v6331 = vmul.f32 %v6322, %v5265
        %v6332 = vmul.f32 %v6326, %v5266
        %v6333 = vmul.f32 %v6326, %v5267
        %v6334 = vmul.f32 %v6326, %v5268
        %v6335 = vmul.f32 %v6326, %v5269
        %6344 = vrot.lane.b32.xlu0 %v6328, 40
        %v6345 = vpop.permute.xlu0 %6344
        %6346 = vrot.lane.b32.xlu0 %v6329, 40
        %v6347 = vpop.permute.xlu0 %6346
        %6348 = vrot.lane.b32.xlu0 %v6330, 40
        %v6349 = vpop.permute.xlu0 %6348
        %6350 = vrot.lane.b32.xlu0 %v6331, 40
        %v6351 = vpop.permute.xlu0 %6350
        %6352 = vrot.lane.b32.xlu0 %v6332, 40
        %v6353 = vpop.permute.xlu0 %6352
        %6354 = vrot.lane.b32.xlu0 %v6333, 40
        %v6355 = vpop.permute.xlu0 %6354
        %6356 = vrot.lane.b32.xlu0 %v6334, 40
        %v6357 = vpop.permute.xlu0 %6356
        %6358 = vrot.lane.b32.xlu0 %v6335, 40
        %v6359 = vpop.permute.xlu0 %6358
        %vm6360 = vcmask 326656
        %v6361 = vsel %vm6360, %v6345, %v6347
        %v6362 = vsel %vm6360, %v6347, %v6349
        %v6363 = vsel %vm6360, %v6349, %v6351
        %v6364 = vsel %vm6360, %v6353, %v6355
        %v6365 = vsel %vm6360, %v6355, %v6357
        %v6366 = vsel %vm6360, %v6357, %v6359
        %v6373 = vadd.f32 %v6140, %v6361
        %v6374 = vadd.f32 %v6141, %v6362
        %v6375 = vadd.f32 %v6142, %v6363
        %v6376 = vadd.f32 %v6143, %v6364
        %v6377 = vadd.f32 %v6144, %v6365
        %v6378 = vadd.f32 %v6145, %v6366
        %6379 = vset.pattern.permute.xlu0 29
        %6380 = vperm.xlu0 %6379, %v4882
        %v6381 = vpop.permute.xlu0 %6380
        %6383 = vset.pattern.permute.xlu0 29
        %6384 = vperm.xlu0 %6383, %v4883
        %v6385 = vpop.permute.xlu0 %6384
        %v6387 = vmul.f32 %v6381, %v5262
        %v6388 = vmul.f32 %v6381, %v5263
        %v6389 = vmul.f32 %v6381, %v5264
        %v6390 = vmul.f32 %v6381, %v5265
        %v6391 = vmul.f32 %v6385, %v5266
        %v6392 = vmul.f32 %v6385, %v5267
        %v6393 = vmul.f32 %v6385, %v5268
        %v6394 = vmul.f32 %v6385, %v5269
        %6403 = vrot.lane.b32.xlu0 %v6387, 40
        %v6404 = vpop.permute.xlu0 %6403
        %6405 = vrot.lane.b32.xlu0 %v6388, 40
        %v6406 = vpop.permute.xlu0 %6405
        %6407 = vrot.lane.b32.xlu0 %v6389, 40
        %v6408 = vpop.permute.xlu0 %6407
        %6409 = vrot.lane.b32.xlu0 %v6390, 40
        %v6410 = vpop.permute.xlu0 %6409
        %6411 = vrot.lane.b32.xlu0 %v6391, 40
        %v6412 = vpop.permute.xlu0 %6411
        %6413 = vrot.lane.b32.xlu0 %v6392, 40
        %v6414 = vpop.permute.xlu0 %6413
        %6415 = vrot.lane.b32.xlu0 %v6393, 40
        %v6416 = vpop.permute.xlu0 %6415
        %6417 = vrot.lane.b32.xlu0 %v6394, 40
        %v6418 = vpop.permute.xlu0 %6417
        %v6419 = vsel %vm6360, %v6404, %v6406
        %v6420 = vsel %vm6360, %v6406, %v6408
        %v6421 = vsel %vm6360, %v6408, %v6410
        %v6422 = vsel %vm6360, %v6412, %v6414
        %v6423 = vsel %vm6360, %v6414, %v6416
        %v6424 = vsel %vm6360, %v6416, %v6418
        %v6431 = vadd.f32 %v6198, %v6419
        %v6432 = vadd.f32 %v6199, %v6420
        %v6433 = vadd.f32 %v6200, %v6421
        %v6434 = vadd.f32 %v6201, %v6422
        %v6435 = vadd.f32 %v6202, %v6423
        %v6436 = vadd.f32 %v6203, %v6424
        %6437 = vset.pattern.permute.xlu0 30
        %6438 = vperm.xlu0 %6437, %v4882
        %v6439 = vpop.permute.xlu0 %6438
        %6441 = vset.pattern.permute.xlu0 30
        %6442 = vperm.xlu0 %6441, %v4883
        %v6443 = vpop.permute.xlu0 %6442
        %v6445 = vmul.f32 %v6439, %v5262
        %v6446 = vmul.f32 %v6439, %v5263
        %v6447 = vmul.f32 %v6439, %v5264
        %v6448 = vmul.f32 %v6439, %v5265
        %v6449 = vmul.f32 %v6443, %v5266
        %v6450 = vmul.f32 %v6443, %v5267
        %v6451 = vmul.f32 %v6443, %v5268
        %v6452 = vmul.f32 %v6443, %v5269
        %6461 = vrot.lane.b32.xlu0 %v6445, 40
        %v6462 = vpop.permute.xlu0 %6461
        %6463 = vrot.lane.b32.xlu0 %v6446, 40
        %v6464 = vpop.permute.xlu0 %6463
        %6465 = vrot.lane.b32.xlu0 %v6447, 40
        %v6466 = vpop.permute.xlu0 %6465
        %6467 = vrot.lane.b32.xlu0 %v6448, 40
        %v6468 = vpop.permute.xlu0 %6467
        %6469 = vrot.lane.b32.xlu0 %v6449, 40
        %v6470 = vpop.permute.xlu0 %6469
        %6471 = vrot.lane.b32.xlu0 %v6450, 40
        %v6472 = vpop.permute.xlu0 %6471
        %6473 = vrot.lane.b32.xlu0 %v6451, 40
        %v6474 = vpop.permute.xlu0 %6473
        %6475 = vrot.lane.b32.xlu0 %v6452, 40
        %v6476 = vpop.permute.xlu0 %6475
        %v6477 = vsel %vm6360, %v6462, %v6464
        %v6478 = vsel %vm6360, %v6464, %v6466
        %v6479 = vsel %vm6360, %v6466, %v6468
        %v6480 = vsel %vm6360, %v6470, %v6472
        %v6481 = vsel %vm6360, %v6472, %v6474
        %v6482 = vsel %vm6360, %v6474, %v6476
        %v6489 = vadd.f32 %v6256, %v6477
        %v6490 = vadd.f32 %v6257, %v6478
        %v6491 = vadd.f32 %v6258, %v6479
        %v6492 = vadd.f32 %v6259, %v6480
        %v6493 = vadd.f32 %v6260, %v6481
        %v6494 = vadd.f32 %v6261, %v6482
        %6495 = vset.pattern.permute.xlu0 31
        %6496 = vperm.xlu0 %6495, %v4882
        %v6497 = vpop.permute.xlu0 %6496
        %6499 = vset.pattern.permute.xlu0 31
        %6500 = vperm.xlu0 %6499, %v4883
        %v6501 = vpop.permute.xlu0 %6500
        %v6503 = vmul.f32 %v6497, %v5262
        %v6504 = vmul.f32 %v6497, %v5263
        %v6505 = vmul.f32 %v6497, %v5264
        %v6506 = vmul.f32 %v6497, %v5265
        %v6507 = vmul.f32 %v6501, %v5266
        %v6508 = vmul.f32 %v6501, %v5267
        %v6509 = vmul.f32 %v6501, %v5268
        %v6510 = vmul.f32 %v6501, %v5269
        %6519 = vrot.lane.b32.xlu0 %v6503, 40
        %v6520 = vpop.permute.xlu0 %6519
        %6521 = vrot.lane.b32.xlu0 %v6504, 40
        %v6522 = vpop.permute.xlu0 %6521
        %6523 = vrot.lane.b32.xlu0 %v6505, 40
        %v6524 = vpop.permute.xlu0 %6523
        %6525 = vrot.lane.b32.xlu0 %v6506, 40
        %v6526 = vpop.permute.xlu0 %6525
        %6527 = vrot.lane.b32.xlu0 %v6507, 40
        %v6528 = vpop.permute.xlu0 %6527
        %6529 = vrot.lane.b32.xlu0 %v6508, 40
        %v6530 = vpop.permute.xlu0 %6529
        %6531 = vrot.lane.b32.xlu0 %v6509, 40
        %v6532 = vpop.permute.xlu0 %6531
        %6533 = vrot.lane.b32.xlu0 %v6510, 40
        %v6534 = vpop.permute.xlu0 %6533
        %v6535 = vsel %vm6360, %v6520, %v6522
        %v6536 = vsel %vm6360, %v6522, %v6524
        %v6537 = vsel %vm6360, %v6524, %v6526
        %v6538 = vsel %vm6360, %v6528, %v6530
        %v6539 = vsel %vm6360, %v6530, %v6532
        %v6540 = vsel %vm6360, %v6532, %v6534
        %v6547 = vadd.f32 %v6314, %v6535
        %v6548 = vadd.f32 %v6315, %v6536
        %v6549 = vadd.f32 %v6316, %v6537
        %v6550 = vadd.f32 %v6317, %v6538
        %v6551 = vadd.f32 %v6318, %v6539
        %v6552 = vadd.f32 %v6319, %v6540
        %6553 = vset.pattern.permute.xlu0 32
        %6554 = vperm.xlu0 %6553, %v4882
        %v6555 = vpop.permute.xlu0 %6554
        %6557 = vset.pattern.permute.xlu0 32
        %6558 = vperm.xlu0 %6557, %v4883
        %v6559 = vpop.permute.xlu0 %6558
        %v6561 = vmul.f32 %v6555, %v5262
        %v6562 = vmul.f32 %v6555, %v5263
        %v6563 = vmul.f32 %v6555, %v5264
        %v6564 = vmul.f32 %v6555, %v5265
        %v6565 = vmul.f32 %v6559, %v5266
        %v6566 = vmul.f32 %v6559, %v5267
        %v6567 = vmul.f32 %v6559, %v5268
        %v6568 = vmul.f32 %v6559, %v5269
        %6577 = vrot.lane.b32.xlu0 %v6561, 36
        %v6578 = vpop.permute.xlu0 %6577
        %6579 = vrot.lane.b32.xlu0 %v6562, 36
        %v6580 = vpop.permute.xlu0 %6579
        %6581 = vrot.lane.b32.xlu0 %v6563, 36
        %v6582 = vpop.permute.xlu0 %6581
        %6583 = vrot.lane.b32.xlu0 %v6564, 36
        %v6584 = vpop.permute.xlu0 %6583
        %6585 = vrot.lane.b32.xlu0 %v6565, 36
        %v6586 = vpop.permute.xlu0 %6585
        %6587 = vrot.lane.b32.xlu0 %v6566, 36
        %v6588 = vpop.permute.xlu0 %6587
        %6589 = vrot.lane.b32.xlu0 %v6567, 36
        %v6590 = vpop.permute.xlu0 %6589
        %6591 = vrot.lane.b32.xlu0 %v6568, 36
        %v6592 = vpop.permute.xlu0 %6591
        %vm6593 = vcmask 293888
        %v6594 = vsel %vm6593, %v6578, %v6580
        %v6595 = vsel %vm6593, %v6580, %v6582
        %v6596 = vsel %vm6593, %v6582, %v6584
        %v6597 = vsel %vm6593, %v6586, %v6588
        %v6598 = vsel %vm6593, %v6588, %v6590
        %v6599 = vsel %vm6593, %v6590, %v6592
        %v6606 = vadd.f32 %v6373, %v6594
        %v6607 = vadd.f32 %v6374, %v6595
        %v6608 = vadd.f32 %v6375, %v6596
        %v6609 = vadd.f32 %v6376, %v6597
        %v6610 = vadd.f32 %v6377, %v6598
        %v6611 = vadd.f32 %v6378, %v6599
        %6612 = vset.pattern.permute.xlu0 33
        %6613 = vperm.xlu0 %6612, %v4882
        %v6614 = vpop.permute.xlu0 %6613
        %6616 = vset.pattern.permute.xlu0 33
        %6617 = vperm.xlu0 %6616, %v4883
        %v6618 = vpop.permute.xlu0 %6617
        %v6620 = vmul.f32 %v6614, %v5262
        %v6621 = vmul.f32 %v6614, %v5263
        %v6622 = vmul.f32 %v6614, %v5264
        %v6623 = vmul.f32 %v6614, %v5265
        %v6624 = vmul.f32 %v6618, %v5266
        %v6625 = vmul.f32 %v6618, %v5267
        %v6626 = vmul.f32 %v6618, %v5268
        %v6627 = vmul.f32 %v6618, %v5269
        %6636 = vrot.lane.b32.xlu0 %v6620, 36
        %v6637 = vpop.permute.xlu0 %6636
        %6638 = vrot.lane.b32.xlu0 %v6621, 36
        %v6639 = vpop.permute.xlu0 %6638
        %6640 = vrot.lane.b32.xlu0 %v6622, 36
        %v6641 = vpop.permute.xlu0 %6640
        %6642 = vrot.lane.b32.xlu0 %v6623, 36
        %v6643 = vpop.permute.xlu0 %6642
        %6644 = vrot.lane.b32.xlu0 %v6624, 36
        %v6645 = vpop.permute.xlu0 %6644
        %6646 = vrot.lane.b32.xlu0 %v6625, 36
        %v6647 = vpop.permute.xlu0 %6646
        %6648 = vrot.lane.b32.xlu0 %v6626, 36
        %v6649 = vpop.permute.xlu0 %6648
        %6650 = vrot.lane.b32.xlu0 %v6627, 36
        %v6651 = vpop.permute.xlu0 %6650
        %v6652 = vsel %vm6593, %v6637, %v6639
        %v6653 = vsel %vm6593, %v6639, %v6641
        %v6654 = vsel %vm6593, %v6641, %v6643
        %v6655 = vsel %vm6593, %v6645, %v6647
        %v6656 = vsel %vm6593, %v6647, %v6649
        %v6657 = vsel %vm6593, %v6649, %v6651
        %v6664 = vadd.f32 %v6431, %v6652
        %v6665 = vadd.f32 %v6432, %v6653
        %v6666 = vadd.f32 %v6433, %v6654
        %v6667 = vadd.f32 %v6434, %v6655
        %v6668 = vadd.f32 %v6435, %v6656
        %v6669 = vadd.f32 %v6436, %v6657
        %6670 = vset.pattern.permute.xlu0 34
        %6671 = vperm.xlu0 %6670, %v4882
        %v6672 = vpop.permute.xlu0 %6671
        %6674 = vset.pattern.permute.xlu0 34
        %6675 = vperm.xlu0 %6674, %v4883
        %v6676 = vpop.permute.xlu0 %6675
        %v6678 = vmul.f32 %v6672, %v5262
        %v6679 = vmul.f32 %v6672, %v5263
        %v6680 = vmul.f32 %v6672, %v5264
        %v6681 = vmul.f32 %v6672, %v5265
        %v6682 = vmul.f32 %v6676, %v5266
        %v6683 = vmul.f32 %v6676, %v5267
        %v6684 = vmul.f32 %v6676, %v5268
        %v6685 = vmul.f32 %v6676, %v5269
        %6694 = vrot.lane.b32.xlu0 %v6678, 36
        %v6695 = vpop.permute.xlu0 %6694
        %6696 = vrot.lane.b32.xlu0 %v6679, 36
        %v6697 = vpop.permute.xlu0 %6696
        %6698 = vrot.lane.b32.xlu0 %v6680, 36
        %v6699 = vpop.permute.xlu0 %6698
        %6700 = vrot.lane.b32.xlu0 %v6681, 36
        %v6701 = vpop.permute.xlu0 %6700
        %6702 = vrot.lane.b32.xlu0 %v6682, 36
        %v6703 = vpop.permute.xlu0 %6702
        %6704 = vrot.lane.b32.xlu0 %v6683, 36
        %v6705 = vpop.permute.xlu0 %6704
        %6706 = vrot.lane.b32.xlu0 %v6684, 36
        %v6707 = vpop.permute.xlu0 %6706
        %6708 = vrot.lane.b32.xlu0 %v6685, 36
        %v6709 = vpop.permute.xlu0 %6708
        %v6710 = vsel %vm6593, %v6695, %v6697
        %v6711 = vsel %vm6593, %v6697, %v6699
        %v6712 = vsel %vm6593, %v6699, %v6701
        %v6713 = vsel %vm6593, %v6703, %v6705
        %v6714 = vsel %vm6593, %v6705, %v6707
        %v6715 = vsel %vm6593, %v6707, %v6709
        %v6722 = vadd.f32 %v6489, %v6710
        %v6723 = vadd.f32 %v6490, %v6711
        %v6724 = vadd.f32 %v6491, %v6712
        %v6725 = vadd.f32 %v6492, %v6713
        %v6726 = vadd.f32 %v6493, %v6714
        %v6727 = vadd.f32 %v6494, %v6715
        %6728 = vset.pattern.permute.xlu0 35
        %6729 = vperm.xlu0 %6728, %v4882
        %v6730 = vpop.permute.xlu0 %6729
        %6732 = vset.pattern.permute.xlu0 35
        %6733 = vperm.xlu0 %6732, %v4883
        %v6734 = vpop.permute.xlu0 %6733
        %v6736 = vmul.f32 %v6730, %v5262
        %v6737 = vmul.f32 %v6730, %v5263
        %v6738 = vmul.f32 %v6730, %v5264
        %v6739 = vmul.f32 %v6730, %v5265
        %v6740 = vmul.f32 %v6734, %v5266
        %v6741 = vmul.f32 %v6734, %v5267
        %v6742 = vmul.f32 %v6734, %v5268
        %v6743 = vmul.f32 %v6734, %v5269
        %6752 = vrot.lane.b32.xlu0 %v6736, 21
        %v6753 = vpop.permute.xlu0 %6752
        %6754 = vrot.lane.b32.xlu0 %v6737, 21
        %v6755 = vpop.permute.xlu0 %6754
        %6756 = vrot.lane.b32.xlu0 %v6738, 21
        %v6757 = vpop.permute.xlu0 %6756
        %6758 = vrot.lane.b32.xlu0 %v6739, 21
        %v6759 = vpop.permute.xlu0 %6758
        %6760 = vrot.lane.b32.xlu0 %v6740, 21
        %v6761 = vpop.permute.xlu0 %6760
        %6762 = vrot.lane.b32.xlu0 %v6741, 21
        %v6763 = vpop.permute.xlu0 %6762
        %6764 = vrot.lane.b32.xlu0 %v6742, 21
        %v6765 = vpop.permute.xlu0 %6764
        %6766 = vrot.lane.b32.xlu0 %v6743, 21
        %v6767 = vpop.permute.xlu0 %6766
        %vm6768 = vcmask 171008
        %v6769 = vsel %vm6768, %v6753, %v6755
        %v6770 = vsel %vm6768, %v6755, %v6757
        %v6771 = vsel %vm6768, %v6757, %v6759
        %v6772 = vsel %vm6768, %v6761, %v6763
        %v6773 = vsel %vm6768, %v6763, %v6765
        %v6774 = vsel %vm6768, %v6765, %v6767
        %v6781 = vadd.f32 %v6547, %v6769
        %v6782 = vadd.f32 %v6548, %v6770
        %v6783 = vadd.f32 %v6549, %v6771
        %v6784 = vadd.f32 %v6550, %v6772
        %v6785 = vadd.f32 %v6551, %v6773
        %v6786 = vadd.f32 %v6552, %v6774
        %6787 = vset.pattern.permute.xlu0 36
        %6788 = vperm.xlu0 %6787, %v4882
        %v6789 = vpop.permute.xlu0 %6788
        %6791 = vset.pattern.permute.xlu0 36
        %6792 = vperm.xlu0 %6791, %v4883
        %v6793 = vpop.permute.xlu0 %6792
        %v6795 = vmul.f32 %v6789, %v5262
        %v6796 = vmul.f32 %v6789, %v5263
        %v6797 = vmul.f32 %v6789, %v5264
        %v6798 = vmul.f32 %v6789, %v5265
        %v6799 = vmul.f32 %v6793, %v5266
        %v6800 = vmul.f32 %v6793, %v5267
        %v6801 = vmul.f32 %v6793, %v5268
        %v6802 = vmul.f32 %v6793, %v5269
        %6811 = vrot.lane.b32.xlu0 %v6795, 17
        %v6812 = vpop.permute.xlu0 %6811
        %6813 = vrot.lane.b32.xlu0 %v6796, 17
        %v6814 = vpop.permute.xlu0 %6813
        %6815 = vrot.lane.b32.xlu0 %v6797, 17
        %v6816 = vpop.permute.xlu0 %6815
        %6817 = vrot.lane.b32.xlu0 %v6798, 17
        %v6818 = vpop.permute.xlu0 %6817
        %6819 = vrot.lane.b32.xlu0 %v6799, 17
        %v6820 = vpop.permute.xlu0 %6819
        %6821 = vrot.lane.b32.xlu0 %v6800, 17
        %v6822 = vpop.permute.xlu0 %6821
        %6823 = vrot.lane.b32.xlu0 %v6801, 17
        %v6824 = vpop.permute.xlu0 %6823
        %6825 = vrot.lane.b32.xlu0 %v6802, 17
        %v6826 = vpop.permute.xlu0 %6825
        %vm6827 = vcmask 138240
        %v6828 = vsel %vm6827, %v6812, %v6814
        %v6829 = vsel %vm6827, %v6814, %v6816
        %v6830 = vsel %vm6827, %v6816, %v6818
        %v6831 = vsel %vm6827, %v6820, %v6822
        %v6832 = vsel %vm6827, %v6822, %v6824
        %v6833 = vsel %vm6827, %v6824, %v6826
        %v6840 = vadd.f32 %v6606, %v6828
        %v6841 = vadd.f32 %v6607, %v6829
        %v6842 = vadd.f32 %v6608, %v6830
        %v6843 = vadd.f32 %v6609, %v6831
        %v6844 = vadd.f32 %v6610, %v6832
        %v6845 = vadd.f32 %v6611, %v6833
        %6846 = vset.pattern.permute.xlu0 37
        %6847 = vperm.xlu0 %6846, %v4882
        %v6848 = vpop.permute.xlu0 %6847
        %6850 = vset.pattern.permute.xlu0 37
        %6851 = vperm.xlu0 %6850, %v4883
        %v6852 = vpop.permute.xlu0 %6851
        %v6854 = vmul.f32 %v6848, %v5262
        %v6855 = vmul.f32 %v6848, %v5263
        %v6856 = vmul.f32 %v6848, %v5264
        %v6857 = vmul.f32 %v6848, %v5265
        %v6858 = vmul.f32 %v6852, %v5266
        %v6859 = vmul.f32 %v6852, %v5267
        %v6860 = vmul.f32 %v6852, %v5268
        %v6861 = vmul.f32 %v6852, %v5269
        %6870 = vrot.lane.b32.xlu0 %v6854, 17
        %v6871 = vpop.permute.xlu0 %6870
        %6872 = vrot.lane.b32.xlu0 %v6855, 17
        %v6873 = vpop.permute.xlu0 %6872
        %6874 = vrot.lane.b32.xlu0 %v6856, 17
        %v6875 = vpop.permute.xlu0 %6874
        %6876 = vrot.lane.b32.xlu0 %v6857, 17
        %v6877 = vpop.permute.xlu0 %6876
        %6878 = vrot.lane.b32.xlu0 %v6858, 17
        %v6879 = vpop.permute.xlu0 %6878
        %6880 = vrot.lane.b32.xlu0 %v6859, 17
        %v6881 = vpop.permute.xlu0 %6880
        %6882 = vrot.lane.b32.xlu0 %v6860, 17
        %v6883 = vpop.permute.xlu0 %6882
        %6884 = vrot.lane.b32.xlu0 %v6861, 17
        %v6885 = vpop.permute.xlu0 %6884
        %v6886 = vsel %vm6827, %v6871, %v6873
        %v6887 = vsel %vm6827, %v6873, %v6875
        %v6888 = vsel %vm6827, %v6875, %v6877
        %v6889 = vsel %vm6827, %v6879, %v6881
        %v6890 = vsel %vm6827, %v6881, %v6883
        %v6891 = vsel %vm6827, %v6883, %v6885
        %v6898 = vadd.f32 %v6664, %v6886
        %v6899 = vadd.f32 %v6665, %v6887
        %v6900 = vadd.f32 %v6666, %v6888
        %v6901 = vadd.f32 %v6667, %v6889
        %v6902 = vadd.f32 %v6668, %v6890
        %v6903 = vadd.f32 %v6669, %v6891
        %6904 = vset.pattern.permute.xlu0 38
        %6905 = vperm.xlu0 %6904, %v4882
        %v6906 = vpop.permute.xlu0 %6905
        %6908 = vset.pattern.permute.xlu0 38
        %6909 = vperm.xlu0 %6908, %v4883
        %v6910 = vpop.permute.xlu0 %6909
        %v6912 = vmul.f32 %v6906, %v5262
        %v6913 = vmul.f32 %v6906, %v5263
        %v6914 = vmul.f32 %v6906, %v5264
        %v6915 = vmul.f32 %v6906, %v5265
        %v6916 = vmul.f32 %v6910, %v5266
        %v6917 = vmul.f32 %v6910, %v5267
        %v6918 = vmul.f32 %v6910, %v5268
        %v6919 = vmul.f32 %v6910, %v5269
        %6928 = vrot.lane.b32.xlu0 %v6912, 17
        %v6929 = vpop.permute.xlu0 %6928
        %6930 = vrot.lane.b32.xlu0 %v6913, 17
        %v6931 = vpop.permute.xlu0 %6930
        %6932 = vrot.lane.b32.xlu0 %v6914, 17
        %v6933 = vpop.permute.xlu0 %6932
        %6934 = vrot.lane.b32.xlu0 %v6915, 17
        %v6935 = vpop.permute.xlu0 %6934
        %6936 = vrot.lane.b32.xlu0 %v6916, 17
        %v6937 = vpop.permute.xlu0 %6936
        %6938 = vrot.lane.b32.xlu0 %v6917, 17
        %v6939 = vpop.permute.xlu0 %6938
        %6940 = vrot.lane.b32.xlu0 %v6918, 17
        %v6941 = vpop.permute.xlu0 %6940
        %6942 = vrot.lane.b32.xlu0 %v6919, 17
        %v6943 = vpop.permute.xlu0 %6942
        %v6944 = vsel %vm6827, %v6929, %v6931
        %v6945 = vsel %vm6827, %v6931, %v6933
        %v6946 = vsel %vm6827, %v6933, %v6935
        %v6947 = vsel %vm6827, %v6937, %v6939
        %v6948 = vsel %vm6827, %v6939, %v6941
        %v6949 = vsel %vm6827, %v6941, %v6943
        %v6956 = vadd.f32 %v6722, %v6944
        %v6957 = vadd.f32 %v6723, %v6945
        %v6958 = vadd.f32 %v6724, %v6946
        %v6959 = vadd.f32 %v6725, %v6947
        %v6960 = vadd.f32 %v6726, %v6948
        %v6961 = vadd.f32 %v6727, %v6949
        %6962 = vset.pattern.permute.xlu0 39
        %6963 = vperm.xlu0 %6962, %v4882
        %v6964 = vpop.permute.xlu0 %6963
        %6966 = vset.pattern.permute.xlu0 39
        %6967 = vperm.xlu0 %6966, %v4883
        %v6968 = vpop.permute.xlu0 %6967
        %v6970 = vmul.f32 %v6964, %v5262
        %v6971 = vmul.f32 %v6964, %v5263
        %v6972 = vmul.f32 %v6964, %v5264
        %v6973 = vmul.f32 %v6964, %v5265
        %v6974 = vmul.f32 %v6968, %v5266
        %v6975 = vmul.f32 %v6968, %v5267
        %v6976 = vmul.f32 %v6968, %v5268
        %v6977 = vmul.f32 %v6968, %v5269
        %6986 = vrot.lane.b32.xlu0 %v6970, 17
        %v6987 = vpop.permute.xlu0 %6986
        %6988 = vrot.lane.b32.xlu0 %v6971, 17
        %v6989 = vpop.permute.xlu0 %6988
        %6990 = vrot.lane.b32.xlu0 %v6972, 17
        %v6991 = vpop.permute.xlu0 %6990
        %6992 = vrot.lane.b32.xlu0 %v6973, 17
        %v6993 = vpop.permute.xlu0 %6992
        %6994 = vrot.lane.b32.xlu0 %v6974, 17
        %v6995 = vpop.permute.xlu0 %6994
        %6996 = vrot.lane.b32.xlu0 %v6975, 17
        %v6997 = vpop.permute.xlu0 %6996
        %6998 = vrot.lane.b32.xlu0 %v6976, 17
        %v6999 = vpop.permute.xlu0 %6998
        %7000 = vrot.lane.b32.xlu0 %v6977, 17
        %v7001 = vpop.permute.xlu0 %7000
        %v7002 = vsel %vm6827, %v6987, %v6989
        %v7003 = vsel %vm6827, %v6989, %v6991
        %v7004 = vsel %vm6827, %v6991, %v6993
        %v7005 = vsel %vm6827, %v6995, %v6997
        %v7006 = vsel %vm6827, %v6997, %v6999
        %v7007 = vsel %vm6827, %v6999, %v7001
        %v7014 = vadd.f32 %v6781, %v7002
        %v7015 = vadd.f32 %v6782, %v7003
        %v7016 = vadd.f32 %v6783, %v7004
        %v7017 = vadd.f32 %v6784, %v7005
        %v7018 = vadd.f32 %v6785, %v7006
        %v7019 = vadd.f32 %v6786, %v7007
        %7020 = vset.pattern.permute.xlu0 40
        %7021 = vperm.xlu0 %7020, %v4882
        %v7022 = vpop.permute.xlu0 %7021
        %7024 = vset.pattern.permute.xlu0 40
        %7025 = vperm.xlu0 %7024, %v4883
        %v7026 = vpop.permute.xlu0 %7025
        %v7028 = vmul.f32 %v7022, %v5262
        %v7029 = vmul.f32 %v7022, %v5263
        %v7030 = vmul.f32 %v7022, %v5264
        %v7031 = vmul.f32 %v7022, %v5265
        %v7032 = vmul.f32 %v7026, %v5266
        %v7033 = vmul.f32 %v7026, %v5267
        %v7034 = vmul.f32 %v7026, %v5268
        %v7035 = vmul.f32 %v7026, %v5269
        %7044 = vrot.lane.b32.xlu0 %v7028, 13
        %v7045 = vpop.permute.xlu0 %7044
        %7046 = vrot.lane.b32.xlu0 %v7029, 13
        %v7047 = vpop.permute.xlu0 %7046
        %7048 = vrot.lane.b32.xlu0 %v7030, 13
        %v7049 = vpop.permute.xlu0 %7048
        %7050 = vrot.lane.b32.xlu0 %v7031, 13
        %v7051 = vpop.permute.xlu0 %7050
        %7052 = vrot.lane.b32.xlu0 %v7032, 13
        %v7053 = vpop.permute.xlu0 %7052
        %7054 = vrot.lane.b32.xlu0 %v7033, 13
        %v7055 = vpop.permute.xlu0 %7054
        %7056 = vrot.lane.b32.xlu0 %v7034, 13
        %v7057 = vpop.permute.xlu0 %7056
        %7058 = vrot.lane.b32.xlu0 %v7035, 13
        %v7059 = vpop.permute.xlu0 %7058
        %v7060 = vsel %vm4466, %v7045, %v7047
        %v7061 = vsel %vm4466, %v7047, %v7049
        %v7062 = vsel %vm4466, %v7049, %v7051
        %v7063 = vsel %vm4466, %v7053, %v7055
        %v7064 = vsel %vm4466, %v7055, %v7057
        %v7065 = vsel %vm4466, %v7057, %v7059
        %v7072 = vadd.f32 %v6840, %v7060
        %v7073 = vadd.f32 %v6841, %v7061
        %v7074 = vadd.f32 %v6842, %v7062
        %v7075 = vadd.f32 %v6843, %v7063
        %v7076 = vadd.f32 %v6844, %v7064
        %v7077 = vadd.f32 %v6845, %v7065
        %7078 = vset.pattern.permute.xlu0 41
        %7079 = vperm.xlu0 %7078, %v4882
        %v7080 = vpop.permute.xlu0 %7079
        %7082 = vset.pattern.permute.xlu0 41
        %7083 = vperm.xlu0 %7082, %v4883
        %v7084 = vpop.permute.xlu0 %7083
        %v7086 = vmul.f32 %v7080, %v5262
        %v7087 = vmul.f32 %v7080, %v5263
        %v7088 = vmul.f32 %v7080, %v5264
        %v7089 = vmul.f32 %v7080, %v5265
        %v7090 = vmul.f32 %v7084, %v5266
        %v7091 = vmul.f32 %v7084, %v5267
        %v7092 = vmul.f32 %v7084, %v5268
        %v7093 = vmul.f32 %v7084, %v5269
        %7102 = vrot.lane.b32.xlu0 %v7086, 13
        %v7103 = vpop.permute.xlu0 %7102
        %7104 = vrot.lane.b32.xlu0 %v7087, 13
        %v7105 = vpop.permute.xlu0 %7104
        %7106 = vrot.lane.b32.xlu0 %v7088, 13
        %v7107 = vpop.permute.xlu0 %7106
        %7108 = vrot.lane.b32.xlu0 %v7089, 13
        %v7109 = vpop.permute.xlu0 %7108
        %7110 = vrot.lane.b32.xlu0 %v7090, 13
        %v7111 = vpop.permute.xlu0 %7110
        %7112 = vrot.lane.b32.xlu0 %v7091, 13
        %v7113 = vpop.permute.xlu0 %7112
        %7114 = vrot.lane.b32.xlu0 %v7092, 13
        %v7115 = vpop.permute.xlu0 %7114
        %7116 = vrot.lane.b32.xlu0 %v7093, 13
        %v7117 = vpop.permute.xlu0 %7116
        %v7118 = vsel %vm4466, %v7103, %v7105
        %v7119 = vsel %vm4466, %v7105, %v7107
        %v7120 = vsel %vm4466, %v7107, %v7109
        %v7121 = vsel %vm4466, %v7111, %v7113
        %v7122 = vsel %vm4466, %v7113, %v7115
        %v7123 = vsel %vm4466, %v7115, %v7117
        %v7130 = vadd.f32 %v6898, %v7118
        %v7131 = vadd.f32 %v6899, %v7119
        %v7132 = vadd.f32 %v6900, %v7120
        %v7133 = vadd.f32 %v6901, %v7121
        %v7134 = vadd.f32 %v6902, %v7122
        %v7135 = vadd.f32 %v6903, %v7123
        %7136 = vset.pattern.permute.xlu0 42
        %7137 = vperm.xlu0 %7136, %v4882
        %v7138 = vpop.permute.xlu0 %7137
        %7140 = vset.pattern.permute.xlu0 42
        %7141 = vperm.xlu0 %7140, %v4883
        %v7142 = vpop.permute.xlu0 %7141
        %v7144 = vmul.f32 %v7138, %v5263
        %v7145 = vmul.f32 %v7138, %v5264
        %v7146 = vmul.f32 %v7138, %v5265
        %v7147 = vmul.f32 %v7142, %v5267
        %v7148 = vmul.f32 %v7142, %v5268
        %v7149 = vmul.f32 %v7142, %v5269
        %7156 = vrot.lane.b32.xlu0 %v7144, 126
        %v7157 = vpop.permute.xlu0 %7156
        %7158 = vrot.lane.b32.xlu0 %v7145, 126
        %v7159 = vpop.permute.xlu0 %7158
        %7160 = vrot.lane.b32.xlu0 %v7146, 126
        %v7161 = vpop.permute.xlu0 %7160
        %7162 = vrot.lane.b32.xlu0 %v7147, 126
        %v7163 = vpop.permute.xlu0 %7162
        %7164 = vrot.lane.b32.xlu0 %v7148, 126
        %v7165 = vpop.permute.xlu0 %7164
        %7166 = vrot.lane.b32.xlu0 %v7149, 126
        %v7167 = vpop.permute.xlu0 %7166
        %v7168 = vsel %vm1244, %v7157, %v7159
        %v7169 = vsel %vm1244, %v7159, %v7161
        %v7170 = vsel %vm1244, %v7163, %v7165
        %v7171 = vsel %vm1244, %v7165, %v7167
        %v7178 = vadd.f32 %v6956, %v7168
        %v7179 = vadd.f32 %v6957, %v7169
        %v7180 = vadd.f32 %v6958, %v7161
        %v7181 = vadd.f32 %v6959, %v7170
        %v7182 = vadd.f32 %v6960, %v7171
        %v7183 = vadd.f32 %v6961, %v7167
        %7184 = vset.pattern.permute.xlu0 43
        %7185 = vperm.xlu0 %7184, %v4882
        %v7186 = vpop.permute.xlu0 %7185
        %7188 = vset.pattern.permute.xlu0 43
        %7189 = vperm.xlu0 %7188, %v4883
        %v7190 = vpop.permute.xlu0 %7189
        %v7192 = vmul.f32 %v7186, %v5263
        %v7193 = vmul.f32 %v7186, %v5264
        %v7194 = vmul.f32 %v7186, %v5265
        %v7195 = vmul.f32 %v7190, %v5267
        %v7196 = vmul.f32 %v7190, %v5268
        %v7197 = vmul.f32 %v7190, %v5269
        %7204 = vrot.lane.b32.xlu0 %v7192, 126
        %v7205 = vpop.permute.xlu0 %7204
        %7206 = vrot.lane.b32.xlu0 %v7193, 126
        %v7207 = vpop.permute.xlu0 %7206
        %7208 = vrot.lane.b32.xlu0 %v7194, 126
        %v7209 = vpop.permute.xlu0 %7208
        %7210 = vrot.lane.b32.xlu0 %v7195, 126
        %v7211 = vpop.permute.xlu0 %7210
        %7212 = vrot.lane.b32.xlu0 %v7196, 126
        %v7213 = vpop.permute.xlu0 %7212
        %7214 = vrot.lane.b32.xlu0 %v7197, 126
        %v7215 = vpop.permute.xlu0 %7214
        %v7216 = vsel %vm1244, %v7205, %v7207
        %v7217 = vsel %vm1244, %v7207, %v7209
        %v7218 = vsel %vm1244, %v7211, %v7213
        %v7219 = vsel %vm1244, %v7213, %v7215
        %v7226 = vadd.f32 %v7014, %v7216
        %v7227 = vadd.f32 %v7015, %v7217
        %v7228 = vadd.f32 %v7016, %v7209
        %v7229 = vadd.f32 %v7017, %v7218
        %v7230 = vadd.f32 %v7018, %v7219
        %v7231 = vadd.f32 %v7019, %v7215
        %7232 = vset.pattern.permute.xlu0 44
        %7233 = vperm.xlu0 %7232, %v4882
        %v7234 = vpop.permute.xlu0 %7233
        %7236 = vset.pattern.permute.xlu0 44
        %7237 = vperm.xlu0 %7236, %v4883
        %v7238 = vpop.permute.xlu0 %7237
        %v7240 = vmul.f32 %v7234, %v5263
        %v7241 = vmul.f32 %v7234, %v5264
        %v7242 = vmul.f32 %v7234, %v5265
        %v7243 = vmul.f32 %v7238, %v5267
        %v7244 = vmul.f32 %v7238, %v5268
        %v7245 = vmul.f32 %v7238, %v5269
        %7252 = vrot.lane.b32.xlu0 %v7240, 122
        %v7253 = vpop.permute.xlu0 %7252
        %7254 = vrot.lane.b32.xlu0 %v7241, 122
        %v7255 = vpop.permute.xlu0 %7254
        %7256 = vrot.lane.b32.xlu0 %v7242, 122
        %v7257 = vpop.permute.xlu0 %7256
        %7258 = vrot.lane.b32.xlu0 %v7243, 122
        %v7259 = vpop.permute.xlu0 %7258
        %7260 = vrot.lane.b32.xlu0 %v7244, 122
        %v7261 = vpop.permute.xlu0 %7260
        %7262 = vrot.lane.b32.xlu0 %v7245, 122
        %v7263 = vpop.permute.xlu0 %7262
        %v7264 = vsel %vm1148, %v7253, %v7255
        %v7265 = vsel %vm1148, %v7255, %v7257
        %v7266 = vsel %vm1148, %v7259, %v7261
        %v7267 = vsel %vm1148, %v7261, %v7263
        %v7274 = vadd.f32 %v7072, %v7264
        %v7275 = vadd.f32 %v7073, %v7265
        %v7276 = vadd.f32 %v7074, %v7257
        %v7277 = vadd.f32 %v7075, %v7266
        %v7278 = vadd.f32 %v7076, %v7267
        %v7279 = vadd.f32 %v7077, %v7263
        %7280 = vset.pattern.permute.xlu0 45
        %7281 = vperm.xlu0 %7280, %v4882
        %v7282 = vpop.permute.xlu0 %7281
        %7284 = vset.pattern.permute.xlu0 45
        %7285 = vperm.xlu0 %7284, %v4883
        %v7286 = vpop.permute.xlu0 %7285
        %v7288 = vmul.f32 %v7282, %v5263
        %v7289 = vmul.f32 %v7282, %v5264
        %v7290 = vmul.f32 %v7282, %v5265
        %v7291 = vmul.f32 %v7286, %v5267
        %v7292 = vmul.f32 %v7286, %v5268
        %v7293 = vmul.f32 %v7286, %v5269
        %7300 = vrot.lane.b32.xlu0 %v7288, 122
        %v7301 = vpop.permute.xlu0 %7300
        %7302 = vrot.lane.b32.xlu0 %v7289, 122
        %v7303 = vpop.permute.xlu0 %7302
        %7304 = vrot.lane.b32.xlu0 %v7290, 122
        %v7305 = vpop.permute.xlu0 %7304
        %7306 = vrot.lane.b32.xlu0 %v7291, 122
        %v7307 = vpop.permute.xlu0 %7306
        %7308 = vrot.lane.b32.xlu0 %v7292, 122
        %v7309 = vpop.permute.xlu0 %7308
        %7310 = vrot.lane.b32.xlu0 %v7293, 122
        %v7311 = vpop.permute.xlu0 %7310
        %v7312 = vsel %vm1148, %v7301, %v7303
        %v7313 = vsel %vm1148, %v7303, %v7305
        %v7314 = vsel %vm1148, %v7307, %v7309
        %v7315 = vsel %vm1148, %v7309, %v7311
        %v7322 = vadd.f32 %v7130, %v7312
        %v7323 = vadd.f32 %v7131, %v7313
        %v7324 = vadd.f32 %v7132, %v7305
        %v7325 = vadd.f32 %v7133, %v7314
        %v7326 = vadd.f32 %v7134, %v7315
        %v7327 = vadd.f32 %v7135, %v7311
        %7328 = vset.pattern.permute.xlu0 46
        %7329 = vperm.xlu0 %7328, %v4882
        %v7330 = vpop.permute.xlu0 %7329
        %7332 = vset.pattern.permute.xlu0 46
        %7333 = vperm.xlu0 %7332, %v4883
        %v7334 = vpop.permute.xlu0 %7333
        %v7336 = vmul.f32 %v7330, %v5263
        %v7337 = vmul.f32 %v7330, %v5264
        %v7338 = vmul.f32 %v7330, %v5265
        %v7339 = vmul.f32 %v7334, %v5267
        %v7340 = vmul.f32 %v7334, %v5268
        %v7341 = vmul.f32 %v7334, %v5269
        %7348 = vrot.lane.b32.xlu0 %v7336, 122
        %v7349 = vpop.permute.xlu0 %7348
        %7350 = vrot.lane.b32.xlu0 %v7337, 122
        %v7351 = vpop.permute.xlu0 %7350
        %7352 = vrot.lane.b32.xlu0 %v7338, 122
        %v7353 = vpop.permute.xlu0 %7352
        %7354 = vrot.lane.b32.xlu0 %v7339, 122
        %v7355 = vpop.permute.xlu0 %7354
        %7356 = vrot.lane.b32.xlu0 %v7340, 122
        %v7357 = vpop.permute.xlu0 %7356
        %7358 = vrot.lane.b32.xlu0 %v7341, 122
        %v7359 = vpop.permute.xlu0 %7358
        %v7360 = vsel %vm1148, %v7349, %v7351
        %v7361 = vsel %vm1148, %v7351, %v7353
        %v7362 = vsel %vm1148, %v7355, %v7357
        %v7363 = vsel %vm1148, %v7357, %v7359
        %v7370 = vadd.f32 %v7178, %v7360
        %v7371 = vadd.f32 %v7179, %v7361
        %v7372 = vadd.f32 %v7180, %v7353
        %v7373 = vadd.f32 %v7181, %v7362
        %v7374 = vadd.f32 %v7182, %v7363
        %v7375 = vadd.f32 %v7183, %v7359
        %7376 = vset.pattern.permute.xlu0 47
        %7377 = vperm.xlu0 %7376, %v4882
        %v7378 = vpop.permute.xlu0 %7377
        %7380 = vset.pattern.permute.xlu0 47
        %7381 = vperm.xlu0 %7380, %v4883
        %v7382 = vpop.permute.xlu0 %7381
        %v7384 = vmul.f32 %v7378, %v5263
        %v7385 = vmul.f32 %v7378, %v5264
        %v7386 = vmul.f32 %v7378, %v5265
        %v7387 = vmul.f32 %v7382, %v5267
        %v7388 = vmul.f32 %v7382, %v5268
        %v7389 = vmul.f32 %v7382, %v5269
        %7396 = vrot.lane.b32.xlu0 %v7384, 122
        %v7397 = vpop.permute.xlu0 %7396
        %7398 = vrot.lane.b32.xlu0 %v7385, 122
        %v7399 = vpop.permute.xlu0 %7398
        %7400 = vrot.lane.b32.xlu0 %v7386, 122
        %v7401 = vpop.permute.xlu0 %7400
        %7402 = vrot.lane.b32.xlu0 %v7387, 122
        %v7403 = vpop.permute.xlu0 %7402
        %7404 = vrot.lane.b32.xlu0 %v7388, 122
        %v7405 = vpop.permute.xlu0 %7404
        %7406 = vrot.lane.b32.xlu0 %v7389, 122
        %v7407 = vpop.permute.xlu0 %7406
        %v7408 = vsel %vm1148, %v7397, %v7399
        %v7409 = vsel %vm1148, %v7399, %v7401
        %v7410 = vsel %vm1148, %v7403, %v7405
        %v7411 = vsel %vm1148, %v7405, %v7407
        %v7418 = vadd.f32 %v7226, %v7408
        %v7419 = vadd.f32 %v7227, %v7409
        %v7420 = vadd.f32 %v7228, %v7401
        %v7421 = vadd.f32 %v7229, %v7410
        %v7422 = vadd.f32 %v7230, %v7411
        %v7423 = vadd.f32 %v7231, %v7407
        %7424 = vset.pattern.permute.xlu0 48
        %7425 = vperm.xlu0 %7424, %v4882
        %v7426 = vpop.permute.xlu0 %7425
        %7428 = vset.pattern.permute.xlu0 48
        %7429 = vperm.xlu0 %7428, %v4883
        %v7430 = vpop.permute.xlu0 %7429
        %v7432 = vmul.f32 %v7426, %v5263
        %v7433 = vmul.f32 %v7426, %v5264
        %v7434 = vmul.f32 %v7426, %v5265
        %v7435 = vmul.f32 %v7430, %v5267
        %v7436 = vmul.f32 %v7430, %v5268
        %v7437 = vmul.f32 %v7430, %v5269
        %7444 = vrot.lane.b32.xlu0 %v7432, 118
        %v7445 = vpop.permute.xlu0 %7444
        %7446 = vrot.lane.b32.xlu0 %v7433, 118
        %v7447 = vpop.permute.xlu0 %7446
        %7448 = vrot.lane.b32.xlu0 %v7434, 118
        %v7449 = vpop.permute.xlu0 %7448
        %7450 = vrot.lane.b32.xlu0 %v7435, 118
        %v7451 = vpop.permute.xlu0 %7450
        %7452 = vrot.lane.b32.xlu0 %v7436, 118
        %v7453 = vpop.permute.xlu0 %7452
        %7454 = vrot.lane.b32.xlu0 %v7437, 118
        %v7455 = vpop.permute.xlu0 %7454
        %v7456 = vsel %vm1108, %v7445, %v7447
        %v7457 = vsel %vm1108, %v7447, %v7449
        %v7458 = vsel %vm1108, %v7451, %v7453
        %v7459 = vsel %vm1108, %v7453, %v7455
        %v7466 = vadd.f32 %v7274, %v7456
        %v7467 = vadd.f32 %v7275, %v7457
        %v7468 = vadd.f32 %v7276, %v7449
        %v7469 = vadd.f32 %v7277, %v7458
        %v7470 = vadd.f32 %v7278, %v7459
        %v7471 = vadd.f32 %v7279, %v7455
        %7478 = vrot.lane.b32.xlu0 %v7322, 127
        %v7479 = vpop.permute.xlu0 %7478
        %7480 = vrot.lane.b32.xlu0 %v7323, 127
        %v7481 = vpop.permute.xlu0 %7480
        %7482 = vrot.lane.b32.xlu0 %v7324, 127
        %v7483 = vpop.permute.xlu0 %7482
        %7484 = vrot.lane.b32.xlu0 %v7325, 127
        %v7485 = vpop.permute.xlu0 %7484
        %7486 = vrot.lane.b32.xlu0 %v7326, 127
        %v7487 = vpop.permute.xlu0 %7486
        %7488 = vrot.lane.b32.xlu0 %v7327, 127
        %v7489 = vpop.permute.xlu0 %7488
        %vm7490 = vcmask 1039360
        %v7491 = vsel %vm7490, %v7479, %v7481
        %v7492 = vsel %vm7490, %v7481, %v7483
        %v7493 = vsel %vm7490, %v7485, %v7487
        %v7494 = vsel %vm7490, %v7487, %v7489
        %v7501 = vadd.f32 %v7466, %v7491
        %v7502 = vadd.f32 %v7467, %v7492
        %v7503 = vadd.f32 %v7468, %v7483
        %v7504 = vadd.f32 %v7469, %v7493
        %v7505 = vadd.f32 %v7470, %v7494
        %v7506 = vadd.f32 %v7471, %v7489
        %7513 = vrot.lane.b32.xlu0 %v7418, 127
        %v7514 = vpop.permute.xlu0 %7513
        %7515 = vrot.lane.b32.xlu0 %v7419, 127
        %v7516 = vpop.permute.xlu0 %7515
        %7517 = vrot.lane.b32.xlu0 %v7420, 127
        %v7518 = vpop.permute.xlu0 %7517
        %7519 = vrot.lane.b32.xlu0 %v7421, 127
        %v7520 = vpop.permute.xlu0 %7519
        %7521 = vrot.lane.b32.xlu0 %v7422, 127
        %v7522 = vpop.permute.xlu0 %7521
        %7523 = vrot.lane.b32.xlu0 %v7423, 127
        %v7524 = vpop.permute.xlu0 %7523
        %v7525 = vsel %vm7490, %v7514, %v7516
        %v7526 = vsel %vm7490, %v7516, %v7518
        %v7527 = vsel %vm7490, %v7520, %v7522
        %v7528 = vsel %vm7490, %v7522, %v7524
        %v7535 = vadd.f32 %v7370, %v7525
        %v7536 = vadd.f32 %v7371, %v7526
        %v7537 = vadd.f32 %v7372, %v7518
        %v7538 = vadd.f32 %v7373, %v7527
        %v7539 = vadd.f32 %v7374, %v7528
        %v7540 = vadd.f32 %v7375, %v7524
        %7547 = vrot.lane.b32.xlu0 %v7535, 126
        %v7548 = vpop.permute.xlu0 %7547
        %7549 = vrot.lane.b32.xlu0 %v7536, 126
        %v7550 = vpop.permute.xlu0 %7549
        %7551 = vrot.lane.b32.xlu0 %v7537, 126
        %v7552 = vpop.permute.xlu0 %7551
        %7553 = vrot.lane.b32.xlu0 %v7538, 126
        %v7554 = vpop.permute.xlu0 %7553
        %7555 = vrot.lane.b32.xlu0 %v7539, 126
        %v7556 = vpop.permute.xlu0 %7555
        %7557 = vrot.lane.b32.xlu0 %v7540, 126
        %v7558 = vpop.permute.xlu0 %7557
        %v7559 = vsel %vm1244, %v7548, %v7550
        %v7560 = vsel %vm1244, %v7550, %v7552
        %v7561 = vsel %vm1244, %v7554, %v7556
        %v7562 = vsel %vm1244, %v7556, %v7558
        %v7569 = vadd.f32 %v7501, %v7559
        %v7570 = vadd.f32 %v7502, %v7560
        %v7571 = vadd.f32 %v7503, %v7552
        %v7572 = vadd.f32 %v7504, %v7561
        %v7573 = vadd.f32 %v7505, %v7562
        %v7574 = vadd.f32 %v7506, %v7558
        %7581 = vrot.lane.b32.xlu0 %v4268, 8
        %v7582 = vpop.permute.xlu0 %7581
        %7583 = vrot.lane.b32.xlu0 %v4270, 8
        %v7584 = vpop.permute.xlu0 %7583
        %7585 = vrot.lane.b32.xlu0 %v4345, 8
        %v7586 = vpop.permute.xlu0 %7585
        %7587 = vrot.lane.b32.xlu0 %v4274, 8
        %v7588 = vpop.permute.xlu0 %7587
        %7589 = vrot.lane.b32.xlu0 %v4276, 8
        %v7590 = vpop.permute.xlu0 %7589
        %7591 = vrot.lane.b32.xlu0 %v4350, 8
        %v7592 = vpop.permute.xlu0 %7591
        %v7593 = vsel %vm1280, %v7582, %v7584
        %v7594 = vsel %vm1280, %v7584, %v7586
        %v7595 = vsel %vm1280, %v7588, %v7590
        %v7596 = vsel %vm1280, %v7590, %v7592
        %v7603 = vadd.f32 %v7569, %v7582
        %v7604 = vadd.f32 %v7570, %v7593
        %v7605 = vadd.f32 %v7571, %v7594
        %v7606 = vadd.f32 %v7572, %v7588
        %v7607 = vadd.f32 %v7573, %v7595
        %v7608 = vadd.f32 %v7574, %v7596
        %v7609 = vld [vmem:[%s11] sm:$0xff]
        %v7610 = vld [vmem:[%s11 + $0x8] sm:$0xff]
        %7612 = vset.pattern.permute.xlu0 0
        %7613 = vperm.xlu0 %7612, %v7609
        %v7614 = vpop.permute.xlu0 %7613
        %7617 = vset.pattern.permute.xlu0 0
        %7618 = vperm.xlu0 %7617, %v7610
        %v7619 = vpop.permute.xlu0 %7618
        %v7621 = vadd.f32 %v7603, %v7614
        %v7622 = vadd.f32 %v7604, %v7614
        %v7623 = vadd.f32 %v7605, %v7614
        %v7624 = vadd.f32 %v7606, %v7619
        %v7625 = vadd.f32 %v7607, %v7619
        %v7626 = vadd.f32 %v7608, %v7619
        %v7627 = vxor.u32 %v7621, 2147483648
        %v7628 = vxor.u32 %v7622, 2147483648
        %v7629 = vxor.u32 %v7623, 2147483648
        %v7630 = vxor.u32 %v7624, 2147483648
        %v7631 = vxor.u32 %v7625, 2147483648
        %v7632 = vxor.u32 %v7626, 2147483648
        %v7633 = vmul.f32 %v7627, 1.442695
        %v7634 = vpow.pop %v7633
        %v7635 = vmul.f32 %v7628, 1.442695
        %v7636 = vpow.pop %v7635
        %v7637 = vmul.f32 %v7629, 1.442695
        %v7638 = vpow.pop %v7637
        %v7639 = vmul.f32 %v7630, 1.442695
        %v7640 = vpow.pop %v7639
        %v7641 = vmul.f32 %v7631, 1.442695
        %v7642 = vpow.pop %v7641
        %v7643 = vmul.f32 %v7632, 1.442695
        %v7644 = vpow.pop %v7643
        %v7645 = vadd.f32 %v7634, 1.0
        %v7646 = vadd.f32 %v7636, 1.0
        %v7647 = vadd.f32 %v7638, 1.0
        %v7648 = vadd.f32 %v7640, 1.0
        %v7649 = vadd.f32 %v7642, 1.0
        %v7650 = vadd.f32 %v7644, 1.0
        %v7651 = vrcp.pop %v7645
        %v7652 = vmul.f32 1.0, %v7651
        %v7653 = vrcp.pop %v7646
        %v7654 = vmul.f32 1.0, %v7653
        %v7655 = vrcp.pop %v7647
        %v7656 = vmul.f32 1.0, %v7655
        %v7657 = vrcp.pop %v7648
        %v7658 = vmul.f32 1.0, %v7657
        %v7659 = vrcp.pop %v7649
        %v7660 = vmul.f32 1.0, %v7659
        %v7661 = vrcp.pop %v7650
        %v7662 = vmul.f32 1.0, %v7661
        %v7663 = vxor.u32 %v7652, 2147483648
        %v7664 = vxor.u32 %v7654, 2147483648
        %v7665 = vxor.u32 %v7656, 2147483648
        %v7666 = vxor.u32 %v7658, 2147483648
        %v7667 = vxor.u32 %v7660, 2147483648
        %v7668 = vxor.u32 %v7662, 2147483648
        %v7669 = vmul.f32 %v7663, 1.442695
        %v7670 = vpow.pop %v7669
        %v7671 = vmul.f32 %v7664, 1.442695
        %v7672 = vpow.pop %v7671
        %v7673 = vmul.f32 %v7665, 1.442695
        %v7674 = vpow.pop %v7673
        %v7675 = vmul.f32 %v7666, 1.442695
        %v7676 = vpow.pop %v7675
        %v7677 = vmul.f32 %v7667, 1.442695
        %v7678 = vpow.pop %v7677
        %v7679 = vmul.f32 %v7668, 1.442695
        %v7680 = vpow.pop %v7679
        %v7681 = vadd.f32 %v7670, 1.0
        %v7682 = vadd.f32 %v7672, 1.0
        %v7683 = vadd.f32 %v7674, 1.0
        %v7684 = vadd.f32 %v7676, 1.0
        %v7685 = vadd.f32 %v7678, 1.0
        %v7686 = vadd.f32 %v7680, 1.0
        %v7687 = vrcp.pop %v7681
        %v7688 = vmul.f32 1.0, %v7687
        %v7689 = vrcp.pop %v7682
        %v7690 = vmul.f32 1.0, %v7689
        %v7691 = vrcp.pop %v7683
        %v7692 = vmul.f32 1.0, %v7691
        %v7693 = vrcp.pop %v7684
        %v7694 = vmul.f32 1.0, %v7693
        %v7695 = vrcp.pop %v7685
        %v7696 = vmul.f32 1.0, %v7695
        %v7697 = vrcp.pop %v7686
        %v7698 = vmul.f32 1.0, %v7697
        %7705 = vrot.lane.b32.xlu0 %v7688, 120
        %v7706 = vpop.permute.xlu0 %7705
        %7707 = vrot.lane.b32.xlu0 %v7690, 120
        %v7708 = vpop.permute.xlu0 %7707
        %7709 = vrot.lane.b32.xlu0 %v7692, 120
        %v7710 = vpop.permute.xlu0 %7709
        %7711 = vrot.lane.b32.xlu0 %v7694, 120
        %v7712 = vpop.permute.xlu0 %7711
        %7713 = vrot.lane.b32.xlu0 %v7696, 120
        %v7714 = vpop.permute.xlu0 %7713
        %7715 = vrot.lane.b32.xlu0 %v7698, 120
        %v7716 = vpop.permute.xlu0 %7715
        %v7717 = vsel %vm1124, %v7706, %v7708
        %v7718 = vsel %vm1124, %v7708, %v7710
        %v7719 = vsel %vm1124, %v7712, %v7714
        %v7720 = vsel %vm1124, %v7714, %v7716
        %7727 = vst [vmem:[#allocation6] sm:$0xff] %v7717
        %7728 = vst [vmem:[#allocation6 + $0x8] sm:$0xff] %v7718
        %7729 = vst.msk [vmem:[#allocation6 + $0x10] sm:$0xff] %vm1695, %v7710
        %7730 = vst [vmem:[#allocation6 + $0x18] sm:$0xff] %v7719
        %7731 = vst [vmem:[#allocation6 + $0x20] sm:$0xff] %v7720
        %7732 = vst.msk [vmem:[#allocation6 + $0x28] sm:$0xff] %vm1695, %v7716
        %v7733 = vld [vmem:[#allocation6] sm:$0xff]
        %v7734 = vld [vmem:[#allocation6 + $0x18] sm:$0xff]
        %7735 = vst.msk [vmem:[#allocation7] sm:$0xff] %vm598, %v7733
        %7736 = vst.msk [vmem:[#allocation7 + $0x10] sm:$0xff] %vm598, %v7734
        %v7737 = vld [vmem:[#allocation6] sm:$0xff]
        %v7738 = vld [vmem:[#allocation6 + $0x18] sm:$0xff]
        %7741 = vrot.lane.b32.xlu0 %v7737, 122
        %v7742 = vpop.permute.xlu0 %7741
        %7743 = vrot.lane.b32.xlu0 %v7738, 122
        %v7744 = vpop.permute.xlu0 %7743
        %vm7747 = vcmask 261248
        %7748 = vst.msk [vmem:[#allocation7] sm:$0xff] %vm7747, %v7742
        %7749 = vst.msk [vmem:[#allocation7 + $0x10] sm:$0xff] %vm7747, %v7744
        %v7750 = vld [vmem:[#allocation6] sm:$0xff]
        %v7751 = vld [vmem:[#allocation6 + $0x18] sm:$0xff]
        %7754 = vrot.lane.b32.xlu0 %v7750, 116
        %v7755 = vpop.permute.xlu0 %7754
        %7756 = vrot.lane.b32.xlu0 %v7751, 116
        %v7757 = vpop.permute.xlu0 %7756
        %vm7760 = vcmask 392448
        %7761 = vst.msk [vmem:[#allocation7] sm:$0xff] %vm7760, %v7755
        %7762 = vst.msk [vmem:[#allocation7 + $0x10] sm:$0xff] %vm7760, %v7757
        %v7763 = vld [vmem:[#allocation6] sm:$0xff]
        %v7764 = vld [vmem:[#allocation6 + $0x18] sm:$0xff]
        %7767 = vrot.lane.b32.xlu0 %v7763, 110
        %v7768 = vpop.permute.xlu0 %7767
        %7769 = vrot.lane.b32.xlu0 %v7764, 110
        %v7770 = vpop.permute.xlu0 %7769
        %vm7773 = vcmask 523648
        %7774 = vst.msk [vmem:[#allocation7] sm:$0xff] %vm7773, %v7768
        %7775 = vst.msk [vmem:[#allocation7 + $0x10] sm:$0xff] %vm7773, %v7770
        %v7776 = vld [vmem:[#allocation6] sm:$0xff]
        %v7777 = vld [vmem:[#allocation6 + $0x18] sm:$0xff]
        %7780 = vrot.lane.b32.xlu0 %v7776, 104
        %v7781 = vpop.permute.xlu0 %7780
        %7782 = vrot.lane.b32.xlu0 %v7777, 104
        %v7783 = vpop.permute.xlu0 %7782
        %vm7786 = vcmask 654848
        %7787 = vst.msk [vmem:[#allocation7] sm:$0xff] %vm7786, %v7781
        %7788 = vst.msk [vmem:[#allocation7 + $0x10] sm:$0xff] %vm7786, %v7783
        %v7789 = vld [vmem:[#allocation6] sm:$0xff]
        %v7790 = vld [vmem:[#allocation6 + $0x18] sm:$0xff]
        %7793 = vrot.lane.b32.xlu0 %v7789, 98
        %v7794 = vpop.permute.xlu0 %7793
        %7795 = vrot.lane.b32.xlu0 %v7790, 98
        %v7796 = vpop.permute.xlu0 %7795
        %vm7799 = vcmask 786048
        %7800 = vst.msk [vmem:[#allocation7] sm:$0xff] %vm7799, %v7794
        %7801 = vst.msk [vmem:[#allocation7 + $0x10] sm:$0xff] %vm7799, %v7796
        %v7802 = vld [vmem:[#allocation6 + $0x8] sm:$0xff]
        %v7803 = vld [vmem:[#allocation6 + $0x20] sm:$0xff]
        %7806 = vrot.lane.b32.xlu0 %v7802, 92
        %v7807 = vpop.permute.xlu0 %7806
        %7808 = vrot.lane.b32.xlu0 %v7803, 92
        %v7809 = vpop.permute.xlu0 %7808
        %vm7812 = vcmask 917248
        %7813 = vst.msk [vmem:[#allocation7] sm:$0xff] %vm7812, %v7807
        %7814 = vst.msk [vmem:[#allocation7 + $0x10] sm:$0xff] %vm7812, %v7809
        %v7815 = vld [vmem:[#allocation6 + $0x8] sm:$0xff]
        %v7816 = vld [vmem:[#allocation6 + $0x20] sm:$0xff]
        %7819 = vrot.lane.b32.xlu0 %v7815, 86
        %v7820 = vpop.permute.xlu0 %7819
        %7821 = vrot.lane.b32.xlu0 %v7816, 86
        %v7822 = vpop.permute.xlu0 %7821
        %vm7825 = vcmask 1048448
        %7826 = vst.msk [vmem:[#allocation7] sm:$0xff] %vm7825, %v7820
        %7827 = vst.msk [vmem:[#allocation7 + $0x10] sm:$0xff] %vm7825, %v7822
        %v7828 = vld [vmem:[#allocation6 + $0x8] sm:$0xff]
        %v7829 = vld [vmem:[#allocation6 + $0x20] sm:$0xff]
        %7832 = vrot.lane.b32.xlu0 %v7828, 80
        %v7833 = vpop.permute.xlu0 %7832
        %7834 = vrot.lane.b32.xlu0 %v7829, 80
        %v7835 = vpop.permute.xlu0 %7834
        %7838 = vst.msk [vmem:[#allocation7 + $0x8] sm:$0xff] %vm598, %v7833
        %7839 = vst.msk [vmem:[#allocation7 + $0x18] sm:$0xff] %vm598, %v7835
        %v7840 = vld [vmem:[#allocation6 + $0x8] sm:$0xff]
        %v7841 = vld [vmem:[#allocation6 + $0x20] sm:$0xff]
        %7844 = vrot.lane.b32.xlu0 %v7840, 74
        %v7845 = vpop.permute.xlu0 %7844
        %7846 = vrot.lane.b32.xlu0 %v7841, 74
        %v7847 = vpop.permute.xlu0 %7846
        %7850 = vst.msk [vmem:[#allocation7 + $0x8] sm:$0xff] %vm7747, %v7845
        %7851 = vst.msk [vmem:[#allocation7 + $0x18] sm:$0xff] %vm7747, %v7847
        %v7852 = vld [vmem:[#allocation6 + $0x8] sm:$0xff]
        %v7853 = vld [vmem:[#allocation6 + $0x20] sm:$0xff]
        %7856 = vrot.lane.b32.xlu0 %v7852, 68
        %v7857 = vpop.permute.xlu0 %7856
        %7858 = vrot.lane.b32.xlu0 %v7853, 68
        %v7859 = vpop.permute.xlu0 %7858
        %7862 = vst.msk [vmem:[#allocation7 + $0x8] sm:$0xff] %vm7760, %v7857
        %7863 = vst.msk [vmem:[#allocation7 + $0x18] sm:$0xff] %vm7760, %v7859
        %v7864 = vld [vmem:[#allocation6 + $0x8] sm:$0xff]
        %v7865 = vld [vmem:[#allocation6 + $0x10] sm:$0xff]
        %v7866 = vld [vmem:[#allocation6 + $0x20] sm:$0xff]
        %v7867 = vld [vmem:[#allocation6 + $0x28] sm:$0xff]
        %7872 = vrot.lane.b32.xlu0 %v7864, 62
        %v7873 = vpop.permute.xlu0 %7872
        %7874 = vrot.lane.b32.xlu0 %v7865, 62
        %v7875 = vpop.permute.xlu0 %7874
        %7876 = vrot.lane.b32.xlu0 %v7866, 62
        %v7877 = vpop.permute.xlu0 %7876
        %7878 = vrot.lane.b32.xlu0 %v7867, 62
        %v7879 = vpop.permute.xlu0 %7878
        %vm7880 = vcmask 506880
        %v7881 = vsel %vm7880, %v7873, %v7875
        %v7882 = vsel %vm7880, %v7877, %v7879
        %7885 = vst.msk [vmem:[#allocation7 + $0x8] sm:$0xff] %vm7773, %v7881
        %7886 = vst.msk [vmem:[#allocation7 + $0x18] sm:$0xff] %vm7773, %v7882
        %v7887 = vld [vmem:[#allocation6 + $0x10] sm:$0xff]
        %v7888 = vld [vmem:[#allocation6 + $0x28] sm:$0xff]
        %7891 = vrot.lane.b32.xlu0 %v7887, 56
        %v7892 = vpop.permute.xlu0 %7891
        %7893 = vrot.lane.b32.xlu0 %v7888, 56
        %v7894 = vpop.permute.xlu0 %7893
        %7897 = vst.msk [vmem:[#allocation7 + $0x8] sm:$0xff] %vm7786, %v7892
        %7898 = vst.msk [vmem:[#allocation7 + $0x18] sm:$0xff] %vm7786, %v7894
        %v7899 = vld [vmem:[#allocation6 + $0x10] sm:$0xff]
        %v7900 = vld [vmem:[#allocation6 + $0x28] sm:$0xff]
        %7903 = vrot.lane.b32.xlu0 %v7899, 50
        %v7904 = vpop.permute.xlu0 %7903
        %7905 = vrot.lane.b32.xlu0 %v7900, 50
        %v7906 = vpop.permute.xlu0 %7905
        %7909 = vst.msk [vmem:[#allocation7 + $0x8] sm:$0xff] %vm7799, %v7904
        %7910 = vst.msk [vmem:[#allocation7 + $0x18] sm:$0xff] %vm7799, %v7906
        %v7911 = vld [vmem:[#allocation6 + $0x10] sm:$0xff]
        %v7912 = vld [vmem:[#allocation6 + $0x28] sm:$0xff]
        %7915 = vrot.lane.b32.xlu0 %v7911, 44
        %v7916 = vpop.permute.xlu0 %7915
        %7917 = vrot.lane.b32.xlu0 %v7912, 44
        %v7918 = vpop.permute.xlu0 %7917
        %7921 = vst.msk [vmem:[#allocation7 + $0x8] sm:$0xff] %vm7812, %v7916
        %7922 = vst.msk [vmem:[#allocation7 + $0x18] sm:$0xff] %vm7812, %v7918
        %v7923 = vld [vmem:[#allocation6 + $0x10] sm:$0xff]
        %v7924 = vld [vmem:[#allocation6 + $0x28] sm:$0xff]
        %7927 = vrot.lane.b32.xlu0 %v7923, 38
        %v7928 = vpop.permute.xlu0 %7927
        %7929 = vrot.lane.b32.xlu0 %v7924, 38
        %v7930 = vpop.permute.xlu0 %7929
        %7933 = vst.msk [vmem:[#allocation7 + $0x8] sm:$0xff] %vm7825, %v7928
        %7934 = vst.msk [vmem:[#allocation7 + $0x18] sm:$0xff] %vm7825, %v7930
        %v7935 = vld [vmem:[#allocation7] sm:$0xff]
        %v7936 = vld [vmem:[#allocation7 + $0x8] sm:$0xff]
        %v7937 = vld [vmem:[#allocation7 + $0x10] sm:$0xff]
        %v7938 = vld [vmem:[#allocation7 + $0x18] sm:$0xff]
        %v7939 = vmul.f32 %v7935, %v561
        %v7940 = vmul.f32 %v7936, %v562
        %v7941 = vmul.f32 %v7937, %v563
        %v7942 = vmul.f32 %v7938, %v564
        %v7943 = vadd.f32 %v569, %v7939
        %v7944 = vadd.f32 %v570, %v7940
        %v7945 = vadd.f32 %v571, %v7941
        %v7946 = vadd.f32 %v572, %v7942
        %v7947 = vsub.f32 1.0, %v7935
        %v7948 = vsub.f32 1.0, %v7936
        %v7949 = vsub.f32 1.0, %v7937
        %v7950 = vsub.f32 1.0, %v7938
        %v7951 = vmul.f32 %v7947, %v565
        %v7952 = vmul.f32 %v7948, %v566
        %v7953 = vmul.f32 %v7949, %v567
        %v7954 = vmul.f32 %v7950, %v568
        %v7955 = vadd.f32 %v7943, %v7951
        %v7956 = vadd.f32 %v7944, %v7952
        %v7957 = vadd.f32 %v7945, %v7953
        %v7958 = vadd.f32 %v7946, %v7954
        %v7959 = vld [vmem:[#allocation17] sm:$0xff]
        %v7960 = vld [vmem:[#allocation17 + $0x8] sm:$0xff]
        %v7961 = vld [vmem:[%s13] sm:$0xff]
        %v7962 = vld [vmem:[%s13 + $0x8] sm:$0xff]
        %7964 = vset.pattern.permute.xlu0 0
        %7965 = vperm.xlu0 %7964, %v7961
        %v7966 = vpop.permute.xlu0 %7965
        %7969 = vset.pattern.permute.xlu0 0
        %7970 = vperm.xlu0 %7969, %v7962
        %v7971 = vpop.permute.xlu0 %7970
        %v7974 = vsel %vm598, %v7959, 0
        %v7977 = vsel %vm598, %v7960, 0
        %7979 = vmatprep.subr.mxu0 0.0
        %7980 = vmatpush1.msra.mxu0 0.0
        %7981 = vmatprep.subr.mxu0 0.0
        %7982 = vmatpush1.msra.mxu0 0.0
        %7983 = vmatprep.subr.mxu0 0.0
        %7984 = vmatpush1.msra.mxu0 0.0
        %7985 = vmatprep.subr.mxu0 0.0
        %7986 = vmatpush1.msra.mxu0 0.0
        %7987 = vmatprep.subr.mxu0 0.0
        %7988 = vmatpush1.msra.mxu0 0.0
        %7989 = vmatprep.subr.mxu0 0.0
        %7990 = vmatpush1.msra.mxu0 0.0
        %7991 = vmatprep.subr.mxu0 0.0
        %7992 = vmatpush1.msra.mxu0 0.0
        %7993 = vmatprep.subr.mxu0 0.0
        %7994 = vmatpush1.msra.mxu0 0.0
        %7995 = vmatprep.subr.mxu0 0.0
        %7996 = vmatpush1.msra.mxu0 0.0
        %7997 = vmatprep.subr.mxu0 0.0
        %7998 = vmatpush1.msra.mxu0 0.0
        %7999 = vmatprep.subr.mxu0 0.0
        %8000 = vmatpush1.msra.mxu0 0.0
        %8001 = vmatprep.subr.mxu0 0.0
        %8002 = vmatpush1.msra.mxu0 0.0
        %8003 = vmatprep.subr.mxu0 0.0
        %8004 = vmatpush1.msra.mxu0 0.0
        %8005 = vmatprep.subr.mxu0 0.0
        %8006 = vmatpush1.msra.mxu0 0.0
        %8007 = vmatprep.subr.mxu0 %v7958
        %8008 = vmatpush1.msra.mxu0 %v7957
        %8009 = vmatprep.subr.mxu0 %v7956
        %8010 = vmatpush1.msra.mxu0 %v7955
        %8011 = vmatprep.subr.mxu0 0.0
        %8012 = vmatpush2.msra.mxu0 0.0
        %8013 = vmatprep.subr.mxu0 0.0
        %8014 = vmatpush2.msra.mxu0 0.0
        %8015 = vmatprep.subr.mxu0 0.0
        %8016 = vmatpush2.msra.mxu0 0.0
        %8017 = vmatprep.subr.mxu0 0.0
        %8018 = vmatpush2.msra.mxu0 0.0
        %8019 = vmatprep.subr.mxu0 0.0
        %8020 = vmatpush2.msra.mxu0 0.0
        %8021 = vmatprep.subr.mxu0 0.0
        %8022 = vmatpush2.msra.mxu0 0.0
        %8023 = vmatprep.subr.mxu0 0.0
        %8024 = vmatpush2.msra.mxu0 0.0
        %8025 = vmatprep.subr.mxu0 0.0
        %8026 = vmatpush2.msra.mxu0 0.0
        %8027 = vmatprep.subr.mxu0 0.0
        %8028 = vmatpush2.msra.mxu0 0.0
        %8029 = vmatprep.subr.mxu0 0.0
        %8030 = vmatpush2.msra.mxu0 0.0
        %8031 = vmatprep.subr.mxu0 0.0
        %8032 = vmatpush2.msra.mxu0 0.0
        %8033 = vmatprep.subr.mxu0 0.0
        %8034 = vmatpush2.msra.mxu0 0.0
        %8035 = vmatprep.subr.mxu0 0.0
        %8036 = vmatpush2.msra.mxu0 0.0
        %8037 = vmatprep.subr.mxu0 0.0
        %8038 = vmatpush2.msra.mxu0 0.0
        %8039 = vmatprep.subr.mxu0 0.0
        %8040 = vmatpush2.msra.mxu0 0.0
        %8041 = vmatprep.subr.mxu0 0.0
        %8042 = vmatpush2.msra.mxu0 0.0
        %8043 = vmatprep.mubr.f32.mxu0 0.0
        %8044 = vmatmul.mubr.f32.gmra.mxu0 %v7974
        %v8045 = vpop.f32.mrf.mxu0
        %v8046 = vadd.f32 %v7966, %v8045
        %v8047 = vpop.f32.mrf.mxu0
        %v8048 = vadd.f32 %v7966, %v8047
        %8049 = vmatprep.mubr.f32.mxu0 0.0
        %8050 = vmatmul.mubr.f32.gmra.mxu0 %v7977
        %v8051 = vpop.f32.mrf.mxu0
        %v8052 = vadd.f32 %v7971, %v8051
        %v8053 = vpop.f32.mrf.mxu0
        %v8054 = vadd.f32 %v7971, %v8053
        %8055 = vdwg.mxu0
        %8056 = vst [vmem:[%s555] sm:$0xff] %v8046
        %8057 = vst [vmem:[%s555 + $0x8] sm:$0xff] %v8048
        %8058 = vst [vmem:[%s555 + $0x10] sm:$0xff] %v8052
        %8059 = vst [vmem:[%s555 + $0x18] sm:$0xff] %v8054
        %s8060 = sand.u32 %s346, 1
        %s8061 = scalar_lea.sflag [#allocation11], %s8060
        %s8062 = sand.u32 %s346, 1
        %s8063 = smul.addr %s8062, 32
        %s8064 = scalar_lea.vmem [#allocation18], %s8063
        // Predicated region
        $region97: #{tpu_custom_call.1} parent=75 // pred_check
          %p8065 = pneg %p356
        $region98: #{tpu_custom_call.1} parent=75 // pred_check_branch
          %8067 = sbr.rel (%p8065) target = $region100
        $region99: #{tpu_custom_call.1} parent=75 // pred_region
          %s8069 = ssub.s32 512, 512
          %8070 = vsyncadd %s8061, %s8069
          %s8071 = smul.addr %s34, 4
          %s8072 = smul.addr %s8071, 128
          %s8073 = scalar_lea.hbm %s14, %s8072
          %s8074 = sshll.u32 %s8064, 4
          %s8075 = int_to_ptr.vmem [resolvable:$true] %s8074
          %8080 = dma.vmem_to_hbm [thread:$0]  %s8075, 512, %s8073, %s8061, 256, 256, 16
        $region100: #{tpu_custom_call.1} parent=75 // pred_fallthru
          _
      $region76: #{tpu_custom_call.1} parent=5 // pred_fallthru
        _
      %p8081 = scmp.le.s32.totalorder 2, %s29
      // Predicated region
      $region101: #{tpu_custom_call.1} parent=5 // pred_check
        %p8082 = pneg %p8081
      $region102: #{tpu_custom_call.1} parent=5 // pred_check_branch
        %8084 = sbr.rel (%p8082) target = $region104
      $region103: #{tpu_custom_call.1} parent=5 // pred_region
        %s8085 = ssub.s32 %s29, 2
        // Predicated region
        $region105: #{tpu_custom_call.1} parent=103 // pred_check
          %p8086 = pneg %p362
        $region106: #{tpu_custom_call.1} parent=103 // pred_check_branch
          %8088 = sbr.rel (%p8086) target = $region108
        $region107: #{tpu_custom_call.1} parent=103 // pred_region
          %s8089 = sand.u32 %s347, 1
          %s8090 = scalar_lea.sflag [#allocation11], %s8089
          %s8091 = sand.u32 %s347, 1
          %s8092 = smul.addr %s8091, 32
          %s8093 = scalar_lea.vmem [#allocation18], %s8092
          %8094 = dma.done %s8090, 512
        $region108: #{tpu_custom_call.1} parent=103 // pred_fallthru
          _
      $region104: #{tpu_custom_call.1} parent=5 // pred_fallthru
        _
    $region6: #{tpu_custom_call.1} parent=1 // loop_footer
      %s33 = sadd.s32 1, %s29
    $region7: #{tpu_custom_call.1} parent=1 // loop_footer_branch
      %28 = sbr.rel target = $region3
    $region8: #{tpu_custom_call.1} parent=1 // loop_exit
      _
    %8095 = vsyncpa [#allocation10], 1
    %s8096 = scalar_lea.sflag [#allocation10], 1
    %8097 = vsyncpa %s8096, 1
    %8098 = vsyncpa [#allocation13], 1
    %8099 = vsyncpa [#allocation16], 1
    %8100 = vsyncpa [#allocation11], 1
    %s8101 = scalar_lea.sflag [#allocation11], 1
    %8102 = vsyncpa %s8101, 1

</llo_original>
